<compile_context>
chip_gen: v5e
topology: v5e:2x2
jax: 0.10.0
libtpu: 0.0.40
codegen_flags: <defaults>
</compile_context>

<pallas_src>
import functools

import jax
import jax.numpy as jnp
from jax.experimental import pallas as pl
from jax.experimental.pallas import tpu as pltpu


FEATURES = [64, 128, 256, 512, 1]
STRIDES = [2, 2, 2, 1, 1]
INSTANCENORMS = [0, 1, 1, 1, 0]
LEAKYRELUS = [1, 1, 1, 1, 0]

# Per-step VMEM with tm=512, tk=1024, Cout=512 (bf16 operands, f32 out/acc) is ~7-8 MiB
# including double buffering, well under this limit on v5e/v6e/v7x.
_VMEM_LIMIT = 48 * 1024 * 1024


def _round_up(x, m):
    return (x + m - 1) // m * m


def _m_tiling(M):
    # M tile: up to 512 rows (multiple of 8 sublanes); pad M to a multiple of the tile.
    tm = min(512, _round_up(M, 8))
    return tm, _round_up(M, tm)


def _k_tiling(K):
    # K tile: up to 1024 (multiple of 128 lanes); pad K to a multiple of the tile.
    k_pad = _round_up(K, 128)
    tk = min(1024, k_pad)
    return tk, _round_up(k_pad, tk)


# ----------------------------- Pallas kernels -----------------------------

def _conv_mm_kernel(p_ref, w_ref, b_ref, o_ref, acc_ref, *, apply_lrelu):
    # One (tm, tk) x (tk, Cout) partial product per grid step. K is the innermost
    # ("arbitrary") grid axis, accumulated into an f32 VMEM scratch; bias (+ optional
    # LeakyReLU) is fused into the epilogue at the last K step.
    k = pl.program_id(1)

    @pl.when(k == 0)
    def _():
        acc_ref[...] = jnp.zeros_like(acc_ref)

    acc_ref[...] += jnp.dot(p_ref[...], w_ref[...],
                            preferred_element_type=jnp.float32)

    @pl.when(k == pl.num_programs(1) - 1)
    def _():
        acc = acc_ref[...] + b_ref[...]          # bias in f32
        if apply_lrelu:
            acc = jnp.where(acc >= 0, acc, 0.2 * acc)
        o_ref[...] = acc.astype(o_ref.dtype)


def _in_lrelu_kernel(x_ref, o_ref):
    # x_ref: (1, HW, tc) -- one sample, one 128-wide channel tile.
    # InstanceNorm2d (affine=False, eps=1e-5, biased variance over spatial) followed
    # by LeakyReLU(0.2); all elementwise in f32.
    x = x_ref[...]
    mean = jnp.mean(x, axis=1, keepdims=True)
    cen = x - mean
    var = jnp.mean(cen * cen, axis=1, keepdims=True)
    y = cen * jax.lax.rsqrt(var + 1e-5)
    o_ref[...] = jnp.where(y >= 0, y, 0.2 * y)


def _avgpool_kernel(x_ref, o_ref):
    # x_ref: (1, HW, C) -> (1, 1, C) spatial mean (== avg_pool2d over full spatial).
    o_ref[...] = jnp.mean(x_ref[...], axis=1, keepdims=True)


# ----------------------------- Pallas wrappers -----------------------------

def conv_matmul(patches, w_pad, b_pad, apply_lrelu):
    # patches: (M, K) im2col rows (bf16); w_pad: (K_pad, Cout_p) bf16; b_pad: (1, Cout_p) f32.
    M, K = patches.shape
    K_pad, cout_p = w_pad.shape
    tk, k_pad_chk = _k_tiling(K)
    assert k_pad_chk == K_pad, (K, K_pad, k_pad_chk)
    tm, M_pad = _m_tiling(M)

    p = patches
    if (M_pad - M) or (K_pad - K):
        p = jnp.pad(p, ((0, M_pad - M), (0, K_pad - K)))
    p = p.astype(jnp.bfloat16)

    grid = (M_pad // tm, K_pad // tk)
    kern = functools.partial(_conv_mm_kernel, apply_lrelu=apply_lrelu)
    out = pl.pallas_call(
        kern,
        out_shape=jax.ShapeDtypeStruct((M_pad, cout_p), jnp.float32),
        grid=grid,
        in_specs=[
            pl.BlockSpec((tm, tk), lambda i, k: (i, k)),
            pl.BlockSpec((tk, cout_p), lambda i, k: (k, 0)),
            pl.BlockSpec((1, cout_p), lambda i, k: (0, 0)),
        ],
        out_specs=pl.BlockSpec((tm, cout_p), lambda i, k: (i, 0)),
        scratch_shapes=[pltpu.VMEM((tm, cout_p), jnp.float32)],
        compiler_params=pltpu.CompilerParams(
            dimension_semantics=("parallel", "arbitrary"),
            vmem_limit_bytes=_VMEM_LIMIT),
    )(p, w_pad, b_pad)
    return out[:M] if M_pad != M else out


def instancenorm_lrelu(x):
    # x: (N, HW, C) f32; per-sample per-channel normalization over spatial, tiled over
    # (sample, 128-channel tile); spatial reduction stays within one block.
    N, HW, C = x.shape
    tc = 128 if C % 128 == 0 else C
    return pl.pallas_call(
        _in_lrelu_kernel,
        out_shape=jax.ShapeDtypeStruct((N, HW, C), jnp.float32),
        grid=(N, C // tc),
        in_specs=[pl.BlockSpec((1, HW, tc), lambda n, c: (n, 0, c))],
        out_specs=pl.BlockSpec((1, HW, tc), lambda n, c: (n, 0, c)),
        compiler_params=pltpu.CompilerParams(
            dimension_semantics=("parallel", "parallel"),
            vmem_limit_bytes=_VMEM_LIMIT),
    )(x)


def avgpool_flatten(x):
    # x: (N, HW, C) with lane-dense C (128-padded final layer) -> (N, C).
    N, HW, C = x.shape
    pooled = pl.pallas_call(
        _avgpool_kernel,
        out_shape=jax.ShapeDtypeStruct((N, 1, C), jnp.float32),
        grid=(N,),
        in_specs=[pl.BlockSpec((1, HW, C), lambda n: (n, 0, 0))],
        out_specs=pl.BlockSpec((1, 1, C), lambda n: (n, 0, 0)),
        compiler_params=pltpu.CompilerParams(
            dimension_semantics=("parallel",),
            vmem_limit_bytes=_VMEM_LIMIT),
    )(x)
    return pooled[:, 0, :]


# ------------------- JAX glue (layout / padding / im2col) -------------------

def reflect_pad(x, p=1):
    # x: (N, H, W, C); PyTorch padding_mode='reflect' == jnp.pad mode='reflect'.
    return jnp.pad(x, ((0, 0), (p, p), (p, p), (0, 0)), mode="reflect")


def im2col(x, k, stride):
    # x: (N, H, W, C) already padded. Returns ((N*OH*OW, k*k*C), OH, OW) with the
    # K-dim ordered (kh, kw, cin) -- must match the weight reshape in init_params.
    N, H, W, C = x.shape
    OH = (H - k) // stride + 1
    OW = (W - k) // stride + 1
    cols = []
    for di in range(k):
        for dj in range(k):
            cols.append(
                x[:, di:di + stride * (OH - 1) + 1:stride,
                     dj:dj + stride * (OW - 1) + 1:stride, :]
            )
    p = jnp.stack(cols, axis=3)  # (N, OH, OW, k*k, C)
    return p.reshape(N * OH * OW, k * k * C), OH, OW


def init_params(key, in_channels=3):
    # Deterministic synthetic weights (PyTorch Conv2d default-init-style uniform),
    # pre-reshaped for the im2col matmul: (K_pad, Cout_p) bf16, bias (1, Cout_p) f32.
    # K is zero-padded to the tile width (layer 0: 48 -> 128); the final Cout=1 is
    # zero-padded to 128 for lane-dense MXU output / stores.
    params = []
    cin = in_channels
    for cout in FEATURES:
        key, k1, k2 = jax.random.split(key, 3)
        fan_in = cin * 4 * 4
        bound = 1.0 / (fan_in ** 0.5)
        w = jax.random.uniform(k1, (cout, cin, 4, 4), jnp.float32, -bound, bound)
        b = jax.random.uniform(k2, (cout,), jnp.float32, -bound, bound)
        K = 4 * 4 * cin
        _, K_pad = _k_tiling(K)
        cout_p = cout if cout >= 64 else _round_up(cout, 128)  # only the 1-ch head pads
        w_mm = jnp.transpose(w, (2, 3, 1, 0)).reshape(K, cout)  # (kh,kw,cin,cout)
        w_mm = jnp.pad(w_mm, ((0, K_pad - K), (0, cout_p - cout))).astype(jnp.bfloat16)
        b_p = jnp.pad(b, (0, cout_p - cout)).reshape(1, cout_p).astype(jnp.float32)
        params.append((w_mm, b_p))
        cin = cout
    return params


def discriminator_forward(x_nchw, params):
    # x_nchw: (N, C, H, W) float32 -- PyTorch layout at the boundary.
    x = jnp.transpose(x_nchw, (0, 2, 3, 1)).astype(jnp.float32)  # -> NHWC
    for i in range(5):
        w, b = params[i]
        # TODO(synk): fuse the (kh, kw) patch extraction into the conv kernel (extra
        # grid axis + shifted window index_map) to avoid materializing the 16x im2col
        # matrix in HBM; for now patches are emitted in bf16 (half the HBM traffic).
        xp = reflect_pad(x.astype(jnp.bfloat16), 1)
        patches, OH, OW = im2col(xp, 4, STRIDES[i])
        N = x.shape[0]
        cout_p = w.shape[1]  # lane-padded Cout (layer 4: 1 -> 128)
        # Fuse LeakyReLU into the conv epilogue only when no InstanceNorm follows
        # (layer 0); otherwise LeakyReLU is fused into the InstanceNorm kernel.
        fuse_lrelu = bool(LEAKYRELUS[i] and not INSTANCENORMS[i])
        y = conv_matmul(patches, w, b, fuse_lrelu)           # (N*OH*OW, cout_p) f32
        y = y.reshape(N, OH * OW, cout_p)
        if INSTANCENORMS[i]:
            y = instancenorm_lrelu(y)                         # IN + LeakyReLU(0.2)
        x = y.reshape(N, OH, OW, cout_p)
    N, OH, OW, C = x.shape
    pooled = avgpool_flatten(x.reshape(N, OH * OW, C))        # (N, C) lane-dense
    return pooled[:, :FEATURES[-1]]                           # true channel 0 -> (N, 1)


if __name__ == "__main__":
    key = jax.random.PRNGKey(0)
    kx, kp = jax.random.split(key)
    # Small input consistent with the module: 3 stride-2 convs + 2 stride-1 k=4 convs
    # need spatial >= 32 for a valid (non-empty) output; final map is 2x2 here.
    x = jax.random.normal(kx, (2, 3, 32, 32), jnp.float32)    # NCHW, like PyTorch
    params = init_params(kp, in_channels=3)
    out = jax.jit(discriminator_forward)(x, params)
    jax.block_until_ready(out)
    assert out.shape == (2, 1), out.shape
    print("KERNEL_OK")
</pallas_src>

<mosaic_0001>
module attributes {stable_mosaic.version = 11 : i64} {
  func.func @_conv_mm_kernel(%arg0: i32, %arg1: i32, %arg2: memref<512x128xbf16, #tpu.memory_space<vmem>>, %arg3: memref<128x64xbf16, #tpu.memory_space<vmem>>, %arg4: memref<1x64xf32, #tpu.memory_space<vmem>>, %arg5: memref<512x64xf32, #tpu.memory_space<vmem>>, %arg6: memref<512x64xf32, #tpu.memory_space<vmem>>) attributes {dimension_semantics = [#tpu.dimension_semantics<parallel>, #tpu.dimension_semantics<arbitrary>], iteration_bounds = array<i64: 1, 1>, scalar_prefetch = 0 : i64, scratch_operands = 1 : i64, tpu.core_type = #tpu.core_type<tc>, window_params = [{transform_indices = @transform_0, window_bounds = array<i64: 512, 128>}, {transform_indices = @transform_1, window_bounds = array<i64: 128, 64>}, {pipeline_mode = #tpu.pipeline_mode<synchronous>, transform_indices = @transform_2, window_bounds = array<i64: 1, 64>}, {transform_indices = @transform_3, window_bounds = array<i64: 512, 64>}]} {
    %c0_i32 = arith.constant 0 : i32
    %0 = arith.cmpi eq, %arg1, %c0_i32 : i32
    %1 = arith.extui %0 : i1 to i32
    %c0_i32_0 = arith.constant 0 : i32
    %2 = arith.cmpi ne, %1, %c0_i32_0 : i32
    scf.if %2 {
      %cst_10 = arith.constant 0.000000e+00 : f32
      %12 = vector.broadcast %cst_10 : f32 to vector<512x64xf32>
      %c0_11 = arith.constant 0 : index
      %c0_12 = arith.constant 0 : index
      %13 = vector.load %arg6[%c0_11, %c0_12] : memref<512x64xf32, #tpu.memory_space<vmem>>, vector<512x64xf32>
      tpu.vector_store %arg6[%c0_11, %c0_12], %12 {strides = array<i32>} : memref<512x64xf32, #tpu.memory_space<vmem>>, vector<512x64xf32>,
    } else {
    }
    %c0 = arith.constant 0 : index
    %c0_1 = arith.constant 0 : index
    %3 = vector.load %arg6[%c0, %c0_1] : memref<512x64xf32, #tpu.memory_space<vmem>>, vector<512x64xf32>
    %c0_2 = arith.constant 0 : index
    %c0_3 = arith.constant 0 : index
    %4 = vector.load %arg2[%c0_2, %c0_3] : memref<512x128xbf16, #tpu.memory_space<vmem>>, vector<512x128xbf16>
    %c0_4 = arith.constant 0 : index
    %c0_5 = arith.constant 0 : index
    %5 = vector.load %arg3[%c0_4, %c0_5] : memref<128x64xbf16, #tpu.memory_space<vmem>>, vector<128x64xbf16>
    %cst = arith.constant dense<0.000000e+00> : vector<512x64xf32>
    %6 = tpu.matmul %4, %5, %cst {dimension_numbers = #tpu.dot_dimension_numbers<[1], [0], [0], [1], [0, 0, 1, 1], [], []>} : vector<512x128xbf16>, vector<128x64xbf16>, vector<512x64xf32> -> vector<512x64xf32>
    %7 = arith.addf %3, %6 : vector<512x64xf32>
    %c0_6 = arith.constant 0 : index
    %c0_7 = arith.constant 0 : index
    %8 = vector.load %arg6[%c0_6, %c0_7] : memref<512x64xf32, #tpu.memory_space<vmem>>, vector<512x64xf32>
    tpu.vector_store %arg6[%c0_6, %c0_7], %7 {strides = array<i32>} : memref<512x64xf32, #tpu.memory_space<vmem>>, vector<512x64xf32>,
    %c0_i32_8 = arith.constant 0 : i32
    %9 = arith.cmpi eq, %arg1, %c0_i32_8 : i32
    %10 = arith.extui %9 : i1 to i32
    %c0_i32_9 = arith.constant 0 : i32
    %11 = arith.cmpi ne, %10, %c0_i32_9 : i32
    scf.if %11 {
      %c0_10 = arith.constant 0 : index
      %c0_11 = arith.constant 0 : index
      %12 = vector.load %arg6[%c0_10, %c0_11] : memref<512x64xf32, #tpu.memory_space<vmem>>, vector<512x64xf32>
      %c0_12 = arith.constant 0 : index
      %c0_13 = arith.constant 0 : index
      %13 = vector.load %arg4[%c0_12, %c0_13] : memref<1x64xf32, #tpu.memory_space<vmem>>, vector<1x64xf32>
      %14 = vector.broadcast %13 : vector<1x64xf32> to vector<512x64xf32>
      %15 = arith.addf %12, %14 : vector<512x64xf32>
      %cst_14 = arith.constant 0.000000e+00 : f32
      %16 = vector.broadcast %cst_14 : f32 to vector<512x64xf32>
      %17 = arith.cmpf oge, %15, %16 : vector<512x64xf32>
      %cst_15 = arith.constant 2.000000e-01 : f32
      %18 = vector.broadcast %cst_15 : f32 to vector<512x64xf32>
      %19 = arith.mulf %18, %15 : vector<512x64xf32>
      %20 = arith.select %17, %15, %19 : vector<512x64xi1>, vector<512x64xf32>
      %c0_16 = arith.constant 0 : index
      %c0_17 = arith.constant 0 : index
      %21 = vector.load %arg5[%c0_16, %c0_17] : memref<512x64xf32, #tpu.memory_space<vmem>>, vector<512x64xf32>
      tpu.vector_store %arg5[%c0_16, %c0_17], %20 {strides = array<i32>} : memref<512x64xf32, #tpu.memory_space<vmem>>, vector<512x64xf32>,
    } else {
    }
    return
  }
  func.func @transform_0(%arg0: i32, %arg1: i32) -> (i32, i32) {
    %c0_i32 = arith.constant 0 : i32
    return %arg0, %arg1 : i32, i32
  }
  func.func @transform_1(%arg0: i32, %arg1: i32) -> (i32, i32) {
    %c0_i32 = arith.constant 0 : i32
    %c0_i32_0 = arith.constant 0 : i32
    return %arg1, %c0_i32 : i32, i32
  }
  func.func @transform_2(%arg0: i32, %arg1: i32) -> (i32, i32) {
    %c0_i32 = arith.constant 0 : i32
    %c0_i32_0 = arith.constant 0 : i32
    %c0_i32_1 = arith.constant 0 : i32
    return %c0_i32, %c0_i32_0 : i32, i32
  }
  func.func @transform_3(%arg0: i32, %arg1: i32) -> (i32, i32) {
    %c0_i32 = arith.constant 0 : i32
    %c0_i32_0 = arith.constant 0 : i32
    return %arg0, %c0_i32 : i32, i32
  }
}

module attributes {stable_mosaic.version = 11 : i64} {
  func.func @_conv_mm_kernel(%arg0: i32, %arg1: i32, %arg2: memref<128x1024xbf16, #tpu.memory_space<vmem>>, %arg3: memref<1024x128xbf16, #tpu.memory_space<vmem>>, %arg4: memref<1x128xf32, #tpu.memory_space<vmem>>, %arg5: memref<128x128xf32, #tpu.memory_space<vmem>>, %arg6: memref<128x128xf32, #tpu.memory_space<vmem>>) attributes {dimension_semantics = [#tpu.dimension_semantics<parallel>, #tpu.dimension_semantics<arbitrary>], iteration_bounds = array<i64: 1, 1>, scalar_prefetch = 0 : i64, scratch_operands = 1 : i64, tpu.core_type = #tpu.core_type<tc>, window_params = [{transform_indices = @transform_0, window_bounds = array<i64: 128, 1024>}, {transform_indices = @transform_1, window_bounds = array<i64: 1024, 128>}, {pipeline_mode = #tpu.pipeline_mode<synchronous>, transform_indices = @transform_2, window_bounds = array<i64: 1, 128>}, {transform_indices = @transform_3, window_bounds = array<i64: 128, 128>}]} {
    %c0_i32 = arith.constant 0 : i32
    %0 = arith.cmpi eq, %arg1, %c0_i32 : i32
    %1 = arith.extui %0 : i1 to i32
    %c0_i32_0 = arith.constant 0 : i32
    %2 = arith.cmpi ne, %1, %c0_i32_0 : i32
    scf.if %2 {
      %cst_10 = arith.constant 0.000000e+00 : f32
      %12 = vector.broadcast %cst_10 : f32 to vector<128x128xf32>
      %c0_11 = arith.constant 0 : index
      %c0_12 = arith.constant 0 : index
      %13 = vector.load %arg6[%c0_11, %c0_12] : memref<128x128xf32, #tpu.memory_space<vmem>>, vector<128x128xf32>
      tpu.vector_store %arg6[%c0_11, %c0_12], %12 {strides = array<i32>} : memref<128x128xf32, #tpu.memory_space<vmem>>, vector<128x128xf32>,
    } else {
    }
    %c0 = arith.constant 0 : index
    %c0_1 = arith.constant 0 : index
    %3 = vector.load %arg6[%c0, %c0_1] : memref<128x128xf32, #tpu.memory_space<vmem>>, vector<128x128xf32>
    %c0_2 = arith.constant 0 : index
    %c0_3 = arith.constant 0 : index
    %4 = vector.load %arg2[%c0_2, %c0_3] : memref<128x1024xbf16, #tpu.memory_space<vmem>>, vector<128x1024xbf16>
    %c0_4 = arith.constant 0 : index
    %c0_5 = arith.constant 0 : index
    %5 = vector.load %arg3[%c0_4, %c0_5] : memref<1024x128xbf16, #tpu.memory_space<vmem>>, vector<1024x128xbf16>
    %cst = arith.constant dense<0.000000e+00> : vector<128x128xf32>
    %6 = tpu.matmul %4, %5, %cst {dimension_numbers = #tpu.dot_dimension_numbers<[1], [0], [0], [1], [0, 0, 1, 1], [], []>} : vector<128x1024xbf16>, vector<1024x128xbf16>, vector<128x128xf32> -> vector<128x128xf32>
    %7 = arith.addf %3, %6 : vector<128x128xf32>
    %c0_6 = arith.constant 0 : index
    %c0_7 = arith.constant 0 : index
    %8 = vector.load %arg6[%c0_6, %c0_7] : memref<128x128xf32, #tpu.memory_space<vmem>>, vector<128x128xf32>
    tpu.vector_store %arg6[%c0_6, %c0_7], %7 {strides = array<i32>} : memref<128x128xf32, #tpu.memory_space<vmem>>, vector<128x128xf32>,
    %c0_i32_8 = arith.constant 0 : i32
    %9 = arith.cmpi eq, %arg1, %c0_i32_8 : i32
    %10 = arith.extui %9 : i1 to i32
    %c0_i32_9 = arith.constant 0 : i32
    %11 = arith.cmpi ne, %10, %c0_i32_9 : i32
    scf.if %11 {
      %c0_10 = arith.constant 0 : index
      %c0_11 = arith.constant 0 : index
      %12 = vector.load %arg6[%c0_10, %c0_11] : memref<128x128xf32, #tpu.memory_space<vmem>>, vector<128x128xf32>
      %c0_12 = arith.constant 0 : index
      %c0_13 = arith.constant 0 : index
      %13 = vector.load %arg4[%c0_12, %c0_13] : memref<1x128xf32, #tpu.memory_space<vmem>>, vector<1x128xf32>
      %14 = vector.broadcast %13 : vector<1x128xf32> to vector<128x128xf32>
      %15 = arith.addf %12, %14 : vector<128x128xf32>
      %c0_14 = arith.constant 0 : index
      %c0_15 = arith.constant 0 : index
      %16 = vector.load %arg5[%c0_14, %c0_15] : memref<128x128xf32, #tpu.memory_space<vmem>>, vector<128x128xf32>
      tpu.vector_store %arg5[%c0_14, %c0_15], %15 {strides = array<i32>} : memref<128x128xf32, #tpu.memory_space<vmem>>, vector<128x128xf32>,
    } else {
    }
    return
  }
  func.func @transform_0(%arg0: i32, %arg1: i32) -> (i32, i32) {
    %c0_i32 = arith.constant 0 : i32
    return %arg0, %arg1 : i32, i32
  }
  func.func @transform_1(%arg0: i32, %arg1: i32) -> (i32, i32) {
    %c0_i32 = arith.constant 0 : i32
    %c0_i32_0 = arith.constant 0 : i32
    return %arg1, %c0_i32 : i32, i32
  }
  func.func @transform_2(%arg0: i32, %arg1: i32) -> (i32, i32) {
    %c0_i32 = arith.constant 0 : i32
    %c0_i32_0 = arith.constant 0 : i32
    %c0_i32_1 = arith.constant 0 : i32
    return %c0_i32, %c0_i32_0 : i32, i32
  }
  func.func @transform_3(%arg0: i32, %arg1: i32) -> (i32, i32) {
    %c0_i32 = arith.constant 0 : i32
    %c0_i32_0 = arith.constant 0 : i32
    return %arg0, %c0_i32 : i32, i32
  }
}

module attributes {stable_mosaic.version = 11 : i64} {
  func.func @_in_lrelu_kernel(%arg0: i32, %arg1: i32, %arg2: memref<1x64x128xf32, #tpu.memory_space<vmem>>, %arg3: memref<1x64x128xf32, #tpu.memory_space<vmem>>) attributes {dimension_semantics = [#tpu.dimension_semantics<parallel>, #tpu.dimension_semantics<parallel>], iteration_bounds = array<i64: 2, 1>, scalar_prefetch = 0 : i64, scratch_operands = 0 : i64, tpu.core_type = #tpu.core_type<tc>, window_params = [{transform_indices = @transform_0, window_bounds = array<i64: 1, 64, 128>}, {transform_indices = @transform_1, window_bounds = array<i64: 1, 64, 128>}]} {
    %c0 = arith.constant 0 : index
    %c0_0 = arith.constant 0 : index
    %c0_1 = arith.constant 0 : index
    %0 = vector.load %arg2[%c0, %c0_0, %c0_1] : memref<1x64x128xf32, #tpu.memory_space<vmem>>, vector<1x64x128xf32>
    %cst = arith.constant dense<0.000000e+00> : vector<1x128xf32>
    %1 = vector.multi_reduction <add>, %0, %cst [1] : vector<1x64x128xf32> to vector<1x128xf32>
    %2 = vector.shape_cast %1 : vector<1x128xf32> to vector<1x1x128xf32>
    %cst_2 = arith.constant 6.400000e+01 : f32
    %3 = vector.broadcast %cst_2 : f32 to vector<1x1x128xf32>
    %4 = arith.divf %2, %3 : vector<1x1x128xf32>
    %5 = vector.broadcast %4 : vector<1x1x128xf32> to vector<1x64x128xf32>
    %6 = arith.subf %0, %5 : vector<1x64x128xf32>
    %7 = arith.mulf %6, %6 : vector<1x64x128xf32>
    %cst_3 = arith.constant dense<0.000000e+00> : vector<1x128xf32>
    %8 = vector.multi_reduction <add>, %7, %cst_3 [1] : vector<1x64x128xf32> to vector<1x128xf32>
    %9 = vector.shape_cast %8 : vector<1x128xf32> to vector<1x1x128xf32>
    %cst_4 = arith.constant 6.400000e+01 : f32
    %10 = vector.broadcast %cst_4 : f32 to vector<1x1x128xf32>
    %11 = arith.divf %9, %10 : vector<1x1x128xf32>
    %cst_5 = arith.constant 9.99999974E-6 : f32
    %12 = vector.broadcast %cst_5 : f32 to vector<1x1x128xf32>
    %13 = arith.addf %11, %12 : vector<1x1x128xf32>
    %14 = math.rsqrt %13 : vector<1x1x128xf32>
    %15 = vector.broadcast %14 : vector<1x1x128xf32> to vector<1x64x128xf32>
    %16 = arith.mulf %6, %15 : vector<1x64x128xf32>
    %cst_6 = arith.constant 0.000000e+00 : f32
    %17 = vector.broadcast %cst_6 : f32 to vector<1x64x128xf32>
    %18 = arith.cmpf oge, %16, %17 : vector<1x64x128xf32>
    %cst_7 = arith.constant 2.000000e-01 : f32
    %19 = vector.broadcast %cst_7 : f32 to vector<1x64x128xf32>
    %20 = arith.mulf %19, %16 : vector<1x64x128xf32>
    %21 = arith.select %18, %16, %20 : vector<1x64x128xi1>, vector<1x64x128xf32>
    %c0_8 = arith.constant 0 : index
    %c0_9 = arith.constant 0 : index
    %c0_10 = arith.constant 0 : index
    %22 = vector.load %arg3[%c0_8, %c0_9, %c0_10] : memref<1x64x128xf32, #tpu.memory_space<vmem>>, vector<1x64x128xf32>
    tpu.vector_store %arg3[%c0_8, %c0_9, %c0_10], %21 {strides = array<i32>} : memref<1x64x128xf32, #tpu.memory_space<vmem>>, vector<1x64x128xf32>,
    return
  }
  func.func @transform_0(%arg0: i32, %arg1: i32) -> (i32, i32, i32) {
    %c0_i32 = arith.constant 0 : i32
    %c0_i32_0 = arith.constant 0 : i32
    return %arg0, %c0_i32, %arg1 : i32, i32, i32
  }
  func.func @transform_1(%arg0: i32, %arg1: i32) -> (i32, i32, i32) {
    %c0_i32 = arith.constant 0 : i32
    %c0_i32_0 = arith.constant 0 : i32
    return %arg0, %c0_i32, %arg1 : i32, i32, i32
  }
}

module attributes {stable_mosaic.version = 11 : i64} {
  func.func @_conv_mm_kernel(%arg0: i32, %arg1: i32, %arg2: memref<32x1024xbf16, #tpu.memory_space<vmem>>, %arg3: memref<1024x256xbf16, #tpu.memory_space<vmem>>, %arg4: memref<1x256xf32, #tpu.memory_space<vmem>>, %arg5: memref<32x256xf32, #tpu.memory_space<vmem>>, %arg6: memref<32x256xf32, #tpu.memory_space<vmem>>) attributes {dimension_semantics = [#tpu.dimension_semantics<parallel>, #tpu.dimension_semantics<arbitrary>], iteration_bounds = array<i64: 1, 2>, scalar_prefetch = 0 : i64, scratch_operands = 1 : i64, tpu.core_type = #tpu.core_type<tc>, window_params = [{transform_indices = @transform_0, window_bounds = array<i64: 32, 1024>}, {transform_indices = @transform_1, window_bounds = array<i64: 1024, 256>}, {pipeline_mode = #tpu.pipeline_mode<synchronous>, transform_indices = @transform_2, window_bounds = array<i64: 1, 256>}, {transform_indices = @transform_3, window_bounds = array<i64: 32, 256>}]} {
    %c0_i32 = arith.constant 0 : i32
    %0 = arith.cmpi eq, %arg1, %c0_i32 : i32
    %1 = arith.extui %0 : i1 to i32
    %c0_i32_0 = arith.constant 0 : i32
    %2 = arith.cmpi ne, %1, %c0_i32_0 : i32
    scf.if %2 {
      %cst_9 = arith.constant 0.000000e+00 : f32
      %12 = vector.broadcast %cst_9 : f32 to vector<32x256xf32>
      %c0_10 = arith.constant 0 : index
      %c0_11 = arith.constant 0 : index
      %13 = vector.load %arg6[%c0_10, %c0_11] : memref<32x256xf32, #tpu.memory_space<vmem>>, vector<32x256xf32>
      tpu.vector_store %arg6[%c0_10, %c0_11], %12 {strides = array<i32>} : memref<32x256xf32, #tpu.memory_space<vmem>>, vector<32x256xf32>,
    } else {
    }
    %c0 = arith.constant 0 : index
    %c0_1 = arith.constant 0 : index
    %3 = vector.load %arg6[%c0, %c0_1] : memref<32x256xf32, #tpu.memory_space<vmem>>, vector<32x256xf32>
    %c0_2 = arith.constant 0 : index
    %c0_3 = arith.constant 0 : index
    %4 = vector.load %arg2[%c0_2, %c0_3] : memref<32x1024xbf16, #tpu.memory_space<vmem>>, vector<32x1024xbf16>
    %c0_4 = arith.constant 0 : index
    %c0_5 = arith.constant 0 : index
    %5 = vector.load %arg3[%c0_4, %c0_5] : memref<1024x256xbf16, #tpu.memory_space<vmem>>, vector<1024x256xbf16>
    %cst = arith.constant dense<0.000000e+00> : vector<32x256xf32>
    %6 = tpu.matmul %4, %5, %cst {dimension_numbers = #tpu.dot_dimension_numbers<[1], [0], [0], [1], [0, 0, 1, 1], [], []>} : vector<32x1024xbf16>, vector<1024x256xbf16>, vector<32x256xf32> -> vector<32x256xf32>
    %7 = arith.addf %3, %6 : vector<32x256xf32>
    %c0_6 = arith.constant 0 : index
    %c0_7 = arith.constant 0 : index
    %8 = vector.load %arg6[%c0_6, %c0_7] : memref<32x256xf32, #tpu.memory_space<vmem>>, vector<32x256xf32>
    tpu.vector_store %arg6[%c0_6, %c0_7], %7 {strides = array<i32>} : memref<32x256xf32, #tpu.memory_space<vmem>>, vector<32x256xf32>,
    %c1_i32 = arith.constant 1 : i32
    %9 = arith.cmpi eq, %arg1, %c1_i32 : i32
    %10 = arith.extui %9 : i1 to i32
    %c0_i32_8 = arith.constant 0 : i32
    %11 = arith.cmpi ne, %10, %c0_i32_8 : i32
    scf.if %11 {
      %c0_9 = arith.constant 0 : index
      %c0_10 = arith.constant 0 : index
      %12 = vector.load %arg6[%c0_9, %c0_10] : memref<32x256xf32, #tpu.memory_space<vmem>>, vector<32x256xf32>
      %c0_11 = arith.constant 0 : index
      %c0_12 = arith.constant 0 : index
      %13 = vector.load %arg4[%c0_11, %c0_12] : memref<1x256xf32, #tpu.memory_space<vmem>>, vector<1x256xf32>
      %14 = vector.broadcast %13 : vector<1x256xf32> to vector<32x256xf32>
      %15 = arith.addf %12, %14 : vector<32x256xf32>
      %c0_13 = arith.constant 0 : index
      %c0_14 = arith.constant 0 : index
      %16 = vector.load %arg5[%c0_13, %c0_14] : memref<32x256xf32, #tpu.memory_space<vmem>>, vector<32x256xf32>
      tpu.vector_store %arg5[%c0_13, %c0_14], %15 {strides = array<i32>} : memref<32x256xf32, #tpu.memory_space<vmem>>, vector<32x256xf32>,
    } else {
    }
    return
  }
  func.func @transform_0(%arg0: i32, %arg1: i32) -> (i32, i32) {
    %c0_i32 = arith.constant 0 : i32
    return %arg0, %arg1 : i32, i32
  }
  func.func @transform_1(%arg0: i32, %arg1: i32) -> (i32, i32) {
    %c0_i32 = arith.constant 0 : i32
    %c0_i32_0 = arith.constant 0 : i32
    return %arg1, %c0_i32 : i32, i32
  }
  func.func @transform_2(%arg0: i32, %arg1: i32) -> (i32, i32) {
    %c0_i32 = arith.constant 0 : i32
    %c0_i32_0 = arith.constant 0 : i32
    %c0_i32_1 = arith.constant 0 : i32
    return %c0_i32, %c0_i32_0 : i32, i32
  }
  func.func @transform_3(%arg0: i32, %arg1: i32) -> (i32, i32) {
    %c0_i32 = arith.constant 0 : i32
    %c0_i32_0 = arith.constant 0 : i32
    return %arg0, %c0_i32 : i32, i32
  }
}

module attributes {stable_mosaic.version = 11 : i64} {
  func.func @_in_lrelu_kernel(%arg0: i32, %arg1: i32, %arg2: memref<1x16x128xf32, #tpu.memory_space<vmem>>, %arg3: memref<1x16x128xf32, #tpu.memory_space<vmem>>) attributes {dimension_semantics = [#tpu.dimension_semantics<parallel>, #tpu.dimension_semantics<parallel>], iteration_bounds = array<i64: 2, 2>, scalar_prefetch = 0 : i64, scratch_operands = 0 : i64, tpu.core_type = #tpu.core_type<tc>, window_params = [{transform_indices = @transform_0, window_bounds = array<i64: 1, 16, 128>}, {transform_indices = @transform_1, window_bounds = array<i64: 1, 16, 128>}]} {
    %c0 = arith.constant 0 : index
    %c0_0 = arith.constant 0 : index
    %c0_1 = arith.constant 0 : index
    %0 = vector.load %arg2[%c0, %c0_0, %c0_1] : memref<1x16x128xf32, #tpu.memory_space<vmem>>, vector<1x16x128xf32>
    %cst = arith.constant dense<0.000000e+00> : vector<1x128xf32>
    %1 = vector.multi_reduction <add>, %0, %cst [1] : vector<1x16x128xf32> to vector<1x128xf32>
    %2 = vector.shape_cast %1 : vector<1x128xf32> to vector<1x1x128xf32>
    %cst_2 = arith.constant 1.600000e+01 : f32
    %3 = vector.broadcast %cst_2 : f32 to vector<1x1x128xf32>
    %4 = arith.divf %2, %3 : vector<1x1x128xf32>
    %5 = vector.broadcast %4 : vector<1x1x128xf32> to vector<1x16x128xf32>
    %6 = arith.subf %0, %5 : vector<1x16x128xf32>
    %7 = arith.mulf %6, %6 : vector<1x16x128xf32>
    %cst_3 = arith.constant dense<0.000000e+00> : vector<1x128xf32>
    %8 = vector.multi_reduction <add>, %7, %cst_3 [1] : vector<1x16x128xf32> to vector<1x128xf32>
    %9 = vector.shape_cast %8 : vector<1x128xf32> to vector<1x1x128xf32>
    %cst_4 = arith.constant 1.600000e+01 : f32
    %10 = vector.broadcast %cst_4 : f32 to vector<1x1x128xf32>
    %11 = arith.divf %9, %10 : vector<1x1x128xf32>
    %cst_5 = arith.constant 9.99999974E-6 : f32
    %12 = vector.broadcast %cst_5 : f32 to vector<1x1x128xf32>
    %13 = arith.addf %11, %12 : vector<1x1x128xf32>
    %14 = math.rsqrt %13 : vector<1x1x128xf32>
    %15 = vector.broadcast %14 : vector<1x1x128xf32> to vector<1x16x128xf32>
    %16 = arith.mulf %6, %15 : vector<1x16x128xf32>
    %cst_6 = arith.constant 0.000000e+00 : f32
    %17 = vector.broadcast %cst_6 : f32 to vector<1x16x128xf32>
    %18 = arith.cmpf oge, %16, %17 : vector<1x16x128xf32>
    %cst_7 = arith.constant 2.000000e-01 : f32
    %19 = vector.broadcast %cst_7 : f32 to vector<1x16x128xf32>
    %20 = arith.mulf %19, %16 : vector<1x16x128xf32>
    %21 = arith.select %18, %16, %20 : vector<1x16x128xi1>, vector<1x16x128xf32>
    %c0_8 = arith.constant 0 : index
    %c0_9 = arith.constant 0 : index
    %c0_10 = arith.constant 0 : index
    %22 = vector.load %arg3[%c0_8, %c0_9, %c0_10] : memref<1x16x128xf32, #tpu.memory_space<vmem>>, vector<1x16x128xf32>
    tpu.vector_store %arg3[%c0_8, %c0_9, %c0_10], %21 {strides = array<i32>} : memref<1x16x128xf32, #tpu.memory_space<vmem>>, vector<1x16x128xf32>,
    return
  }
  func.func @transform_0(%arg0: i32, %arg1: i32) -> (i32, i32, i32) {
    %c0_i32 = arith.constant 0 : i32
    %c0_i32_0 = arith.constant 0 : i32
    return %arg0, %c0_i32, %arg1 : i32, i32, i32
  }
  func.func @transform_1(%arg0: i32, %arg1: i32) -> (i32, i32, i32) {
    %c0_i32 = arith.constant 0 : i32
    %c0_i32_0 = arith.constant 0 : i32
    return %arg0, %c0_i32, %arg1 : i32, i32, i32
  }
}

module attributes {stable_mosaic.version = 11 : i64} {
  func.func @_in_lrelu_kernel(%arg0: i32, %arg1: i32, %arg2: memref<1x9x128xf32, #tpu.memory_space<vmem>>, %arg3: memref<1x9x128xf32, #tpu.memory_space<vmem>>) attributes {dimension_semantics = [#tpu.dimension_semantics<parallel>, #tpu.dimension_semantics<parallel>], iteration_bounds = array<i64: 2, 4>, scalar_prefetch = 0 : i64, scratch_operands = 0 : i64, tpu.core_type = #tpu.core_type<tc>, window_params = [{transform_indices = @transform_0, window_bounds = array<i64: 1, 9, 128>}, {transform_indices = @transform_1, window_bounds = array<i64: 1, 9, 128>}]} {
    %c0 = arith.constant 0 : index
    %c0_0 = arith.constant 0 : index
    %c0_1 = arith.constant 0 : index
    %0 = vector.load %arg2[%c0, %c0_0, %c0_1] : memref<1x9x128xf32, #tpu.memory_space<vmem>>, vector<1x9x128xf32>
    %cst = arith.constant dense<0.000000e+00> : vector<1x128xf32>
    %1 = vector.multi_reduction <add>, %0, %cst [1] : vector<1x9x128xf32> to vector<1x128xf32>
    %2 = vector.shape_cast %1 : vector<1x128xf32> to vector<1x1x128xf32>
    %cst_2 = arith.constant 9.000000e+00 : f32
    %3 = vector.broadcast %cst_2 : f32 to vector<1x1x128xf32>
    %4 = arith.divf %2, %3 : vector<1x1x128xf32>
    %5 = vector.broadcast %4 : vector<1x1x128xf32> to vector<1x9x128xf32>
    %6 = arith.subf %0, %5 : vector<1x9x128xf32>
    %7 = arith.mulf %6, %6 : vector<1x9x128xf32>
    %cst_3 = arith.constant dense<0.000000e+00> : vector<1x128xf32>
    %8 = vector.multi_reduction <add>, %7, %cst_3 [1] : vector<1x9x128xf32> to vector<1x128xf32>
    %9 = vector.shape_cast %8 : vector<1x128xf32> to vector<1x1x128xf32>
    %cst_4 = arith.constant 9.000000e+00 : f32
    %10 = vector.broadcast %cst_4 : f32 to vector<1x1x128xf32>
    %11 = arith.divf %9, %10 : vector<1x1x128xf32>
    %cst_5 = arith.constant 9.99999974E-6 : f32
    %12 = vector.broadcast %cst_5 : f32 to vector<1x1x128xf32>
    %13 = arith.addf %11, %12 : vector<1x1x128xf32>
    %14 = math.rsqrt %13 : vector<1x1x128xf32>
    %15 = vector.broadcast %14 : vector<1x1x128xf32> to vector<1x9x128xf32>
    %16 = arith.mulf %6, %15 : vector<1x9x128xf32>
    %cst_6 = arith.constant 0.000000e+00 : f32
    %17 = vector.broadcast %cst_6 : f32 to vector<1x9x128xf32>
    %18 = arith.cmpf oge, %16, %17 : vector<1x9x128xf32>
    %cst_7 = arith.constant 2.000000e-01 : f32
    %19 = vector.broadcast %cst_7 : f32 to vector<1x9x128xf32>
    %20 = arith.mulf %19, %16 : vector<1x9x128xf32>
    %21 = arith.select %18, %16, %20 : vector<1x9x128xi1>, vector<1x9x128xf32>
    %c0_8 = arith.constant 0 : index
    %c0_9 = arith.constant 0 : index
    %c0_10 = arith.constant 0 : index
    %22 = vector.load %arg3[%c0_8, %c0_9, %c0_10] : memref<1x9x128xf32, #tpu.memory_space<vmem>>, vector<1x9x128xf32>
    tpu.vector_store %arg3[%c0_8, %c0_9, %c0_10], %21 {strides = array<i32>} : memref<1x9x128xf32, #tpu.memory_space<vmem>>, vector<1x9x128xf32>,
    return
  }
  func.func @transform_0(%arg0: i32, %arg1: i32) -> (i32, i32, i32) {
    %c0_i32 = arith.constant 0 : i32
    %c0_i32_0 = arith.constant 0 : i32
    return %arg0, %c0_i32, %arg1 : i32, i32, i32
  }
  func.func @transform_1(%arg0: i32, %arg1: i32) -> (i32, i32, i32) {
    %c0_i32 = arith.constant 0 : i32
    %c0_i32_0 = arith.constant 0 : i32
    return %arg0, %c0_i32, %arg1 : i32, i32, i32
  }
}

module attributes {stable_mosaic.version = 11 : i64} {
  func.func @_conv_mm_kernel(%arg0: i32, %arg1: i32, %arg2: memref<24x1024xbf16, #tpu.memory_space<vmem>>, %arg3: memref<1024x512xbf16, #tpu.memory_space<vmem>>, %arg4: memref<1x512xf32, #tpu.memory_space<vmem>>, %arg5: memref<24x512xf32, #tpu.memory_space<vmem>>, %arg6: memref<24x512xf32, #tpu.memory_space<vmem>>) attributes {dimension_semantics = [#tpu.dimension_semantics<parallel>, #tpu.dimension_semantics<arbitrary>], iteration_bounds = array<i64: 1, 4>, scalar_prefetch = 0 : i64, scratch_operands = 1 : i64, tpu.core_type = #tpu.core_type<tc>, window_params = [{transform_indices = @transform_0, window_bounds = array<i64: 24, 1024>}, {transform_indices = @transform_1, window_bounds = array<i64: 1024, 512>}, {pipeline_mode = #tpu.pipeline_mode<synchronous>, transform_indices = @transform_2, window_bounds = array<i64: 1, 512>}, {transform_indices = @transform_3, window_bounds = array<i64: 24, 512>}]} {
    %c0_i32 = arith.constant 0 : i32
    %0 = arith.cmpi eq, %arg1, %c0_i32 : i32
    %1 = arith.extui %0 : i1 to i32
    %c0_i32_0 = arith.constant 0 : i32
    %2 = arith.cmpi ne, %1, %c0_i32_0 : i32
    scf.if %2 {
      %cst_9 = arith.constant 0.000000e+00 : f32
      %12 = vector.broadcast %cst_9 : f32 to vector<24x512xf32>
      %c0_10 = arith.constant 0 : index
      %c0_11 = arith.constant 0 : index
      %13 = vector.load %arg6[%c0_10, %c0_11] : memref<24x512xf32, #tpu.memory_space<vmem>>, vector<24x512xf32>
      tpu.vector_store %arg6[%c0_10, %c0_11], %12 {strides = array<i32>} : memref<24x512xf32, #tpu.memory_space<vmem>>, vector<24x512xf32>,
    } else {
    }
    %c0 = arith.constant 0 : index
    %c0_1 = arith.constant 0 : index
    %3 = vector.load %arg6[%c0, %c0_1] : memref<24x512xf32, #tpu.memory_space<vmem>>, vector<24x512xf32>
    %c0_2 = arith.constant 0 : index
    %c0_3 = arith.constant 0 : index
    %4 = vector.load %arg2[%c0_2, %c0_3] : memref<24x1024xbf16, #tpu.memory_space<vmem>>, vector<24x1024xbf16>
    %c0_4 = arith.constant 0 : index
    %c0_5 = arith.constant 0 : index
    %5 = vector.load %arg3[%c0_4, %c0_5] : memref<1024x512xbf16, #tpu.memory_space<vmem>>, vector<1024x512xbf16>
    %cst = arith.constant dense<0.000000e+00> : vector<24x512xf32>
    %6 = tpu.matmul %4, %5, %cst {dimension_numbers = #tpu.dot_dimension_numbers<[1], [0], [0], [1], [0, 0, 1, 1], [], []>} : vector<24x1024xbf16>, vector<1024x512xbf16>, vector<24x512xf32> -> vector<24x512xf32>
    %7 = arith.addf %3, %6 : vector<24x512xf32>
    %c0_6 = arith.constant 0 : index
    %c0_7 = arith.constant 0 : index
    %8 = vector.load %arg6[%c0_6, %c0_7] : memref<24x512xf32, #tpu.memory_space<vmem>>, vector<24x512xf32>
    tpu.vector_store %arg6[%c0_6, %c0_7], %7 {strides = array<i32>} : memref<24x512xf32, #tpu.memory_space<vmem>>, vector<24x512xf32>,
    %c3_i32 = arith.constant 3 : i32
    %9 = arith.cmpi eq, %arg1, %c3_i32 : i32
    %10 = arith.extui %9 : i1 to i32
    %c0_i32_8 = arith.constant 0 : i32
    %11 = arith.cmpi ne, %10, %c0_i32_8 : i32
    scf.if %11 {
      %c0_9 = arith.constant 0 : index
      %c0_10 = arith.constant 0 : index
      %12 = vector.load %arg6[%c0_9, %c0_10] : memref<24x512xf32, #tpu.memory_space<vmem>>, vector<24x512xf32>
      %c0_11 = arith.constant 0 : index
      %c0_12 = arith.constant 0 : index
      %13 = vector.load %arg4[%c0_11, %c0_12] : memref<1x512xf32, #tpu.memory_space<vmem>>, vector<1x512xf32>
      %14 = vector.broadcast %13 : vector<1x512xf32> to vector<24x512xf32>
      %15 = arith.addf %12, %14 : vector<24x512xf32>
      %c0_13 = arith.constant 0 : index
      %c0_14 = arith.constant 0 : index
      %16 = vector.load %arg5[%c0_13, %c0_14] : memref<24x512xf32, #tpu.memory_space<vmem>>, vector<24x512xf32>
      tpu.vector_store %arg5[%c0_13, %c0_14], %15 {strides = array<i32>} : memref<24x512xf32, #tpu.memory_space<vmem>>, vector<24x512xf32>,
    } else {
    }
    return
  }
  func.func @transform_0(%arg0: i32, %arg1: i32) -> (i32, i32) {
    %c0_i32 = arith.constant 0 : i32
    return %arg0, %arg1 : i32, i32
  }
  func.func @transform_1(%arg0: i32, %arg1: i32) -> (i32, i32) {
    %c0_i32 = arith.constant 0 : i32
    %c0_i32_0 = arith.constant 0 : i32
    return %arg1, %c0_i32 : i32, i32
  }
  func.func @transform_2(%arg0: i32, %arg1: i32) -> (i32, i32) {
    %c0_i32 = arith.constant 0 : i32
    %c0_i32_0 = arith.constant 0 : i32
    %c0_i32_1 = arith.constant 0 : i32
    return %c0_i32, %c0_i32_0 : i32, i32
  }
  func.func @transform_3(%arg0: i32, %arg1: i32) -> (i32, i32) {
    %c0_i32 = arith.constant 0 : i32
    %c0_i32_0 = arith.constant 0 : i32
    return %arg0, %c0_i32 : i32, i32
  }
}

module attributes {stable_mosaic.version = 11 : i64} {
  func.func @_conv_mm_kernel(%arg0: i32, %arg1: i32, %arg2: memref<8x1024xbf16, #tpu.memory_space<vmem>>, %arg3: memref<1024x128xbf16, #tpu.memory_space<vmem>>, %arg4: memref<1x128xf32, #tpu.memory_space<vmem>>, %arg5: memref<8x128xf32, #tpu.memory_space<vmem>>, %arg6: memref<8x128xf32, #tpu.memory_space<vmem>>) attributes {dimension_semantics = [#tpu.dimension_semantics<parallel>, #tpu.dimension_semantics<arbitrary>], iteration_bounds = array<i64: 1, 8>, scalar_prefetch = 0 : i64, scratch_operands = 1 : i64, tpu.core_type = #tpu.core_type<tc>, window_params = [{transform_indices = @transform_0, window_bounds = array<i64: 8, 1024>}, {transform_indices = @transform_1, window_bounds = array<i64: 1024, 128>}, {pipeline_mode = #tpu.pipeline_mode<synchronous>, transform_indices = @transform_2, window_bounds = array<i64: 1, 128>}, {transform_indices = @transform_3, window_bounds = array<i64: 8, 128>}]} {
    %c0_i32 = arith.constant 0 : i32
    %0 = arith.cmpi eq, %arg1, %c0_i32 : i32
    %1 = arith.extui %0 : i1 to i32
    %c0_i32_0 = arith.constant 0 : i32
    %2 = arith.cmpi ne, %1, %c0_i32_0 : i32
    scf.if %2 {
      %cst_9 = arith.constant 0.000000e+00 : f32
      %12 = vector.broadcast %cst_9 : f32 to vector<8x128xf32>
      %c0_10 = arith.constant 0 : index
      %c0_11 = arith.constant 0 : index
      %13 = vector.load %arg6[%c0_10, %c0_11] : memref<8x128xf32, #tpu.memory_space<vmem>>, vector<8x128xf32>
      tpu.vector_store %arg6[%c0_10, %c0_11], %12 {strides = array<i32>} : memref<8x128xf32, #tpu.memory_space<vmem>>, vector<8x128xf32>,
    } else {
    }
    %c0 = arith.constant 0 : index
    %c0_1 = arith.constant 0 : index
    %3 = vector.load %arg6[%c0, %c0_1] : memref<8x128xf32, #tpu.memory_space<vmem>>, vector<8x128xf32>
    %c0_2 = arith.constant 0 : index
    %c0_3 = arith.constant 0 : index
    %4 = vector.load %arg2[%c0_2, %c0_3] : memref<8x1024xbf16, #tpu.memory_space<vmem>>, vector<8x1024xbf16>
    %c0_4 = arith.constant 0 : index
    %c0_5 = arith.constant 0 : index
    %5 = vector.load %arg3[%c0_4, %c0_5] : memref<1024x128xbf16, #tpu.memory_space<vmem>>, vector<1024x128xbf16>
    %cst = arith.constant dense<0.000000e+00> : vector<8x128xf32>
    %6 = tpu.matmul %4, %5, %cst {dimension_numbers = #tpu.dot_dimension_numbers<[1], [0], [0], [1], [0, 0, 1, 1], [], []>} : vector<8x1024xbf16>, vector<1024x128xbf16>, vector<8x128xf32> -> vector<8x128xf32>
    %7 = arith.addf %3, %6 : vector<8x128xf32>
    %c0_6 = arith.constant 0 : index
    %c0_7 = arith.constant 0 : index
    %8 = vector.load %arg6[%c0_6, %c0_7] : memref<8x128xf32, #tpu.memory_space<vmem>>, vector<8x128xf32>
    tpu.vector_store %arg6[%c0_6, %c0_7], %7 {strides = array<i32>} : memref<8x128xf32, #tpu.memory_space<vmem>>, vector<8x128xf32>,
    %c7_i32 = arith.constant 7 : i32
    %9 = arith.cmpi eq, %arg1, %c7_i32 : i32
    %10 = arith.extui %9 : i1 to i32
    %c0_i32_8 = arith.constant 0 : i32
    %11 = arith.cmpi ne, %10, %c0_i32_8 : i32
    scf.if %11 {
      %c0_9 = arith.constant 0 : index
      %c0_10 = arith.constant 0 : index
      %12 = vector.load %arg6[%c0_9, %c0_10] : memref<8x128xf32, #tpu.memory_space<vmem>>, vector<8x128xf32>
      %c0_11 = arith.constant 0 : index
      %c0_12 = arith.constant 0 : index
      %13 = vector.load %arg4[%c0_11, %c0_12] : memref<1x128xf32, #tpu.memory_space<vmem>>, vector<1x128xf32>
      %14 = vector.broadcast %13 : vector<1x128xf32> to vector<8x128xf32>
      %15 = arith.addf %12, %14 : vector<8x128xf32>
      %c0_13 = arith.constant 0 : index
      %c0_14 = arith.constant 0 : index
      %16 = vector.load %arg5[%c0_13, %c0_14] : memref<8x128xf32, #tpu.memory_space<vmem>>, vector<8x128xf32>
      tpu.vector_store %arg5[%c0_13, %c0_14], %15 {strides = array<i32>} : memref<8x128xf32, #tpu.memory_space<vmem>>, vector<8x128xf32>,
    } else {
    }
    return
  }
  func.func @transform_0(%arg0: i32, %arg1: i32) -> (i32, i32) {
    %c0_i32 = arith.constant 0 : i32
    return %arg0, %arg1 : i32, i32
  }
  func.func @transform_1(%arg0: i32, %arg1: i32) -> (i32, i32) {
    %c0_i32 = arith.constant 0 : i32
    %c0_i32_0 = arith.constant 0 : i32
    return %arg1, %c0_i32 : i32, i32
  }
  func.func @transform_2(%arg0: i32, %arg1: i32) -> (i32, i32) {
    %c0_i32 = arith.constant 0 : i32
    %c0_i32_0 = arith.constant 0 : i32
    %c0_i32_1 = arith.constant 0 : i32
    return %c0_i32, %c0_i32_0 : i32, i32
  }
  func.func @transform_3(%arg0: i32, %arg1: i32) -> (i32, i32) {
    %c0_i32 = arith.constant 0 : i32
    %c0_i32_0 = arith.constant 0 : i32
    return %arg0, %c0_i32 : i32, i32
  }
}

module attributes {stable_mosaic.version = 11 : i64} {
  func.func @_avgpool_kernel(%arg0: i32, %arg1: memref<1x4x128xf32, #tpu.memory_space<vmem>>, %arg2: memref<1x1x128xf32, #tpu.memory_space<vmem>>) attributes {dimension_semantics = [#tpu.dimension_semantics<parallel>], iteration_bounds = array<i64: 2>, scalar_prefetch = 0 : i64, scratch_operands = 0 : i64, tpu.core_type = #tpu.core_type<tc>, window_params = [{transform_indices = @transform_0, window_bounds = array<i64: 1, 4, 128>}, {transform_indices = @transform_1, window_bounds = array<i64: 1, 1, 128>}]} {
    %c0 = arith.constant 0 : index
    %c0_0 = arith.constant 0 : index
    %c0_1 = arith.constant 0 : index
    %0 = vector.load %arg1[%c0, %c0_0, %c0_1] : memref<1x4x128xf32, #tpu.memory_space<vmem>>, vector<1x4x128xf32>
    %cst = arith.constant dense<0.000000e+00> : vector<1x128xf32>
    %1 = vector.multi_reduction <add>, %0, %cst [1] : vector<1x4x128xf32> to vector<1x128xf32>
    %2 = vector.shape_cast %1 : vector<1x128xf32> to vector<1x1x128xf32>
    %cst_2 = arith.constant 4.000000e+00 : f32
    %3 = vector.broadcast %cst_2 : f32 to vector<1x1x128xf32>
    %4 = arith.divf %2, %3 : vector<1x1x128xf32>
    %c0_3 = arith.constant 0 : index
    %c0_4 = arith.constant 0 : index
    %c0_5 = arith.constant 0 : index
    %5 = vector.load %arg2[%c0_3, %c0_4, %c0_5] : memref<1x1x128xf32, #tpu.memory_space<vmem>>, vector<1x1x128xf32>
    tpu.vector_store %arg2[%c0_3, %c0_4, %c0_5], %4 {strides = array<i32>} : memref<1x1x128xf32, #tpu.memory_space<vmem>>, vector<1x1x128xf32>,
    return
  }
  func.func @transform_0(%arg0: i32) -> (i32, i32, i32) {
    %c0_i32 = arith.constant 0 : i32
    %c0_i32_0 = arith.constant 0 : i32
    %c0_i32_1 = arith.constant 0 : i32
    return %arg0, %c0_i32, %c0_i32_0 : i32, i32, i32
  }
  func.func @transform_1(%arg0: i32) -> (i32, i32, i32) {
    %c0_i32 = arith.constant 0 : i32
    %c0_i32_0 = arith.constant 0 : i32
    %c0_i32_1 = arith.constant 0 : i32
    return %arg0, %c0_i32, %c0_i32_0 : i32, i32, i32
  }
}

</mosaic_0001>

<llo_original>
// kernel: discriminator_forward.9
$region0: #{discriminator_forward.9}
  #allocation0 [shape = 'u32[]', space=smem, size = 0x4, offset = 0x4, fixed_abs, tag = 'smem constant byte address 0x4 - core index']
  #allocation1 [shape = 'u32[72,128]{1,0:T(1,128)}', space=vmem, size = 0x9000, scoped, tag = 'internal scratch']
  #allocation2 [shape = 'f32[512,64]{1,0:T(8,128)}', space=vmem, size = 0x40000, scoped, tag = 'scratch operand']
  %s0 = inlined_call_operand.vmem [shape: bf16[512,128], index: 0, kind: input, shape index: {}]
  %s1 = inlined_call_operand.vmem [shape: bf16[128,64], index: 1, kind: input, shape index: {}]
  %s2 = inlined_call_operand.hbm [shape: f32[1,64], index: 2, kind: input, shape index: {}]
  %s3 = inlined_call_operand.vmem [shape: f32[512,64], index: 3, kind: output, shape index: {}]
  %s4 = sld [smem:[#allocation0]]
  $region34: #{discriminator_forward.9} parent=0
    _
  %s6 = ssub.s32 1, %s4
  %s7 = scalar_select 0, %s6, %s4
  $region1: #{discriminator_forward.9} parent=0
    #allocation3 [shape = 'u8[512]{0}', space=vmem, size = 0x400, scoped, tag = 'input window, operand 2, single buffered']
    #allocation4 [shape = 's32[1]{0}', space=sflag, size = 0x4, scoped, tag = 'scoped memory for discriminator_forward.9']
    %8 = vsyncpa [#allocation4], 0
    // Predicated region
    $region2: #{discriminator_forward.9} parent=1 // pred_check
      _
    $region3: #{discriminator_forward.9} parent=1 // pred_check_branch
      %10 = sbr.rel (0) target = $region5
    $region4: #{discriminator_forward.9} parent=1 // pred_region
      _
    $region5: #{discriminator_forward.9} parent=1 // pred_fallthru
      _
    // Predicated region
    $region6: #{discriminator_forward.9} parent=1 // pred_check
      _
    $region7: #{discriminator_forward.9} parent=1 // pred_check_branch
      %12 = sbr.rel (0) target = $region9
    $region8: #{discriminator_forward.9} parent=1 // pred_region
      _
    $region9: #{discriminator_forward.9} parent=1 // pred_fallthru
      _
    // Predicated region
    $region10: #{discriminator_forward.9} parent=1 // pred_check
      _
    $region11: #{discriminator_forward.9} parent=1 // pred_check_branch
      %14 = sbr.rel (0) target = $region13
    $region12: #{discriminator_forward.9} parent=1 // pred_region
      %16 = vsyncadd [#allocation4], 0
      %s18 = sshll.u32 %s2, 4
      %s19 = int_to_ptr.hbm [resolvable:$true] %s18
      %s20 = sshll.u32 [#allocation3], 4
      %s21 = int_to_ptr.vmem [resolvable:$true] %s20
      %23 = dma.hbm_to_vmem [thread:$0]  %s19, 16, %s21, [#allocation4]
    $region13: #{discriminator_forward.9} parent=1 // pred_fallthru
      _
    // Predicated region
    $region14: #{discriminator_forward.9} parent=1 // pred_check
      _
    $region15: #{discriminator_forward.9} parent=1 // pred_check_branch
      %25 = sbr.rel (0) target = $region17
    $region16: #{discriminator_forward.9} parent=1 // pred_region
      %27 = dma.done [#allocation4], 16
    $region17: #{discriminator_forward.9} parent=1 // pred_fallthru
      _
    %p28 = scmp.eq.s32.totalorder 0, 0
    // Predicated region
    $region18: #{discriminator_forward.9} parent=1 // pred_check
      %p29 = pneg %p28
    $region19: #{discriminator_forward.9} parent=1 // pred_check_branch
      %31 = sbr.rel (%p29) target = $region21
    $region20: #{discriminator_forward.9} parent=1 // pred_region
      %vm32 = vcmask 523264
      %33 = vst.msk [vmem:[#allocation2] sm:$0xff] %vm32, 0.0
      %34 = vst.msk [vmem:[#allocation2 + $0x8] sm:$0xff] %vm32, 0.0
      %35 = vst.msk [vmem:[#allocation2 + $0x10] sm:$0xff] %vm32, 0.0
      %36 = vst.msk [vmem:[#allocation2 + $0x18] sm:$0xff] %vm32, 0.0
      %37 = vst.msk [vmem:[#allocation2 + $0x20] sm:$0xff] %vm32, 0.0
      %38 = vst.msk [vmem:[#allocation2 + $0x28] sm:$0xff] %vm32, 0.0
      %39 = vst.msk [vmem:[#allocation2 + $0x30] sm:$0xff] %vm32, 0.0
      %40 = vst.msk [vmem:[#allocation2 + $0x38] sm:$0xff] %vm32, 0.0
      %41 = vst.msk [vmem:[#allocation2 + $0x40] sm:$0xff] %vm32, 0.0
      %42 = vst.msk [vmem:[#allocation2 + $0x48] sm:$0xff] %vm32, 0.0
      %43 = vst.msk [vmem:[#allocation2 + $0x50] sm:$0xff] %vm32, 0.0
      %44 = vst.msk [vmem:[#allocation2 + $0x58] sm:$0xff] %vm32, 0.0
      %45 = vst.msk [vmem:[#allocation2 + $0x60] sm:$0xff] %vm32, 0.0
      %46 = vst.msk [vmem:[#allocation2 + $0x68] sm:$0xff] %vm32, 0.0
      %47 = vst.msk [vmem:[#allocation2 + $0x70] sm:$0xff] %vm32, 0.0
      %48 = vst.msk [vmem:[#allocation2 + $0x78] sm:$0xff] %vm32, 0.0
      %49 = vst.msk [vmem:[#allocation2 + $0x80] sm:$0xff] %vm32, 0.0
      %50 = vst.msk [vmem:[#allocation2 + $0x88] sm:$0xff] %vm32, 0.0
      %51 = vst.msk [vmem:[#allocation2 + $0x90] sm:$0xff] %vm32, 0.0
      %52 = vst.msk [vmem:[#allocation2 + $0x98] sm:$0xff] %vm32, 0.0
      %53 = vst.msk [vmem:[#allocation2 + $0xa0] sm:$0xff] %vm32, 0.0
      %54 = vst.msk [vmem:[#allocation2 + $0xa8] sm:$0xff] %vm32, 0.0
      %55 = vst.msk [vmem:[#allocation2 + $0xb0] sm:$0xff] %vm32, 0.0
      %56 = vst.msk [vmem:[#allocation2 + $0xb8] sm:$0xff] %vm32, 0.0
      %57 = vst.msk [vmem:[#allocation2 + $0xc0] sm:$0xff] %vm32, 0.0
      %58 = vst.msk [vmem:[#allocation2 + $0xc8] sm:$0xff] %vm32, 0.0
      %59 = vst.msk [vmem:[#allocation2 + $0xd0] sm:$0xff] %vm32, 0.0
      %60 = vst.msk [vmem:[#allocation2 + $0xd8] sm:$0xff] %vm32, 0.0
      %61 = vst.msk [vmem:[#allocation2 + $0xe0] sm:$0xff] %vm32, 0.0
      %62 = vst.msk [vmem:[#allocation2 + $0xe8] sm:$0xff] %vm32, 0.0
      %63 = vst.msk [vmem:[#allocation2 + $0xf0] sm:$0xff] %vm32, 0.0
      %64 = vst.msk [vmem:[#allocation2 + $0xf8] sm:$0xff] %vm32, 0.0
      %65 = vst.msk [vmem:[#allocation2 + $0x100] sm:$0xff] %vm32, 0.0
      %66 = vst.msk [vmem:[#allocation2 + $0x108] sm:$0xff] %vm32, 0.0
      %67 = vst.msk [vmem:[#allocation2 + $0x110] sm:$0xff] %vm32, 0.0
      %68 = vst.msk [vmem:[#allocation2 + $0x118] sm:$0xff] %vm32, 0.0
      %69 = vst.msk [vmem:[#allocation2 + $0x120] sm:$0xff] %vm32, 0.0
      %70 = vst.msk [vmem:[#allocation2 + $0x128] sm:$0xff] %vm32, 0.0
      %71 = vst.msk [vmem:[#allocation2 + $0x130] sm:$0xff] %vm32, 0.0
      %72 = vst.msk [vmem:[#allocation2 + $0x138] sm:$0xff] %vm32, 0.0
      %73 = vst.msk [vmem:[#allocation2 + $0x140] sm:$0xff] %vm32, 0.0
      %74 = vst.msk [vmem:[#allocation2 + $0x148] sm:$0xff] %vm32, 0.0
      %75 = vst.msk [vmem:[#allocation2 + $0x150] sm:$0xff] %vm32, 0.0
      %76 = vst.msk [vmem:[#allocation2 + $0x158] sm:$0xff] %vm32, 0.0
      %77 = vst.msk [vmem:[#allocation2 + $0x160] sm:$0xff] %vm32, 0.0
      %78 = vst.msk [vmem:[#allocation2 + $0x168] sm:$0xff] %vm32, 0.0
      %79 = vst.msk [vmem:[#allocation2 + $0x170] sm:$0xff] %vm32, 0.0
      %80 = vst.msk [vmem:[#allocation2 + $0x178] sm:$0xff] %vm32, 0.0
      %81 = vst.msk [vmem:[#allocation2 + $0x180] sm:$0xff] %vm32, 0.0
      %82 = vst.msk [vmem:[#allocation2 + $0x188] sm:$0xff] %vm32, 0.0
      %83 = vst.msk [vmem:[#allocation2 + $0x190] sm:$0xff] %vm32, 0.0
      %84 = vst.msk [vmem:[#allocation2 + $0x198] sm:$0xff] %vm32, 0.0
      %85 = vst.msk [vmem:[#allocation2 + $0x1a0] sm:$0xff] %vm32, 0.0
      %86 = vst.msk [vmem:[#allocation2 + $0x1a8] sm:$0xff] %vm32, 0.0
      %87 = vst.msk [vmem:[#allocation2 + $0x1b0] sm:$0xff] %vm32, 0.0
      %88 = vst.msk [vmem:[#allocation2 + $0x1b8] sm:$0xff] %vm32, 0.0
      %89 = vst.msk [vmem:[#allocation2 + $0x1c0] sm:$0xff] %vm32, 0.0
      %90 = vst.msk [vmem:[#allocation2 + $0x1c8] sm:$0xff] %vm32, 0.0
      %91 = vst.msk [vmem:[#allocation2 + $0x1d0] sm:$0xff] %vm32, 0.0
      %92 = vst.msk [vmem:[#allocation2 + $0x1d8] sm:$0xff] %vm32, 0.0
      %93 = vst.msk [vmem:[#allocation2 + $0x1e0] sm:$0xff] %vm32, 0.0
      %94 = vst.msk [vmem:[#allocation2 + $0x1e8] sm:$0xff] %vm32, 0.0
      %95 = vst.msk [vmem:[#allocation2 + $0x1f0] sm:$0xff] %vm32, 0.0
      %96 = vst.msk [vmem:[#allocation2 + $0x1f8] sm:$0xff] %vm32, 0.0
    $region21: #{discriminator_forward.9} parent=1 // pred_fallthru
      _
    %v97 = vld [vmem:[#allocation2] sm:$0xff]
    %v98 = vld [vmem:[#allocation2 + $0x8] sm:$0xff]
    %v99 = vld [vmem:[#allocation2 + $0x10] sm:$0xff]
    %v100 = vld [vmem:[#allocation2 + $0x18] sm:$0xff]
    %v101 = vld [vmem:[#allocation2 + $0x20] sm:$0xff]
    %v102 = vld [vmem:[#allocation2 + $0x28] sm:$0xff]
    %v103 = vld [vmem:[#allocation2 + $0x30] sm:$0xff]
    %v104 = vld [vmem:[#allocation2 + $0x38] sm:$0xff]
    %v105 = vld [vmem:[#allocation2 + $0x40] sm:$0xff]
    %v106 = vld [vmem:[#allocation2 + $0x48] sm:$0xff]
    %v107 = vld [vmem:[#allocation2 + $0x50] sm:$0xff]
    %v108 = vld [vmem:[#allocation2 + $0x58] sm:$0xff]
    %v109 = vld [vmem:[#allocation2 + $0x60] sm:$0xff]
    %v110 = vld [vmem:[#allocation2 + $0x68] sm:$0xff]
    %v111 = vld [vmem:[#allocation2 + $0x70] sm:$0xff]
    %v112 = vld [vmem:[#allocation2 + $0x78] sm:$0xff]
    %v113 = vld [vmem:[#allocation2 + $0x80] sm:$0xff]
    %v114 = vld [vmem:[#allocation2 + $0x88] sm:$0xff]
    %v115 = vld [vmem:[#allocation2 + $0x90] sm:$0xff]
    %v116 = vld [vmem:[#allocation2 + $0x98] sm:$0xff]
    %v117 = vld [vmem:[#allocation2 + $0xa0] sm:$0xff]
    %v118 = vld [vmem:[#allocation2 + $0xa8] sm:$0xff]
    %v119 = vld [vmem:[#allocation2 + $0xb0] sm:$0xff]
    %v120 = vld [vmem:[#allocation2 + $0xb8] sm:$0xff]
    %v121 = vld [vmem:[#allocation2 + $0xc0] sm:$0xff]
    %v122 = vld [vmem:[#allocation2 + $0xc8] sm:$0xff]
    %v123 = vld [vmem:[#allocation2 + $0xd0] sm:$0xff]
    %v124 = vld [vmem:[#allocation2 + $0xd8] sm:$0xff]
    %v125 = vld [vmem:[#allocation2 + $0xe0] sm:$0xff]
    %v126 = vld [vmem:[#allocation2 + $0xe8] sm:$0xff]
    %v127 = vld [vmem:[#allocation2 + $0xf0] sm:$0xff]
    %v128 = vld [vmem:[#allocation2 + $0xf8] sm:$0xff]
    %v129 = vld [vmem:[#allocation2 + $0x100] sm:$0xff]
    %v130 = vld [vmem:[#allocation2 + $0x108] sm:$0xff]
    %v131 = vld [vmem:[#allocation2 + $0x110] sm:$0xff]
    %v132 = vld [vmem:[#allocation2 + $0x118] sm:$0xff]
    %v133 = vld [vmem:[#allocation2 + $0x120] sm:$0xff]
    %v134 = vld [vmem:[#allocation2 + $0x128] sm:$0xff]
    %v135 = vld [vmem:[#allocation2 + $0x130] sm:$0xff]
    %v136 = vld [vmem:[#allocation2 + $0x138] sm:$0xff]
    %v137 = vld [vmem:[#allocation2 + $0x140] sm:$0xff]
    %v138 = vld [vmem:[#allocation2 + $0x148] sm:$0xff]
    %v139 = vld [vmem:[#allocation2 + $0x150] sm:$0xff]
    %v140 = vld [vmem:[#allocation2 + $0x158] sm:$0xff]
    %v141 = vld [vmem:[#allocation2 + $0x160] sm:$0xff]
    %v142 = vld [vmem:[#allocation2 + $0x168] sm:$0xff]
    %v143 = vld [vmem:[#allocation2 + $0x170] sm:$0xff]
    %v144 = vld [vmem:[#allocation2 + $0x178] sm:$0xff]
    %v145 = vld [vmem:[#allocation2 + $0x180] sm:$0xff]
    %v146 = vld [vmem:[#allocation2 + $0x188] sm:$0xff]
    %v147 = vld [vmem:[#allocation2 + $0x190] sm:$0xff]
    %v148 = vld [vmem:[#allocation2 + $0x198] sm:$0xff]
    %v149 = vld [vmem:[#allocation2 + $0x1a0] sm:$0xff]
    %v150 = vld [vmem:[#allocation2 + $0x1a8] sm:$0xff]
    %v151 = vld [vmem:[#allocation2 + $0x1b0] sm:$0xff]
    %v152 = vld [vmem:[#allocation2 + $0x1b8] sm:$0xff]
    %v153 = vld [vmem:[#allocation2 + $0x1c0] sm:$0xff]
    %v154 = vld [vmem:[#allocation2 + $0x1c8] sm:$0xff]
    %v155 = vld [vmem:[#allocation2 + $0x1d0] sm:$0xff]
    %v156 = vld [vmem:[#allocation2 + $0x1d8] sm:$0xff]
    %v157 = vld [vmem:[#allocation2 + $0x1e0] sm:$0xff]
    %v158 = vld [vmem:[#allocation2 + $0x1e8] sm:$0xff]
    %v159 = vld [vmem:[#allocation2 + $0x1f0] sm:$0xff]
    %v160 = vld [vmem:[#allocation2 + $0x1f8] sm:$0xff]
    %v161 = vld [vmem:[%s0] sm:$0xf]
    %v162 = vld [vmem:[%s0 + $0x4] sm:$0xf]
    %v163 = vld [vmem:[%s0 + $0x8] sm:$0xf]
    %v164 = vld [vmem:[%s0 + $0xc] sm:$0xf]
    %v165 = vld [vmem:[%s0 + $0x10] sm:$0xf]
    %v166 = vld [vmem:[%s0 + $0x14] sm:$0xf]
    %v167 = vld [vmem:[%s0 + $0x18] sm:$0xf]
    %v168 = vld [vmem:[%s0 + $0x1c] sm:$0xf]
    %v169 = vld [vmem:[%s0 + $0x20] sm:$0xf]
    %v170 = vld [vmem:[%s0 + $0x24] sm:$0xf]
    %v171 = vld [vmem:[%s0 + $0x28] sm:$0xf]
    %v172 = vld [vmem:[%s0 + $0x2c] sm:$0xf]
    %v173 = vld [vmem:[%s0 + $0x30] sm:$0xf]
    %v174 = vld [vmem:[%s0 + $0x34] sm:$0xf]
    %v175 = vld [vmem:[%s0 + $0x38] sm:$0xf]
    %v176 = vld [vmem:[%s0 + $0x3c] sm:$0xf]
    %v177 = vld [vmem:[%s0 + $0x40] sm:$0xf]
    %v178 = vld [vmem:[%s0 + $0x44] sm:$0xf]
    %v179 = vld [vmem:[%s0 + $0x48] sm:$0xf]
    %v180 = vld [vmem:[%s0 + $0x4c] sm:$0xf]
    %v181 = vld [vmem:[%s0 + $0x50] sm:$0xf]
    %v182 = vld [vmem:[%s0 + $0x54] sm:$0xf]
    %v183 = vld [vmem:[%s0 + $0x58] sm:$0xf]
    %v184 = vld [vmem:[%s0 + $0x5c] sm:$0xf]
    %v185 = vld [vmem:[%s0 + $0x60] sm:$0xf]
    %v186 = vld [vmem:[%s0 + $0x64] sm:$0xf]
    %v187 = vld [vmem:[%s0 + $0x68] sm:$0xf]
    %v188 = vld [vmem:[%s0 + $0x6c] sm:$0xf]
    %v189 = vld [vmem:[%s0 + $0x70] sm:$0xf]
    %v190 = vld [vmem:[%s0 + $0x74] sm:$0xf]
    %v191 = vld [vmem:[%s0 + $0x78] sm:$0xf]
    %v192 = vld [vmem:[%s0 + $0x7c] sm:$0xf]
    %v193 = vld [vmem:[%s0 + $0x80] sm:$0xf]
    %v194 = vld [vmem:[%s0 + $0x84] sm:$0xf]
    %v195 = vld [vmem:[%s0 + $0x88] sm:$0xf]
    %v196 = vld [vmem:[%s0 + $0x8c] sm:$0xf]
    %v197 = vld [vmem:[%s0 + $0x90] sm:$0xf]
    %v198 = vld [vmem:[%s0 + $0x94] sm:$0xf]
    %v199 = vld [vmem:[%s0 + $0x98] sm:$0xf]
    %v200 = vld [vmem:[%s0 + $0x9c] sm:$0xf]
    %v201 = vld [vmem:[%s0 + $0xa0] sm:$0xf]
    %v202 = vld [vmem:[%s0 + $0xa4] sm:$0xf]
    %v203 = vld [vmem:[%s0 + $0xa8] sm:$0xf]
    %v204 = vld [vmem:[%s0 + $0xac] sm:$0xf]
    %v205 = vld [vmem:[%s0 + $0xb0] sm:$0xf]
    %v206 = vld [vmem:[%s0 + $0xb4] sm:$0xf]
    %v207 = vld [vmem:[%s0 + $0xb8] sm:$0xf]
    %v208 = vld [vmem:[%s0 + $0xbc] sm:$0xf]
    %v209 = vld [vmem:[%s0 + $0xc0] sm:$0xf]
    %v210 = vld [vmem:[%s0 + $0xc4] sm:$0xf]
    %v211 = vld [vmem:[%s0 + $0xc8] sm:$0xf]
    %v212 = vld [vmem:[%s0 + $0xcc] sm:$0xf]
    %v213 = vld [vmem:[%s0 + $0xd0] sm:$0xf]
    %v214 = vld [vmem:[%s0 + $0xd4] sm:$0xf]
    %v215 = vld [vmem:[%s0 + $0xd8] sm:$0xf]
    %v216 = vld [vmem:[%s0 + $0xdc] sm:$0xf]
    %v217 = vld [vmem:[%s0 + $0xe0] sm:$0xf]
    %v218 = vld [vmem:[%s0 + $0xe4] sm:$0xf]
    %v219 = vld [vmem:[%s0 + $0xe8] sm:$0xf]
    %v220 = vld [vmem:[%s0 + $0xec] sm:$0xf]
    %v221 = vld [vmem:[%s0 + $0xf0] sm:$0xf]
    %v222 = vld [vmem:[%s0 + $0xf4] sm:$0xf]
    %v223 = vld [vmem:[%s0 + $0xf8] sm:$0xf]
    %v224 = vld [vmem:[%s0 + $0xfc] sm:$0xf]
    %v225 = vld [vmem:[%s1] sm:$0xf]
    %v226 = vld [vmem:[%s1 + $0x4] sm:$0xf]
    %v227 = vld [vmem:[%s1 + $0x8] sm:$0xf]
    %v228 = vld [vmem:[%s1 + $0xc] sm:$0xf]
    %v229 = vld [vmem:[%s1 + $0x10] sm:$0xf]
    %v230 = vld [vmem:[%s1 + $0x14] sm:$0xf]
    %v231 = vld [vmem:[%s1 + $0x18] sm:$0xf]
    %v232 = vld [vmem:[%s1 + $0x1c] sm:$0xf]
    %v233 = vld [vmem:[%s1 + $0x20] sm:$0xf]
    %v234 = vld [vmem:[%s1 + $0x24] sm:$0xf]
    %v235 = vld [vmem:[%s1 + $0x28] sm:$0xf]
    %v236 = vld [vmem:[%s1 + $0x2c] sm:$0xf]
    %v237 = vld [vmem:[%s1 + $0x30] sm:$0xf]
    %v238 = vld [vmem:[%s1 + $0x34] sm:$0xf]
    %v239 = vld [vmem:[%s1 + $0x38] sm:$0xf]
    %v240 = vld [vmem:[%s1 + $0x3c] sm:$0xf]
    %v305 = vunpack.c.l.b16 %v161
    %v306 = vunpack.c.l.b16 %v162
    %v307 = vunpack.c.l.b16 %v163
    %v308 = vunpack.c.l.b16 %v164
    %v309 = vunpack.c.l.b16 %v165
    %v310 = vunpack.c.l.b16 %v166
    %v311 = vunpack.c.l.b16 %v167
    %v312 = vunpack.c.l.b16 %v168
    %v313 = vunpack.c.l.b16 %v169
    %v314 = vunpack.c.l.b16 %v170
    %v315 = vunpack.c.l.b16 %v171
    %v316 = vunpack.c.l.b16 %v172
    %v317 = vunpack.c.l.b16 %v173
    %v318 = vunpack.c.l.b16 %v174
    %v319 = vunpack.c.l.b16 %v175
    %v320 = vunpack.c.l.b16 %v176
    %v321 = vunpack.c.l.b16 %v177
    %v322 = vunpack.c.l.b16 %v178
    %v323 = vunpack.c.l.b16 %v179
    %v324 = vunpack.c.l.b16 %v180
    %v325 = vunpack.c.l.b16 %v181
    %v326 = vunpack.c.l.b16 %v182
    %v327 = vunpack.c.l.b16 %v183
    %v328 = vunpack.c.l.b16 %v184
    %v329 = vunpack.c.l.b16 %v185
    %v330 = vunpack.c.l.b16 %v186
    %v331 = vunpack.c.l.b16 %v187
    %v332 = vunpack.c.l.b16 %v188
    %v333 = vunpack.c.l.b16 %v189
    %v334 = vunpack.c.l.b16 %v190
    %v335 = vunpack.c.l.b16 %v191
    %v336 = vunpack.c.l.b16 %v192
    %v337 = vunpack.c.l.b16 %v193
    %v338 = vunpack.c.l.b16 %v194
    %v339 = vunpack.c.l.b16 %v195
    %v340 = vunpack.c.l.b16 %v196
    %v341 = vunpack.c.l.b16 %v197
    %v342 = vunpack.c.l.b16 %v198
    %v343 = vunpack.c.l.b16 %v199
    %v344 = vunpack.c.l.b16 %v200
    %v345 = vunpack.c.l.b16 %v201
    %v346 = vunpack.c.l.b16 %v202
    %v347 = vunpack.c.l.b16 %v203
    %v348 = vunpack.c.l.b16 %v204
    %v349 = vunpack.c.l.b16 %v205
    %v350 = vunpack.c.l.b16 %v206
    %v351 = vunpack.c.l.b16 %v207
    %v352 = vunpack.c.l.b16 %v208
    %v353 = vunpack.c.l.b16 %v209
    %v354 = vunpack.c.l.b16 %v210
    %v355 = vunpack.c.l.b16 %v211
    %v356 = vunpack.c.l.b16 %v212
    %v357 = vunpack.c.l.b16 %v213
    %v358 = vunpack.c.l.b16 %v214
    %v359 = vunpack.c.l.b16 %v215
    %v360 = vunpack.c.l.b16 %v216
    %v361 = vunpack.c.l.b16 %v217
    %v362 = vunpack.c.l.b16 %v218
    %v363 = vunpack.c.l.b16 %v219
    %v364 = vunpack.c.l.b16 %v220
    %v365 = vunpack.c.l.b16 %v221
    %v366 = vunpack.c.l.b16 %v222
    %v367 = vunpack.c.l.b16 %v223
    %v368 = vunpack.c.l.b16 %v224
    %v369 = vpack.c.b16 %v306, %v305
    %v370 = vpack.c.b16 %v308, %v307
    %v371 = vpack.c.b16 %v310, %v309
    %v372 = vpack.c.b16 %v312, %v311
    %v373 = vpack.c.b16 %v314, %v313
    %v374 = vpack.c.b16 %v316, %v315
    %v375 = vpack.c.b16 %v318, %v317
    %v376 = vpack.c.b16 %v320, %v319
    %v377 = vpack.c.b16 %v322, %v321
    %v378 = vpack.c.b16 %v324, %v323
    %v379 = vpack.c.b16 %v326, %v325
    %v380 = vpack.c.b16 %v328, %v327
    %v381 = vpack.c.b16 %v330, %v329
    %v382 = vpack.c.b16 %v332, %v331
    %v383 = vpack.c.b16 %v334, %v333
    %v384 = vpack.c.b16 %v336, %v335
    %v385 = vpack.c.b16 %v338, %v337
    %v386 = vpack.c.b16 %v340, %v339
    %v387 = vpack.c.b16 %v342, %v341
    %v388 = vpack.c.b16 %v344, %v343
    %v389 = vpack.c.b16 %v346, %v345
    %v390 = vpack.c.b16 %v348, %v347
    %v391 = vpack.c.b16 %v350, %v349
    %v392 = vpack.c.b16 %v352, %v351
    %v393 = vpack.c.b16 %v354, %v353
    %v394 = vpack.c.b16 %v356, %v355
    %v395 = vpack.c.b16 %v358, %v357
    %v396 = vpack.c.b16 %v360, %v359
    %v397 = vpack.c.b16 %v362, %v361
    %v398 = vpack.c.b16 %v364, %v363
    %v399 = vpack.c.b16 %v366, %v365
    %v400 = vpack.c.b16 %v368, %v367
    %v449 = vunpack.c.l.b16 %v225
    %v450 = vunpack.c.l.b16 %v226
    %v451 = vunpack.c.l.b16 %v227
    %v452 = vunpack.c.l.b16 %v228
    %v453 = vunpack.c.l.b16 %v229
    %v454 = vunpack.c.l.b16 %v230
    %v455 = vunpack.c.l.b16 %v231
    %v456 = vunpack.c.l.b16 %v232
    %v457 = vunpack.c.l.b16 %v233
    %v458 = vunpack.c.l.b16 %v234
    %v459 = vunpack.c.l.b16 %v235
    %v460 = vunpack.c.l.b16 %v236
    %v461 = vunpack.c.l.b16 %v237
    %v462 = vunpack.c.l.b16 %v238
    %v463 = vunpack.c.l.b16 %v239
    %v464 = vunpack.c.l.b16 %v240
    %v465 = vpack.c.b16 %v450, %v449
    %v466 = vpack.c.b16 %v452, %v451
    %v467 = vpack.c.b16 %v454, %v453
    %v468 = vpack.c.b16 %v456, %v455
    %v469 = vpack.c.b16 %v458, %v457
    %v470 = vpack.c.b16 %v460, %v459
    %v471 = vpack.c.b16 %v462, %v461
    %v472 = vpack.c.b16 %v464, %v463
    %481 = vmatpush.bf16.msra.mxu0 %v472
    %482 = vmatpush.bf16.msra.mxu0 %v471
    %483 = vmatpush.bf16.msra.mxu0 %v470
    %484 = vmatpush.bf16.msra.mxu0 %v469
    %485 = vmatpush.bf16.msra.mxu0 %v468
    %486 = vmatpush.bf16.msra.mxu0 %v467
    %487 = vmatpush.bf16.msra.mxu0 %v466
    %488 = vmatpush.bf16.msra.mxu0 %v465
    %489 = vmatmul.bf16.gmra.mxu0 %v369
    %v490 = vpop.f32.mrf.mxu0
    %v491 = vadd.f32 0.0, %v490
    %v492 = vpop.f32.mrf.mxu0
    %v493 = vadd.f32 0.0, %v492
    %494 = vmatmul.bf16.gmra.mxu0 %v370
    %v495 = vpop.f32.mrf.mxu0
    %v496 = vadd.f32 0.0, %v495
    %v497 = vpop.f32.mrf.mxu0
    %v498 = vadd.f32 0.0, %v497
    %499 = vmatmul.bf16.gmra.mxu0 %v371
    %v500 = vpop.f32.mrf.mxu0
    %v501 = vadd.f32 0.0, %v500
    %v502 = vpop.f32.mrf.mxu0
    %v503 = vadd.f32 0.0, %v502
    %504 = vmatmul.bf16.gmra.mxu0 %v372
    %v505 = vpop.f32.mrf.mxu0
    %v506 = vadd.f32 0.0, %v505
    %v507 = vpop.f32.mrf.mxu0
    %v508 = vadd.f32 0.0, %v507
    %509 = vmatmul.bf16.gmra.mxu0 %v373
    %v510 = vpop.f32.mrf.mxu0
    %v511 = vadd.f32 0.0, %v510
    %v512 = vpop.f32.mrf.mxu0
    %v513 = vadd.f32 0.0, %v512
    %514 = vmatmul.bf16.gmra.mxu0 %v374
    %v515 = vpop.f32.mrf.mxu0
    %v516 = vadd.f32 0.0, %v515
    %v517 = vpop.f32.mrf.mxu0
    %v518 = vadd.f32 0.0, %v517
    %519 = vmatmul.bf16.gmra.mxu0 %v375
    %v520 = vpop.f32.mrf.mxu0
    %v521 = vadd.f32 0.0, %v520
    %v522 = vpop.f32.mrf.mxu0
    %v523 = vadd.f32 0.0, %v522
    %524 = vmatmul.bf16.gmra.mxu0 %v376
    %v525 = vpop.f32.mrf.mxu0
    %v526 = vadd.f32 0.0, %v525
    %v527 = vpop.f32.mrf.mxu0
    %v528 = vadd.f32 0.0, %v527
    %529 = vmatmul.bf16.gmra.mxu0 %v377
    %v530 = vpop.f32.mrf.mxu0
    %v531 = vadd.f32 0.0, %v530
    %v532 = vpop.f32.mrf.mxu0
    %v533 = vadd.f32 0.0, %v532
    %534 = vmatmul.bf16.gmra.mxu0 %v378
    %v535 = vpop.f32.mrf.mxu0
    %v536 = vadd.f32 0.0, %v535
    %v537 = vpop.f32.mrf.mxu0
    %v538 = vadd.f32 0.0, %v537
    %539 = vmatmul.bf16.gmra.mxu0 %v379
    %v540 = vpop.f32.mrf.mxu0
    %v541 = vadd.f32 0.0, %v540
    %v542 = vpop.f32.mrf.mxu0
    %v543 = vadd.f32 0.0, %v542
    %544 = vmatmul.bf16.gmra.mxu0 %v380
    %v545 = vpop.f32.mrf.mxu0
    %v546 = vadd.f32 0.0, %v545
    %v547 = vpop.f32.mrf.mxu0
    %v548 = vadd.f32 0.0, %v547
    %549 = vmatmul.bf16.gmra.mxu0 %v381
    %v550 = vpop.f32.mrf.mxu0
    %v551 = vadd.f32 0.0, %v550
    %v552 = vpop.f32.mrf.mxu0
    %v553 = vadd.f32 0.0, %v552
    %554 = vmatmul.bf16.gmra.mxu0 %v382
    %v555 = vpop.f32.mrf.mxu0
    %v556 = vadd.f32 0.0, %v555
    %v557 = vpop.f32.mrf.mxu0
    %v558 = vadd.f32 0.0, %v557
    %559 = vmatmul.bf16.gmra.mxu0 %v383
    %v560 = vpop.f32.mrf.mxu0
    %v561 = vadd.f32 0.0, %v560
    %v562 = vpop.f32.mrf.mxu0
    %v563 = vadd.f32 0.0, %v562
    %564 = vmatmul.bf16.gmra.mxu0 %v384
    %v565 = vpop.f32.mrf.mxu0
    %v566 = vadd.f32 0.0, %v565
    %v567 = vpop.f32.mrf.mxu0
    %v568 = vadd.f32 0.0, %v567
    %569 = vmatmul.bf16.gmra.mxu0 %v385
    %v570 = vpop.f32.mrf.mxu0
    %v571 = vadd.f32 0.0, %v570
    %v572 = vpop.f32.mrf.mxu0
    %v573 = vadd.f32 0.0, %v572
    %574 = vmatmul.bf16.gmra.mxu0 %v386
    %v575 = vpop.f32.mrf.mxu0
    %v576 = vadd.f32 0.0, %v575
    %v577 = vpop.f32.mrf.mxu0
    %v578 = vadd.f32 0.0, %v577
    %579 = vmatmul.bf16.gmra.mxu0 %v387
    %v580 = vpop.f32.mrf.mxu0
    %v581 = vadd.f32 0.0, %v580
    %v582 = vpop.f32.mrf.mxu0
    %v583 = vadd.f32 0.0, %v582
    %584 = vmatmul.bf16.gmra.mxu0 %v388
    %v585 = vpop.f32.mrf.mxu0
    %v586 = vadd.f32 0.0, %v585
    %v587 = vpop.f32.mrf.mxu0
    %v588 = vadd.f32 0.0, %v587
    %589 = vmatmul.bf16.gmra.mxu0 %v389
    %v590 = vpop.f32.mrf.mxu0
    %v591 = vadd.f32 0.0, %v590
    %v592 = vpop.f32.mrf.mxu0
    %v593 = vadd.f32 0.0, %v592
    %594 = vmatmul.bf16.gmra.mxu0 %v390
    %v595 = vpop.f32.mrf.mxu0
    %v596 = vadd.f32 0.0, %v595
    %v597 = vpop.f32.mrf.mxu0
    %v598 = vadd.f32 0.0, %v597
    %599 = vmatmul.bf16.gmra.mxu0 %v391
    %v600 = vpop.f32.mrf.mxu0
    %v601 = vadd.f32 0.0, %v600
    %v602 = vpop.f32.mrf.mxu0
    %v603 = vadd.f32 0.0, %v602
    %604 = vmatmul.bf16.gmra.mxu0 %v392
    %v605 = vpop.f32.mrf.mxu0
    %v606 = vadd.f32 0.0, %v605
    %v607 = vpop.f32.mrf.mxu0
    %v608 = vadd.f32 0.0, %v607
    %609 = vmatmul.bf16.gmra.mxu0 %v393
    %v610 = vpop.f32.mrf.mxu0
    %v611 = vadd.f32 0.0, %v610
    %v612 = vpop.f32.mrf.mxu0
    %v613 = vadd.f32 0.0, %v612
    %614 = vmatmul.bf16.gmra.mxu0 %v394
    %v615 = vpop.f32.mrf.mxu0
    %v616 = vadd.f32 0.0, %v615
    %v617 = vpop.f32.mrf.mxu0
    %v618 = vadd.f32 0.0, %v617
    %619 = vmatmul.bf16.gmra.mxu0 %v395
    %v620 = vpop.f32.mrf.mxu0
    %v621 = vadd.f32 0.0, %v620
    %v622 = vpop.f32.mrf.mxu0
    %v623 = vadd.f32 0.0, %v622
    %624 = vmatmul.bf16.gmra.mxu0 %v396
    %v625 = vpop.f32.mrf.mxu0
    %v626 = vadd.f32 0.0, %v625
    %v627 = vpop.f32.mrf.mxu0
    %v628 = vadd.f32 0.0, %v627
    %629 = vmatmul.bf16.gmra.mxu0 %v397
    %v630 = vpop.f32.mrf.mxu0
    %v631 = vadd.f32 0.0, %v630
    %v632 = vpop.f32.mrf.mxu0
    %v633 = vadd.f32 0.0, %v632
    %634 = vmatmul.bf16.gmra.mxu0 %v398
    %v635 = vpop.f32.mrf.mxu0
    %v636 = vadd.f32 0.0, %v635
    %v637 = vpop.f32.mrf.mxu0
    %v638 = vadd.f32 0.0, %v637
    %639 = vmatmul.bf16.gmra.mxu0 %v399
    %v640 = vpop.f32.mrf.mxu0
    %v641 = vadd.f32 0.0, %v640
    %v642 = vpop.f32.mrf.mxu0
    %v643 = vadd.f32 0.0, %v642
    %644 = vmatmul.bf16.gmra.mxu0 %v400
    %v645 = vpop.f32.mrf.mxu0
    %v646 = vadd.f32 0.0, %v645
    %v647 = vpop.f32.mrf.mxu0
    %v648 = vadd.f32 0.0, %v647
    %649 = vdwg.mxu0
    %v650 = vadd.f32 %v97, %v491
    %v651 = vadd.f32 %v98, %v493
    %v652 = vadd.f32 %v99, %v496
    %v653 = vadd.f32 %v100, %v498
    %v654 = vadd.f32 %v101, %v501
    %v655 = vadd.f32 %v102, %v503
    %v656 = vadd.f32 %v103, %v506
    %v657 = vadd.f32 %v104, %v508
    %v658 = vadd.f32 %v105, %v511
    %v659 = vadd.f32 %v106, %v513
    %v660 = vadd.f32 %v107, %v516
    %v661 = vadd.f32 %v108, %v518
    %v662 = vadd.f32 %v109, %v521
    %v663 = vadd.f32 %v110, %v523
    %v664 = vadd.f32 %v111, %v526
    %v665 = vadd.f32 %v112, %v528
    %v666 = vadd.f32 %v113, %v531
    %v667 = vadd.f32 %v114, %v533
    %v668 = vadd.f32 %v115, %v536
    %v669 = vadd.f32 %v116, %v538
    %v670 = vadd.f32 %v117, %v541
    %v671 = vadd.f32 %v118, %v543
    %v672 = vadd.f32 %v119, %v546
    %v673 = vadd.f32 %v120, %v548
    %v674 = vadd.f32 %v121, %v551
    %v675 = vadd.f32 %v122, %v553
    %v676 = vadd.f32 %v123, %v556
    %v677 = vadd.f32 %v124, %v558
    %v678 = vadd.f32 %v125, %v561
    %v679 = vadd.f32 %v126, %v563
    %v680 = vadd.f32 %v127, %v566
    %v681 = vadd.f32 %v128, %v568
    %v682 = vadd.f32 %v129, %v571
    %v683 = vadd.f32 %v130, %v573
    %v684 = vadd.f32 %v131, %v576
    %v685 = vadd.f32 %v132, %v578
    %v686 = vadd.f32 %v133, %v581
    %v687 = vadd.f32 %v134, %v583
    %v688 = vadd.f32 %v135, %v586
    %v689 = vadd.f32 %v136, %v588
    %v690 = vadd.f32 %v137, %v591
    %v691 = vadd.f32 %v138, %v593
    %v692 = vadd.f32 %v139, %v596
    %v693 = vadd.f32 %v140, %v598
    %v694 = vadd.f32 %v141, %v601
    %v695 = vadd.f32 %v142, %v603
    %v696 = vadd.f32 %v143, %v606
    %v697 = vadd.f32 %v144, %v608
    %v698 = vadd.f32 %v145, %v611
    %v699 = vadd.f32 %v146, %v613
    %v700 = vadd.f32 %v147, %v616
    %v701 = vadd.f32 %v148, %v618
    %v702 = vadd.f32 %v149, %v621
    %v703 = vadd.f32 %v150, %v623
    %v704 = vadd.f32 %v151, %v626
    %v705 = vadd.f32 %v152, %v628
    %v706 = vadd.f32 %v153, %v631
    %v707 = vadd.f32 %v154, %v633
    %v708 = vadd.f32 %v155, %v636
    %v709 = vadd.f32 %v156, %v638
    %v710 = vadd.f32 %v157, %v641
    %v711 = vadd.f32 %v158, %v643
    %v712 = vadd.f32 %v159, %v646
    %v713 = vadd.f32 %v160, %v648
    %vm714 = vcmask 523264
    %715 = vst.msk [vmem:[#allocation2] sm:$0xff] %vm714, %v650
    %716 = vst.msk [vmem:[#allocation2 + $0x8] sm:$0xff] %vm714, %v651
    %717 = vst.msk [vmem:[#allocation2 + $0x10] sm:$0xff] %vm714, %v652
    %718 = vst.msk [vmem:[#allocation2 + $0x18] sm:$0xff] %vm714, %v653
    %719 = vst.msk [vmem:[#allocation2 + $0x20] sm:$0xff] %vm714, %v654
    %720 = vst.msk [vmem:[#allocation2 + $0x28] sm:$0xff] %vm714, %v655
    %721 = vst.msk [vmem:[#allocation2 + $0x30] sm:$0xff] %vm714, %v656
    %722 = vst.msk [vmem:[#allocation2 + $0x38] sm:$0xff] %vm714, %v657
    %723 = vst.msk [vmem:[#allocation2 + $0x40] sm:$0xff] %vm714, %v658
    %724 = vst.msk [vmem:[#allocation2 + $0x48] sm:$0xff] %vm714, %v659
    %725 = vst.msk [vmem:[#allocation2 + $0x50] sm:$0xff] %vm714, %v660
    %726 = vst.msk [vmem:[#allocation2 + $0x58] sm:$0xff] %vm714, %v661
    %727 = vst.msk [vmem:[#allocation2 + $0x60] sm:$0xff] %vm714, %v662
    %728 = vst.msk [vmem:[#allocation2 + $0x68] sm:$0xff] %vm714, %v663
    %729 = vst.msk [vmem:[#allocation2 + $0x70] sm:$0xff] %vm714, %v664
    %730 = vst.msk [vmem:[#allocation2 + $0x78] sm:$0xff] %vm714, %v665
    %731 = vst.msk [vmem:[#allocation2 + $0x80] sm:$0xff] %vm714, %v666
    %732 = vst.msk [vmem:[#allocation2 + $0x88] sm:$0xff] %vm714, %v667
    %733 = vst.msk [vmem:[#allocation2 + $0x90] sm:$0xff] %vm714, %v668
    %734 = vst.msk [vmem:[#allocation2 + $0x98] sm:$0xff] %vm714, %v669
    %735 = vst.msk [vmem:[#allocation2 + $0xa0] sm:$0xff] %vm714, %v670
    %736 = vst.msk [vmem:[#allocation2 + $0xa8] sm:$0xff] %vm714, %v671
    %737 = vst.msk [vmem:[#allocation2 + $0xb0] sm:$0xff] %vm714, %v672
    %738 = vst.msk [vmem:[#allocation2 + $0xb8] sm:$0xff] %vm714, %v673
    %739 = vst.msk [vmem:[#allocation2 + $0xc0] sm:$0xff] %vm714, %v674
    %740 = vst.msk [vmem:[#allocation2 + $0xc8] sm:$0xff] %vm714, %v675
    %741 = vst.msk [vmem:[#allocation2 + $0xd0] sm:$0xff] %vm714, %v676
    %742 = vst.msk [vmem:[#allocation2 + $0xd8] sm:$0xff] %vm714, %v677
    %743 = vst.msk [vmem:[#allocation2 + $0xe0] sm:$0xff] %vm714, %v678
    %744 = vst.msk [vmem:[#allocation2 + $0xe8] sm:$0xff] %vm714, %v679
    %745 = vst.msk [vmem:[#allocation2 + $0xf0] sm:$0xff] %vm714, %v680
    %746 = vst.msk [vmem:[#allocation2 + $0xf8] sm:$0xff] %vm714, %v681
    %747 = vst.msk [vmem:[#allocation2 + $0x100] sm:$0xff] %vm714, %v682
    %748 = vst.msk [vmem:[#allocation2 + $0x108] sm:$0xff] %vm714, %v683
    %749 = vst.msk [vmem:[#allocation2 + $0x110] sm:$0xff] %vm714, %v684
    %750 = vst.msk [vmem:[#allocation2 + $0x118] sm:$0xff] %vm714, %v685
    %751 = vst.msk [vmem:[#allocation2 + $0x120] sm:$0xff] %vm714, %v686
    %752 = vst.msk [vmem:[#allocation2 + $0x128] sm:$0xff] %vm714, %v687
    %753 = vst.msk [vmem:[#allocation2 + $0x130] sm:$0xff] %vm714, %v688
    %754 = vst.msk [vmem:[#allocation2 + $0x138] sm:$0xff] %vm714, %v689
    %755 = vst.msk [vmem:[#allocation2 + $0x140] sm:$0xff] %vm714, %v690
    %756 = vst.msk [vmem:[#allocation2 + $0x148] sm:$0xff] %vm714, %v691
    %757 = vst.msk [vmem:[#allocation2 + $0x150] sm:$0xff] %vm714, %v692
    %758 = vst.msk [vmem:[#allocation2 + $0x158] sm:$0xff] %vm714, %v693
    %759 = vst.msk [vmem:[#allocation2 + $0x160] sm:$0xff] %vm714, %v694
    %760 = vst.msk [vmem:[#allocation2 + $0x168] sm:$0xff] %vm714, %v695
    %761 = vst.msk [vmem:[#allocation2 + $0x170] sm:$0xff] %vm714, %v696
    %762 = vst.msk [vmem:[#allocation2 + $0x178] sm:$0xff] %vm714, %v697
    %763 = vst.msk [vmem:[#allocation2 + $0x180] sm:$0xff] %vm714, %v698
    %764 = vst.msk [vmem:[#allocation2 + $0x188] sm:$0xff] %vm714, %v699
    %765 = vst.msk [vmem:[#allocation2 + $0x190] sm:$0xff] %vm714, %v700
    %766 = vst.msk [vmem:[#allocation2 + $0x198] sm:$0xff] %vm714, %v701
    %767 = vst.msk [vmem:[#allocation2 + $0x1a0] sm:$0xff] %vm714, %v702
    %768 = vst.msk [vmem:[#allocation2 + $0x1a8] sm:$0xff] %vm714, %v703
    %769 = vst.msk [vmem:[#allocation2 + $0x1b0] sm:$0xff] %vm714, %v704
    %770 = vst.msk [vmem:[#allocation2 + $0x1b8] sm:$0xff] %vm714, %v705
    %771 = vst.msk [vmem:[#allocation2 + $0x1c0] sm:$0xff] %vm714, %v706
    %772 = vst.msk [vmem:[#allocation2 + $0x1c8] sm:$0xff] %vm714, %v707
    %773 = vst.msk [vmem:[#allocation2 + $0x1d0] sm:$0xff] %vm714, %v708
    %774 = vst.msk [vmem:[#allocation2 + $0x1d8] sm:$0xff] %vm714, %v709
    %775 = vst.msk [vmem:[#allocation2 + $0x1e0] sm:$0xff] %vm714, %v710
    %776 = vst.msk [vmem:[#allocation2 + $0x1e8] sm:$0xff] %vm714, %v711
    %777 = vst.msk [vmem:[#allocation2 + $0x1f0] sm:$0xff] %vm714, %v712
    %778 = vst.msk [vmem:[#allocation2 + $0x1f8] sm:$0xff] %vm714, %v713
    // Predicated region
    $region22: #{discriminator_forward.9} parent=1 // pred_check
      %p779 = pneg %p28
    $region23: #{discriminator_forward.9} parent=1 // pred_check_branch
      %781 = sbr.rel (%p779) target = $region25
    $region24: #{discriminator_forward.9} parent=1 // pred_region
      %v782 = vld [vmem:[#allocation2] sm:$0xff]
      %v783 = vld [vmem:[#allocation2 + $0x8] sm:$0xff]
      %v784 = vld [vmem:[#allocation2 + $0x10] sm:$0xff]
      %v785 = vld [vmem:[#allocation2 + $0x18] sm:$0xff]
      %v786 = vld [vmem:[#allocation2 + $0x20] sm:$0xff]
      %v787 = vld [vmem:[#allocation2 + $0x28] sm:$0xff]
      %v788 = vld [vmem:[#allocation2 + $0x30] sm:$0xff]
      %v789 = vld [vmem:[#allocation2 + $0x38] sm:$0xff]
      %v790 = vld [vmem:[#allocation2 + $0x40] sm:$0xff]
      %v791 = vld [vmem:[#allocation2 + $0x48] sm:$0xff]
      %v792 = vld [vmem:[#allocation2 + $0x50] sm:$0xff]
      %v793 = vld [vmem:[#allocation2 + $0x58] sm:$0xff]
      %v794 = vld [vmem:[#allocation2 + $0x60] sm:$0xff]
      %v795 = vld [vmem:[#allocation2 + $0x68] sm:$0xff]
      %v796 = vld [vmem:[#allocation2 + $0x70] sm:$0xff]
      %v797 = vld [vmem:[#allocation2 + $0x78] sm:$0xff]
      %v798 = vld [vmem:[#allocation2 + $0x80] sm:$0xff]
      %v799 = vld [vmem:[#allocation2 + $0x88] sm:$0xff]
      %v800 = vld [vmem:[#allocation2 + $0x90] sm:$0xff]
      %v801 = vld [vmem:[#allocation2 + $0x98] sm:$0xff]
      %v802 = vld [vmem:[#allocation2 + $0xa0] sm:$0xff]
      %v803 = vld [vmem:[#allocation2 + $0xa8] sm:$0xff]
      %v804 = vld [vmem:[#allocation2 + $0xb0] sm:$0xff]
      %v805 = vld [vmem:[#allocation2 + $0xb8] sm:$0xff]
      %v806 = vld [vmem:[#allocation2 + $0xc0] sm:$0xff]
      %v807 = vld [vmem:[#allocation2 + $0xc8] sm:$0xff]
      %v808 = vld [vmem:[#allocation2 + $0xd0] sm:$0xff]
      %v809 = vld [vmem:[#allocation2 + $0xd8] sm:$0xff]
      %v810 = vld [vmem:[#allocation2 + $0xe0] sm:$0xff]
      %v811 = vld [vmem:[#allocation2 + $0xe8] sm:$0xff]
      %v812 = vld [vmem:[#allocation2 + $0xf0] sm:$0xff]
      %v813 = vld [vmem:[#allocation2 + $0xf8] sm:$0xff]
      %v814 = vld [vmem:[#allocation2 + $0x100] sm:$0xff]
      %v815 = vld [vmem:[#allocation2 + $0x108] sm:$0xff]
      %v816 = vld [vmem:[#allocation2 + $0x110] sm:$0xff]
      %v817 = vld [vmem:[#allocation2 + $0x118] sm:$0xff]
      %v818 = vld [vmem:[#allocation2 + $0x120] sm:$0xff]
      %v819 = vld [vmem:[#allocation2 + $0x128] sm:$0xff]
      %v820 = vld [vmem:[#allocation2 + $0x130] sm:$0xff]
      %v821 = vld [vmem:[#allocation2 + $0x138] sm:$0xff]
      %v822 = vld [vmem:[#allocation2 + $0x140] sm:$0xff]
      %v823 = vld [vmem:[#allocation2 + $0x148] sm:$0xff]
      %v824 = vld [vmem:[#allocation2 + $0x150] sm:$0xff]
      %v825 = vld [vmem:[#allocation2 + $0x158] sm:$0xff]
      %v826 = vld [vmem:[#allocation2 + $0x160] sm:$0xff]
      %v827 = vld [vmem:[#allocation2 + $0x168] sm:$0xff]
      %v828 = vld [vmem:[#allocation2 + $0x170] sm:$0xff]
      %v829 = vld [vmem:[#allocation2 + $0x178] sm:$0xff]
      %v830 = vld [vmem:[#allocation2 + $0x180] sm:$0xff]
      %v831 = vld [vmem:[#allocation2 + $0x188] sm:$0xff]
      %v832 = vld [vmem:[#allocation2 + $0x190] sm:$0xff]
      %v833 = vld [vmem:[#allocation2 + $0x198] sm:$0xff]
      %v834 = vld [vmem:[#allocation2 + $0x1a0] sm:$0xff]
      %v835 = vld [vmem:[#allocation2 + $0x1a8] sm:$0xff]
      %v836 = vld [vmem:[#allocation2 + $0x1b0] sm:$0xff]
      %v837 = vld [vmem:[#allocation2 + $0x1b8] sm:$0xff]
      %v838 = vld [vmem:[#allocation2 + $0x1c0] sm:$0xff]
      %v839 = vld [vmem:[#allocation2 + $0x1c8] sm:$0xff]
      %v840 = vld [vmem:[#allocation2 + $0x1d0] sm:$0xff]
      %v841 = vld [vmem:[#allocation2 + $0x1d8] sm:$0xff]
      %v842 = vld [vmem:[#allocation2 + $0x1e0] sm:$0xff]
      %v843 = vld [vmem:[#allocation2 + $0x1e8] sm:$0xff]
      %v844 = vld [vmem:[#allocation2 + $0x1f0] sm:$0xff]
      %v845 = vld [vmem:[#allocation2 + $0x1f8] sm:$0xff]
      %v846 = vld [vmem:[#allocation3] sm:$0x1]
      %v848 = vperm.slane %v846, 0
      %v850 = vadd.f32 %v782, %v848
      %v851 = vadd.f32 %v783, %v848
      %v852 = vadd.f32 %v784, %v848
      %v853 = vadd.f32 %v785, %v848
      %v854 = vadd.f32 %v786, %v848
      %v855 = vadd.f32 %v787, %v848
      %v856 = vadd.f32 %v788, %v848
      %v857 = vadd.f32 %v789, %v848
      %v858 = vadd.f32 %v790, %v848
      %v859 = vadd.f32 %v791, %v848
      %v860 = vadd.f32 %v792, %v848
      %v861 = vadd.f32 %v793, %v848
      %v862 = vadd.f32 %v794, %v848
      %v863 = vadd.f32 %v795, %v848
      %v864 = vadd.f32 %v796, %v848
      %v865 = vadd.f32 %v797, %v848
      %v866 = vadd.f32 %v798, %v848
      %v867 = vadd.f32 %v799, %v848
      %v868 = vadd.f32 %v800, %v848
      %v869 = vadd.f32 %v801, %v848
      %v870 = vadd.f32 %v802, %v848
      %v871 = vadd.f32 %v803, %v848
      %v872 = vadd.f32 %v804, %v848
      %v873 = vadd.f32 %v805, %v848
      %v874 = vadd.f32 %v806, %v848
      %v875 = vadd.f32 %v807, %v848
      %v876 = vadd.f32 %v808, %v848
      %v877 = vadd.f32 %v809, %v848
      %v878 = vadd.f32 %v810, %v848
      %v879 = vadd.f32 %v811, %v848
      %v880 = vadd.f32 %v812, %v848
      %v881 = vadd.f32 %v813, %v848
      %v882 = vadd.f32 %v814, %v848
      %v883 = vadd.f32 %v815, %v848
      %v884 = vadd.f32 %v816, %v848
      %v885 = vadd.f32 %v817, %v848
      %v886 = vadd.f32 %v818, %v848
      %v887 = vadd.f32 %v819, %v848
      %v888 = vadd.f32 %v820, %v848
      %v889 = vadd.f32 %v821, %v848
      %v890 = vadd.f32 %v822, %v848
      %v891 = vadd.f32 %v823, %v848
      %v892 = vadd.f32 %v824, %v848
      %v893 = vadd.f32 %v825, %v848
      %v894 = vadd.f32 %v826, %v848
      %v895 = vadd.f32 %v827, %v848
      %v896 = vadd.f32 %v828, %v848
      %v897 = vadd.f32 %v829, %v848
      %v898 = vadd.f32 %v830, %v848
      %v899 = vadd.f32 %v831, %v848
      %v900 = vadd.f32 %v832, %v848
      %v901 = vadd.f32 %v833, %v848
      %v902 = vadd.f32 %v834, %v848
      %v903 = vadd.f32 %v835, %v848
      %v904 = vadd.f32 %v836, %v848
      %v905 = vadd.f32 %v837, %v848
      %v906 = vadd.f32 %v838, %v848
      %v907 = vadd.f32 %v839, %v848
      %v908 = vadd.f32 %v840, %v848
      %v909 = vadd.f32 %v841, %v848
      %v910 = vadd.f32 %v842, %v848
      %v911 = vadd.f32 %v843, %v848
      %v912 = vadd.f32 %v844, %v848
      %v913 = vadd.f32 %v845, %v848
      %vm914 = vcmp.ge.f32.partialorder %v850, 0.0
      %vm915 = vcmp.ge.f32.partialorder %v851, 0.0
      %vm916 = vcmp.ge.f32.partialorder %v852, 0.0
      %vm917 = vcmp.ge.f32.partialorder %v853, 0.0
      %vm918 = vcmp.ge.f32.partialorder %v854, 0.0
      %vm919 = vcmp.ge.f32.partialorder %v855, 0.0
      %vm920 = vcmp.ge.f32.partialorder %v856, 0.0
      %vm921 = vcmp.ge.f32.partialorder %v857, 0.0
      %vm922 = vcmp.ge.f32.partialorder %v858, 0.0
      %vm923 = vcmp.ge.f32.partialorder %v859, 0.0
      %vm924 = vcmp.ge.f32.partialorder %v860, 0.0
      %vm925 = vcmp.ge.f32.partialorder %v861, 0.0
      %vm926 = vcmp.ge.f32.partialorder %v862, 0.0
      %vm927 = vcmp.ge.f32.partialorder %v863, 0.0
      %vm928 = vcmp.ge.f32.partialorder %v864, 0.0
      %vm929 = vcmp.ge.f32.partialorder %v865, 0.0
      %vm930 = vcmp.ge.f32.partialorder %v866, 0.0
      %vm931 = vcmp.ge.f32.partialorder %v867, 0.0
      %vm932 = vcmp.ge.f32.partialorder %v868, 0.0
      %vm933 = vcmp.ge.f32.partialorder %v869, 0.0
      %vm934 = vcmp.ge.f32.partialorder %v870, 0.0
      %vm935 = vcmp.ge.f32.partialorder %v871, 0.0
      %vm936 = vcmp.ge.f32.partialorder %v872, 0.0
      %vm937 = vcmp.ge.f32.partialorder %v873, 0.0
      %vm938 = vcmp.ge.f32.partialorder %v874, 0.0
      %vm939 = vcmp.ge.f32.partialorder %v875, 0.0
      %vm940 = vcmp.ge.f32.partialorder %v876, 0.0
      %vm941 = vcmp.ge.f32.partialorder %v877, 0.0
      %vm942 = vcmp.ge.f32.partialorder %v878, 0.0
      %vm943 = vcmp.ge.f32.partialorder %v879, 0.0
      %vm944 = vcmp.ge.f32.partialorder %v880, 0.0
      %vm945 = vcmp.ge.f32.partialorder %v881, 0.0
      %vm946 = vcmp.ge.f32.partialorder %v882, 0.0
      %vm947 = vcmp.ge.f32.partialorder %v883, 0.0
      %vm948 = vcmp.ge.f32.partialorder %v884, 0.0
      %vm949 = vcmp.ge.f32.partialorder %v885, 0.0
      %vm950 = vcmp.ge.f32.partialorder %v886, 0.0
      %vm951 = vcmp.ge.f32.partialorder %v887, 0.0
      %vm952 = vcmp.ge.f32.partialorder %v888, 0.0
      %vm953 = vcmp.ge.f32.partialorder %v889, 0.0
      %vm954 = vcmp.ge.f32.partialorder %v890, 0.0
      %vm955 = vcmp.ge.f32.partialorder %v891, 0.0
      %vm956 = vcmp.ge.f32.partialorder %v892, 0.0
      %vm957 = vcmp.ge.f32.partialorder %v893, 0.0
      %vm958 = vcmp.ge.f32.partialorder %v894, 0.0
      %vm959 = vcmp.ge.f32.partialorder %v895, 0.0
      %vm960 = vcmp.ge.f32.partialorder %v896, 0.0
      %vm961 = vcmp.ge.f32.partialorder %v897, 0.0
      %vm962 = vcmp.ge.f32.partialorder %v898, 0.0
      %vm963 = vcmp.ge.f32.partialorder %v899, 0.0
      %vm964 = vcmp.ge.f32.partialorder %v900, 0.0
      %vm965 = vcmp.ge.f32.partialorder %v901, 0.0
      %vm966 = vcmp.ge.f32.partialorder %v902, 0.0
      %vm967 = vcmp.ge.f32.partialorder %v903, 0.0
      %vm968 = vcmp.ge.f32.partialorder %v904, 0.0
      %vm969 = vcmp.ge.f32.partialorder %v905, 0.0
      %vm970 = vcmp.ge.f32.partialorder %v906, 0.0
      %vm971 = vcmp.ge.f32.partialorder %v907, 0.0
      %vm972 = vcmp.ge.f32.partialorder %v908, 0.0
      %vm973 = vcmp.ge.f32.partialorder %v909, 0.0
      %vm974 = vcmp.ge.f32.partialorder %v910, 0.0
      %vm975 = vcmp.ge.f32.partialorder %v911, 0.0
      %vm976 = vcmp.ge.f32.partialorder %v912, 0.0
      %vm977 = vcmp.ge.f32.partialorder %v913, 0.0
      %v978 = vmul.f32 %v850, 0.2
      %v979 = vmul.f32 %v851, 0.2
      %v980 = vmul.f32 %v852, 0.2
      %v981 = vmul.f32 %v853, 0.2
      %v982 = vmul.f32 %v854, 0.2
      %v983 = vmul.f32 %v855, 0.2
      %v984 = vmul.f32 %v856, 0.2
      %v985 = vmul.f32 %v857, 0.2
      %v986 = vmul.f32 %v858, 0.2
      %v987 = vmul.f32 %v859, 0.2
      %v988 = vmul.f32 %v860, 0.2
      %v989 = vmul.f32 %v861, 0.2
      %v990 = vmul.f32 %v862, 0.2
      %v991 = vmul.f32 %v863, 0.2
      %v992 = vmul.f32 %v864, 0.2
      %v993 = vmul.f32 %v865, 0.2
      %v994 = vmul.f32 %v866, 0.2
      %v995 = vmul.f32 %v867, 0.2
      %v996 = vmul.f32 %v868, 0.2
      %v997 = vmul.f32 %v869, 0.2
      %v998 = vmul.f32 %v870, 0.2
      %v999 = vmul.f32 %v871, 0.2
      %v1000 = vmul.f32 %v872, 0.2
      %v1001 = vmul.f32 %v873, 0.2
      %v1002 = vmul.f32 %v874, 0.2
      %v1003 = vmul.f32 %v875, 0.2
      %v1004 = vmul.f32 %v876, 0.2
      %v1005 = vmul.f32 %v877, 0.2
      %v1006 = vmul.f32 %v878, 0.2
      %v1007 = vmul.f32 %v879, 0.2
      %v1008 = vmul.f32 %v880, 0.2
      %v1009 = vmul.f32 %v881, 0.2
      %v1010 = vmul.f32 %v882, 0.2
      %v1011 = vmul.f32 %v883, 0.2
      %v1012 = vmul.f32 %v884, 0.2
      %v1013 = vmul.f32 %v885, 0.2
      %v1014 = vmul.f32 %v886, 0.2
      %v1015 = vmul.f32 %v887, 0.2
      %v1016 = vmul.f32 %v888, 0.2
      %v1017 = vmul.f32 %v889, 0.2
      %v1018 = vmul.f32 %v890, 0.2
      %v1019 = vmul.f32 %v891, 0.2
      %v1020 = vmul.f32 %v892, 0.2
      %v1021 = vmul.f32 %v893, 0.2
      %v1022 = vmul.f32 %v894, 0.2
      %v1023 = vmul.f32 %v895, 0.2
      %v1024 = vmul.f32 %v896, 0.2
      %v1025 = vmul.f32 %v897, 0.2
      %v1026 = vmul.f32 %v898, 0.2
      %v1027 = vmul.f32 %v899, 0.2
      %v1028 = vmul.f32 %v900, 0.2
      %v1029 = vmul.f32 %v901, 0.2
      %v1030 = vmul.f32 %v902, 0.2
      %v1031 = vmul.f32 %v903, 0.2
      %v1032 = vmul.f32 %v904, 0.2
      %v1033 = vmul.f32 %v905, 0.2
      %v1034 = vmul.f32 %v906, 0.2
      %v1035 = vmul.f32 %v907, 0.2
      %v1036 = vmul.f32 %v908, 0.2
      %v1037 = vmul.f32 %v909, 0.2
      %v1038 = vmul.f32 %v910, 0.2
      %v1039 = vmul.f32 %v911, 0.2
      %v1040 = vmul.f32 %v912, 0.2
      %v1041 = vmul.f32 %v913, 0.2
      %v1042 = vsel %vm914, %v850, %v978
      %v1043 = vsel %vm915, %v851, %v979
      %v1044 = vsel %vm916, %v852, %v980
      %v1045 = vsel %vm917, %v853, %v981
      %v1046 = vsel %vm918, %v854, %v982
      %v1047 = vsel %vm919, %v855, %v983
      %v1048 = vsel %vm920, %v856, %v984
      %v1049 = vsel %vm921, %v857, %v985
      %v1050 = vsel %vm922, %v858, %v986
      %v1051 = vsel %vm923, %v859, %v987
      %v1052 = vsel %vm924, %v860, %v988
      %v1053 = vsel %vm925, %v861, %v989
      %v1054 = vsel %vm926, %v862, %v990
      %v1055 = vsel %vm927, %v863, %v991
      %v1056 = vsel %vm928, %v864, %v992
      %v1057 = vsel %vm929, %v865, %v993
      %v1058 = vsel %vm930, %v866, %v994
      %v1059 = vsel %vm931, %v867, %v995
      %v1060 = vsel %vm932, %v868, %v996
      %v1061 = vsel %vm933, %v869, %v997
      %v1062 = vsel %vm934, %v870, %v998
      %v1063 = vsel %vm935, %v871, %v999
      %v1064 = vsel %vm936, %v872, %v1000
      %v1065 = vsel %vm937, %v873, %v1001
      %v1066 = vsel %vm938, %v874, %v1002
      %v1067 = vsel %vm939, %v875, %v1003
      %v1068 = vsel %vm940, %v876, %v1004
      %v1069 = vsel %vm941, %v877, %v1005
      %v1070 = vsel %vm942, %v878, %v1006
      %v1071 = vsel %vm943, %v879, %v1007
      %v1072 = vsel %vm944, %v880, %v1008
      %v1073 = vsel %vm945, %v881, %v1009
      %v1074 = vsel %vm946, %v882, %v1010
      %v1075 = vsel %vm947, %v883, %v1011
      %v1076 = vsel %vm948, %v884, %v1012
      %v1077 = vsel %vm949, %v885, %v1013
      %v1078 = vsel %vm950, %v886, %v1014
      %v1079 = vsel %vm951, %v887, %v1015
      %v1080 = vsel %vm952, %v888, %v1016
      %v1081 = vsel %vm953, %v889, %v1017
      %v1082 = vsel %vm954, %v890, %v1018
      %v1083 = vsel %vm955, %v891, %v1019
      %v1084 = vsel %vm956, %v892, %v1020
      %v1085 = vsel %vm957, %v893, %v1021
      %v1086 = vsel %vm958, %v894, %v1022
      %v1087 = vsel %vm959, %v895, %v1023
      %v1088 = vsel %vm960, %v896, %v1024
      %v1089 = vsel %vm961, %v897, %v1025
      %v1090 = vsel %vm962, %v898, %v1026
      %v1091 = vsel %vm963, %v899, %v1027
      %v1092 = vsel %vm964, %v900, %v1028
      %v1093 = vsel %vm965, %v901, %v1029
      %v1094 = vsel %vm966, %v902, %v1030
      %v1095 = vsel %vm967, %v903, %v1031
      %v1096 = vsel %vm968, %v904, %v1032
      %v1097 = vsel %vm969, %v905, %v1033
      %v1098 = vsel %vm970, %v906, %v1034
      %v1099 = vsel %vm971, %v907, %v1035
      %v1100 = vsel %vm972, %v908, %v1036
      %v1101 = vsel %vm973, %v909, %v1037
      %v1102 = vsel %vm974, %v910, %v1038
      %v1103 = vsel %vm975, %v911, %v1039
      %v1104 = vsel %vm976, %v912, %v1040
      %v1105 = vsel %vm977, %v913, %v1041
      %1106 = vst.msk [vmem:[%s3] sm:$0xff] %vm714, %v1042
      %1107 = vst.msk [vmem:[%s3 + $0x8] sm:$0xff] %vm714, %v1043
      %1108 = vst.msk [vmem:[%s3 + $0x10] sm:$0xff] %vm714, %v1044
      %1109 = vst.msk [vmem:[%s3 + $0x18] sm:$0xff] %vm714, %v1045
      %1110 = vst.msk [vmem:[%s3 + $0x20] sm:$0xff] %vm714, %v1046
      %1111 = vst.msk [vmem:[%s3 + $0x28] sm:$0xff] %vm714, %v1047
      %1112 = vst.msk [vmem:[%s3 + $0x30] sm:$0xff] %vm714, %v1048
      %1113 = vst.msk [vmem:[%s3 + $0x38] sm:$0xff] %vm714, %v1049
      %1114 = vst.msk [vmem:[%s3 + $0x40] sm:$0xff] %vm714, %v1050
      %1115 = vst.msk [vmem:[%s3 + $0x48] sm:$0xff] %vm714, %v1051
      %1116 = vst.msk [vmem:[%s3 + $0x50] sm:$0xff] %vm714, %v1052
      %1117 = vst.msk [vmem:[%s3 + $0x58] sm:$0xff] %vm714, %v1053
      %1118 = vst.msk [vmem:[%s3 + $0x60] sm:$0xff] %vm714, %v1054
      %1119 = vst.msk [vmem:[%s3 + $0x68] sm:$0xff] %vm714, %v1055
      %1120 = vst.msk [vmem:[%s3 + $0x70] sm:$0xff] %vm714, %v1056
      %1121 = vst.msk [vmem:[%s3 + $0x78] sm:$0xff] %vm714, %v1057
      %1122 = vst.msk [vmem:[%s3 + $0x80] sm:$0xff] %vm714, %v1058
      %1123 = vst.msk [vmem:[%s3 + $0x88] sm:$0xff] %vm714, %v1059
      %1124 = vst.msk [vmem:[%s3 + $0x90] sm:$0xff] %vm714, %v1060
      %1125 = vst.msk [vmem:[%s3 + $0x98] sm:$0xff] %vm714, %v1061
      %1126 = vst.msk [vmem:[%s3 + $0xa0] sm:$0xff] %vm714, %v1062
      %1127 = vst.msk [vmem:[%s3 + $0xa8] sm:$0xff] %vm714, %v1063
      %1128 = vst.msk [vmem:[%s3 + $0xb0] sm:$0xff] %vm714, %v1064
      %1129 = vst.msk [vmem:[%s3 + $0xb8] sm:$0xff] %vm714, %v1065
      %1130 = vst.msk [vmem:[%s3 + $0xc0] sm:$0xff] %vm714, %v1066
      %1131 = vst.msk [vmem:[%s3 + $0xc8] sm:$0xff] %vm714, %v1067
      %1132 = vst.msk [vmem:[%s3 + $0xd0] sm:$0xff] %vm714, %v1068
      %1133 = vst.msk [vmem:[%s3 + $0xd8] sm:$0xff] %vm714, %v1069
      %1134 = vst.msk [vmem:[%s3 + $0xe0] sm:$0xff] %vm714, %v1070
      %1135 = vst.msk [vmem:[%s3 + $0xe8] sm:$0xff] %vm714, %v1071
      %1136 = vst.msk [vmem:[%s3 + $0xf0] sm:$0xff] %vm714, %v1072
      %1137 = vst.msk [vmem:[%s3 + $0xf8] sm:$0xff] %vm714, %v1073
      %1138 = vst.msk [vmem:[%s3 + $0x100] sm:$0xff] %vm714, %v1074
      %1139 = vst.msk [vmem:[%s3 + $0x108] sm:$0xff] %vm714, %v1075
      %1140 = vst.msk [vmem:[%s3 + $0x110] sm:$0xff] %vm714, %v1076
      %1141 = vst.msk [vmem:[%s3 + $0x118] sm:$0xff] %vm714, %v1077
      %1142 = vst.msk [vmem:[%s3 + $0x120] sm:$0xff] %vm714, %v1078
      %1143 = vst.msk [vmem:[%s3 + $0x128] sm:$0xff] %vm714, %v1079
      %1144 = vst.msk [vmem:[%s3 + $0x130] sm:$0xff] %vm714, %v1080
      %1145 = vst.msk [vmem:[%s3 + $0x138] sm:$0xff] %vm714, %v1081
      %1146 = vst.msk [vmem:[%s3 + $0x140] sm:$0xff] %vm714, %v1082
      %1147 = vst.msk [vmem:[%s3 + $0x148] sm:$0xff] %vm714, %v1083
      %1148 = vst.msk [vmem:[%s3 + $0x150] sm:$0xff] %vm714, %v1084
      %1149 = vst.msk [vmem:[%s3 + $0x158] sm:$0xff] %vm714, %v1085
      %1150 = vst.msk [vmem:[%s3 + $0x160] sm:$0xff] %vm714, %v1086
      %1151 = vst.msk [vmem:[%s3 + $0x168] sm:$0xff] %vm714, %v1087
      %1152 = vst.msk [vmem:[%s3 + $0x170] sm:$0xff] %vm714, %v1088
      %1153 = vst.msk [vmem:[%s3 + $0x178] sm:$0xff] %vm714, %v1089
      %1154 = vst.msk [vmem:[%s3 + $0x180] sm:$0xff] %vm714, %v1090
      %1155 = vst.msk [vmem:[%s3 + $0x188] sm:$0xff] %vm714, %v1091
      %1156 = vst.msk [vmem:[%s3 + $0x190] sm:$0xff] %vm714, %v1092
      %1157 = vst.msk [vmem:[%s3 + $0x198] sm:$0xff] %vm714, %v1093
      %1158 = vst.msk [vmem:[%s3 + $0x1a0] sm:$0xff] %vm714, %v1094
      %1159 = vst.msk [vmem:[%s3 + $0x1a8] sm:$0xff] %vm714, %v1095
      %1160 = vst.msk [vmem:[%s3 + $0x1b0] sm:$0xff] %vm714, %v1096
      %1161 = vst.msk [vmem:[%s3 + $0x1b8] sm:$0xff] %vm714, %v1097
      %1162 = vst.msk [vmem:[%s3 + $0x1c0] sm:$0xff] %vm714, %v1098
      %1163 = vst.msk [vmem:[%s3 + $0x1c8] sm:$0xff] %vm714, %v1099
      %1164 = vst.msk [vmem:[%s3 + $0x1d0] sm:$0xff] %vm714, %v1100
      %1165 = vst.msk [vmem:[%s3 + $0x1d8] sm:$0xff] %vm714, %v1101
      %1166 = vst.msk [vmem:[%s3 + $0x1e0] sm:$0xff] %vm714, %v1102
      %1167 = vst.msk [vmem:[%s3 + $0x1e8] sm:$0xff] %vm714, %v1103
      %1168 = vst.msk [vmem:[%s3 + $0x1f0] sm:$0xff] %vm714, %v1104
      %1169 = vst.msk [vmem:[%s3 + $0x1f8] sm:$0xff] %vm714, %v1105
    $region25: #{discriminator_forward.9} parent=1 // pred_fallthru
      _
    // Predicated region
    $region26: #{discriminator_forward.9} parent=1 // pred_check
      _
    $region27: #{discriminator_forward.9} parent=1 // pred_check_branch
      %1171 = sbr.rel (0) target = $region29
    $region28: #{discriminator_forward.9} parent=1 // pred_region
      _
    $region29: #{discriminator_forward.9} parent=1 // pred_fallthru
      _
    // Predicated region
    $region30: #{discriminator_forward.9} parent=1 // pred_check
      _
    $region31: #{discriminator_forward.9} parent=1 // pred_check_branch
      %1173 = sbr.rel (0) target = $region33
    $region32: #{discriminator_forward.9} parent=1 // pred_region
      _
    $region33: #{discriminator_forward.9} parent=1 // pred_fallthru
      _
    %1174 = vsyncpa [#allocation4], 1

// kernel: discriminator_forward.10
$region0: #{discriminator_forward.10}
  #allocation0 [shape = 'u32[]', space=smem, size = 0x4, offset = 0x4, fixed_abs, tag = 'smem constant byte address 0x4 - core index']
  #allocation1 [shape = 'u32[72,128]{1,0:T(1,128)}', space=vmem, size = 0x9000, scoped, tag = 'internal scratch']
  #allocation2 [shape = 'f32[128,128]{1,0:T(8,128)}', space=vmem, size = 0x10000, scoped, tag = 'scratch operand']
  %s0 = inlined_call_operand.vmem [shape: bf16[128,1024], index: 0, kind: input, shape index: {}]
  %s1 = inlined_call_operand.vmem [shape: bf16[1024,128], index: 1, kind: input, shape index: {}]
  %s2 = inlined_call_operand.vmem [shape: f32[1,128], index: 2, kind: input, shape index: {}]
  %s3 = inlined_call_operand.vmem [shape: f32[128,128], index: 3, kind: output, shape index: {}]
  %s4 = sld [smem:[#allocation0]]
  $region30: #{discriminator_forward.10} parent=0
    _
  %s6 = ssub.s32 1, %s4
  %s7 = scalar_select 0, %s6, %s4
  // Predicated region
  $region2: #{discriminator_forward.10} parent=0 // pred_check
    _
  $region3: #{discriminator_forward.10} parent=0 // pred_check_branch
    %9 = sbr.rel (0) target = $region5
  $region4: #{discriminator_forward.10} parent=0 // pred_region
    _
  $region5: #{discriminator_forward.10} parent=0 // pred_fallthru
    _
  // Predicated region
  $region6: #{discriminator_forward.10} parent=0 // pred_check
    _
  $region7: #{discriminator_forward.10} parent=0 // pred_check_branch
    %11 = sbr.rel (0) target = $region9
  $region8: #{discriminator_forward.10} parent=0 // pred_region
    _
  $region9: #{discriminator_forward.10} parent=0 // pred_fallthru
    _
  // Predicated region
  $region10: #{discriminator_forward.10} parent=0 // pred_check
    _
  $region11: #{discriminator_forward.10} parent=0 // pred_check_branch
    %13 = sbr.rel (0) target = $region13
  $region12: #{discriminator_forward.10} parent=0 // pred_region
    _
  $region13: #{discriminator_forward.10} parent=0 // pred_fallthru
    _
  %p14 = scmp.eq.s32.totalorder 0, 0
  // Predicated region
  $region14: #{discriminator_forward.10} parent=0 // pred_check
    %p15 = pneg %p14
  $region15: #{discriminator_forward.10} parent=0 // pred_check_branch
    %17 = sbr.rel (%p15) target = $region17
  $region16: #{discriminator_forward.10} parent=0 // pred_region
    %18 = vst [vmem:[#allocation2] sm:$0xff] 0.0
    %19 = vst [vmem:[#allocation2 + $0x8] sm:$0xff] 0.0
    %20 = vst [vmem:[#allocation2 + $0x10] sm:$0xff] 0.0
    %21 = vst [vmem:[#allocation2 + $0x18] sm:$0xff] 0.0
    %22 = vst [vmem:[#allocation2 + $0x20] sm:$0xff] 0.0
    %23 = vst [vmem:[#allocation2 + $0x28] sm:$0xff] 0.0
    %24 = vst [vmem:[#allocation2 + $0x30] sm:$0xff] 0.0
    %25 = vst [vmem:[#allocation2 + $0x38] sm:$0xff] 0.0
    %26 = vst [vmem:[#allocation2 + $0x40] sm:$0xff] 0.0
    %27 = vst [vmem:[#allocation2 + $0x48] sm:$0xff] 0.0
    %28 = vst [vmem:[#allocation2 + $0x50] sm:$0xff] 0.0
    %29 = vst [vmem:[#allocation2 + $0x58] sm:$0xff] 0.0
    %30 = vst [vmem:[#allocation2 + $0x60] sm:$0xff] 0.0
    %31 = vst [vmem:[#allocation2 + $0x68] sm:$0xff] 0.0
    %32 = vst [vmem:[#allocation2 + $0x70] sm:$0xff] 0.0
    %33 = vst [vmem:[#allocation2 + $0x78] sm:$0xff] 0.0
  $region17: #{discriminator_forward.10} parent=0 // pred_fallthru
    _
  %v34 = vld [vmem:[#allocation2] sm:$0xff]
  %v35 = vld [vmem:[#allocation2 + $0x8] sm:$0xff]
  %v36 = vld [vmem:[#allocation2 + $0x10] sm:$0xff]
  %v37 = vld [vmem:[#allocation2 + $0x18] sm:$0xff]
  %v38 = vld [vmem:[#allocation2 + $0x20] sm:$0xff]
  %v39 = vld [vmem:[#allocation2 + $0x28] sm:$0xff]
  %v40 = vld [vmem:[#allocation2 + $0x30] sm:$0xff]
  %v41 = vld [vmem:[#allocation2 + $0x38] sm:$0xff]
  %v42 = vld [vmem:[#allocation2 + $0x40] sm:$0xff]
  %v43 = vld [vmem:[#allocation2 + $0x48] sm:$0xff]
  %v44 = vld [vmem:[#allocation2 + $0x50] sm:$0xff]
  %v45 = vld [vmem:[#allocation2 + $0x58] sm:$0xff]
  %v46 = vld [vmem:[#allocation2 + $0x60] sm:$0xff]
  %v47 = vld [vmem:[#allocation2 + $0x68] sm:$0xff]
  %v48 = vld [vmem:[#allocation2 + $0x70] sm:$0xff]
  %v49 = vld [vmem:[#allocation2 + $0x78] sm:$0xff]
  %v50 = vld [vmem:[%s0] sm:$0xff]
  %v51 = vld [vmem:[%s0 + $0x8] sm:$0xff]
  %v52 = vld [vmem:[%s0 + $0x10] sm:$0xff]
  %v53 = vld [vmem:[%s0 + $0x18] sm:$0xff]
  %v54 = vld [vmem:[%s0 + $0x20] sm:$0xff]
  %v55 = vld [vmem:[%s0 + $0x28] sm:$0xff]
  %v56 = vld [vmem:[%s0 + $0x30] sm:$0xff]
  %v57 = vld [vmem:[%s0 + $0x38] sm:$0xff]
  %v58 = vld [vmem:[%s0 + $0x40] sm:$0xff]
  %v59 = vld [vmem:[%s0 + $0x48] sm:$0xff]
  %v60 = vld [vmem:[%s0 + $0x50] sm:$0xff]
  %v61 = vld [vmem:[%s0 + $0x58] sm:$0xff]
  %v62 = vld [vmem:[%s0 + $0x60] sm:$0xff]
  %v63 = vld [vmem:[%s0 + $0x68] sm:$0xff]
  %v64 = vld [vmem:[%s0 + $0x70] sm:$0xff]
  %v65 = vld [vmem:[%s0 + $0x78] sm:$0xff]
  %v66 = vld [vmem:[%s0 + $0x80] sm:$0xff]
  %v67 = vld [vmem:[%s0 + $0x88] sm:$0xff]
  %v68 = vld [vmem:[%s0 + $0x90] sm:$0xff]
  %v69 = vld [vmem:[%s0 + $0x98] sm:$0xff]
  %v70 = vld [vmem:[%s0 + $0xa0] sm:$0xff]
  %v71 = vld [vmem:[%s0 + $0xa8] sm:$0xff]
  %v72 = vld [vmem:[%s0 + $0xb0] sm:$0xff]
  %v73 = vld [vmem:[%s0 + $0xb8] sm:$0xff]
  %v74 = vld [vmem:[%s0 + $0xc0] sm:$0xff]
  %v75 = vld [vmem:[%s0 + $0xc8] sm:$0xff]
  %v76 = vld [vmem:[%s0 + $0xd0] sm:$0xff]
  %v77 = vld [vmem:[%s0 + $0xd8] sm:$0xff]
  %v78 = vld [vmem:[%s0 + $0xe0] sm:$0xff]
  %v79 = vld [vmem:[%s0 + $0xe8] sm:$0xff]
  %v80 = vld [vmem:[%s0 + $0xf0] sm:$0xff]
  %v81 = vld [vmem:[%s0 + $0xf8] sm:$0xff]
  %v82 = vld [vmem:[%s0 + $0x100] sm:$0xff]
  %v83 = vld [vmem:[%s0 + $0x108] sm:$0xff]
  %v84 = vld [vmem:[%s0 + $0x110] sm:$0xff]
  %v85 = vld [vmem:[%s0 + $0x118] sm:$0xff]
  %v86 = vld [vmem:[%s0 + $0x120] sm:$0xff]
  %v87 = vld [vmem:[%s0 + $0x128] sm:$0xff]
  %v88 = vld [vmem:[%s0 + $0x130] sm:$0xff]
  %v89 = vld [vmem:[%s0 + $0x138] sm:$0xff]
  %v90 = vld [vmem:[%s0 + $0x140] sm:$0xff]
  %v91 = vld [vmem:[%s0 + $0x148] sm:$0xff]
  %v92 = vld [vmem:[%s0 + $0x150] sm:$0xff]
  %v93 = vld [vmem:[%s0 + $0x158] sm:$0xff]
  %v94 = vld [vmem:[%s0 + $0x160] sm:$0xff]
  %v95 = vld [vmem:[%s0 + $0x168] sm:$0xff]
  %v96 = vld [vmem:[%s0 + $0x170] sm:$0xff]
  %v97 = vld [vmem:[%s0 + $0x178] sm:$0xff]
  %v98 = vld [vmem:[%s0 + $0x180] sm:$0xff]
  %v99 = vld [vmem:[%s0 + $0x188] sm:$0xff]
  %v100 = vld [vmem:[%s0 + $0x190] sm:$0xff]
  %v101 = vld [vmem:[%s0 + $0x198] sm:$0xff]
  %v102 = vld [vmem:[%s0 + $0x1a0] sm:$0xff]
  %v103 = vld [vmem:[%s0 + $0x1a8] sm:$0xff]
  %v104 = vld [vmem:[%s0 + $0x1b0] sm:$0xff]
  %v105 = vld [vmem:[%s0 + $0x1b8] sm:$0xff]
  %v106 = vld [vmem:[%s0 + $0x1c0] sm:$0xff]
  %v107 = vld [vmem:[%s0 + $0x1c8] sm:$0xff]
  %v108 = vld [vmem:[%s0 + $0x1d0] sm:$0xff]
  %v109 = vld [vmem:[%s0 + $0x1d8] sm:$0xff]
  %v110 = vld [vmem:[%s0 + $0x1e0] sm:$0xff]
  %v111 = vld [vmem:[%s0 + $0x1e8] sm:$0xff]
  %v112 = vld [vmem:[%s0 + $0x1f0] sm:$0xff]
  %v113 = vld [vmem:[%s0 + $0x1f8] sm:$0xff]
  %v114 = vld [vmem:[%s1] sm:$0xf]
  %v115 = vld [vmem:[%s1 + $0x4] sm:$0xf]
  %v116 = vld [vmem:[%s1 + $0x8] sm:$0xf]
  %v117 = vld [vmem:[%s1 + $0xc] sm:$0xf]
  %v118 = vld [vmem:[%s1 + $0x10] sm:$0xf]
  %v119 = vld [vmem:[%s1 + $0x14] sm:$0xf]
  %v120 = vld [vmem:[%s1 + $0x18] sm:$0xf]
  %v121 = vld [vmem:[%s1 + $0x1c] sm:$0xf]
  %v122 = vld [vmem:[%s1 + $0x20] sm:$0xf]
  %v123 = vld [vmem:[%s1 + $0x24] sm:$0xf]
  %v124 = vld [vmem:[%s1 + $0x28] sm:$0xf]
  %v125 = vld [vmem:[%s1 + $0x2c] sm:$0xf]
  %v126 = vld [vmem:[%s1 + $0x30] sm:$0xf]
  %v127 = vld [vmem:[%s1 + $0x34] sm:$0xf]
  %v128 = vld [vmem:[%s1 + $0x38] sm:$0xf]
  %v129 = vld [vmem:[%s1 + $0x3c] sm:$0xf]
  %v130 = vld [vmem:[%s1 + $0x40] sm:$0xf]
  %v131 = vld [vmem:[%s1 + $0x44] sm:$0xf]
  %v132 = vld [vmem:[%s1 + $0x48] sm:$0xf]
  %v133 = vld [vmem:[%s1 + $0x4c] sm:$0xf]
  %v134 = vld [vmem:[%s1 + $0x50] sm:$0xf]
  %v135 = vld [vmem:[%s1 + $0x54] sm:$0xf]
  %v136 = vld [vmem:[%s1 + $0x58] sm:$0xf]
  %v137 = vld [vmem:[%s1 + $0x5c] sm:$0xf]
  %v138 = vld [vmem:[%s1 + $0x60] sm:$0xf]
  %v139 = vld [vmem:[%s1 + $0x64] sm:$0xf]
  %v140 = vld [vmem:[%s1 + $0x68] sm:$0xf]
  %v141 = vld [vmem:[%s1 + $0x6c] sm:$0xf]
  %v142 = vld [vmem:[%s1 + $0x70] sm:$0xf]
  %v143 = vld [vmem:[%s1 + $0x74] sm:$0xf]
  %v144 = vld [vmem:[%s1 + $0x78] sm:$0xf]
  %v145 = vld [vmem:[%s1 + $0x7c] sm:$0xf]
  %v146 = vld [vmem:[%s1 + $0x80] sm:$0xf]
  %v147 = vld [vmem:[%s1 + $0x84] sm:$0xf]
  %v148 = vld [vmem:[%s1 + $0x88] sm:$0xf]
  %v149 = vld [vmem:[%s1 + $0x8c] sm:$0xf]
  %v150 = vld [vmem:[%s1 + $0x90] sm:$0xf]
  %v151 = vld [vmem:[%s1 + $0x94] sm:$0xf]
  %v152 = vld [vmem:[%s1 + $0x98] sm:$0xf]
  %v153 = vld [vmem:[%s1 + $0x9c] sm:$0xf]
  %v154 = vld [vmem:[%s1 + $0xa0] sm:$0xf]
  %v155 = vld [vmem:[%s1 + $0xa4] sm:$0xf]
  %v156 = vld [vmem:[%s1 + $0xa8] sm:$0xf]
  %v157 = vld [vmem:[%s1 + $0xac] sm:$0xf]
  %v158 = vld [vmem:[%s1 + $0xb0] sm:$0xf]
  %v159 = vld [vmem:[%s1 + $0xb4] sm:$0xf]
  %v160 = vld [vmem:[%s1 + $0xb8] sm:$0xf]
  %v161 = vld [vmem:[%s1 + $0xbc] sm:$0xf]
  %v162 = vld [vmem:[%s1 + $0xc0] sm:$0xf]
  %v163 = vld [vmem:[%s1 + $0xc4] sm:$0xf]
  %v164 = vld [vmem:[%s1 + $0xc8] sm:$0xf]
  %v165 = vld [vmem:[%s1 + $0xcc] sm:$0xf]
  %v166 = vld [vmem:[%s1 + $0xd0] sm:$0xf]
  %v167 = vld [vmem:[%s1 + $0xd4] sm:$0xf]
  %v168 = vld [vmem:[%s1 + $0xd8] sm:$0xf]
  %v169 = vld [vmem:[%s1 + $0xdc] sm:$0xf]
  %v170 = vld [vmem:[%s1 + $0xe0] sm:$0xf]
  %v171 = vld [vmem:[%s1 + $0xe4] sm:$0xf]
  %v172 = vld [vmem:[%s1 + $0xe8] sm:$0xf]
  %v173 = vld [vmem:[%s1 + $0xec] sm:$0xf]
  %v174 = vld [vmem:[%s1 + $0xf0] sm:$0xf]
  %v175 = vld [vmem:[%s1 + $0xf4] sm:$0xf]
  %v176 = vld [vmem:[%s1 + $0xf8] sm:$0xf]
  %v177 = vld [vmem:[%s1 + $0xfc] sm:$0xf]
  %v178 = vld [vmem:[%s1 + $0x100] sm:$0xf]
  %v179 = vld [vmem:[%s1 + $0x104] sm:$0xf]
  %v180 = vld [vmem:[%s1 + $0x108] sm:$0xf]
  %v181 = vld [vmem:[%s1 + $0x10c] sm:$0xf]
  %v182 = vld [vmem:[%s1 + $0x110] sm:$0xf]
  %v183 = vld [vmem:[%s1 + $0x114] sm:$0xf]
  %v184 = vld [vmem:[%s1 + $0x118] sm:$0xf]
  %v185 = vld [vmem:[%s1 + $0x11c] sm:$0xf]
  %v186 = vld [vmem:[%s1 + $0x120] sm:$0xf]
  %v187 = vld [vmem:[%s1 + $0x124] sm:$0xf]
  %v188 = vld [vmem:[%s1 + $0x128] sm:$0xf]
  %v189 = vld [vmem:[%s1 + $0x12c] sm:$0xf]
  %v190 = vld [vmem:[%s1 + $0x130] sm:$0xf]
  %v191 = vld [vmem:[%s1 + $0x134] sm:$0xf]
  %v192 = vld [vmem:[%s1 + $0x138] sm:$0xf]
  %v193 = vld [vmem:[%s1 + $0x13c] sm:$0xf]
  %v194 = vld [vmem:[%s1 + $0x140] sm:$0xf]
  %v195 = vld [vmem:[%s1 + $0x144] sm:$0xf]
  %v196 = vld [vmem:[%s1 + $0x148] sm:$0xf]
  %v197 = vld [vmem:[%s1 + $0x14c] sm:$0xf]
  %v198 = vld [vmem:[%s1 + $0x150] sm:$0xf]
  %v199 = vld [vmem:[%s1 + $0x154] sm:$0xf]
  %v200 = vld [vmem:[%s1 + $0x158] sm:$0xf]
  %v201 = vld [vmem:[%s1 + $0x15c] sm:$0xf]
  %v202 = vld [vmem:[%s1 + $0x160] sm:$0xf]
  %v203 = vld [vmem:[%s1 + $0x164] sm:$0xf]
  %v204 = vld [vmem:[%s1 + $0x168] sm:$0xf]
  %v205 = vld [vmem:[%s1 + $0x16c] sm:$0xf]
  %v206 = vld [vmem:[%s1 + $0x170] sm:$0xf]
  %v207 = vld [vmem:[%s1 + $0x174] sm:$0xf]
  %v208 = vld [vmem:[%s1 + $0x178] sm:$0xf]
  %v209 = vld [vmem:[%s1 + $0x17c] sm:$0xf]
  %v210 = vld [vmem:[%s1 + $0x180] sm:$0xf]
  %v211 = vld [vmem:[%s1 + $0x184] sm:$0xf]
  %v212 = vld [vmem:[%s1 + $0x188] sm:$0xf]
  %v213 = vld [vmem:[%s1 + $0x18c] sm:$0xf]
  %v214 = vld [vmem:[%s1 + $0x190] sm:$0xf]
  %v215 = vld [vmem:[%s1 + $0x194] sm:$0xf]
  %v216 = vld [vmem:[%s1 + $0x198] sm:$0xf]
  %v217 = vld [vmem:[%s1 + $0x19c] sm:$0xf]
  %v218 = vld [vmem:[%s1 + $0x1a0] sm:$0xf]
  %v219 = vld [vmem:[%s1 + $0x1a4] sm:$0xf]
  %v220 = vld [vmem:[%s1 + $0x1a8] sm:$0xf]
  %v221 = vld [vmem:[%s1 + $0x1ac] sm:$0xf]
  %v222 = vld [vmem:[%s1 + $0x1b0] sm:$0xf]
  %v223 = vld [vmem:[%s1 + $0x1b4] sm:$0xf]
  %v224 = vld [vmem:[%s1 + $0x1b8] sm:$0xf]
  %v225 = vld [vmem:[%s1 + $0x1bc] sm:$0xf]
  %v226 = vld [vmem:[%s1 + $0x1c0] sm:$0xf]
  %v227 = vld [vmem:[%s1 + $0x1c4] sm:$0xf]
  %v228 = vld [vmem:[%s1 + $0x1c8] sm:$0xf]
  %v229 = vld [vmem:[%s1 + $0x1cc] sm:$0xf]
  %v230 = vld [vmem:[%s1 + $0x1d0] sm:$0xf]
  %v231 = vld [vmem:[%s1 + $0x1d4] sm:$0xf]
  %v232 = vld [vmem:[%s1 + $0x1d8] sm:$0xf]
  %v233 = vld [vmem:[%s1 + $0x1dc] sm:$0xf]
  %v234 = vld [vmem:[%s1 + $0x1e0] sm:$0xf]
  %v235 = vld [vmem:[%s1 + $0x1e4] sm:$0xf]
  %v236 = vld [vmem:[%s1 + $0x1e8] sm:$0xf]
  %v237 = vld [vmem:[%s1 + $0x1ec] sm:$0xf]
  %v238 = vld [vmem:[%s1 + $0x1f0] sm:$0xf]
  %v239 = vld [vmem:[%s1 + $0x1f4] sm:$0xf]
  %v240 = vld [vmem:[%s1 + $0x1f8] sm:$0xf]
  %v241 = vld [vmem:[%s1 + $0x1fc] sm:$0xf]
  %v306 = vunpack.c.l.b16 %v50
  %v307 = vunpack.c.h.b16 %v50
  %v308 = vunpack.c.l.b16 %v51
  %v309 = vunpack.c.h.b16 %v51
  %v310 = vunpack.c.l.b16 %v52
  %v311 = vunpack.c.h.b16 %v52
  %v312 = vunpack.c.l.b16 %v53
  %v313 = vunpack.c.h.b16 %v53
  %v314 = vunpack.c.l.b16 %v54
  %v315 = vunpack.c.h.b16 %v54
  %v316 = vunpack.c.l.b16 %v55
  %v317 = vunpack.c.h.b16 %v55
  %v318 = vunpack.c.l.b16 %v56
  %v319 = vunpack.c.h.b16 %v56
  %v320 = vunpack.c.l.b16 %v57
  %v321 = vunpack.c.h.b16 %v57
  %v322 = vunpack.c.l.b16 %v58
  %v323 = vunpack.c.h.b16 %v58
  %v324 = vunpack.c.l.b16 %v59
  %v325 = vunpack.c.h.b16 %v59
  %v326 = vunpack.c.l.b16 %v60
  %v327 = vunpack.c.h.b16 %v60
  %v328 = vunpack.c.l.b16 %v61
  %v329 = vunpack.c.h.b16 %v61
  %v330 = vunpack.c.l.b16 %v62
  %v331 = vunpack.c.h.b16 %v62
  %v332 = vunpack.c.l.b16 %v63
  %v333 = vunpack.c.h.b16 %v63
  %v334 = vunpack.c.l.b16 %v64
  %v335 = vunpack.c.h.b16 %v64
  %v336 = vunpack.c.l.b16 %v65
  %v337 = vunpack.c.h.b16 %v65
  %v338 = vunpack.c.l.b16 %v66
  %v339 = vunpack.c.h.b16 %v66
  %v340 = vunpack.c.l.b16 %v67
  %v341 = vunpack.c.h.b16 %v67
  %v342 = vunpack.c.l.b16 %v68
  %v343 = vunpack.c.h.b16 %v68
  %v344 = vunpack.c.l.b16 %v69
  %v345 = vunpack.c.h.b16 %v69
  %v346 = vunpack.c.l.b16 %v70
  %v347 = vunpack.c.h.b16 %v70
  %v348 = vunpack.c.l.b16 %v71
  %v349 = vunpack.c.h.b16 %v71
  %v350 = vunpack.c.l.b16 %v72
  %v351 = vunpack.c.h.b16 %v72
  %v352 = vunpack.c.l.b16 %v73
  %v353 = vunpack.c.h.b16 %v73
  %v354 = vunpack.c.l.b16 %v74
  %v355 = vunpack.c.h.b16 %v74
  %v356 = vunpack.c.l.b16 %v75
  %v357 = vunpack.c.h.b16 %v75
  %v358 = vunpack.c.l.b16 %v76
  %v359 = vunpack.c.h.b16 %v76
  %v360 = vunpack.c.l.b16 %v77
  %v361 = vunpack.c.h.b16 %v77
  %v362 = vunpack.c.l.b16 %v78
  %v363 = vunpack.c.h.b16 %v78
  %v364 = vunpack.c.l.b16 %v79
  %v365 = vunpack.c.h.b16 %v79
  %v366 = vunpack.c.l.b16 %v80
  %v367 = vunpack.c.h.b16 %v80
  %v368 = vunpack.c.l.b16 %v81
  %v369 = vunpack.c.h.b16 %v81
  %v370 = vunpack.c.l.b16 %v82
  %v371 = vunpack.c.h.b16 %v82
  %v372 = vunpack.c.l.b16 %v83
  %v373 = vunpack.c.h.b16 %v83
  %v374 = vunpack.c.l.b16 %v84
  %v375 = vunpack.c.h.b16 %v84
  %v376 = vunpack.c.l.b16 %v85
  %v377 = vunpack.c.h.b16 %v85
  %v378 = vunpack.c.l.b16 %v86
  %v379 = vunpack.c.h.b16 %v86
  %v380 = vunpack.c.l.b16 %v87
  %v381 = vunpack.c.h.b16 %v87
  %v382 = vunpack.c.l.b16 %v88
  %v383 = vunpack.c.h.b16 %v88
  %v384 = vunpack.c.l.b16 %v89
  %v385 = vunpack.c.h.b16 %v89
  %v386 = vunpack.c.l.b16 %v90
  %v387 = vunpack.c.h.b16 %v90
  %v388 = vunpack.c.l.b16 %v91
  %v389 = vunpack.c.h.b16 %v91
  %v390 = vunpack.c.l.b16 %v92
  %v391 = vunpack.c.h.b16 %v92
  %v392 = vunpack.c.l.b16 %v93
  %v393 = vunpack.c.h.b16 %v93
  %v394 = vunpack.c.l.b16 %v94
  %v395 = vunpack.c.h.b16 %v94
  %v396 = vunpack.c.l.b16 %v95
  %v397 = vunpack.c.h.b16 %v95
  %v398 = vunpack.c.l.b16 %v96
  %v399 = vunpack.c.h.b16 %v96
  %v400 = vunpack.c.l.b16 %v97
  %v401 = vunpack.c.h.b16 %v97
  %v402 = vunpack.c.l.b16 %v98
  %v403 = vunpack.c.h.b16 %v98
  %v404 = vunpack.c.l.b16 %v99
  %v405 = vunpack.c.h.b16 %v99
  %v406 = vunpack.c.l.b16 %v100
  %v407 = vunpack.c.h.b16 %v100
  %v408 = vunpack.c.l.b16 %v101
  %v409 = vunpack.c.h.b16 %v101
  %v410 = vunpack.c.l.b16 %v102
  %v411 = vunpack.c.h.b16 %v102
  %v412 = vunpack.c.l.b16 %v103
  %v413 = vunpack.c.h.b16 %v103
  %v414 = vunpack.c.l.b16 %v104
  %v415 = vunpack.c.h.b16 %v104
  %v416 = vunpack.c.l.b16 %v105
  %v417 = vunpack.c.h.b16 %v105
  %v418 = vunpack.c.l.b16 %v106
  %v419 = vunpack.c.h.b16 %v106
  %v420 = vunpack.c.l.b16 %v107
  %v421 = vunpack.c.h.b16 %v107
  %v422 = vunpack.c.l.b16 %v108
  %v423 = vunpack.c.h.b16 %v108
  %v424 = vunpack.c.l.b16 %v109
  %v425 = vunpack.c.h.b16 %v109
  %v426 = vunpack.c.l.b16 %v110
  %v427 = vunpack.c.h.b16 %v110
  %v428 = vunpack.c.l.b16 %v111
  %v429 = vunpack.c.h.b16 %v111
  %v430 = vunpack.c.l.b16 %v112
  %v431 = vunpack.c.h.b16 %v112
  %v432 = vunpack.c.l.b16 %v113
  %v433 = vunpack.c.h.b16 %v113
  %v434 = vpack.c.b16 %v314, %v306
  %v435 = vpack.c.b16 %v315, %v307
  %v436 = vpack.c.b16 %v316, %v308
  %v437 = vpack.c.b16 %v317, %v309
  %v438 = vpack.c.b16 %v318, %v310
  %v439 = vpack.c.b16 %v319, %v311
  %v440 = vpack.c.b16 %v320, %v312
  %v441 = vpack.c.b16 %v321, %v313
  %v442 = vpack.c.b16 %v330, %v322
  %v443 = vpack.c.b16 %v331, %v323
  %v444 = vpack.c.b16 %v332, %v324
  %v445 = vpack.c.b16 %v333, %v325
  %v446 = vpack.c.b16 %v334, %v326
  %v447 = vpack.c.b16 %v335, %v327
  %v448 = vpack.c.b16 %v336, %v328
  %v449 = vpack.c.b16 %v337, %v329
  %v450 = vpack.c.b16 %v346, %v338
  %v451 = vpack.c.b16 %v347, %v339
  %v452 = vpack.c.b16 %v348, %v340
  %v453 = vpack.c.b16 %v349, %v341
  %v454 = vpack.c.b16 %v350, %v342
  %v455 = vpack.c.b16 %v351, %v343
  %v456 = vpack.c.b16 %v352, %v344
  %v457 = vpack.c.b16 %v353, %v345
  %v458 = vpack.c.b16 %v362, %v354
  %v459 = vpack.c.b16 %v363, %v355
  %v460 = vpack.c.b16 %v364, %v356
  %v461 = vpack.c.b16 %v365, %v357
  %v462 = vpack.c.b16 %v366, %v358
  %v463 = vpack.c.b16 %v367, %v359
  %v464 = vpack.c.b16 %v368, %v360
  %v465 = vpack.c.b16 %v369, %v361
  %v466 = vpack.c.b16 %v378, %v370
  %v467 = vpack.c.b16 %v379, %v371
  %v468 = vpack.c.b16 %v380, %v372
  %v469 = vpack.c.b16 %v381, %v373
  %v470 = vpack.c.b16 %v382, %v374
  %v471 = vpack.c.b16 %v383, %v375
  %v472 = vpack.c.b16 %v384, %v376
  %v473 = vpack.c.b16 %v385, %v377
  %v474 = vpack.c.b16 %v394, %v386
  %v475 = vpack.c.b16 %v395, %v387
  %v476 = vpack.c.b16 %v396, %v388
  %v477 = vpack.c.b16 %v397, %v389
  %v478 = vpack.c.b16 %v398, %v390
  %v479 = vpack.c.b16 %v399, %v391
  %v480 = vpack.c.b16 %v400, %v392
  %v481 = vpack.c.b16 %v401, %v393
  %v482 = vpack.c.b16 %v410, %v402
  %v483 = vpack.c.b16 %v411, %v403
  %v484 = vpack.c.b16 %v412, %v404
  %v485 = vpack.c.b16 %v413, %v405
  %v486 = vpack.c.b16 %v414, %v406
  %v487 = vpack.c.b16 %v415, %v407
  %v488 = vpack.c.b16 %v416, %v408
  %v489 = vpack.c.b16 %v417, %v409
  %v490 = vpack.c.b16 %v426, %v418
  %v491 = vpack.c.b16 %v427, %v419
  %v492 = vpack.c.b16 %v428, %v420
  %v493 = vpack.c.b16 %v429, %v421
  %v494 = vpack.c.b16 %v430, %v422
  %v495 = vpack.c.b16 %v431, %v423
  %v496 = vpack.c.b16 %v432, %v424
  %v497 = vpack.c.b16 %v433, %v425
  %v690 = vunpack.c.l.b16 %v114
  %v691 = vunpack.c.l.b16 %v115
  %v692 = vunpack.c.l.b16 %v116
  %v693 = vunpack.c.l.b16 %v117
  %v694 = vunpack.c.l.b16 %v118
  %v695 = vunpack.c.l.b16 %v119
  %v696 = vunpack.c.l.b16 %v120
  %v697 = vunpack.c.l.b16 %v121
  %v698 = vunpack.c.l.b16 %v122
  %v699 = vunpack.c.l.b16 %v123
  %v700 = vunpack.c.l.b16 %v124
  %v701 = vunpack.c.l.b16 %v125
  %v702 = vunpack.c.l.b16 %v126
  %v703 = vunpack.c.l.b16 %v127
  %v704 = vunpack.c.l.b16 %v128
  %v705 = vunpack.c.l.b16 %v129
  %v706 = vunpack.c.l.b16 %v130
  %v707 = vunpack.c.l.b16 %v131
  %v708 = vunpack.c.l.b16 %v132
  %v709 = vunpack.c.l.b16 %v133
  %v710 = vunpack.c.l.b16 %v134
  %v711 = vunpack.c.l.b16 %v135
  %v712 = vunpack.c.l.b16 %v136
  %v713 = vunpack.c.l.b16 %v137
  %v714 = vunpack.c.l.b16 %v138
  %v715 = vunpack.c.l.b16 %v139
  %v716 = vunpack.c.l.b16 %v140
  %v717 = vunpack.c.l.b16 %v141
  %v718 = vunpack.c.l.b16 %v142
  %v719 = vunpack.c.l.b16 %v143
  %v720 = vunpack.c.l.b16 %v144
  %v721 = vunpack.c.l.b16 %v145
  %v722 = vunpack.c.l.b16 %v146
  %v723 = vunpack.c.l.b16 %v147
  %v724 = vunpack.c.l.b16 %v148
  %v725 = vunpack.c.l.b16 %v149
  %v726 = vunpack.c.l.b16 %v150
  %v727 = vunpack.c.l.b16 %v151
  %v728 = vunpack.c.l.b16 %v152
  %v729 = vunpack.c.l.b16 %v153
  %v730 = vunpack.c.l.b16 %v154
  %v731 = vunpack.c.l.b16 %v155
  %v732 = vunpack.c.l.b16 %v156
  %v733 = vunpack.c.l.b16 %v157
  %v734 = vunpack.c.l.b16 %v158
  %v735 = vunpack.c.l.b16 %v159
  %v736 = vunpack.c.l.b16 %v160
  %v737 = vunpack.c.l.b16 %v161
  %v738 = vunpack.c.l.b16 %v162
  %v739 = vunpack.c.l.b16 %v163
  %v740 = vunpack.c.l.b16 %v164
  %v741 = vunpack.c.l.b16 %v165
  %v742 = vunpack.c.l.b16 %v166
  %v743 = vunpack.c.l.b16 %v167
  %v744 = vunpack.c.l.b16 %v168
  %v745 = vunpack.c.l.b16 %v169
  %v746 = vunpack.c.l.b16 %v170
  %v747 = vunpack.c.l.b16 %v171
  %v748 = vunpack.c.l.b16 %v172
  %v749 = vunpack.c.l.b16 %v173
  %v750 = vunpack.c.l.b16 %v174
  %v751 = vunpack.c.l.b16 %v175
  %v752 = vunpack.c.l.b16 %v176
  %v753 = vunpack.c.l.b16 %v177
  %v754 = vunpack.c.l.b16 %v178
  %v755 = vunpack.c.l.b16 %v179
  %v756 = vunpack.c.l.b16 %v180
  %v757 = vunpack.c.l.b16 %v181
  %v758 = vunpack.c.l.b16 %v182
  %v759 = vunpack.c.l.b16 %v183
  %v760 = vunpack.c.l.b16 %v184
  %v761 = vunpack.c.l.b16 %v185
  %v762 = vunpack.c.l.b16 %v186
  %v763 = vunpack.c.l.b16 %v187
  %v764 = vunpack.c.l.b16 %v188
  %v765 = vunpack.c.l.b16 %v189
  %v766 = vunpack.c.l.b16 %v190
  %v767 = vunpack.c.l.b16 %v191
  %v768 = vunpack.c.l.b16 %v192
  %v769 = vunpack.c.l.b16 %v193
  %v770 = vunpack.c.l.b16 %v194
  %v771 = vunpack.c.l.b16 %v195
  %v772 = vunpack.c.l.b16 %v196
  %v773 = vunpack.c.l.b16 %v197
  %v774 = vunpack.c.l.b16 %v198
  %v775 = vunpack.c.l.b16 %v199
  %v776 = vunpack.c.l.b16 %v200
  %v777 = vunpack.c.l.b16 %v201
  %v778 = vunpack.c.l.b16 %v202
  %v779 = vunpack.c.l.b16 %v203
  %v780 = vunpack.c.l.b16 %v204
  %v781 = vunpack.c.l.b16 %v205
  %v782 = vunpack.c.l.b16 %v206
  %v783 = vunpack.c.l.b16 %v207
  %v784 = vunpack.c.l.b16 %v208
  %v785 = vunpack.c.l.b16 %v209
  %v786 = vunpack.c.l.b16 %v210
  %v787 = vunpack.c.l.b16 %v211
  %v788 = vunpack.c.l.b16 %v212
  %v789 = vunpack.c.l.b16 %v213
  %v790 = vunpack.c.l.b16 %v214
  %v791 = vunpack.c.l.b16 %v215
  %v792 = vunpack.c.l.b16 %v216
  %v793 = vunpack.c.l.b16 %v217
  %v794 = vunpack.c.l.b16 %v218
  %v795 = vunpack.c.l.b16 %v219
  %v796 = vunpack.c.l.b16 %v220
  %v797 = vunpack.c.l.b16 %v221
  %v798 = vunpack.c.l.b16 %v222
  %v799 = vunpack.c.l.b16 %v223
  %v800 = vunpack.c.l.b16 %v224
  %v801 = vunpack.c.l.b16 %v225
  %v802 = vunpack.c.l.b16 %v226
  %v803 = vunpack.c.l.b16 %v227
  %v804 = vunpack.c.l.b16 %v228
  %v805 = vunpack.c.l.b16 %v229
  %v806 = vunpack.c.l.b16 %v230
  %v807 = vunpack.c.l.b16 %v231
  %v808 = vunpack.c.l.b16 %v232
  %v809 = vunpack.c.l.b16 %v233
  %v810 = vunpack.c.l.b16 %v234
  %v811 = vunpack.c.l.b16 %v235
  %v812 = vunpack.c.l.b16 %v236
  %v813 = vunpack.c.l.b16 %v237
  %v814 = vunpack.c.l.b16 %v238
  %v815 = vunpack.c.l.b16 %v239
  %v816 = vunpack.c.l.b16 %v240
  %v817 = vunpack.c.l.b16 %v241
  %v818 = vpack.c.b16 %v691, %v690
  %v819 = vpack.c.b16 %v693, %v692
  %v820 = vpack.c.b16 %v695, %v694
  %v821 = vpack.c.b16 %v697, %v696
  %v822 = vpack.c.b16 %v699, %v698
  %v823 = vpack.c.b16 %v701, %v700
  %v824 = vpack.c.b16 %v703, %v702
  %v825 = vpack.c.b16 %v705, %v704
  %v826 = vpack.c.b16 %v707, %v706
  %v827 = vpack.c.b16 %v709, %v708
  %v828 = vpack.c.b16 %v711, %v710
  %v829 = vpack.c.b16 %v713, %v712
  %v830 = vpack.c.b16 %v715, %v714
  %v831 = vpack.c.b16 %v717, %v716
  %v832 = vpack.c.b16 %v719, %v718
  %v833 = vpack.c.b16 %v721, %v720
  %v834 = vpack.c.b16 %v723, %v722
  %v835 = vpack.c.b16 %v725, %v724
  %v836 = vpack.c.b16 %v727, %v726
  %v837 = vpack.c.b16 %v729, %v728
  %v838 = vpack.c.b16 %v731, %v730
  %v839 = vpack.c.b16 %v733, %v732
  %v840 = vpack.c.b16 %v735, %v734
  %v841 = vpack.c.b16 %v737, %v736
  %v842 = vpack.c.b16 %v739, %v738
  %v843 = vpack.c.b16 %v741, %v740
  %v844 = vpack.c.b16 %v743, %v742
  %v845 = vpack.c.b16 %v745, %v744
  %v846 = vpack.c.b16 %v747, %v746
  %v847 = vpack.c.b16 %v749, %v748
  %v848 = vpack.c.b16 %v751, %v750
  %v849 = vpack.c.b16 %v753, %v752
  %v850 = vpack.c.b16 %v755, %v754
  %v851 = vpack.c.b16 %v757, %v756
  %v852 = vpack.c.b16 %v759, %v758
  %v853 = vpack.c.b16 %v761, %v760
  %v854 = vpack.c.b16 %v763, %v762
  %v855 = vpack.c.b16 %v765, %v764
  %v856 = vpack.c.b16 %v767, %v766
  %v857 = vpack.c.b16 %v769, %v768
  %v858 = vpack.c.b16 %v771, %v770
  %v859 = vpack.c.b16 %v773, %v772
  %v860 = vpack.c.b16 %v775, %v774
  %v861 = vpack.c.b16 %v777, %v776
  %v862 = vpack.c.b16 %v779, %v778
  %v863 = vpack.c.b16 %v781, %v780
  %v864 = vpack.c.b16 %v783, %v782
  %v865 = vpack.c.b16 %v785, %v784
  %v866 = vpack.c.b16 %v787, %v786
  %v867 = vpack.c.b16 %v789, %v788
  %v868 = vpack.c.b16 %v791, %v790
  %v869 = vpack.c.b16 %v793, %v792
  %v870 = vpack.c.b16 %v795, %v794
  %v871 = vpack.c.b16 %v797, %v796
  %v872 = vpack.c.b16 %v799, %v798
  %v873 = vpack.c.b16 %v801, %v800
  %v874 = vpack.c.b16 %v803, %v802
  %v875 = vpack.c.b16 %v805, %v804
  %v876 = vpack.c.b16 %v807, %v806
  %v877 = vpack.c.b16 %v809, %v808
  %v878 = vpack.c.b16 %v811, %v810
  %v879 = vpack.c.b16 %v813, %v812
  %v880 = vpack.c.b16 %v815, %v814
  %v881 = vpack.c.b16 %v817, %v816
  %946 = vmatpush.bf16.msra.mxu0 %v825
  %947 = vmatpush.bf16.msra.mxu0 %v824
  %948 = vmatpush.bf16.msra.mxu0 %v823
  %949 = vmatpush.bf16.msra.mxu0 %v822
  %950 = vmatpush.bf16.msra.mxu0 %v821
  %951 = vmatpush.bf16.msra.mxu0 %v820
  %952 = vmatpush.bf16.msra.mxu0 %v819
  %953 = vmatpush.bf16.msra.mxu0 %v818
  %954 = vmatmul.bf16.gmra.mxu0 %v434
  %v955 = vpop.f32.mrf.mxu0
  %v956 = vadd.f32 0.0, %v955
  %v957 = vpop.f32.mrf.mxu0
  %v958 = vadd.f32 0.0, %v957
  %959 = vmatmul.bf16.gmra.mxu0 %v442
  %v960 = vpop.f32.mrf.mxu0
  %v961 = vadd.f32 0.0, %v960
  %v962 = vpop.f32.mrf.mxu0
  %v963 = vadd.f32 0.0, %v962
  %964 = vmatmul.bf16.gmra.mxu0 %v450
  %v965 = vpop.f32.mrf.mxu0
  %v966 = vadd.f32 0.0, %v965
  %v967 = vpop.f32.mrf.mxu0
  %v968 = vadd.f32 0.0, %v967
  %969 = vmatmul.bf16.gmra.mxu0 %v458
  %v970 = vpop.f32.mrf.mxu0
  %v971 = vadd.f32 0.0, %v970
  %v972 = vpop.f32.mrf.mxu0
  %v973 = vadd.f32 0.0, %v972
  %974 = vmatmul.bf16.gmra.mxu0 %v466
  %v975 = vpop.f32.mrf.mxu0
  %v976 = vadd.f32 0.0, %v975
  %v977 = vpop.f32.mrf.mxu0
  %v978 = vadd.f32 0.0, %v977
  %979 = vmatmul.bf16.gmra.mxu0 %v474
  %v980 = vpop.f32.mrf.mxu0
  %v981 = vadd.f32 0.0, %v980
  %v982 = vpop.f32.mrf.mxu0
  %v983 = vadd.f32 0.0, %v982
  %984 = vmatmul.bf16.gmra.mxu0 %v482
  %v985 = vpop.f32.mrf.mxu0
  %v986 = vadd.f32 0.0, %v985
  %v987 = vpop.f32.mrf.mxu0
  %v988 = vadd.f32 0.0, %v987
  %989 = vmatmul.bf16.gmra.mxu0 %v490
  %v990 = vpop.f32.mrf.mxu0
  %v991 = vadd.f32 0.0, %v990
  %v992 = vpop.f32.mrf.mxu0
  %v993 = vadd.f32 0.0, %v992
  %994 = vdwg.mxu0
  %995 = vmatpush.bf16.msra.mxu0 %v833
  %996 = vmatpush.bf16.msra.mxu0 %v832
  %997 = vmatpush.bf16.msra.mxu0 %v831
  %998 = vmatpush.bf16.msra.mxu0 %v830
  %999 = vmatpush.bf16.msra.mxu0 %v829
  %1000 = vmatpush.bf16.msra.mxu0 %v828
  %1001 = vmatpush.bf16.msra.mxu0 %v827
  %1002 = vmatpush.bf16.msra.mxu0 %v826
  %1003 = vmatmul.bf16.gmra.mxu0 %v435
  %v1004 = vpop.f32.mrf.mxu0
  %v1005 = vadd.f32 %v956, %v1004
  %v1006 = vpop.f32.mrf.mxu0
  %v1007 = vadd.f32 %v958, %v1006
  %1008 = vmatmul.bf16.gmra.mxu0 %v443
  %v1009 = vpop.f32.mrf.mxu0
  %v1010 = vadd.f32 %v961, %v1009
  %v1011 = vpop.f32.mrf.mxu0
  %v1012 = vadd.f32 %v963, %v1011
  %1013 = vmatmul.bf16.gmra.mxu0 %v451
  %v1014 = vpop.f32.mrf.mxu0
  %v1015 = vadd.f32 %v966, %v1014
  %v1016 = vpop.f32.mrf.mxu0
  %v1017 = vadd.f32 %v968, %v1016
  %1018 = vmatmul.bf16.gmra.mxu0 %v459
  %v1019 = vpop.f32.mrf.mxu0
  %v1020 = vadd.f32 %v971, %v1019
  %v1021 = vpop.f32.mrf.mxu0
  %v1022 = vadd.f32 %v973, %v1021
  %1023 = vmatmul.bf16.gmra.mxu0 %v467
  %v1024 = vpop.f32.mrf.mxu0
  %v1025 = vadd.f32 %v976, %v1024
  %v1026 = vpop.f32.mrf.mxu0
  %v1027 = vadd.f32 %v978, %v1026
  %1028 = vmatmul.bf16.gmra.mxu0 %v475
  %v1029 = vpop.f32.mrf.mxu0
  %v1030 = vadd.f32 %v981, %v1029
  %v1031 = vpop.f32.mrf.mxu0
  %v1032 = vadd.f32 %v983, %v1031
  %1033 = vmatmul.bf16.gmra.mxu0 %v483
  %v1034 = vpop.f32.mrf.mxu0
  %v1035 = vadd.f32 %v986, %v1034
  %v1036 = vpop.f32.mrf.mxu0
  %v1037 = vadd.f32 %v988, %v1036
  %1038 = vmatmul.bf16.gmra.mxu0 %v491
  %v1039 = vpop.f32.mrf.mxu0
  %v1040 = vadd.f32 %v991, %v1039
  %v1041 = vpop.f32.mrf.mxu0
  %v1042 = vadd.f32 %v993, %v1041
  %1043 = vdwg.mxu0
  %1044 = vmatpush.bf16.msra.mxu0 %v841
  %1045 = vmatpush.bf16.msra.mxu0 %v840
  %1046 = vmatpush.bf16.msra.mxu0 %v839
  %1047 = vmatpush.bf16.msra.mxu0 %v838
  %1048 = vmatpush.bf16.msra.mxu0 %v837
  %1049 = vmatpush.bf16.msra.mxu0 %v836
  %1050 = vmatpush.bf16.msra.mxu0 %v835
  %1051 = vmatpush.bf16.msra.mxu0 %v834
  %1052 = vmatmul.bf16.gmra.mxu0 %v436
  %v1053 = vpop.f32.mrf.mxu0
  %v1054 = vadd.f32 %v1005, %v1053
  %v1055 = vpop.f32.mrf.mxu0
  %v1056 = vadd.f32 %v1007, %v1055
  %1057 = vmatmul.bf16.gmra.mxu0 %v444
  %v1058 = vpop.f32.mrf.mxu0
  %v1059 = vadd.f32 %v1010, %v1058
  %v1060 = vpop.f32.mrf.mxu0
  %v1061 = vadd.f32 %v1012, %v1060
  %1062 = vmatmul.bf16.gmra.mxu0 %v452
  %v1063 = vpop.f32.mrf.mxu0
  %v1064 = vadd.f32 %v1015, %v1063
  %v1065 = vpop.f32.mrf.mxu0
  %v1066 = vadd.f32 %v1017, %v1065
  %1067 = vmatmul.bf16.gmra.mxu0 %v460
  %v1068 = vpop.f32.mrf.mxu0
  %v1069 = vadd.f32 %v1020, %v1068
  %v1070 = vpop.f32.mrf.mxu0
  %v1071 = vadd.f32 %v1022, %v1070
  %1072 = vmatmul.bf16.gmra.mxu0 %v468
  %v1073 = vpop.f32.mrf.mxu0
  %v1074 = vadd.f32 %v1025, %v1073
  %v1075 = vpop.f32.mrf.mxu0
  %v1076 = vadd.f32 %v1027, %v1075
  %1077 = vmatmul.bf16.gmra.mxu0 %v476
  %v1078 = vpop.f32.mrf.mxu0
  %v1079 = vadd.f32 %v1030, %v1078
  %v1080 = vpop.f32.mrf.mxu0
  %v1081 = vadd.f32 %v1032, %v1080
  %1082 = vmatmul.bf16.gmra.mxu0 %v484
  %v1083 = vpop.f32.mrf.mxu0
  %v1084 = vadd.f32 %v1035, %v1083
  %v1085 = vpop.f32.mrf.mxu0
  %v1086 = vadd.f32 %v1037, %v1085
  %1087 = vmatmul.bf16.gmra.mxu0 %v492
  %v1088 = vpop.f32.mrf.mxu0
  %v1089 = vadd.f32 %v1040, %v1088
  %v1090 = vpop.f32.mrf.mxu0
  %v1091 = vadd.f32 %v1042, %v1090
  %1092 = vdwg.mxu0
  %1093 = vmatpush.bf16.msra.mxu0 %v849
  %1094 = vmatpush.bf16.msra.mxu0 %v848
  %1095 = vmatpush.bf16.msra.mxu0 %v847
  %1096 = vmatpush.bf16.msra.mxu0 %v846
  %1097 = vmatpush.bf16.msra.mxu0 %v845
  %1098 = vmatpush.bf16.msra.mxu0 %v844
  %1099 = vmatpush.bf16.msra.mxu0 %v843
  %1100 = vmatpush.bf16.msra.mxu0 %v842
  %1101 = vmatmul.bf16.gmra.mxu0 %v437
  %v1102 = vpop.f32.mrf.mxu0
  %v1103 = vadd.f32 %v1054, %v1102
  %v1104 = vpop.f32.mrf.mxu0
  %v1105 = vadd.f32 %v1056, %v1104
  %1106 = vmatmul.bf16.gmra.mxu0 %v445
  %v1107 = vpop.f32.mrf.mxu0
  %v1108 = vadd.f32 %v1059, %v1107
  %v1109 = vpop.f32.mrf.mxu0
  %v1110 = vadd.f32 %v1061, %v1109
  %1111 = vmatmul.bf16.gmra.mxu0 %v453
  %v1112 = vpop.f32.mrf.mxu0
  %v1113 = vadd.f32 %v1064, %v1112
  %v1114 = vpop.f32.mrf.mxu0
  %v1115 = vadd.f32 %v1066, %v1114
  %1116 = vmatmul.bf16.gmra.mxu0 %v461
  %v1117 = vpop.f32.mrf.mxu0
  %v1118 = vadd.f32 %v1069, %v1117
  %v1119 = vpop.f32.mrf.mxu0
  %v1120 = vadd.f32 %v1071, %v1119
  %1121 = vmatmul.bf16.gmra.mxu0 %v469
  %v1122 = vpop.f32.mrf.mxu0
  %v1123 = vadd.f32 %v1074, %v1122
  %v1124 = vpop.f32.mrf.mxu0
  %v1125 = vadd.f32 %v1076, %v1124
  %1126 = vmatmul.bf16.gmra.mxu0 %v477
  %v1127 = vpop.f32.mrf.mxu0
  %v1128 = vadd.f32 %v1079, %v1127
  %v1129 = vpop.f32.mrf.mxu0
  %v1130 = vadd.f32 %v1081, %v1129
  %1131 = vmatmul.bf16.gmra.mxu0 %v485
  %v1132 = vpop.f32.mrf.mxu0
  %v1133 = vadd.f32 %v1084, %v1132
  %v1134 = vpop.f32.mrf.mxu0
  %v1135 = vadd.f32 %v1086, %v1134
  %1136 = vmatmul.bf16.gmra.mxu0 %v493
  %v1137 = vpop.f32.mrf.mxu0
  %v1138 = vadd.f32 %v1089, %v1137
  %v1139 = vpop.f32.mrf.mxu0
  %v1140 = vadd.f32 %v1091, %v1139
  %1141 = vdwg.mxu0
  %1142 = vmatpush.bf16.msra.mxu0 %v857
  %1143 = vmatpush.bf16.msra.mxu0 %v856
  %1144 = vmatpush.bf16.msra.mxu0 %v855
  %1145 = vmatpush.bf16.msra.mxu0 %v854
  %1146 = vmatpush.bf16.msra.mxu0 %v853
  %1147 = vmatpush.bf16.msra.mxu0 %v852
  %1148 = vmatpush.bf16.msra.mxu0 %v851
  %1149 = vmatpush.bf16.msra.mxu0 %v850
  %1150 = vmatmul.bf16.gmra.mxu0 %v438
  %v1151 = vpop.f32.mrf.mxu0
  %v1152 = vadd.f32 %v1103, %v1151
  %v1153 = vpop.f32.mrf.mxu0
  %v1154 = vadd.f32 %v1105, %v1153
  %1155 = vmatmul.bf16.gmra.mxu0 %v446
  %v1156 = vpop.f32.mrf.mxu0
  %v1157 = vadd.f32 %v1108, %v1156
  %v1158 = vpop.f32.mrf.mxu0
  %v1159 = vadd.f32 %v1110, %v1158
  %1160 = vmatmul.bf16.gmra.mxu0 %v454
  %v1161 = vpop.f32.mrf.mxu0
  %v1162 = vadd.f32 %v1113, %v1161
  %v1163 = vpop.f32.mrf.mxu0
  %v1164 = vadd.f32 %v1115, %v1163
  %1165 = vmatmul.bf16.gmra.mxu0 %v462
  %v1166 = vpop.f32.mrf.mxu0
  %v1167 = vadd.f32 %v1118, %v1166
  %v1168 = vpop.f32.mrf.mxu0
  %v1169 = vadd.f32 %v1120, %v1168
  %1170 = vmatmul.bf16.gmra.mxu0 %v470
  %v1171 = vpop.f32.mrf.mxu0
  %v1172 = vadd.f32 %v1123, %v1171
  %v1173 = vpop.f32.mrf.mxu0
  %v1174 = vadd.f32 %v1125, %v1173
  %1175 = vmatmul.bf16.gmra.mxu0 %v478
  %v1176 = vpop.f32.mrf.mxu0
  %v1177 = vadd.f32 %v1128, %v1176
  %v1178 = vpop.f32.mrf.mxu0
  %v1179 = vadd.f32 %v1130, %v1178
  %1180 = vmatmul.bf16.gmra.mxu0 %v486
  %v1181 = vpop.f32.mrf.mxu0
  %v1182 = vadd.f32 %v1133, %v1181
  %v1183 = vpop.f32.mrf.mxu0
  %v1184 = vadd.f32 %v1135, %v1183
  %1185 = vmatmul.bf16.gmra.mxu0 %v494
  %v1186 = vpop.f32.mrf.mxu0
  %v1187 = vadd.f32 %v1138, %v1186
  %v1188 = vpop.f32.mrf.mxu0
  %v1189 = vadd.f32 %v1140, %v1188
  %1190 = vdwg.mxu0
  %1191 = vmatpush.bf16.msra.mxu0 %v865
  %1192 = vmatpush.bf16.msra.mxu0 %v864
  %1193 = vmatpush.bf16.msra.mxu0 %v863
  %1194 = vmatpush.bf16.msra.mxu0 %v862
  %1195 = vmatpush.bf16.msra.mxu0 %v861
  %1196 = vmatpush.bf16.msra.mxu0 %v860
  %1197 = vmatpush.bf16.msra.mxu0 %v859
  %1198 = vmatpush.bf16.msra.mxu0 %v858
  %1199 = vmatmul.bf16.gmra.mxu0 %v439
  %v1200 = vpop.f32.mrf.mxu0
  %v1201 = vadd.f32 %v1152, %v1200
  %v1202 = vpop.f32.mrf.mxu0
  %v1203 = vadd.f32 %v1154, %v1202
  %1204 = vmatmul.bf16.gmra.mxu0 %v447
  %v1205 = vpop.f32.mrf.mxu0
  %v1206 = vadd.f32 %v1157, %v1205
  %v1207 = vpop.f32.mrf.mxu0
  %v1208 = vadd.f32 %v1159, %v1207
  %1209 = vmatmul.bf16.gmra.mxu0 %v455
  %v1210 = vpop.f32.mrf.mxu0
  %v1211 = vadd.f32 %v1162, %v1210
  %v1212 = vpop.f32.mrf.mxu0
  %v1213 = vadd.f32 %v1164, %v1212
  %1214 = vmatmul.bf16.gmra.mxu0 %v463
  %v1215 = vpop.f32.mrf.mxu0
  %v1216 = vadd.f32 %v1167, %v1215
  %v1217 = vpop.f32.mrf.mxu0
  %v1218 = vadd.f32 %v1169, %v1217
  %1219 = vmatmul.bf16.gmra.mxu0 %v471
  %v1220 = vpop.f32.mrf.mxu0
  %v1221 = vadd.f32 %v1172, %v1220
  %v1222 = vpop.f32.mrf.mxu0
  %v1223 = vadd.f32 %v1174, %v1222
  %1224 = vmatmul.bf16.gmra.mxu0 %v479
  %v1225 = vpop.f32.mrf.mxu0
  %v1226 = vadd.f32 %v1177, %v1225
  %v1227 = vpop.f32.mrf.mxu0
  %v1228 = vadd.f32 %v1179, %v1227
  %1229 = vmatmul.bf16.gmra.mxu0 %v487
  %v1230 = vpop.f32.mrf.mxu0
  %v1231 = vadd.f32 %v1182, %v1230
  %v1232 = vpop.f32.mrf.mxu0
  %v1233 = vadd.f32 %v1184, %v1232
  %1234 = vmatmul.bf16.gmra.mxu0 %v495
  %v1235 = vpop.f32.mrf.mxu0
  %v1236 = vadd.f32 %v1187, %v1235
  %v1237 = vpop.f32.mrf.mxu0
  %v1238 = vadd.f32 %v1189, %v1237
  %1239 = vdwg.mxu0
  %1240 = vmatpush.bf16.msra.mxu0 %v873
  %1241 = vmatpush.bf16.msra.mxu0 %v872
  %1242 = vmatpush.bf16.msra.mxu0 %v871
  %1243 = vmatpush.bf16.msra.mxu0 %v870
  %1244 = vmatpush.bf16.msra.mxu0 %v869
  %1245 = vmatpush.bf16.msra.mxu0 %v868
  %1246 = vmatpush.bf16.msra.mxu0 %v867
  %1247 = vmatpush.bf16.msra.mxu0 %v866
  %1248 = vmatmul.bf16.gmra.mxu0 %v440
  %v1249 = vpop.f32.mrf.mxu0
  %v1250 = vadd.f32 %v1201, %v1249
  %v1251 = vpop.f32.mrf.mxu0
  %v1252 = vadd.f32 %v1203, %v1251
  %1253 = vmatmul.bf16.gmra.mxu0 %v448
  %v1254 = vpop.f32.mrf.mxu0
  %v1255 = vadd.f32 %v1206, %v1254
  %v1256 = vpop.f32.mrf.mxu0
  %v1257 = vadd.f32 %v1208, %v1256
  %1258 = vmatmul.bf16.gmra.mxu0 %v456
  %v1259 = vpop.f32.mrf.mxu0
  %v1260 = vadd.f32 %v1211, %v1259
  %v1261 = vpop.f32.mrf.mxu0
  %v1262 = vadd.f32 %v1213, %v1261
  %1263 = vmatmul.bf16.gmra.mxu0 %v464
  %v1264 = vpop.f32.mrf.mxu0
  %v1265 = vadd.f32 %v1216, %v1264
  %v1266 = vpop.f32.mrf.mxu0
  %v1267 = vadd.f32 %v1218, %v1266
  %1268 = vmatmul.bf16.gmra.mxu0 %v472
  %v1269 = vpop.f32.mrf.mxu0
  %v1270 = vadd.f32 %v1221, %v1269
  %v1271 = vpop.f32.mrf.mxu0
  %v1272 = vadd.f32 %v1223, %v1271
  %1273 = vmatmul.bf16.gmra.mxu0 %v480
  %v1274 = vpop.f32.mrf.mxu0
  %v1275 = vadd.f32 %v1226, %v1274
  %v1276 = vpop.f32.mrf.mxu0
  %v1277 = vadd.f32 %v1228, %v1276
  %1278 = vmatmul.bf16.gmra.mxu0 %v488
  %v1279 = vpop.f32.mrf.mxu0
  %v1280 = vadd.f32 %v1231, %v1279
  %v1281 = vpop.f32.mrf.mxu0
  %v1282 = vadd.f32 %v1233, %v1281
  %1283 = vmatmul.bf16.gmra.mxu0 %v496
  %v1284 = vpop.f32.mrf.mxu0
  %v1285 = vadd.f32 %v1236, %v1284
  %v1286 = vpop.f32.mrf.mxu0
  %v1287 = vadd.f32 %v1238, %v1286
  %1288 = vdwg.mxu0
  %1289 = vmatpush.bf16.msra.mxu0 %v881
  %1290 = vmatpush.bf16.msra.mxu0 %v880
  %1291 = vmatpush.bf16.msra.mxu0 %v879
  %1292 = vmatpush.bf16.msra.mxu0 %v878
  %1293 = vmatpush.bf16.msra.mxu0 %v877
  %1294 = vmatpush.bf16.msra.mxu0 %v876
  %1295 = vmatpush.bf16.msra.mxu0 %v875
  %1296 = vmatpush.bf16.msra.mxu0 %v874
  %1297 = vmatmul.bf16.gmra.mxu0 %v441
  %v1298 = vpop.f32.mrf.mxu0
  %v1299 = vadd.f32 %v1250, %v1298
  %v1300 = vpop.f32.mrf.mxu0
  %v1301 = vadd.f32 %v1252, %v1300
  %1302 = vmatmul.bf16.gmra.mxu0 %v449
  %v1303 = vpop.f32.mrf.mxu0
  %v1304 = vadd.f32 %v1255, %v1303
  %v1305 = vpop.f32.mrf.mxu0
  %v1306 = vadd.f32 %v1257, %v1305
  %1307 = vmatmul.bf16.gmra.mxu0 %v457
  %v1308 = vpop.f32.mrf.mxu0
  %v1309 = vadd.f32 %v1260, %v1308
  %v1310 = vpop.f32.mrf.mxu0
  %v1311 = vadd.f32 %v1262, %v1310
  %1312 = vmatmul.bf16.gmra.mxu0 %v465
  %v1313 = vpop.f32.mrf.mxu0
  %v1314 = vadd.f32 %v1265, %v1313
  %v1315 = vpop.f32.mrf.mxu0
  %v1316 = vadd.f32 %v1267, %v1315
  %1317 = vmatmul.bf16.gmra.mxu0 %v473
  %v1318 = vpop.f32.mrf.mxu0
  %v1319 = vadd.f32 %v1270, %v1318
  %v1320 = vpop.f32.mrf.mxu0
  %v1321 = vadd.f32 %v1272, %v1320
  %1322 = vmatmul.bf16.gmra.mxu0 %v481
  %v1323 = vpop.f32.mrf.mxu0
  %v1324 = vadd.f32 %v1275, %v1323
  %v1325 = vpop.f32.mrf.mxu0
  %v1326 = vadd.f32 %v1277, %v1325
  %1327 = vmatmul.bf16.gmra.mxu0 %v489
  %v1328 = vpop.f32.mrf.mxu0
  %v1329 = vadd.f32 %v1280, %v1328
  %v1330 = vpop.f32.mrf.mxu0
  %v1331 = vadd.f32 %v1282, %v1330
  %1332 = vmatmul.bf16.gmra.mxu0 %v497
  %v1333 = vpop.f32.mrf.mxu0
  %v1334 = vadd.f32 %v1285, %v1333
  %v1335 = vpop.f32.mrf.mxu0
  %v1336 = vadd.f32 %v1287, %v1335
  %1337 = vdwg.mxu0
  %v1338 = vadd.f32 %v34, %v1299
  %v1339 = vadd.f32 %v35, %v1301
  %v1340 = vadd.f32 %v36, %v1304
  %v1341 = vadd.f32 %v37, %v1306
  %v1342 = vadd.f32 %v38, %v1309
  %v1343 = vadd.f32 %v39, %v1311
  %v1344 = vadd.f32 %v40, %v1314
  %v1345 = vadd.f32 %v41, %v1316
  %v1346 = vadd.f32 %v42, %v1319
  %v1347 = vadd.f32 %v43, %v1321
  %v1348 = vadd.f32 %v44, %v1324
  %v1349 = vadd.f32 %v45, %v1326
  %v1350 = vadd.f32 %v46, %v1329
  %v1351 = vadd.f32 %v47, %v1331
  %v1352 = vadd.f32 %v48, %v1334
  %v1353 = vadd.f32 %v49, %v1336
  %1354 = vst [vmem:[#allocation2] sm:$0xff] %v1338
  %1355 = vst [vmem:[#allocation2 + $0x8] sm:$0xff] %v1339
  %1356 = vst [vmem:[#allocation2 + $0x10] sm:$0xff] %v1340
  %1357 = vst [vmem:[#allocation2 + $0x18] sm:$0xff] %v1341
  %1358 = vst [vmem:[#allocation2 + $0x20] sm:$0xff] %v1342
  %1359 = vst [vmem:[#allocation2 + $0x28] sm:$0xff] %v1343
  %1360 = vst [vmem:[#allocation2 + $0x30] sm:$0xff] %v1344
  %1361 = vst [vmem:[#allocation2 + $0x38] sm:$0xff] %v1345
  %1362 = vst [vmem:[#allocation2 + $0x40] sm:$0xff] %v1346
  %1363 = vst [vmem:[#allocation2 + $0x48] sm:$0xff] %v1347
  %1364 = vst [vmem:[#allocation2 + $0x50] sm:$0xff] %v1348
  %1365 = vst [vmem:[#allocation2 + $0x58] sm:$0xff] %v1349
  %1366 = vst [vmem:[#allocation2 + $0x60] sm:$0xff] %v1350
  %1367 = vst [vmem:[#allocation2 + $0x68] sm:$0xff] %v1351
  %1368 = vst [vmem:[#allocation2 + $0x70] sm:$0xff] %v1352
  %1369 = vst [vmem:[#allocation2 + $0x78] sm:$0xff] %v1353
  // Predicated region
  $region18: #{discriminator_forward.10} parent=0 // pred_check
    %p1370 = pneg %p14
  $region19: #{discriminator_forward.10} parent=0 // pred_check_branch
    %1372 = sbr.rel (%p1370) target = $region21
  $region20: #{discriminator_forward.10} parent=0 // pred_region
    %v1373 = vld [vmem:[#allocation2] sm:$0xff]
    %v1374 = vld [vmem:[#allocation2 + $0x8] sm:$0xff]
    %v1375 = vld [vmem:[#allocation2 + $0x10] sm:$0xff]
    %v1376 = vld [vmem:[#allocation2 + $0x18] sm:$0xff]
    %v1377 = vld [vmem:[#allocation2 + $0x20] sm:$0xff]
    %v1378 = vld [vmem:[#allocation2 + $0x28] sm:$0xff]
    %v1379 = vld [vmem:[#allocation2 + $0x30] sm:$0xff]
    %v1380 = vld [vmem:[#allocation2 + $0x38] sm:$0xff]
    %v1381 = vld [vmem:[#allocation2 + $0x40] sm:$0xff]
    %v1382 = vld [vmem:[#allocation2 + $0x48] sm:$0xff]
    %v1383 = vld [vmem:[#allocation2 + $0x50] sm:$0xff]
    %v1384 = vld [vmem:[#allocation2 + $0x58] sm:$0xff]
    %v1385 = vld [vmem:[#allocation2 + $0x60] sm:$0xff]
    %v1386 = vld [vmem:[#allocation2 + $0x68] sm:$0xff]
    %v1387 = vld [vmem:[#allocation2 + $0x70] sm:$0xff]
    %v1388 = vld [vmem:[#allocation2 + $0x78] sm:$0xff]
    %v1389 = vld [vmem:[%s2] sm:$0x1]
    %v1391 = vperm.slane %v1389, 0
    %v1393 = vadd.f32 %v1373, %v1391
    %v1394 = vadd.f32 %v1374, %v1391
    %v1395 = vadd.f32 %v1375, %v1391
    %v1396 = vadd.f32 %v1376, %v1391
    %v1397 = vadd.f32 %v1377, %v1391
    %v1398 = vadd.f32 %v1378, %v1391
    %v1399 = vadd.f32 %v1379, %v1391
    %v1400 = vadd.f32 %v1380, %v1391
    %v1401 = vadd.f32 %v1381, %v1391
    %v1402 = vadd.f32 %v1382, %v1391
    %v1403 = vadd.f32 %v1383, %v1391
    %v1404 = vadd.f32 %v1384, %v1391
    %v1405 = vadd.f32 %v1385, %v1391
    %v1406 = vadd.f32 %v1386, %v1391
    %v1407 = vadd.f32 %v1387, %v1391
    %v1408 = vadd.f32 %v1388, %v1391
    %1409 = vst [vmem:[%s3] sm:$0xff] %v1393
    %1410 = vst [vmem:[%s3 + $0x8] sm:$0xff] %v1394
    %1411 = vst [vmem:[%s3 + $0x10] sm:$0xff] %v1395
    %1412 = vst [vmem:[%s3 + $0x18] sm:$0xff] %v1396
    %1413 = vst [vmem:[%s3 + $0x20] sm:$0xff] %v1397
    %1414 = vst [vmem:[%s3 + $0x28] sm:$0xff] %v1398
    %1415 = vst [vmem:[%s3 + $0x30] sm:$0xff] %v1399
    %1416 = vst [vmem:[%s3 + $0x38] sm:$0xff] %v1400
    %1417 = vst [vmem:[%s3 + $0x40] sm:$0xff] %v1401
    %1418 = vst [vmem:[%s3 + $0x48] sm:$0xff] %v1402
    %1419 = vst [vmem:[%s3 + $0x50] sm:$0xff] %v1403
    %1420 = vst [vmem:[%s3 + $0x58] sm:$0xff] %v1404
    %1421 = vst [vmem:[%s3 + $0x60] sm:$0xff] %v1405
    %1422 = vst [vmem:[%s3 + $0x68] sm:$0xff] %v1406
    %1423 = vst [vmem:[%s3 + $0x70] sm:$0xff] %v1407
    %1424 = vst [vmem:[%s3 + $0x78] sm:$0xff] %v1408
  $region21: #{discriminator_forward.10} parent=0 // pred_fallthru
    _
  // Predicated region
  $region22: #{discriminator_forward.10} parent=0 // pred_check
    _
  $region23: #{discriminator_forward.10} parent=0 // pred_check_branch
    %1426 = sbr.rel (0) target = $region25
  $region24: #{discriminator_forward.10} parent=0 // pred_region
    _
  $region25: #{discriminator_forward.10} parent=0 // pred_fallthru
    _
  // Predicated region
  $region26: #{discriminator_forward.10} parent=0 // pred_check
    _
  $region27: #{discriminator_forward.10} parent=0 // pred_check_branch
    %1428 = sbr.rel (0) target = $region29
  $region28: #{discriminator_forward.10} parent=0 // pred_region
    _
  $region29: #{discriminator_forward.10} parent=0 // pred_fallthru
    _

// kernel: discriminator_forward.11
$region0: #{discriminator_forward.11}
  #allocation0 [shape = 'u32[]', space=smem, size = 0x4, offset = 0x4, fixed_abs, tag = 'smem constant byte address 0x4 - core index']
  #allocation1 [shape = 'u32[72,128]{1,0:T(1,128)}', space=vmem, size = 0x9000, scoped, tag = 'internal scratch']
  %s0 = inlined_call_operand.vmem [shape: f32[2,64,128], index: 0, kind: input, shape index: {}]
  %s1 = inlined_call_operand.vmem [shape: f32[2,64,128], index: 1, kind: output, shape index: {}]
  %s2 = sld [smem:[#allocation0]]
  $region37: #{discriminator_forward.11} parent=0
    _
  %s4 = ssub.s32 1, %s2
  %s5 = scalar_select 0, %s4, %s2
  loop: start=0, step=1, limit=4
  $region2: #{discriminator_forward.11} parent=0 // loop_pre_header
    _
  $region3: #{discriminator_forward.11} parent=0 // loop_header
    %s7 = sphi 0, %s11
    %p8 = scmp.ge.s32.totalorder %s7, 4
    %s14 = sphi 0, %s26
    %s15 = sphi 0, %s22
    %s16 = sphi 0, %s14
    %s17 = sphi 0, %s15
    %s18 = sphi 0, %s16
    %s19 = sphi 0, %s17
    %s31 = sphi 0, %s33
    %s34 = sphi 0, %s31
    %s35 = sphi 0, %s34
    %s51 = sphi 0, %s35
    %s59 = sphi 0, %s61
    %s62 = sphi 0, %s59
    %s63 = sphi 0, %s62
    %s79 = sphi 0, %s63
  $region4: #{discriminator_forward.11} parent=0 // loop_header_branch
    %10 = sbr.rel (%p8) target = $region8
  $region5: #{discriminator_forward.11} parent=0 // loop_body
    %s12 = ssub.s32 %s7, 1
    %s13 = ssub.s32 %s7, 2
    %s20 = sadd.s32 1, %s15
    %p21 = scmp.ge.s32.totalorder %s20, 1
    %s22 = scalar_select %p21, 0, %s20
    %s23 = sadd.s32 1, %s14
    %s24 = scalar_select %p21, %s23, %s14
    %p25 = scmp.ge.s32.totalorder %s24, 2
    %s26 = scalar_select %p25, 0, %s24
    %s27 = ssub.s32 %s14, %s26
    %s28 = ssub.s32 %s15, %s22
    %s29 = sor.u32 %s27, %s28
    %p30 = scmp.eq.s32.totalorder %s29, 0
    %s32 = sadd.s32 %s31, 1
    %s33 = scalar_select %p30, %s31, %s32
    %p36 = pneg %p30
    %p37 = scmp.eq.s32.totalorder %s7, 1
    %p38 = por %p36, %p37
    %p39 = scmp.ne.s32.totalorder %s31, %s34
    %p40 = scmp.eq.s32.totalorder %s7, 0
    %p41 = por %p39, %p40
    %p42 = scmp.ne.s32.totalorder %s31, %s34
    %p43 = scmp.eq.s32.totalorder %s12, 1
    %p44 = por %p42, %p43
    %p45 = scmp.ne.s32.totalorder %s34, %s35
    %p46 = scmp.eq.s32.totalorder %s12, 0
    %p47 = por %p45, %p46
    %p48 = scmp.ne.s32.totalorder %s34, %s35
    %p49 = scmp.eq.s32.totalorder %s13, 1
    %p50 = por %p48, %p49
    %p52 = scmp.ne.s32.totalorder %s35, %s51
    %p53 = scmp.eq.s32.totalorder %s13, 0
    %p54 = por %p52, %p53
    %s55 = ssub.s32 %s14, %s26
    %s56 = ssub.s32 %s15, %s22
    %s57 = sor.u32 %s55, %s56
    %p58 = scmp.eq.s32.totalorder %s57, 0
    %s60 = sadd.s32 %s59, 1
    %s61 = scalar_select %p58, %s59, %s60
    %p64 = pneg %p58
    %p65 = scmp.eq.s32.totalorder %s7, 1
    %p66 = por %p64, %p65
    %p67 = scmp.ne.s32.totalorder %s59, %s62
    %p68 = scmp.eq.s32.totalorder %s7, 0
    %p69 = por %p67, %p68
    %p70 = scmp.ne.s32.totalorder %s59, %s62
    %p71 = scmp.eq.s32.totalorder %s12, 1
    %p72 = por %p70, %p71
    %p73 = scmp.ne.s32.totalorder %s62, %s63
    %p74 = scmp.eq.s32.totalorder %s12, 0
    %p75 = por %p73, %p74
    %p76 = scmp.ne.s32.totalorder %s62, %s63
    %p77 = scmp.eq.s32.totalorder %s13, 1
    %p78 = por %p76, %p77
    %p80 = scmp.ne.s32.totalorder %s63, %s79
    %p81 = scmp.eq.s32.totalorder %s13, 0
    %p82 = por %p80, %p81
    %p83 = scmp.le.s32.totalorder 1, %s7
    %p84 = scmp.lt.s32.totalorder %s7, 3
    %p85 = pnand %p83, %p84
    %p86 = pneg %p85
    // Predicated region
    $region9: #{discriminator_forward.11} parent=5 // pred_check
      _
    $region10: #{discriminator_forward.11} parent=5 // pred_check_branch
      %88 = sbr.rel (%p85) target = $region12
    $region11: #{discriminator_forward.11} parent=5 // pred_region
      %s89 = ssub.s32 %s7, 1
    $region12: #{discriminator_forward.11} parent=5 // pred_fallthru
      _
    %p90 = scmp.lt.s32.totalorder %s7, 2
    // Predicated region
    $region13: #{discriminator_forward.11} parent=5 // pred_check
      %p91 = pneg %p90
    $region14: #{discriminator_forward.11} parent=5 // pred_check_branch
      %93 = sbr.rel (%p91) target = $region16
    $region15: #{discriminator_forward.11} parent=5 // pred_region
      // Predicated region
      $region17: #{discriminator_forward.11} parent=15 // pred_check
        %p94 = pneg %p41
      $region18: #{discriminator_forward.11} parent=15 // pred_check_branch
        %96 = sbr.rel (%p94) target = $region20
      $region19: #{discriminator_forward.11} parent=15 // pred_region
        %p97 = scmp.lt.s32.totalorder %s14, 1
        %s98 = scalar_select %p97, %s14, 1
        %p99 = scmp.lt.s32.totalorder %s15, 0
        %s100 = scalar_select %p99, %s15, 0
        %s101 = smul.addr %s98, 8
        %s102 = sadd.s32 %s100, %s101
        %s103 = smul.addr %s102, 8
        %s104 = scalar_lea.vmem %s0, %s103
      $region20: #{discriminator_forward.11} parent=15 // pred_fallthru
        _
    $region16: #{discriminator_forward.11} parent=5 // pred_fallthru
      _
    %p105 = scmp.le.s32.totalorder 1, %s7
    %p106 = scmp.lt.s32.totalorder %s7, 3
    %p107 = pnand %p105, %p106
    %p108 = pneg %p107
    // Predicated region
    $region21: #{discriminator_forward.11} parent=5 // pred_check
      _
    $region22: #{discriminator_forward.11} parent=5 // pred_check_branch
      %110 = sbr.rel (%p107) target = $region24
    $region23: #{discriminator_forward.11} parent=5 // pred_region
      %s111 = ssub.s32 %s7, 1
      %p112 = scmp.lt.s32.totalorder %s16, 1
      %s113 = scalar_select %p112, %s16, 1
      %p114 = scmp.lt.s32.totalorder %s17, 0
      %s115 = scalar_select %p114, %s17, 0
      %s116 = smul.addr %s113, 8
      %s117 = sadd.s32 %s115, %s116
      %s118 = smul.addr %s117, 8
      %s119 = scalar_lea.vmem %s0, %s118
      %p120 = pneg %p47
      %p121 = pneg %p44
      %p122 = pneg %p75
      %p123 = pneg %p72
      %p124 = scmp.lt.s32.totalorder %s16, 1
      %s125 = scalar_select %p124, %s16, 1
      %p126 = scmp.lt.s32.totalorder %s17, 0
      %s127 = scalar_select %p126, %s17, 0
      %s128 = smul.addr %s125, 8
      %s129 = sadd.s32 %s127, %s128
      %s130 = smul.addr %s129, 8
      %s131 = scalar_lea.vmem %s1, %s130
      %p132 = scmp.lt.s32.totalorder %s16, 1
      %s133 = scalar_select %p132, %s16, 1
      %p134 = scmp.lt.s32.totalorder %s17, 0
      %s135 = scalar_select %p134, %s17, 0
      %s136 = smul.addr %s133, 8
      %s137 = sadd.s32 %s135, %s136
      %s138 = smul.addr %s137, 8
      %s139 = scalar_lea.vmem %s0, %s138
      %p140 = scmp.lt.s32.totalorder %s16, 1
      %s141 = scalar_select %p140, %s16, 1
      %p142 = scmp.lt.s32.totalorder %s17, 0
      %s143 = scalar_select %p142, %s17, 0
      %s144 = smul.addr %s141, 8
      %s145 = sadd.s32 %s143, %s144
      %s146 = smul.addr %s145, 8
      %s147 = scalar_lea.vmem %s1, %s146
      %v148 = vld [vmem:[%s139] sm:$0xff]
      %v149 = vld [vmem:[%s139 + $0x8] sm:$0xff]
      %v150 = vld [vmem:[%s139 + $0x10] sm:$0xff]
      %v151 = vld [vmem:[%s139 + $0x18] sm:$0xff]
      %v152 = vld [vmem:[%s139 + $0x20] sm:$0xff]
      %v153 = vld [vmem:[%s139 + $0x28] sm:$0xff]
      %v154 = vld [vmem:[%s139 + $0x30] sm:$0xff]
      %v155 = vld [vmem:[%s139 + $0x38] sm:$0xff]
      %v156 = vadd.f32 %v148, %v149
      %v157 = vadd.f32 %v156, %v150
      %v158 = vadd.f32 %v157, %v151
      %v159 = vadd.f32 %v158, %v152
      %v160 = vadd.f32 %v159, %v153
      %v161 = vadd.f32 %v160, %v154
      %v162 = vadd.f32 %v161, %v155
      %v163 = vrot.slane %v162, 4
      %v164 = vadd.f32 %v162, %v163
      %v165 = vrot.slane %v164, 2
      %v166 = vadd.f32 %v164, %v165
      %v167 = vrot.slane %v166, 1
      %v168 = vadd.f32 %v166, %v167
      %v169 = vrcp.pop 64.0
      %v170 = vmul.f32 64.0, %v169
      %v171 = vsub.f32 1.0, %v170
      %v172 = vmul.f32 %v169, %v171
      %v173 = vadd.f32 %v169, %v172
      %vm174 = vweird.f32 %v169
      %v175 = vsel %vm174, %v169, %v173
      %v176 = vmul.f32 %v168, %v175
      %v177 = vsub.f32 %v148, %v176
      %v178 = vsub.f32 %v149, %v176
      %v179 = vsub.f32 %v150, %v176
      %v180 = vsub.f32 %v151, %v176
      %v181 = vsub.f32 %v152, %v176
      %v182 = vsub.f32 %v153, %v176
      %v183 = vsub.f32 %v154, %v176
      %v184 = vsub.f32 %v155, %v176
      %v185 = vmul.f32 %v177, %v177
      %v186 = vmul.f32 %v178, %v178
      %v187 = vmul.f32 %v179, %v179
      %v188 = vmul.f32 %v180, %v180
      %v189 = vmul.f32 %v181, %v181
      %v190 = vmul.f32 %v182, %v182
      %v191 = vmul.f32 %v183, %v183
      %v192 = vmul.f32 %v184, %v184
      %v193 = vadd.f32 %v185, %v186
      %v194 = vadd.f32 %v193, %v187
      %v195 = vadd.f32 %v194, %v188
      %v196 = vadd.f32 %v195, %v189
      %v197 = vadd.f32 %v196, %v190
      %v198 = vadd.f32 %v197, %v191
      %v199 = vadd.f32 %v198, %v192
      %v200 = vrot.slane %v199, 4
      %v201 = vadd.f32 %v199, %v200
      %v202 = vrot.slane %v201, 2
      %v203 = vadd.f32 %v201, %v202
      %v204 = vrot.slane %v203, 1
      %v205 = vadd.f32 %v203, %v204
      %v206 = vmul.f32 %v205, %v175
      %v207 = vadd.f32 %v206, 1e-05
      %v208 = vrsqrt.pop %v207
      %v209 = vmul.f32 %v208, %v207
      %v210 = vmul.f32 %v209, %v208
      %v211 = vmul.f32 0.5, %v210
      %v212 = vsub.f32 1.5, %v211
      %v213 = vmul.f32 %v208, %v212
      %vm214 = vweird.f32 %v207
      %vm215 = vweird.f32 %v208
      %vm216 = vmor %vm214, %vm215
      %v217 = vsel %vm216, %v208, %v213
      %v218 = vmul.f32 %v177, %v217
      %v219 = vmul.f32 %v178, %v217
      %v220 = vmul.f32 %v179, %v217
      %v221 = vmul.f32 %v180, %v217
      %v222 = vmul.f32 %v181, %v217
      %v223 = vmul.f32 %v182, %v217
      %v224 = vmul.f32 %v183, %v217
      %v225 = vmul.f32 %v184, %v217
      %vm226 = vcmp.ge.f32.partialorder %v218, 0.0
      %vm227 = vcmp.ge.f32.partialorder %v219, 0.0
      %vm228 = vcmp.ge.f32.partialorder %v220, 0.0
      %vm229 = vcmp.ge.f32.partialorder %v221, 0.0
      %vm230 = vcmp.ge.f32.partialorder %v222, 0.0
      %vm231 = vcmp.ge.f32.partialorder %v223, 0.0
      %vm232 = vcmp.ge.f32.partialorder %v224, 0.0
      %vm233 = vcmp.ge.f32.partialorder %v225, 0.0
      %v234 = vmul.f32 %v218, 0.2
      %v235 = vmul.f32 %v219, 0.2
      %v236 = vmul.f32 %v220, 0.2
      %v237 = vmul.f32 %v221, 0.2
      %v238 = vmul.f32 %v222, 0.2
      %v239 = vmul.f32 %v223, 0.2
      %v240 = vmul.f32 %v224, 0.2
      %v241 = vmul.f32 %v225, 0.2
      %v242 = vsel %vm226, %v218, %v234
      %v243 = vsel %vm227, %v219, %v235
      %v244 = vsel %vm228, %v220, %v236
      %v245 = vsel %vm229, %v221, %v237
      %v246 = vsel %vm230, %v222, %v238
      %v247 = vsel %vm231, %v223, %v239
      %v248 = vsel %vm232, %v224, %v240
      %v249 = vsel %vm233, %v225, %v241
      %250 = vst [vmem:[%s147] sm:$0xff] %v242
      %251 = vst [vmem:[%s147 + $0x8] sm:$0xff] %v243
      %252 = vst [vmem:[%s147 + $0x10] sm:$0xff] %v244
      %253 = vst [vmem:[%s147 + $0x18] sm:$0xff] %v245
      %254 = vst [vmem:[%s147 + $0x20] sm:$0xff] %v246
      %255 = vst [vmem:[%s147 + $0x28] sm:$0xff] %v247
      %256 = vst [vmem:[%s147 + $0x30] sm:$0xff] %v248
      %257 = vst [vmem:[%s147 + $0x38] sm:$0xff] %v249
      %p258 = scmp.lt.s32.totalorder %s16, 1
      %s259 = scalar_select %p258, %s16, 1
      %p260 = scmp.lt.s32.totalorder %s17, 0
      %s261 = scalar_select %p260, %s17, 0
      %s262 = smul.addr %s259, 8
      %s263 = sadd.s32 %s261, %s262
      %s264 = smul.addr %s263, 8
      %s265 = scalar_lea.vmem %s1, %s264
      // Predicated region
      $region25: #{discriminator_forward.11} parent=23 // pred_check
        %p266 = pneg %p72
      $region26: #{discriminator_forward.11} parent=23 // pred_check_branch
        %268 = sbr.rel (%p266) target = $region28
      $region27: #{discriminator_forward.11} parent=23 // pred_region
        _
      $region28: #{discriminator_forward.11} parent=23 // pred_fallthru
        _
    $region24: #{discriminator_forward.11} parent=5 // pred_fallthru
      _
    %p269 = scmp.le.s32.totalorder 2, %s7
    // Predicated region
    $region29: #{discriminator_forward.11} parent=5 // pred_check
      %p270 = pneg %p269
    $region30: #{discriminator_forward.11} parent=5 // pred_check_branch
      %272 = sbr.rel (%p270) target = $region32
    $region31: #{discriminator_forward.11} parent=5 // pred_region
      %s273 = ssub.s32 %s7, 2
      // Predicated region
      $region33: #{discriminator_forward.11} parent=31 // pred_check
        %p274 = pneg %p78
      $region34: #{discriminator_forward.11} parent=31 // pred_check_branch
        %276 = sbr.rel (%p274) target = $region36
      $region35: #{discriminator_forward.11} parent=31 // pred_region
        %p277 = scmp.lt.s32.totalorder %s18, 1
        %s278 = scalar_select %p277, %s18, 1
        %p279 = scmp.lt.s32.totalorder %s19, 0
        %s280 = scalar_select %p279, %s19, 0
        %s281 = smul.addr %s278, 8
        %s282 = sadd.s32 %s280, %s281
        %s283 = smul.addr %s282, 8
        %s284 = scalar_lea.vmem %s1, %s283
      $region36: #{discriminator_forward.11} parent=31 // pred_fallthru
        _
    $region32: #{discriminator_forward.11} parent=5 // pred_fallthru
      _
  $region6: #{discriminator_forward.11} parent=0 // loop_footer
    %s11 = sadd.s32 1, %s7
  $region7: #{discriminator_forward.11} parent=0 // loop_footer_branch
    %6 = sbr.rel target = $region3
  $region8: #{discriminator_forward.11} parent=0 // loop_exit
    _

// kernel: discriminator_forward.13
$region0: #{discriminator_forward.13}
  #allocation0 [shape = 'u32[]', space=smem, size = 0x4, offset = 0x4, fixed_abs, tag = 'smem constant byte address 0x4 - core index']
  #allocation1 [shape = 'u32[72,128]{1,0:T(1,128)}', space=vmem, size = 0x9000, scoped, tag = 'internal scratch']
  %s0 = inlined_call_operand.vmem [shape: f32[2,16,256], index: 0, kind: input, shape index: {}]
  %s1 = inlined_call_operand.vmem [shape: f32[2,16,256], index: 1, kind: output, shape index: {}]
  %s2 = sld [smem:[#allocation0]]
  $region109: #{discriminator_forward.13} parent=0
    _
  %s4 = ssub.s32 1, %s2
  %s5 = scalar_select 0, %s4, %s2
  $region1: #{discriminator_forward.13} parent=0
    #allocation2 [shape = 'u8[16384]{0}', space=vmem, size = 0x4000, scoped, tag = 'input window, operand 0']
    #allocation3 [shape = 'u8[16384]{0}', space=vmem, size = 0x4000, scoped, tag = 'output window, operand 0']
    loop: start=0, step=1, limit=6
    $region2: #{discriminator_forward.13} parent=1 // loop_pre_header
      _
    $region3: #{discriminator_forward.13} parent=1 // loop_header
      %s7 = sphi 0, %s11
      %p8 = scmp.ge.s32.totalorder %s7, 6
      %s14 = sphi 0, %s26
      %s15 = sphi 0, %s22
      %s16 = sphi 0, %s14
      %s17 = sphi 0, %s15
      %s18 = sphi 0, %s16
      %s19 = sphi 0, %s17
      %s31 = sphi 0, %s33
      %s34 = sphi 0, %s31
      %s35 = sphi 0, %s34
      %s51 = sphi 0, %s35
      %s59 = sphi 0, %s61
      %s62 = sphi 0, %s59
      %s63 = sphi 0, %s62
      %s79 = sphi 0, %s63
    $region4: #{discriminator_forward.13} parent=1 // loop_header_branch
      %10 = sbr.rel (%p8) target = $region8
    $region5: #{discriminator_forward.13} parent=1 // loop_body
      %s12 = ssub.s32 %s7, 1
      %s13 = ssub.s32 %s7, 2
      %s20 = sadd.s32 1, %s15
      %p21 = scmp.ge.s32.totalorder %s20, 2
      %s22 = scalar_select %p21, 0, %s20
      %s23 = sadd.s32 1, %s14
      %s24 = scalar_select %p21, %s23, %s14
      %p25 = scmp.ge.s32.totalorder %s24, 2
      %s26 = scalar_select %p25, 0, %s24
      %s27 = ssub.s32 %s14, %s26
      %s28 = ssub.s32 %s15, %s22
      %s29 = sor.u32 %s27, %s28
      %p30 = scmp.eq.s32.totalorder %s29, 0
      %s32 = sadd.s32 %s31, 1
      %s33 = scalar_select %p30, %s31, %s32
      %p36 = pneg %p30
      %p37 = scmp.eq.s32.totalorder %s7, 3
      %p38 = por %p36, %p37
      %p39 = scmp.ne.s32.totalorder %s31, %s34
      %p40 = scmp.eq.s32.totalorder %s7, 0
      %p41 = por %p39, %p40
      %p42 = scmp.ne.s32.totalorder %s31, %s34
      %p43 = scmp.eq.s32.totalorder %s12, 3
      %p44 = por %p42, %p43
      %p45 = scmp.ne.s32.totalorder %s34, %s35
      %p46 = scmp.eq.s32.totalorder %s12, 0
      %p47 = por %p45, %p46
      %p48 = scmp.ne.s32.totalorder %s34, %s35
      %p49 = scmp.eq.s32.totalorder %s13, 3
      %p50 = por %p48, %p49
      %p52 = scmp.ne.s32.totalorder %s35, %s51
      %p53 = scmp.eq.s32.totalorder %s13, 0
      %p54 = por %p52, %p53
      %s55 = ssub.s32 %s14, %s26
      %s56 = ssub.s32 %s15, %s22
      %s57 = sor.u32 %s55, %s56
      %p58 = scmp.eq.s32.totalorder %s57, 0
      %s60 = sadd.s32 %s59, 1
      %s61 = scalar_select %p58, %s59, %s60
      %p64 = pneg %p58
      %p65 = scmp.eq.s32.totalorder %s7, 3
      %p66 = por %p64, %p65
      %p67 = scmp.ne.s32.totalorder %s59, %s62
      %p68 = scmp.eq.s32.totalorder %s7, 0
      %p69 = por %p67, %p68
      %p70 = scmp.ne.s32.totalorder %s59, %s62
      %p71 = scmp.eq.s32.totalorder %s12, 3
      %p72 = por %p70, %p71
      %p73 = scmp.ne.s32.totalorder %s62, %s63
      %p74 = scmp.eq.s32.totalorder %s12, 0
      %p75 = por %p73, %p74
      %p76 = scmp.ne.s32.totalorder %s62, %s63
      %p77 = scmp.eq.s32.totalorder %s13, 3
      %p78 = por %p76, %p77
      %p80 = scmp.ne.s32.totalorder %s63, %s79
      %p81 = scmp.eq.s32.totalorder %s13, 0
      %p82 = por %p80, %p81
      %p83 = scmp.le.s32.totalorder 1, %s7
      %p84 = scmp.lt.s32.totalorder %s7, 5
      %p85 = pnand %p83, %p84
      %p86 = pneg %p85
      // Predicated region
      $region9: #{discriminator_forward.13} parent=5 // pred_check
        _
      $region10: #{discriminator_forward.13} parent=5 // pred_check_branch
        %88 = sbr.rel (%p85) target = $region12
      $region11: #{discriminator_forward.13} parent=5 // pred_region
        %s89 = ssub.s32 %s7, 1
      $region12: #{discriminator_forward.13} parent=5 // pred_fallthru
        _
      %p90 = scmp.lt.s32.totalorder %s7, 4
      // Predicated region
      $region13: #{discriminator_forward.13} parent=5 // pred_check
        %p91 = pneg %p90
      $region14: #{discriminator_forward.13} parent=5 // pred_check_branch
        %93 = sbr.rel (%p91) target = $region16
      $region15: #{discriminator_forward.13} parent=5 // pred_region
        // Predicated region
        $region17: #{discriminator_forward.13} parent=15 // pred_check
          %p94 = pneg %p41
        $region18: #{discriminator_forward.13} parent=15 // pred_check_branch
          %96 = sbr.rel (%p94) target = $region20
        $region19: #{discriminator_forward.13} parent=15 // pred_region
          %s97 = sand.u32 %s31, 1
          %s98 = sand.u32 %s31, 1
          %s99 = smul.addr %s98, 16
          %s100 = scalar_lea.vmem [#allocation2], %s99
          %s101 = smul.addr %s14, 4
          %s102 = sadd.s32 %s15, %s101
          %s103 = smul.addr %s102, 8
          %s104 = scalar_lea.vmem %s0, %s103
          // Predicated region
          $region21: #{discriminator_forward.13} parent=19 // pred_check
            _
          $region22: #{discriminator_forward.13} parent=19 // pred_check_branch
            %106 = sbr.rel (0) target = $region24
          $region23: #{discriminator_forward.13} parent=19 // pred_region
            // Predicated region
            $region25: #{discriminator_forward.13} parent=23 // pred_check
              _
            $region26: #{discriminator_forward.13} parent=23 // pred_check_branch
              %108 = sbr.rel (0) target = $region28
            $region27: #{discriminator_forward.13} parent=23 // pred_region
              // Predicated region
              $region40: #{discriminator_forward.13} parent=27 // pred_check
                _
              $region41: #{discriminator_forward.13} parent=27 // pred_check_branch
                %126 = sbr.rel (0) target = $region43
              $region42: #{discriminator_forward.13} parent=27 // pred_region
                loop: start=0, step=1, limit=1
                $region44: #{discriminator_forward.13} parent=42 // loop_pre_header
                  _
                $region45: #{discriminator_forward.13} parent=42 // loop_header
                  %s128 = sphi 0, %s132
                  %p129 = scmp.ge.s32.totalorder %s128, 1
                  %s133 = sphi %s104, %s104
                  %s134 = sphi %s100, %s100
                $region46: #{discriminator_forward.13} parent=42 // loop_header_branch
                  %131 = sbr.rel (%p129) target = $region50
                $region47: #{discriminator_forward.13} parent=42 // loop_body
                  %v135 = vld [vmem:[%s133] sm:$0xff]
                  %136 = vst [vmem:[%s134] sm:$0xff] %v135
                  %v137 = vld [vmem:[%s133 + $0x10] sm:$0xff]
                  %138 = vst [vmem:[%s134 + $0x8] sm:$0xff] %v137
                $region48: #{discriminator_forward.13} parent=42 // loop_footer
                  %s132 = sadd.s32 1, %s128
                $region49: #{discriminator_forward.13} parent=42 // loop_footer_branch
                  %127 = sbr.rel target = $region45
                $region50: #{discriminator_forward.13} parent=42 // loop_exit
                  _
              $region43: #{discriminator_forward.13} parent=27 // pred_fallthru
                _
              // Predicated region
              $region51: #{discriminator_forward.13} parent=27 // pred_check
                _
              $region52: #{discriminator_forward.13} parent=27 // pred_check_branch
                %140 = sbr.rel target = $region54
              $region53: #{discriminator_forward.13} parent=27 // pred_region
                _
              $region54: #{discriminator_forward.13} parent=27 // pred_fallthru
                _
            $region28: #{discriminator_forward.13} parent=23 // pred_fallthru
              _
            // Predicated region
            $region29: #{discriminator_forward.13} parent=23 // pred_check
              _
            $region30: #{discriminator_forward.13} parent=23 // pred_check_branch
              %110 = sbr.rel target = $region32
            $region31: #{discriminator_forward.13} parent=23 // pred_region
              %s112 = ssub.s32 256, 1
              loop: start=0, step=1, limit=1
              $region33: #{discriminator_forward.13} parent=31 // loop_pre_header
                _
              $region34: #{discriminator_forward.13} parent=31 // loop_header
                %s114 = sphi 0, %s118
                %p115 = scmp.ge.s32.totalorder %s114, 1
                %s119 = sphi %s104, %s104
                %s120 = sphi %s100, %s100
              $region35: #{discriminator_forward.13} parent=31 // loop_header_branch
                %117 = sbr.rel (%p115) target = $region39
              $region36: #{discriminator_forward.13} parent=31 // loop_body
                %v121 = vld [vmem:[%s119] sm:%s112]
                %122 = vst [vmem:[%s120] sm:%s112] %v121
                %v123 = vld [vmem:[%s119 + $0x10] sm:%s112]
                %124 = vst [vmem:[%s120 + $0x8] sm:%s112] %v123
              $region37: #{discriminator_forward.13} parent=31 // loop_footer
                %s118 = sadd.s32 1, %s114
              $region38: #{discriminator_forward.13} parent=31 // loop_footer_branch
                %113 = sbr.rel target = $region34
              $region39: #{discriminator_forward.13} parent=31 // loop_exit
                _
            $region32: #{discriminator_forward.13} parent=23 // pred_fallthru
              _
          $region24: #{discriminator_forward.13} parent=19 // pred_fallthru
            _
          %141 = vnop
        $region20: #{discriminator_forward.13} parent=15 // pred_fallthru
          _
      $region16: #{discriminator_forward.13} parent=5 // pred_fallthru
        _
      %p142 = scmp.le.s32.totalorder 1, %s7
      %p143 = scmp.lt.s32.totalorder %s7, 5
      %p144 = pnand %p142, %p143
      %p145 = pneg %p144
      // Predicated region
      $region55: #{discriminator_forward.13} parent=5 // pred_check
        _
      $region56: #{discriminator_forward.13} parent=5 // pred_check_branch
        %147 = sbr.rel (%p144) target = $region58
      $region57: #{discriminator_forward.13} parent=5 // pred_region
        %s148 = ssub.s32 %s7, 1
        %s149 = sand.u32 %s34, 1
        %s150 = sand.u32 %s34, 1
        %s151 = smul.addr %s150, 16
        %s152 = scalar_lea.vmem [#allocation2], %s151
        // Predicated region
        $region59: #{discriminator_forward.13} parent=57 // pred_check
          %p153 = pneg %p47
        $region60: #{discriminator_forward.13} parent=57 // pred_check_branch
          %155 = sbr.rel (%p153) target = $region62
        $region61: #{discriminator_forward.13} parent=57 // pred_region
          _
        $region62: #{discriminator_forward.13} parent=57 // pred_fallthru
          _
        %s156 = sand.u32 %s34, 1
        %s157 = sand.u32 %s34, 1
        %s158 = smul.addr %s157, 16
        %s159 = scalar_lea.vmem [#allocation2], %s158
        %p160 = pneg %p47
        %p161 = pneg %p44
        %p162 = pneg %p75
        %p163 = pneg %p72
        %s164 = sand.u32 %s62, 1
        %s165 = sand.u32 %s62, 1
        %s166 = smul.addr %s165, 16
        %s167 = scalar_lea.vmem [#allocation3], %s166
        %v168 = vld [vmem:[%s152] sm:$0xff]
        %v169 = vld [vmem:[%s152 + $0x8] sm:$0xff]
        %v170 = vadd.f32 %v168, %v169
        %v171 = vrot.slane %v170, 4
        %v172 = vadd.f32 %v170, %v171
        %v173 = vrot.slane %v172, 2
        %v174 = vadd.f32 %v172, %v173
        %v175 = vrot.slane %v174, 1
        %v176 = vadd.f32 %v174, %v175
        %v177 = vrcp.pop 16.0
        %v178 = vmul.f32 16.0, %v177
        %v179 = vsub.f32 1.0, %v178
        %v180 = vmul.f32 %v177, %v179
        %v181 = vadd.f32 %v177, %v180
        %vm182 = vweird.f32 %v177
        %v183 = vsel %vm182, %v177, %v181
        %v184 = vmul.f32 %v176, %v183
        %v185 = vsub.f32 %v168, %v184
        %v186 = vsub.f32 %v169, %v184
        %v187 = vmul.f32 %v185, %v185
        %v188 = vmul.f32 %v186, %v186
        %v189 = vadd.f32 %v187, %v188
        %v190 = vrot.slane %v189, 4
        %v191 = vadd.f32 %v189, %v190
        %v192 = vrot.slane %v191, 2
        %v193 = vadd.f32 %v191, %v192
        %v194 = vrot.slane %v193, 1
        %v195 = vadd.f32 %v193, %v194
        %v196 = vmul.f32 %v195, %v183
        %v197 = vadd.f32 %v196, 1e-05
        %v198 = vrsqrt.pop %v197
        %v199 = vmul.f32 %v198, %v197
        %v200 = vmul.f32 %v199, %v198
        %v201 = vmul.f32 0.5, %v200
        %v202 = vsub.f32 1.5, %v201
        %v203 = vmul.f32 %v198, %v202
        %vm204 = vweird.f32 %v197
        %vm205 = vweird.f32 %v198
        %vm206 = vmor %vm204, %vm205
        %v207 = vsel %vm206, %v198, %v203
        %v208 = vmul.f32 %v185, %v207
        %v209 = vmul.f32 %v186, %v207
        %vm210 = vcmp.ge.f32.partialorder %v208, 0.0
        %vm211 = vcmp.ge.f32.partialorder %v209, 0.0
        %v212 = vmul.f32 %v208, 0.2
        %v213 = vmul.f32 %v209, 0.2
        %v214 = vsel %vm210, %v208, %v212
        %v215 = vsel %vm211, %v209, %v213
        %216 = vst [vmem:[%s167] sm:$0xff] %v214
        %217 = vst [vmem:[%s167 + $0x8] sm:$0xff] %v215
        %s218 = sand.u32 %s62, 1
        %s219 = sand.u32 %s62, 1
        %s220 = smul.addr %s219, 16
        %s221 = scalar_lea.vmem [#allocation3], %s220
        // Predicated region
        $region63: #{discriminator_forward.13} parent=57 // pred_check
          %p222 = pneg %p72
        $region64: #{discriminator_forward.13} parent=57 // pred_check_branch
          %224 = sbr.rel (%p222) target = $region66
        $region65: #{discriminator_forward.13} parent=57 // pred_region
          %s225 = smul.addr %s16, 4
          %s226 = sadd.s32 %s17, %s225
          %s227 = smul.addr %s226, 8
          %s228 = scalar_lea.vmem %s1, %s227
          // Predicated region
          $region67: #{discriminator_forward.13} parent=65 // pred_check
            _
          $region68: #{discriminator_forward.13} parent=65 // pred_check_branch
            %230 = sbr.rel (0) target = $region70
          $region69: #{discriminator_forward.13} parent=65 // pred_region
            // Predicated region
            $region71: #{discriminator_forward.13} parent=69 // pred_check
              _
            $region72: #{discriminator_forward.13} parent=69 // pred_check_branch
              %232 = sbr.rel (0) target = $region74
            $region73: #{discriminator_forward.13} parent=69 // pred_region
              // Predicated region
              $region86: #{discriminator_forward.13} parent=73 // pred_check
                _
              $region87: #{discriminator_forward.13} parent=73 // pred_check_branch
                %250 = sbr.rel (0) target = $region89
              $region88: #{discriminator_forward.13} parent=73 // pred_region
                loop: start=0, step=1, limit=1
                $region90: #{discriminator_forward.13} parent=88 // loop_pre_header
                  _
                $region91: #{discriminator_forward.13} parent=88 // loop_header
                  %s252 = sphi 0, %s256
                  %p253 = scmp.ge.s32.totalorder %s252, 1
                  %s257 = sphi %s221, %s221
                  %s258 = sphi %s228, %s228
                $region92: #{discriminator_forward.13} parent=88 // loop_header_branch
                  %255 = sbr.rel (%p253) target = $region96
                $region93: #{discriminator_forward.13} parent=88 // loop_body
                  %v259 = vld [vmem:[%s257] sm:$0xff]
                  %260 = vst [vmem:[%s258] sm:$0xff] %v259
                  %v261 = vld [vmem:[%s257 + $0x8] sm:$0xff]
                  %262 = vst [vmem:[%s258 + $0x10] sm:$0xff] %v261
                $region94: #{discriminator_forward.13} parent=88 // loop_footer
                  %s256 = sadd.s32 1, %s252
                $region95: #{discriminator_forward.13} parent=88 // loop_footer_branch
                  %251 = sbr.rel target = $region91
                $region96: #{discriminator_forward.13} parent=88 // loop_exit
                  _
              $region89: #{discriminator_forward.13} parent=73 // pred_fallthru
                _
              // Predicated region
              $region97: #{discriminator_forward.13} parent=73 // pred_check
                _
              $region98: #{discriminator_forward.13} parent=73 // pred_check_branch
                %264 = sbr.rel target = $region100
              $region99: #{discriminator_forward.13} parent=73 // pred_region
                _
              $region100: #{discriminator_forward.13} parent=73 // pred_fallthru
                _
            $region74: #{discriminator_forward.13} parent=69 // pred_fallthru
              _
            // Predicated region
            $region75: #{discriminator_forward.13} parent=69 // pred_check
              _
            $region76: #{discriminator_forward.13} parent=69 // pred_check_branch
              %234 = sbr.rel target = $region78
            $region77: #{discriminator_forward.13} parent=69 // pred_region
              %s236 = ssub.s32 256, 1
              loop: start=0, step=1, limit=1
              $region79: #{discriminator_forward.13} parent=77 // loop_pre_header
                _
              $region80: #{discriminator_forward.13} parent=77 // loop_header
                %s238 = sphi 0, %s242
                %p239 = scmp.ge.s32.totalorder %s238, 1
                %s243 = sphi %s221, %s221
                %s244 = sphi %s228, %s228
              $region81: #{discriminator_forward.13} parent=77 // loop_header_branch
                %241 = sbr.rel (%p239) target = $region85
              $region82: #{discriminator_forward.13} parent=77 // loop_body
                %v245 = vld [vmem:[%s243] sm:%s236]
                %246 = vst [vmem:[%s244] sm:%s236] %v245
                %v247 = vld [vmem:[%s243 + $0x8] sm:%s236]
                %248 = vst [vmem:[%s244 + $0x10] sm:%s236] %v247
              $region83: #{discriminator_forward.13} parent=77 // loop_footer
                %s242 = sadd.s32 1, %s238
              $region84: #{discriminator_forward.13} parent=77 // loop_footer_branch
                %237 = sbr.rel target = $region80
              $region85: #{discriminator_forward.13} parent=77 // loop_exit
                _
            $region78: #{discriminator_forward.13} parent=69 // pred_fallthru
              _
          $region70: #{discriminator_forward.13} parent=65 // pred_fallthru
            _
          %265 = vnop
        $region66: #{discriminator_forward.13} parent=57 // pred_fallthru
          _
      $region58: #{discriminator_forward.13} parent=5 // pred_fallthru
        _
      %p266 = scmp.le.s32.totalorder 2, %s7
      // Predicated region
      $region101: #{discriminator_forward.13} parent=5 // pred_check
        %p267 = pneg %p266
      $region102: #{discriminator_forward.13} parent=5 // pred_check_branch
        %269 = sbr.rel (%p267) target = $region104
      $region103: #{discriminator_forward.13} parent=5 // pred_region
        %s270 = ssub.s32 %s7, 2
        // Predicated region
        $region105: #{discriminator_forward.13} parent=103 // pred_check
          %p271 = pneg %p78
        $region106: #{discriminator_forward.13} parent=103 // pred_check_branch
          %273 = sbr.rel (%p271) target = $region108
        $region107: #{discriminator_forward.13} parent=103 // pred_region
          %s274 = sand.u32 %s63, 1
          %s275 = sand.u32 %s63, 1
          %s276 = smul.addr %s275, 16
          %s277 = scalar_lea.vmem [#allocation3], %s276
        $region108: #{discriminator_forward.13} parent=103 // pred_fallthru
          _
      $region104: #{discriminator_forward.13} parent=5 // pred_fallthru
        _
    $region6: #{discriminator_forward.13} parent=1 // loop_footer
      %s11 = sadd.s32 1, %s7
    $region7: #{discriminator_forward.13} parent=1 // loop_footer_branch
      %6 = sbr.rel target = $region3
    $region8: #{discriminator_forward.13} parent=1 // loop_exit
      _

// kernel: discriminator_forward.12
$region0: #{discriminator_forward.12}
  #allocation0 [shape = 'u32[]', space=smem, size = 0x4, offset = 0x4, fixed_abs, tag = 'smem constant byte address 0x4 - core index']
  #allocation1 [shape = 'u32[72,128]{1,0:T(1,128)}', space=vmem, size = 0x9000, scoped, tag = 'internal scratch']
  #allocation2 [shape = 'f32[32,256]{1,0:T(8,128)}', space=vmem, size = 0x8000, scoped, tag = 'scratch operand']
  %s0 = inlined_call_operand.vmem [shape: bf16[32,2048], index: 0, kind: input, shape index: {}]
  %s1 = inlined_call_operand.vmem [shape: bf16[2048,256], index: 1, kind: input, shape index: {}]
  %s2 = inlined_call_operand.vmem [shape: f32[1,256], index: 2, kind: input, shape index: {}]
  %s3 = inlined_call_operand.vmem [shape: f32[32,256], index: 3, kind: output, shape index: {}]
  %s4 = sld [smem:[#allocation0]]
  $region76: #{discriminator_forward.12} parent=0
    _
  %s6 = ssub.s32 1, %s4
  %s7 = scalar_select 0, %s6, %s4
  $region1: #{discriminator_forward.12} parent=0
    #allocation3 [shape = 'u8[131072]{0}', space=vmem, size = 0x20000, scoped, tag = 'input window, operand 0']
    loop: start=0, step=1, limit=4
    $region2: #{discriminator_forward.12} parent=1 // loop_pre_header
      _
    $region3: #{discriminator_forward.12} parent=1 // loop_header
      %s9 = sphi 0, %s13
      %p10 = scmp.ge.s32.totalorder %s9, 4
      %s16 = sphi 0, %s28
      %s17 = sphi 0, %s24
      %s18 = sphi 0, %s16
      %s19 = sphi 0, %s17
      %s20 = sphi 0, %s18
      %s21 = sphi 0, %s19
      %s33 = sphi 0, %s35
      %s36 = sphi 0, %s33
      %s37 = sphi 0, %s36
      %s53 = sphi 0, %s37
      %s59 = sphi 0, %s61
      %s62 = sphi 0, %s59
      %s63 = sphi 0, %s62
      %s79 = sphi 0, %s63
      %s83 = sphi 0, %s83
      %s85 = sphi 0, %s83
      %s86 = sphi 0, %s85
      %s100 = sphi 0, %s86
      %s106 = sphi 0, %s108
      %s109 = sphi 0, %s106
      %s110 = sphi 0, %s109
      %s126 = sphi 0, %s110
    $region4: #{discriminator_forward.12} parent=1 // loop_header_branch
      %12 = sbr.rel (%p10) target = $region8
    $region5: #{discriminator_forward.12} parent=1 // loop_body
      %s14 = ssub.s32 %s9, 1
      %s15 = ssub.s32 %s9, 2
      %s22 = sadd.s32 1, %s17
      %p23 = scmp.ge.s32.totalorder %s22, 2
      %s24 = scalar_select %p23, 0, %s22
      %s25 = sadd.s32 1, %s16
      %s26 = scalar_select %p23, %s25, %s16
      %p27 = scmp.ge.s32.totalorder %s26, 1
      %s28 = scalar_select %p27, 0, %s26
      %s29 = ssub.s32 %s16, %s28
      %s30 = ssub.s32 %s17, %s24
      %s31 = sor.u32 %s29, %s30
      %p32 = scmp.eq.s32.totalorder %s31, 0
      %s34 = sadd.s32 %s33, 1
      %s35 = scalar_select %p32, %s33, %s34
      %p38 = pneg %p32
      %p39 = scmp.eq.s32.totalorder %s9, 1
      %p40 = por %p38, %p39
      %p41 = scmp.ne.s32.totalorder %s33, %s36
      %p42 = scmp.eq.s32.totalorder %s9, 0
      %p43 = por %p41, %p42
      %p44 = scmp.ne.s32.totalorder %s33, %s36
      %p45 = scmp.eq.s32.totalorder %s14, 1
      %p46 = por %p44, %p45
      %p47 = scmp.ne.s32.totalorder %s36, %s37
      %p48 = scmp.eq.s32.totalorder %s14, 0
      %p49 = por %p47, %p48
      %p50 = scmp.ne.s32.totalorder %s36, %s37
      %p51 = scmp.eq.s32.totalorder %s15, 1
      %p52 = por %p50, %p51
      %p54 = scmp.ne.s32.totalorder %s37, %s53
      %p55 = scmp.eq.s32.totalorder %s15, 0
      %p56 = por %p54, %p55
      %s57 = ssub.s32 %s17, %s24
      %p58 = scmp.eq.s32.totalorder %s57, 0
      %s60 = sadd.s32 %s59, 1
      %s61 = scalar_select %p58, %s59, %s60
      %p64 = pneg %p58
      %p65 = scmp.eq.s32.totalorder %s9, 1
      %p66 = por %p64, %p65
      %p67 = scmp.ne.s32.totalorder %s59, %s62
      %p68 = scmp.eq.s32.totalorder %s9, 0
      %p69 = por %p67, %p68
      %p70 = scmp.ne.s32.totalorder %s59, %s62
      %p71 = scmp.eq.s32.totalorder %s14, 1
      %p72 = por %p70, %p71
      %p73 = scmp.ne.s32.totalorder %s62, %s63
      %p74 = scmp.eq.s32.totalorder %s14, 0
      %p75 = por %p73, %p74
      %p76 = scmp.ne.s32.totalorder %s62, %s63
      %p77 = scmp.eq.s32.totalorder %s15, 1
      %p78 = por %p76, %p77
      %p80 = scmp.ne.s32.totalorder %s63, %s79
      %p81 = scmp.eq.s32.totalorder %s15, 0
      %p82 = por %p80, %p81
      %s84 = sadd.s32 %s83, 1
      %p87 = scmp.eq.s32.totalorder %s9, 1
      %p88 = scmp.ne.s32.totalorder %s83, %s85
      %p89 = scmp.eq.s32.totalorder %s9, 0
      %p90 = por %p88, %p89
      %p91 = scmp.ne.s32.totalorder %s83, %s85
      %p92 = scmp.eq.s32.totalorder %s14, 1
      %p93 = por %p91, %p92
      %p94 = scmp.ne.s32.totalorder %s85, %s86
      %p95 = scmp.eq.s32.totalorder %s14, 0
      %p96 = por %p94, %p95
      %p97 = scmp.ne.s32.totalorder %s85, %s86
      %p98 = scmp.eq.s32.totalorder %s15, 1
      %p99 = por %p97, %p98
      %p101 = scmp.ne.s32.totalorder %s86, %s100
      %p102 = scmp.eq.s32.totalorder %s15, 0
      %p103 = por %p101, %p102
      %s104 = ssub.s32 %s16, %s28
      %p105 = scmp.eq.s32.totalorder %s104, 0
      %s107 = sadd.s32 %s106, 1
      %s108 = scalar_select %p105, %s106, %s107
      %p111 = pneg %p105
      %p112 = scmp.eq.s32.totalorder %s9, 1
      %p113 = por %p111, %p112
      %p114 = scmp.ne.s32.totalorder %s106, %s109
      %p115 = scmp.eq.s32.totalorder %s9, 0
      %p116 = por %p114, %p115
      %p117 = scmp.ne.s32.totalorder %s106, %s109
      %p118 = scmp.eq.s32.totalorder %s14, 1
      %p119 = por %p117, %p118
      %p120 = scmp.ne.s32.totalorder %s109, %s110
      %p121 = scmp.eq.s32.totalorder %s14, 0
      %p122 = por %p120, %p121
      %p123 = scmp.ne.s32.totalorder %s109, %s110
      %p124 = scmp.eq.s32.totalorder %s15, 1
      %p125 = por %p123, %p124
      %p127 = scmp.ne.s32.totalorder %s110, %s126
      %p128 = scmp.eq.s32.totalorder %s15, 0
      %p129 = por %p127, %p128
      %p130 = scmp.le.s32.totalorder 1, %s9
      %p131 = scmp.lt.s32.totalorder %s9, 3
      %p132 = pnand %p130, %p131
      %p133 = pneg %p132
      // Predicated region
      $region9: #{discriminator_forward.12} parent=5 // pred_check
        _
      $region10: #{discriminator_forward.12} parent=5 // pred_check_branch
        %135 = sbr.rel (%p132) target = $region12
      $region11: #{discriminator_forward.12} parent=5 // pred_region
        %s136 = ssub.s32 %s9, 1
        // Predicated region
        $region13: #{discriminator_forward.12} parent=11 // pred_check
          %p137 = pneg %p96
        $region14: #{discriminator_forward.12} parent=11 // pred_check_branch
          %139 = sbr.rel (%p137) target = $region16
        $region15: #{discriminator_forward.12} parent=11 // pred_region
          _
        $region16: #{discriminator_forward.12} parent=11 // pred_fallthru
          _
      $region12: #{discriminator_forward.12} parent=5 // pred_fallthru
        _
      %p140 = scmp.lt.s32.totalorder %s9, 2
      // Predicated region
      $region17: #{discriminator_forward.12} parent=5 // pred_check
        %p141 = pneg %p140
      $region18: #{discriminator_forward.12} parent=5 // pred_check_branch
        %143 = sbr.rel (%p141) target = $region20
      $region19: #{discriminator_forward.12} parent=5 // pred_region
        // Predicated region
        $region21: #{discriminator_forward.12} parent=19 // pred_check
          %p144 = pneg %p43
        $region22: #{discriminator_forward.12} parent=19 // pred_check_branch
          %146 = sbr.rel (%p144) target = $region24
        $region23: #{discriminator_forward.12} parent=19 // pred_region
          %s147 = sand.u32 %s33, 1
          %s148 = sand.u32 %s33, 1
          %s149 = smul.addr %s148, 128
          %s150 = scalar_lea.vmem [#allocation3], %s149
          %s151 = smul.u32 4, %s16
          %s152 = smul.u32 8, %s17
          %s153 = smul.addr %s151, 16
          %s154 = sadd.s32 %s152, %s153
          %s155 = smul.addr %s154, 4
          %s156 = scalar_lea.vmem %s0, %s155
          // Predicated region
          $region25: #{discriminator_forward.12} parent=23 // pred_check
            _
          $region26: #{discriminator_forward.12} parent=23 // pred_check_branch
            %158 = sbr.rel (0) target = $region28
          $region27: #{discriminator_forward.12} parent=23 // pred_region
            // Predicated region
            $region29: #{discriminator_forward.12} parent=27 // pred_check
              _
            $region30: #{discriminator_forward.12} parent=27 // pred_check_branch
              %160 = sbr.rel (0) target = $region32
            $region31: #{discriminator_forward.12} parent=27 // pred_region
              loop: start=0, step=1, limit=1
              $region33: #{discriminator_forward.12} parent=31 // loop_pre_header
                _
              $region34: #{discriminator_forward.12} parent=31 // loop_header
                %s162 = sphi 0, %s166
                %p163 = scmp.ge.s32.totalorder %s162, 1
                %s167 = sphi %s156, %s156
                %s168 = sphi %s150, %s150
              $region35: #{discriminator_forward.12} parent=31 // loop_header_branch
                %165 = sbr.rel (%p163) target = $region39
              $region36: #{discriminator_forward.12} parent=31 // loop_body
                %v169 = vld [vmem:[%s167] sm:$0xff]
                %170 = vst [vmem:[%s168] sm:$0xff] %v169
                %v171 = vld [vmem:[%s167 + $0x8] sm:$0xff]
                %172 = vst [vmem:[%s168 + $0x8] sm:$0xff] %v171
                %v173 = vld [vmem:[%s167 + $0x10] sm:$0xff]
                %174 = vst [vmem:[%s168 + $0x10] sm:$0xff] %v173
                %v175 = vld [vmem:[%s167 + $0x18] sm:$0xff]
                %176 = vst [vmem:[%s168 + $0x18] sm:$0xff] %v175
                %v177 = vld [vmem:[%s167 + $0x40] sm:$0xff]
                %178 = vst [vmem:[%s168 + $0x20] sm:$0xff] %v177
                %v179 = vld [vmem:[%s167 + $0x48] sm:$0xff]
                %180 = vst [vmem:[%s168 + $0x28] sm:$0xff] %v179
                %v181 = vld [vmem:[%s167 + $0x50] sm:$0xff]
                %182 = vst [vmem:[%s168 + $0x30] sm:$0xff] %v181
                %v183 = vld [vmem:[%s167 + $0x58] sm:$0xff]
                %184 = vst [vmem:[%s168 + $0x38] sm:$0xff] %v183
                %v185 = vld [vmem:[%s167 + $0x80] sm:$0xff]
                %186 = vst [vmem:[%s168 + $0x40] sm:$0xff] %v185
                %v187 = vld [vmem:[%s167 + $0x88] sm:$0xff]
                %188 = vst [vmem:[%s168 + $0x48] sm:$0xff] %v187
                %v189 = vld [vmem:[%s167 + $0x90] sm:$0xff]
                %190 = vst [vmem:[%s168 + $0x50] sm:$0xff] %v189
                %v191 = vld [vmem:[%s167 + $0x98] sm:$0xff]
                %192 = vst [vmem:[%s168 + $0x58] sm:$0xff] %v191
                %v193 = vld [vmem:[%s167 + $0xc0] sm:$0xff]
                %194 = vst [vmem:[%s168 + $0x60] sm:$0xff] %v193
                %v195 = vld [vmem:[%s167 + $0xc8] sm:$0xff]
                %196 = vst [vmem:[%s168 + $0x68] sm:$0xff] %v195
                %v197 = vld [vmem:[%s167 + $0xd0] sm:$0xff]
                %198 = vst [vmem:[%s168 + $0x70] sm:$0xff] %v197
                %v199 = vld [vmem:[%s167 + $0xd8] sm:$0xff]
                %200 = vst [vmem:[%s168 + $0x78] sm:$0xff] %v199
              $region37: #{discriminator_forward.12} parent=31 // loop_footer
                %s166 = sadd.s32 1, %s162
              $region38: #{discriminator_forward.12} parent=31 // loop_footer_branch
                %161 = sbr.rel target = $region34
              $region39: #{discriminator_forward.12} parent=31 // loop_exit
                _
            $region32: #{discriminator_forward.12} parent=27 // pred_fallthru
              _
            // Predicated region
            $region40: #{discriminator_forward.12} parent=27 // pred_check
              _
            $region41: #{discriminator_forward.12} parent=27 // pred_check_branch
              %202 = sbr.rel target = $region43
            $region42: #{discriminator_forward.12} parent=27 // pred_region
              _
            $region43: #{discriminator_forward.12} parent=27 // pred_fallthru
              _
          $region28: #{discriminator_forward.12} parent=23 // pred_fallthru
            _
          %203 = vnop
        $region24: #{discriminator_forward.12} parent=19 // pred_fallthru
          _
        // Predicated region
        $region44: #{discriminator_forward.12} parent=19 // pred_check
          %p204 = pneg %p69
        $region45: #{discriminator_forward.12} parent=19 // pred_check_branch
          %206 = sbr.rel (%p204) target = $region47
        $region46: #{discriminator_forward.12} parent=19 // pred_region
          %s207 = smul.u32 128, %s17
          %p208 = scmp.lt.s32.totalorder %s207, 255
          %s209 = scalar_select %p208, %s207, 255
          %s210 = smul.addr %s209, 2
          %s211 = smul.addr %s210, 4
          %s212 = scalar_lea.vmem %s1, %s211
          %s213 = smul.u32 128, %s17
        $region47: #{discriminator_forward.12} parent=19 // pred_fallthru
          _
      $region20: #{discriminator_forward.12} parent=5 // pred_fallthru
        _
      %p214 = scmp.le.s32.totalorder 1, %s9
      %p215 = scmp.lt.s32.totalorder %s9, 3
      %p216 = pnand %p214, %p215
      %p217 = pneg %p216
      // Predicated region
      $region48: #{discriminator_forward.12} parent=5 // pred_check
        _
      $region49: #{discriminator_forward.12} parent=5 // pred_check_branch
        %219 = sbr.rel (%p216) target = $region51
      $region50: #{discriminator_forward.12} parent=5 // pred_region
        %s220 = ssub.s32 %s9, 1
        %s221 = sand.u32 %s36, 1
        %s222 = sand.u32 %s36, 1
        %s223 = smul.addr %s222, 128
        %s224 = scalar_lea.vmem [#allocation3], %s223
        // Predicated region
        $region52: #{discriminator_forward.12} parent=50 // pred_check
          %p225 = pneg %p49
        $region53: #{discriminator_forward.12} parent=50 // pred_check_branch
          %227 = sbr.rel (%p225) target = $region55
        $region54: #{discriminator_forward.12} parent=50 // pred_region
          _
        $region55: #{discriminator_forward.12} parent=50 // pred_fallthru
          _
        %s228 = sand.u32 %s36, 1
        %s229 = sand.u32 %s36, 1
        %s230 = smul.addr %s229, 128
        %s231 = scalar_lea.vmem [#allocation3], %s230
        %p232 = pneg %p49
        %p233 = pneg %p46
        %s234 = smul.u32 128, %s19
        %p235 = scmp.lt.s32.totalorder %s234, 255
        %s236 = scalar_select %p235, %s234, 255
        %s237 = smul.addr %s236, 2
        %s238 = smul.addr %s237, 4
        %s239 = scalar_lea.vmem %s1, %s238
        %p240 = pneg %p75
        %p241 = pneg %p72
        %p242 = pneg %p96
        %p243 = pneg %p93
        %p244 = pneg %p122
        %p245 = pneg %p119
        %s246 = smul.u32 4, %s18
        %p247 = scmp.lt.s32.totalorder %s246, 3
        %s248 = scalar_select %p247, %s246, 3
        %s249 = smul.addr %s248, 2
        %s250 = smul.addr %s249, 8
        %s251 = scalar_lea.vmem %s3, %s250
        %s252 = smul.u32 4, %s18
        %s253 = smul.u32 8, %s19
        %s254 = smul.u32 128, %s19
        %p255 = scmp.lt.s32.totalorder %s254, 255
        %s256 = scalar_select %p255, %s254, 255
        %s257 = smul.addr %s256, 2
        %s258 = smul.addr %s257, 4
        %s259 = scalar_lea.vmem %s1, %s258
        %s260 = smul.u32 128, %s19
        %s261 = smul.u32 4, %s18
        %p262 = scmp.lt.s32.totalorder %s261, 3
        %s263 = scalar_select %p262, %s261, 3
        %s264 = smul.addr %s263, 2
        %s265 = smul.addr %s264, 8
        %s266 = scalar_lea.vmem %s3, %s265
        %s267 = smul.u32 4, %s18
        %p268 = scmp.eq.s32.totalorder %s19, 0
        // Predicated region
        $region56: #{discriminator_forward.12} parent=50 // pred_check
          %p269 = pneg %p268
        $region57: #{discriminator_forward.12} parent=50 // pred_check_branch
          %271 = sbr.rel (%p269) target = $region59
        $region58: #{discriminator_forward.12} parent=50 // pred_region
          %272 = vst [vmem:[#allocation2] sm:$0xff] 0.0
          %273 = vst [vmem:[#allocation2 + $0x8] sm:$0xff] 0.0
          %274 = vst [vmem:[#allocation2 + $0x10] sm:$0xff] 0.0
          %275 = vst [vmem:[#allocation2 + $0x18] sm:$0xff] 0.0
          %276 = vst [vmem:[#allocation2 + $0x20] sm:$0xff] 0.0
          %277 = vst [vmem:[#allocation2 + $0x28] sm:$0xff] 0.0
          %278 = vst [vmem:[#allocation2 + $0x30] sm:$0xff] 0.0
          %279 = vst [vmem:[#allocation2 + $0x38] sm:$0xff] 0.0
        $region59: #{discriminator_forward.12} parent=50 // pred_fallthru
          _
        %v280 = vld [vmem:[#allocation2] sm:$0xff]
        %v281 = vld [vmem:[#allocation2 + $0x8] sm:$0xff]
        %v282 = vld [vmem:[#allocation2 + $0x10] sm:$0xff]
        %v283 = vld [vmem:[#allocation2 + $0x18] sm:$0xff]
        %v284 = vld [vmem:[#allocation2 + $0x20] sm:$0xff]
        %v285 = vld [vmem:[#allocation2 + $0x28] sm:$0xff]
        %v286 = vld [vmem:[#allocation2 + $0x30] sm:$0xff]
        %v287 = vld [vmem:[#allocation2 + $0x38] sm:$0xff]
        %v288 = vld [vmem:[%s224] sm:$0xff]
        %v289 = vld [vmem:[%s224 + $0x8] sm:$0xff]
        %v290 = vld [vmem:[%s224 + $0x10] sm:$0xff]
        %v291 = vld [vmem:[%s224 + $0x18] sm:$0xff]
        %v292 = vld [vmem:[%s224 + $0x20] sm:$0xff]
        %v293 = vld [vmem:[%s224 + $0x28] sm:$0xff]
        %v294 = vld [vmem:[%s224 + $0x30] sm:$0xff]
        %v295 = vld [vmem:[%s224 + $0x38] sm:$0xff]
        %v296 = vld [vmem:[%s224 + $0x40] sm:$0xff]
        %v297 = vld [vmem:[%s224 + $0x48] sm:$0xff]
        %v298 = vld [vmem:[%s224 + $0x50] sm:$0xff]
        %v299 = vld [vmem:[%s224 + $0x58] sm:$0xff]
        %v300 = vld [vmem:[%s224 + $0x60] sm:$0xff]
        %v301 = vld [vmem:[%s224 + $0x68] sm:$0xff]
        %v302 = vld [vmem:[%s224 + $0x70] sm:$0xff]
        %v303 = vld [vmem:[%s224 + $0x78] sm:$0xff]
        %v304 = vld [vmem:[%s259] sm:$0xff]
        %v305 = vld [vmem:[%s259 + $0x8] sm:$0xff]
        %v306 = vld [vmem:[%s259 + $0x10] sm:$0xff]
        %v307 = vld [vmem:[%s259 + $0x18] sm:$0xff]
        %v308 = vld [vmem:[%s259 + $0x20] sm:$0xff]
        %v309 = vld [vmem:[%s259 + $0x28] sm:$0xff]
        %v310 = vld [vmem:[%s259 + $0x30] sm:$0xff]
        %v311 = vld [vmem:[%s259 + $0x38] sm:$0xff]
        %v312 = vld [vmem:[%s259 + $0x40] sm:$0xff]
        %v313 = vld [vmem:[%s259 + $0x48] sm:$0xff]
        %v314 = vld [vmem:[%s259 + $0x50] sm:$0xff]
        %v315 = vld [vmem:[%s259 + $0x58] sm:$0xff]
        %v316 = vld [vmem:[%s259 + $0x60] sm:$0xff]
        %v317 = vld [vmem:[%s259 + $0x68] sm:$0xff]
        %v318 = vld [vmem:[%s259 + $0x70] sm:$0xff]
        %v319 = vld [vmem:[%s259 + $0x78] sm:$0xff]
        %v320 = vld [vmem:[%s259 + $0x80] sm:$0xff]
        %v321 = vld [vmem:[%s259 + $0x88] sm:$0xff]
        %v322 = vld [vmem:[%s259 + $0x90] sm:$0xff]
        %v323 = vld [vmem:[%s259 + $0x98] sm:$0xff]
        %v324 = vld [vmem:[%s259 + $0xa0] sm:$0xff]
        %v325 = vld [vmem:[%s259 + $0xa8] sm:$0xff]
        %v326 = vld [vmem:[%s259 + $0xb0] sm:$0xff]
        %v327 = vld [vmem:[%s259 + $0xb8] sm:$0xff]
        %v328 = vld [vmem:[%s259 + $0xc0] sm:$0xff]
        %v329 = vld [vmem:[%s259 + $0xc8] sm:$0xff]
        %v330 = vld [vmem:[%s259 + $0xd0] sm:$0xff]
        %v331 = vld [vmem:[%s259 + $0xd8] sm:$0xff]
        %v332 = vld [vmem:[%s259 + $0xe0] sm:$0xff]
        %v333 = vld [vmem:[%s259 + $0xe8] sm:$0xff]
        %v334 = vld [vmem:[%s259 + $0xf0] sm:$0xff]
        %v335 = vld [vmem:[%s259 + $0xf8] sm:$0xff]
        %v336 = vld [vmem:[%s259 + $0x100] sm:$0xff]
        %v337 = vld [vmem:[%s259 + $0x108] sm:$0xff]
        %v338 = vld [vmem:[%s259 + $0x110] sm:$0xff]
        %v339 = vld [vmem:[%s259 + $0x118] sm:$0xff]
        %v340 = vld [vmem:[%s259 + $0x120] sm:$0xff]
        %v341 = vld [vmem:[%s259 + $0x128] sm:$0xff]
        %v342 = vld [vmem:[%s259 + $0x130] sm:$0xff]
        %v343 = vld [vmem:[%s259 + $0x138] sm:$0xff]
        %v344 = vld [vmem:[%s259 + $0x140] sm:$0xff]
        %v345 = vld [vmem:[%s259 + $0x148] sm:$0xff]
        %v346 = vld [vmem:[%s259 + $0x150] sm:$0xff]
        %v347 = vld [vmem:[%s259 + $0x158] sm:$0xff]
        %v348 = vld [vmem:[%s259 + $0x160] sm:$0xff]
        %v349 = vld [vmem:[%s259 + $0x168] sm:$0xff]
        %v350 = vld [vmem:[%s259 + $0x170] sm:$0xff]
        %v351 = vld [vmem:[%s259 + $0x178] sm:$0xff]
        %v352 = vld [vmem:[%s259 + $0x180] sm:$0xff]
        %v353 = vld [vmem:[%s259 + $0x188] sm:$0xff]
        %v354 = vld [vmem:[%s259 + $0x190] sm:$0xff]
        %v355 = vld [vmem:[%s259 + $0x198] sm:$0xff]
        %v356 = vld [vmem:[%s259 + $0x1a0] sm:$0xff]
        %v357 = vld [vmem:[%s259 + $0x1a8] sm:$0xff]
        %v358 = vld [vmem:[%s259 + $0x1b0] sm:$0xff]
        %v359 = vld [vmem:[%s259 + $0x1b8] sm:$0xff]
        %v360 = vld [vmem:[%s259 + $0x1c0] sm:$0xff]
        %v361 = vld [vmem:[%s259 + $0x1c8] sm:$0xff]
        %v362 = vld [vmem:[%s259 + $0x1d0] sm:$0xff]
        %v363 = vld [vmem:[%s259 + $0x1d8] sm:$0xff]
        %v364 = vld [vmem:[%s259 + $0x1e0] sm:$0xff]
        %v365 = vld [vmem:[%s259 + $0x1e8] sm:$0xff]
        %v366 = vld [vmem:[%s259 + $0x1f0] sm:$0xff]
        %v367 = vld [vmem:[%s259 + $0x1f8] sm:$0xff]
        %v368 = vld [vmem:[%s259 + $0x200] sm:$0xff]
        %v369 = vld [vmem:[%s259 + $0x208] sm:$0xff]
        %v370 = vld [vmem:[%s259 + $0x210] sm:$0xff]
        %v371 = vld [vmem:[%s259 + $0x218] sm:$0xff]
        %v372 = vld [vmem:[%s259 + $0x220] sm:$0xff]
        %v373 = vld [vmem:[%s259 + $0x228] sm:$0xff]
        %v374 = vld [vmem:[%s259 + $0x230] sm:$0xff]
        %v375 = vld [vmem:[%s259 + $0x238] sm:$0xff]
        %v376 = vld [vmem:[%s259 + $0x240] sm:$0xff]
        %v377 = vld [vmem:[%s259 + $0x248] sm:$0xff]
        %v378 = vld [vmem:[%s259 + $0x250] sm:$0xff]
        %v379 = vld [vmem:[%s259 + $0x258] sm:$0xff]
        %v380 = vld [vmem:[%s259 + $0x260] sm:$0xff]
        %v381 = vld [vmem:[%s259 + $0x268] sm:$0xff]
        %v382 = vld [vmem:[%s259 + $0x270] sm:$0xff]
        %v383 = vld [vmem:[%s259 + $0x278] sm:$0xff]
        %v384 = vld [vmem:[%s259 + $0x280] sm:$0xff]
        %v385 = vld [vmem:[%s259 + $0x288] sm:$0xff]
        %v386 = vld [vmem:[%s259 + $0x290] sm:$0xff]
        %v387 = vld [vmem:[%s259 + $0x298] sm:$0xff]
        %v388 = vld [vmem:[%s259 + $0x2a0] sm:$0xff]
        %v389 = vld [vmem:[%s259 + $0x2a8] sm:$0xff]
        %v390 = vld [vmem:[%s259 + $0x2b0] sm:$0xff]
        %v391 = vld [vmem:[%s259 + $0x2b8] sm:$0xff]
        %v392 = vld [vmem:[%s259 + $0x2c0] sm:$0xff]
        %v393 = vld [vmem:[%s259 + $0x2c8] sm:$0xff]
        %v394 = vld [vmem:[%s259 + $0x2d0] sm:$0xff]
        %v395 = vld [vmem:[%s259 + $0x2d8] sm:$0xff]
        %v396 = vld [vmem:[%s259 + $0x2e0] sm:$0xff]
        %v397 = vld [vmem:[%s259 + $0x2e8] sm:$0xff]
        %v398 = vld [vmem:[%s259 + $0x2f0] sm:$0xff]
        %v399 = vld [vmem:[%s259 + $0x2f8] sm:$0xff]
        %v400 = vld [vmem:[%s259 + $0x300] sm:$0xff]
        %v401 = vld [vmem:[%s259 + $0x308] sm:$0xff]
        %v402 = vld [vmem:[%s259 + $0x310] sm:$0xff]
        %v403 = vld [vmem:[%s259 + $0x318] sm:$0xff]
        %v404 = vld [vmem:[%s259 + $0x320] sm:$0xff]
        %v405 = vld [vmem:[%s259 + $0x328] sm:$0xff]
        %v406 = vld [vmem:[%s259 + $0x330] sm:$0xff]
        %v407 = vld [vmem:[%s259 + $0x338] sm:$0xff]
        %v408 = vld [vmem:[%s259 + $0x340] sm:$0xff]
        %v409 = vld [vmem:[%s259 + $0x348] sm:$0xff]
        %v410 = vld [vmem:[%s259 + $0x350] sm:$0xff]
        %v411 = vld [vmem:[%s259 + $0x358] sm:$0xff]
        %v412 = vld [vmem:[%s259 + $0x360] sm:$0xff]
        %v413 = vld [vmem:[%s259 + $0x368] sm:$0xff]
        %v414 = vld [vmem:[%s259 + $0x370] sm:$0xff]
        %v415 = vld [vmem:[%s259 + $0x378] sm:$0xff]
        %v416 = vld [vmem:[%s259 + $0x380] sm:$0xff]
        %v417 = vld [vmem:[%s259 + $0x388] sm:$0xff]
        %v418 = vld [vmem:[%s259 + $0x390] sm:$0xff]
        %v419 = vld [vmem:[%s259 + $0x398] sm:$0xff]
        %v420 = vld [vmem:[%s259 + $0x3a0] sm:$0xff]
        %v421 = vld [vmem:[%s259 + $0x3a8] sm:$0xff]
        %v422 = vld [vmem:[%s259 + $0x3b0] sm:$0xff]
        %v423 = vld [vmem:[%s259 + $0x3b8] sm:$0xff]
        %v424 = vld [vmem:[%s259 + $0x3c0] sm:$0xff]
        %v425 = vld [vmem:[%s259 + $0x3c8] sm:$0xff]
        %v426 = vld [vmem:[%s259 + $0x3d0] sm:$0xff]
        %v427 = vld [vmem:[%s259 + $0x3d8] sm:$0xff]
        %v428 = vld [vmem:[%s259 + $0x3e0] sm:$0xff]
        %v429 = vld [vmem:[%s259 + $0x3e8] sm:$0xff]
        %v430 = vld [vmem:[%s259 + $0x3f0] sm:$0xff]
        %v431 = vld [vmem:[%s259 + $0x3f8] sm:$0xff]
        %v448 = vunpack.c.l.b16 %v288
        %v449 = vunpack.c.h.b16 %v288
        %v450 = vunpack.c.l.b16 %v289
        %v451 = vunpack.c.h.b16 %v289
        %v452 = vunpack.c.l.b16 %v290
        %v453 = vunpack.c.h.b16 %v290
        %v454 = vunpack.c.l.b16 %v291
        %v455 = vunpack.c.h.b16 %v291
        %v456 = vunpack.c.l.b16 %v292
        %v457 = vunpack.c.h.b16 %v292
        %v458 = vunpack.c.l.b16 %v293
        %v459 = vunpack.c.h.b16 %v293
        %v460 = vunpack.c.l.b16 %v294
        %v461 = vunpack.c.h.b16 %v294
        %v462 = vunpack.c.l.b16 %v295
        %v463 = vunpack.c.h.b16 %v295
        %v464 = vunpack.c.l.b16 %v296
        %v465 = vunpack.c.h.b16 %v296
        %v466 = vunpack.c.l.b16 %v297
        %v467 = vunpack.c.h.b16 %v297
        %v468 = vunpack.c.l.b16 %v298
        %v469 = vunpack.c.h.b16 %v298
        %v470 = vunpack.c.l.b16 %v299
        %v471 = vunpack.c.h.b16 %v299
        %v472 = vunpack.c.l.b16 %v300
        %v473 = vunpack.c.h.b16 %v300
        %v474 = vunpack.c.l.b16 %v301
        %v475 = vunpack.c.h.b16 %v301
        %v476 = vunpack.c.l.b16 %v302
        %v477 = vunpack.c.h.b16 %v302
        %v478 = vunpack.c.l.b16 %v303
        %v479 = vunpack.c.h.b16 %v303
        %v480 = vpack.c.b16 %v456, %v448
        %v481 = vpack.c.b16 %v457, %v449
        %v482 = vpack.c.b16 %v458, %v450
        %v483 = vpack.c.b16 %v459, %v451
        %v484 = vpack.c.b16 %v460, %v452
        %v485 = vpack.c.b16 %v461, %v453
        %v486 = vpack.c.b16 %v462, %v454
        %v487 = vpack.c.b16 %v463, %v455
        %v488 = vpack.c.b16 %v472, %v464
        %v489 = vpack.c.b16 %v473, %v465
        %v490 = vpack.c.b16 %v474, %v466
        %v491 = vpack.c.b16 %v475, %v467
        %v492 = vpack.c.b16 %v476, %v468
        %v493 = vpack.c.b16 %v477, %v469
        %v494 = vpack.c.b16 %v478, %v470
        %v495 = vpack.c.b16 %v479, %v471
        %v640 = vunpack.c.l.b16 %v304
        %v641 = vunpack.c.h.b16 %v304
        %v642 = vunpack.c.l.b16 %v305
        %v643 = vunpack.c.h.b16 %v305
        %v644 = vunpack.c.l.b16 %v306
        %v645 = vunpack.c.h.b16 %v306
        %v646 = vunpack.c.l.b16 %v307
        %v647 = vunpack.c.h.b16 %v307
        %v648 = vunpack.c.l.b16 %v308
        %v649 = vunpack.c.h.b16 %v308
        %v650 = vunpack.c.l.b16 %v309
        %v651 = vunpack.c.h.b16 %v309
        %v652 = vunpack.c.l.b16 %v310
        %v653 = vunpack.c.h.b16 %v310
        %v654 = vunpack.c.l.b16 %v311
        %v655 = vunpack.c.h.b16 %v311
        %v656 = vunpack.c.l.b16 %v312
        %v657 = vunpack.c.h.b16 %v312
        %v658 = vunpack.c.l.b16 %v313
        %v659 = vunpack.c.h.b16 %v313
        %v660 = vunpack.c.l.b16 %v314
        %v661 = vunpack.c.h.b16 %v314
        %v662 = vunpack.c.l.b16 %v315
        %v663 = vunpack.c.h.b16 %v315
        %v664 = vunpack.c.l.b16 %v316
        %v665 = vunpack.c.h.b16 %v316
        %v666 = vunpack.c.l.b16 %v317
        %v667 = vunpack.c.h.b16 %v317
        %v668 = vunpack.c.l.b16 %v318
        %v669 = vunpack.c.h.b16 %v318
        %v670 = vunpack.c.l.b16 %v319
        %v671 = vunpack.c.h.b16 %v319
        %v672 = vunpack.c.l.b16 %v320
        %v673 = vunpack.c.h.b16 %v320
        %v674 = vunpack.c.l.b16 %v321
        %v675 = vunpack.c.h.b16 %v321
        %v676 = vunpack.c.l.b16 %v322
        %v677 = vunpack.c.h.b16 %v322
        %v678 = vunpack.c.l.b16 %v323
        %v679 = vunpack.c.h.b16 %v323
        %v680 = vunpack.c.l.b16 %v324
        %v681 = vunpack.c.h.b16 %v324
        %v682 = vunpack.c.l.b16 %v325
        %v683 = vunpack.c.h.b16 %v325
        %v684 = vunpack.c.l.b16 %v326
        %v685 = vunpack.c.h.b16 %v326
        %v686 = vunpack.c.l.b16 %v327
        %v687 = vunpack.c.h.b16 %v327
        %v688 = vunpack.c.l.b16 %v328
        %v689 = vunpack.c.h.b16 %v328
        %v690 = vunpack.c.l.b16 %v329
        %v691 = vunpack.c.h.b16 %v329
        %v692 = vunpack.c.l.b16 %v330
        %v693 = vunpack.c.h.b16 %v330
        %v694 = vunpack.c.l.b16 %v331
        %v695 = vunpack.c.h.b16 %v331
        %v696 = vunpack.c.l.b16 %v332
        %v697 = vunpack.c.h.b16 %v332
        %v698 = vunpack.c.l.b16 %v333
        %v699 = vunpack.c.h.b16 %v333
        %v700 = vunpack.c.l.b16 %v334
        %v701 = vunpack.c.h.b16 %v334
        %v702 = vunpack.c.l.b16 %v335
        %v703 = vunpack.c.h.b16 %v335
        %v704 = vunpack.c.l.b16 %v336
        %v705 = vunpack.c.h.b16 %v336
        %v706 = vunpack.c.l.b16 %v337
        %v707 = vunpack.c.h.b16 %v337
        %v708 = vunpack.c.l.b16 %v338
        %v709 = vunpack.c.h.b16 %v338
        %v710 = vunpack.c.l.b16 %v339
        %v711 = vunpack.c.h.b16 %v339
        %v712 = vunpack.c.l.b16 %v340
        %v713 = vunpack.c.h.b16 %v340
        %v714 = vunpack.c.l.b16 %v341
        %v715 = vunpack.c.h.b16 %v341
        %v716 = vunpack.c.l.b16 %v342
        %v717 = vunpack.c.h.b16 %v342
        %v718 = vunpack.c.l.b16 %v343
        %v719 = vunpack.c.h.b16 %v343
        %v720 = vunpack.c.l.b16 %v344
        %v721 = vunpack.c.h.b16 %v344
        %v722 = vunpack.c.l.b16 %v345
        %v723 = vunpack.c.h.b16 %v345
        %v724 = vunpack.c.l.b16 %v346
        %v725 = vunpack.c.h.b16 %v346
        %v726 = vunpack.c.l.b16 %v347
        %v727 = vunpack.c.h.b16 %v347
        %v728 = vunpack.c.l.b16 %v348
        %v729 = vunpack.c.h.b16 %v348
        %v730 = vunpack.c.l.b16 %v349
        %v731 = vunpack.c.h.b16 %v349
        %v732 = vunpack.c.l.b16 %v350
        %v733 = vunpack.c.h.b16 %v350
        %v734 = vunpack.c.l.b16 %v351
        %v735 = vunpack.c.h.b16 %v351
        %v736 = vunpack.c.l.b16 %v352
        %v737 = vunpack.c.h.b16 %v352
        %v738 = vunpack.c.l.b16 %v353
        %v739 = vunpack.c.h.b16 %v353
        %v740 = vunpack.c.l.b16 %v354
        %v741 = vunpack.c.h.b16 %v354
        %v742 = vunpack.c.l.b16 %v355
        %v743 = vunpack.c.h.b16 %v355
        %v744 = vunpack.c.l.b16 %v356
        %v745 = vunpack.c.h.b16 %v356
        %v746 = vunpack.c.l.b16 %v357
        %v747 = vunpack.c.h.b16 %v357
        %v748 = vunpack.c.l.b16 %v358
        %v749 = vunpack.c.h.b16 %v358
        %v750 = vunpack.c.l.b16 %v359
        %v751 = vunpack.c.h.b16 %v359
        %v752 = vunpack.c.l.b16 %v360
        %v753 = vunpack.c.h.b16 %v360
        %v754 = vunpack.c.l.b16 %v361
        %v755 = vunpack.c.h.b16 %v361
        %v756 = vunpack.c.l.b16 %v362
        %v757 = vunpack.c.h.b16 %v362
        %v758 = vunpack.c.l.b16 %v363
        %v759 = vunpack.c.h.b16 %v363
        %v760 = vunpack.c.l.b16 %v364
        %v761 = vunpack.c.h.b16 %v364
        %v762 = vunpack.c.l.b16 %v365
        %v763 = vunpack.c.h.b16 %v365
        %v764 = vunpack.c.l.b16 %v366
        %v765 = vunpack.c.h.b16 %v366
        %v766 = vunpack.c.l.b16 %v367
        %v767 = vunpack.c.h.b16 %v367
        %v768 = vunpack.c.l.b16 %v368
        %v769 = vunpack.c.h.b16 %v368
        %v770 = vunpack.c.l.b16 %v369
        %v771 = vunpack.c.h.b16 %v369
        %v772 = vunpack.c.l.b16 %v370
        %v773 = vunpack.c.h.b16 %v370
        %v774 = vunpack.c.l.b16 %v371
        %v775 = vunpack.c.h.b16 %v371
        %v776 = vunpack.c.l.b16 %v372
        %v777 = vunpack.c.h.b16 %v372
        %v778 = vunpack.c.l.b16 %v373
        %v779 = vunpack.c.h.b16 %v373
        %v780 = vunpack.c.l.b16 %v374
        %v781 = vunpack.c.h.b16 %v374
        %v782 = vunpack.c.l.b16 %v375
        %v783 = vunpack.c.h.b16 %v375
        %v784 = vunpack.c.l.b16 %v376
        %v785 = vunpack.c.h.b16 %v376
        %v786 = vunpack.c.l.b16 %v377
        %v787 = vunpack.c.h.b16 %v377
        %v788 = vunpack.c.l.b16 %v378
        %v789 = vunpack.c.h.b16 %v378
        %v790 = vunpack.c.l.b16 %v379
        %v791 = vunpack.c.h.b16 %v379
        %v792 = vunpack.c.l.b16 %v380
        %v793 = vunpack.c.h.b16 %v380
        %v794 = vunpack.c.l.b16 %v381
        %v795 = vunpack.c.h.b16 %v381
        %v796 = vunpack.c.l.b16 %v382
        %v797 = vunpack.c.h.b16 %v382
        %v798 = vunpack.c.l.b16 %v383
        %v799 = vunpack.c.h.b16 %v383
        %v800 = vunpack.c.l.b16 %v384
        %v801 = vunpack.c.h.b16 %v384
        %v802 = vunpack.c.l.b16 %v385
        %v803 = vunpack.c.h.b16 %v385
        %v804 = vunpack.c.l.b16 %v386
        %v805 = vunpack.c.h.b16 %v386
        %v806 = vunpack.c.l.b16 %v387
        %v807 = vunpack.c.h.b16 %v387
        %v808 = vunpack.c.l.b16 %v388
        %v809 = vunpack.c.h.b16 %v388
        %v810 = vunpack.c.l.b16 %v389
        %v811 = vunpack.c.h.b16 %v389
        %v812 = vunpack.c.l.b16 %v390
        %v813 = vunpack.c.h.b16 %v390
        %v814 = vunpack.c.l.b16 %v391
        %v815 = vunpack.c.h.b16 %v391
        %v816 = vunpack.c.l.b16 %v392
        %v817 = vunpack.c.h.b16 %v392
        %v818 = vunpack.c.l.b16 %v393
        %v819 = vunpack.c.h.b16 %v393
        %v820 = vunpack.c.l.b16 %v394
        %v821 = vunpack.c.h.b16 %v394
        %v822 = vunpack.c.l.b16 %v395
        %v823 = vunpack.c.h.b16 %v395
        %v824 = vunpack.c.l.b16 %v396
        %v825 = vunpack.c.h.b16 %v396
        %v826 = vunpack.c.l.b16 %v397
        %v827 = vunpack.c.h.b16 %v397
        %v828 = vunpack.c.l.b16 %v398
        %v829 = vunpack.c.h.b16 %v398
        %v830 = vunpack.c.l.b16 %v399
        %v831 = vunpack.c.h.b16 %v399
        %v832 = vunpack.c.l.b16 %v400
        %v833 = vunpack.c.h.b16 %v400
        %v834 = vunpack.c.l.b16 %v401
        %v835 = vunpack.c.h.b16 %v401
        %v836 = vunpack.c.l.b16 %v402
        %v837 = vunpack.c.h.b16 %v402
        %v838 = vunpack.c.l.b16 %v403
        %v839 = vunpack.c.h.b16 %v403
        %v840 = vunpack.c.l.b16 %v404
        %v841 = vunpack.c.h.b16 %v404
        %v842 = vunpack.c.l.b16 %v405
        %v843 = vunpack.c.h.b16 %v405
        %v844 = vunpack.c.l.b16 %v406
        %v845 = vunpack.c.h.b16 %v406
        %v846 = vunpack.c.l.b16 %v407
        %v847 = vunpack.c.h.b16 %v407
        %v848 = vunpack.c.l.b16 %v408
        %v849 = vunpack.c.h.b16 %v408
        %v850 = vunpack.c.l.b16 %v409
        %v851 = vunpack.c.h.b16 %v409
        %v852 = vunpack.c.l.b16 %v410
        %v853 = vunpack.c.h.b16 %v410
        %v854 = vunpack.c.l.b16 %v411
        %v855 = vunpack.c.h.b16 %v411
        %v856 = vunpack.c.l.b16 %v412
        %v857 = vunpack.c.h.b16 %v412
        %v858 = vunpack.c.l.b16 %v413
        %v859 = vunpack.c.h.b16 %v413
        %v860 = vunpack.c.l.b16 %v414
        %v861 = vunpack.c.h.b16 %v414
        %v862 = vunpack.c.l.b16 %v415
        %v863 = vunpack.c.h.b16 %v415
        %v864 = vunpack.c.l.b16 %v416
        %v865 = vunpack.c.h.b16 %v416
        %v866 = vunpack.c.l.b16 %v417
        %v867 = vunpack.c.h.b16 %v417
        %v868 = vunpack.c.l.b16 %v418
        %v869 = vunpack.c.h.b16 %v418
        %v870 = vunpack.c.l.b16 %v419
        %v871 = vunpack.c.h.b16 %v419
        %v872 = vunpack.c.l.b16 %v420
        %v873 = vunpack.c.h.b16 %v420
        %v874 = vunpack.c.l.b16 %v421
        %v875 = vunpack.c.h.b16 %v421
        %v876 = vunpack.c.l.b16 %v422
        %v877 = vunpack.c.h.b16 %v422
        %v878 = vunpack.c.l.b16 %v423
        %v879 = vunpack.c.h.b16 %v423
        %v880 = vunpack.c.l.b16 %v424
        %v881 = vunpack.c.h.b16 %v424
        %v882 = vunpack.c.l.b16 %v425
        %v883 = vunpack.c.h.b16 %v425
        %v884 = vunpack.c.l.b16 %v426
        %v885 = vunpack.c.h.b16 %v426
        %v886 = vunpack.c.l.b16 %v427
        %v887 = vunpack.c.h.b16 %v427
        %v888 = vunpack.c.l.b16 %v428
        %v889 = vunpack.c.h.b16 %v428
        %v890 = vunpack.c.l.b16 %v429
        %v891 = vunpack.c.h.b16 %v429
        %v892 = vunpack.c.l.b16 %v430
        %v893 = vunpack.c.h.b16 %v430
        %v894 = vunpack.c.l.b16 %v431
        %v895 = vunpack.c.h.b16 %v431
        %v896 = vpack.c.b16 %v642, %v640
        %v897 = vpack.c.b16 %v643, %v641
        %v898 = vpack.c.b16 %v646, %v644
        %v899 = vpack.c.b16 %v647, %v645
        %v900 = vpack.c.b16 %v650, %v648
        %v901 = vpack.c.b16 %v651, %v649
        %v902 = vpack.c.b16 %v654, %v652
        %v903 = vpack.c.b16 %v655, %v653
        %v904 = vpack.c.b16 %v658, %v656
        %v905 = vpack.c.b16 %v659, %v657
        %v906 = vpack.c.b16 %v662, %v660
        %v907 = vpack.c.b16 %v663, %v661
        %v908 = vpack.c.b16 %v666, %v664
        %v909 = vpack.c.b16 %v667, %v665
        %v910 = vpack.c.b16 %v670, %v668
        %v911 = vpack.c.b16 %v671, %v669
        %v912 = vpack.c.b16 %v674, %v672
        %v913 = vpack.c.b16 %v675, %v673
        %v914 = vpack.c.b16 %v678, %v676
        %v915 = vpack.c.b16 %v679, %v677
        %v916 = vpack.c.b16 %v682, %v680
        %v917 = vpack.c.b16 %v683, %v681
        %v918 = vpack.c.b16 %v686, %v684
        %v919 = vpack.c.b16 %v687, %v685
        %v920 = vpack.c.b16 %v690, %v688
        %v921 = vpack.c.b16 %v691, %v689
        %v922 = vpack.c.b16 %v694, %v692
        %v923 = vpack.c.b16 %v695, %v693
        %v924 = vpack.c.b16 %v698, %v696
        %v925 = vpack.c.b16 %v699, %v697
        %v926 = vpack.c.b16 %v702, %v700
        %v927 = vpack.c.b16 %v703, %v701
        %v928 = vpack.c.b16 %v706, %v704
        %v929 = vpack.c.b16 %v707, %v705
        %v930 = vpack.c.b16 %v710, %v708
        %v931 = vpack.c.b16 %v711, %v709
        %v932 = vpack.c.b16 %v714, %v712
        %v933 = vpack.c.b16 %v715, %v713
        %v934 = vpack.c.b16 %v718, %v716
        %v935 = vpack.c.b16 %v719, %v717
        %v936 = vpack.c.b16 %v722, %v720
        %v937 = vpack.c.b16 %v723, %v721
        %v938 = vpack.c.b16 %v726, %v724
        %v939 = vpack.c.b16 %v727, %v725
        %v940 = vpack.c.b16 %v730, %v728
        %v941 = vpack.c.b16 %v731, %v729
        %v942 = vpack.c.b16 %v734, %v732
        %v943 = vpack.c.b16 %v735, %v733
        %v944 = vpack.c.b16 %v738, %v736
        %v945 = vpack.c.b16 %v739, %v737
        %v946 = vpack.c.b16 %v742, %v740
        %v947 = vpack.c.b16 %v743, %v741
        %v948 = vpack.c.b16 %v746, %v744
        %v949 = vpack.c.b16 %v747, %v745
        %v950 = vpack.c.b16 %v750, %v748
        %v951 = vpack.c.b16 %v751, %v749
        %v952 = vpack.c.b16 %v754, %v752
        %v953 = vpack.c.b16 %v755, %v753
        %v954 = vpack.c.b16 %v758, %v756
        %v955 = vpack.c.b16 %v759, %v757
        %v956 = vpack.c.b16 %v762, %v760
        %v957 = vpack.c.b16 %v763, %v761
        %v958 = vpack.c.b16 %v766, %v764
        %v959 = vpack.c.b16 %v767, %v765
        %v960 = vpack.c.b16 %v770, %v768
        %v961 = vpack.c.b16 %v771, %v769
        %v962 = vpack.c.b16 %v774, %v772
        %v963 = vpack.c.b16 %v775, %v773
        %v964 = vpack.c.b16 %v778, %v776
        %v965 = vpack.c.b16 %v779, %v777
        %v966 = vpack.c.b16 %v782, %v780
        %v967 = vpack.c.b16 %v783, %v781
        %v968 = vpack.c.b16 %v786, %v784
        %v969 = vpack.c.b16 %v787, %v785
        %v970 = vpack.c.b16 %v790, %v788
        %v971 = vpack.c.b16 %v791, %v789
        %v972 = vpack.c.b16 %v794, %v792
        %v973 = vpack.c.b16 %v795, %v793
        %v974 = vpack.c.b16 %v798, %v796
        %v975 = vpack.c.b16 %v799, %v797
        %v976 = vpack.c.b16 %v802, %v800
        %v977 = vpack.c.b16 %v803, %v801
        %v978 = vpack.c.b16 %v806, %v804
        %v979 = vpack.c.b16 %v807, %v805
        %v980 = vpack.c.b16 %v810, %v808
        %v981 = vpack.c.b16 %v811, %v809
        %v982 = vpack.c.b16 %v814, %v812
        %v983 = vpack.c.b16 %v815, %v813
        %v984 = vpack.c.b16 %v818, %v816
        %v985 = vpack.c.b16 %v819, %v817
        %v986 = vpack.c.b16 %v822, %v820
        %v987 = vpack.c.b16 %v823, %v821
        %v988 = vpack.c.b16 %v826, %v824
        %v989 = vpack.c.b16 %v827, %v825
        %v990 = vpack.c.b16 %v830, %v828
        %v991 = vpack.c.b16 %v831, %v829
        %v992 = vpack.c.b16 %v834, %v832
        %v993 = vpack.c.b16 %v835, %v833
        %v994 = vpack.c.b16 %v838, %v836
        %v995 = vpack.c.b16 %v839, %v837
        %v996 = vpack.c.b16 %v842, %v840
        %v997 = vpack.c.b16 %v843, %v841
        %v998 = vpack.c.b16 %v846, %v844
        %v999 = vpack.c.b16 %v847, %v845
        %v1000 = vpack.c.b16 %v850, %v848
        %v1001 = vpack.c.b16 %v851, %v849
        %v1002 = vpack.c.b16 %v854, %v852
        %v1003 = vpack.c.b16 %v855, %v853
        %v1004 = vpack.c.b16 %v858, %v856
        %v1005 = vpack.c.b16 %v859, %v857
        %v1006 = vpack.c.b16 %v862, %v860
        %v1007 = vpack.c.b16 %v863, %v861
        %v1008 = vpack.c.b16 %v866, %v864
        %v1009 = vpack.c.b16 %v867, %v865
        %v1010 = vpack.c.b16 %v870, %v868
        %v1011 = vpack.c.b16 %v871, %v869
        %v1012 = vpack.c.b16 %v874, %v872
        %v1013 = vpack.c.b16 %v875, %v873
        %v1014 = vpack.c.b16 %v878, %v876
        %v1015 = vpack.c.b16 %v879, %v877
        %v1016 = vpack.c.b16 %v882, %v880
        %v1017 = vpack.c.b16 %v883, %v881
        %v1018 = vpack.c.b16 %v886, %v884
        %v1019 = vpack.c.b16 %v887, %v885
        %v1020 = vpack.c.b16 %v890, %v888
        %v1021 = vpack.c.b16 %v891, %v889
        %v1022 = vpack.c.b16 %v894, %v892
        %v1023 = vpack.c.b16 %v895, %v893
        %1152 = vmatpush.bf16.msra.mxu0 %v910
        %1153 = vmatpush.bf16.msra.mxu0 %v908
        %1154 = vmatpush.bf16.msra.mxu0 %v906
        %1155 = vmatpush.bf16.msra.mxu0 %v904
        %1156 = vmatpush.bf16.msra.mxu0 %v902
        %1157 = vmatpush.bf16.msra.mxu0 %v900
        %1158 = vmatpush.bf16.msra.mxu0 %v898
        %1159 = vmatpush.bf16.msra.mxu0 %v896
        %1160 = vmatmul.bf16.gmra.mxu0 %v480
        %v1161 = vpop.f32.mrf.mxu0
        %v1162 = vadd.f32 0.0, %v1161
        %v1163 = vpop.f32.mrf.mxu0
        %v1164 = vadd.f32 0.0, %v1163
        %1165 = vmatmul.bf16.gmra.mxu0 %v488
        %v1166 = vpop.f32.mrf.mxu0
        %v1167 = vadd.f32 0.0, %v1166
        %v1168 = vpop.f32.mrf.mxu0
        %v1169 = vadd.f32 0.0, %v1168
        %1170 = vdwg.mxu0
        %1171 = vmatpush.bf16.msra.mxu0 %v926
        %1172 = vmatpush.bf16.msra.mxu0 %v924
        %1173 = vmatpush.bf16.msra.mxu0 %v922
        %1174 = vmatpush.bf16.msra.mxu0 %v920
        %1175 = vmatpush.bf16.msra.mxu0 %v918
        %1176 = vmatpush.bf16.msra.mxu0 %v916
        %1177 = vmatpush.bf16.msra.mxu0 %v914
        %1178 = vmatpush.bf16.msra.mxu0 %v912
        %1179 = vmatmul.bf16.gmra.mxu0 %v481
        %v1180 = vpop.f32.mrf.mxu0
        %v1181 = vadd.f32 %v1162, %v1180
        %v1182 = vpop.f32.mrf.mxu0
        %v1183 = vadd.f32 %v1164, %v1182
        %1184 = vmatmul.bf16.gmra.mxu0 %v489
        %v1185 = vpop.f32.mrf.mxu0
        %v1186 = vadd.f32 %v1167, %v1185
        %v1187 = vpop.f32.mrf.mxu0
        %v1188 = vadd.f32 %v1169, %v1187
        %1189 = vdwg.mxu0
        %1190 = vmatpush.bf16.msra.mxu0 %v942
        %1191 = vmatpush.bf16.msra.mxu0 %v940
        %1192 = vmatpush.bf16.msra.mxu0 %v938
        %1193 = vmatpush.bf16.msra.mxu0 %v936
        %1194 = vmatpush.bf16.msra.mxu0 %v934
        %1195 = vmatpush.bf16.msra.mxu0 %v932
        %1196 = vmatpush.bf16.msra.mxu0 %v930
        %1197 = vmatpush.bf16.msra.mxu0 %v928
        %1198 = vmatmul.bf16.gmra.mxu0 %v482
        %v1199 = vpop.f32.mrf.mxu0
        %v1200 = vadd.f32 %v1181, %v1199
        %v1201 = vpop.f32.mrf.mxu0
        %v1202 = vadd.f32 %v1183, %v1201
        %1203 = vmatmul.bf16.gmra.mxu0 %v490
        %v1204 = vpop.f32.mrf.mxu0
        %v1205 = vadd.f32 %v1186, %v1204
        %v1206 = vpop.f32.mrf.mxu0
        %v1207 = vadd.f32 %v1188, %v1206
        %1208 = vdwg.mxu0
        %1209 = vmatpush.bf16.msra.mxu0 %v958
        %1210 = vmatpush.bf16.msra.mxu0 %v956
        %1211 = vmatpush.bf16.msra.mxu0 %v954
        %1212 = vmatpush.bf16.msra.mxu0 %v952
        %1213 = vmatpush.bf16.msra.mxu0 %v950
        %1214 = vmatpush.bf16.msra.mxu0 %v948
        %1215 = vmatpush.bf16.msra.mxu0 %v946
        %1216 = vmatpush.bf16.msra.mxu0 %v944
        %1217 = vmatmul.bf16.gmra.mxu0 %v483
        %v1218 = vpop.f32.mrf.mxu0
        %v1219 = vadd.f32 %v1200, %v1218
        %v1220 = vpop.f32.mrf.mxu0
        %v1221 = vadd.f32 %v1202, %v1220
        %1222 = vmatmul.bf16.gmra.mxu0 %v491
        %v1223 = vpop.f32.mrf.mxu0
        %v1224 = vadd.f32 %v1205, %v1223
        %v1225 = vpop.f32.mrf.mxu0
        %v1226 = vadd.f32 %v1207, %v1225
        %1227 = vdwg.mxu0
        %1228 = vmatpush.bf16.msra.mxu0 %v974
        %1229 = vmatpush.bf16.msra.mxu0 %v972
        %1230 = vmatpush.bf16.msra.mxu0 %v970
        %1231 = vmatpush.bf16.msra.mxu0 %v968
        %1232 = vmatpush.bf16.msra.mxu0 %v966
        %1233 = vmatpush.bf16.msra.mxu0 %v964
        %1234 = vmatpush.bf16.msra.mxu0 %v962
        %1235 = vmatpush.bf16.msra.mxu0 %v960
        %1236 = vmatmul.bf16.gmra.mxu0 %v484
        %v1237 = vpop.f32.mrf.mxu0
        %v1238 = vadd.f32 %v1219, %v1237
        %v1239 = vpop.f32.mrf.mxu0
        %v1240 = vadd.f32 %v1221, %v1239
        %1241 = vmatmul.bf16.gmra.mxu0 %v492
        %v1242 = vpop.f32.mrf.mxu0
        %v1243 = vadd.f32 %v1224, %v1242
        %v1244 = vpop.f32.mrf.mxu0
        %v1245 = vadd.f32 %v1226, %v1244
        %1246 = vdwg.mxu0
        %1247 = vmatpush.bf16.msra.mxu0 %v990
        %1248 = vmatpush.bf16.msra.mxu0 %v988
        %1249 = vmatpush.bf16.msra.mxu0 %v986
        %1250 = vmatpush.bf16.msra.mxu0 %v984
        %1251 = vmatpush.bf16.msra.mxu0 %v982
        %1252 = vmatpush.bf16.msra.mxu0 %v980
        %1253 = vmatpush.bf16.msra.mxu0 %v978
        %1254 = vmatpush.bf16.msra.mxu0 %v976
        %1255 = vmatmul.bf16.gmra.mxu0 %v485
        %v1256 = vpop.f32.mrf.mxu0
        %v1257 = vadd.f32 %v1238, %v1256
        %v1258 = vpop.f32.mrf.mxu0
        %v1259 = vadd.f32 %v1240, %v1258
        %1260 = vmatmul.bf16.gmra.mxu0 %v493
        %v1261 = vpop.f32.mrf.mxu0
        %v1262 = vadd.f32 %v1243, %v1261
        %v1263 = vpop.f32.mrf.mxu0
        %v1264 = vadd.f32 %v1245, %v1263
        %1265 = vdwg.mxu0
        %1266 = vmatpush.bf16.msra.mxu0 %v1006
        %1267 = vmatpush.bf16.msra.mxu0 %v1004
        %1268 = vmatpush.bf16.msra.mxu0 %v1002
        %1269 = vmatpush.bf16.msra.mxu0 %v1000
        %1270 = vmatpush.bf16.msra.mxu0 %v998
        %1271 = vmatpush.bf16.msra.mxu0 %v996
        %1272 = vmatpush.bf16.msra.mxu0 %v994
        %1273 = vmatpush.bf16.msra.mxu0 %v992
        %1274 = vmatmul.bf16.gmra.mxu0 %v486
        %v1275 = vpop.f32.mrf.mxu0
        %v1276 = vadd.f32 %v1257, %v1275
        %v1277 = vpop.f32.mrf.mxu0
        %v1278 = vadd.f32 %v1259, %v1277
        %1279 = vmatmul.bf16.gmra.mxu0 %v494
        %v1280 = vpop.f32.mrf.mxu0
        %v1281 = vadd.f32 %v1262, %v1280
        %v1282 = vpop.f32.mrf.mxu0
        %v1283 = vadd.f32 %v1264, %v1282
        %1284 = vdwg.mxu0
        %1285 = vmatpush.bf16.msra.mxu0 %v1022
        %1286 = vmatpush.bf16.msra.mxu0 %v1020
        %1287 = vmatpush.bf16.msra.mxu0 %v1018
        %1288 = vmatpush.bf16.msra.mxu0 %v1016
        %1289 = vmatpush.bf16.msra.mxu0 %v1014
        %1290 = vmatpush.bf16.msra.mxu0 %v1012
        %1291 = vmatpush.bf16.msra.mxu0 %v1010
        %1292 = vmatpush.bf16.msra.mxu0 %v1008
        %1293 = vmatmul.bf16.gmra.mxu0 %v487
        %v1294 = vpop.f32.mrf.mxu0
        %v1295 = vadd.f32 %v1276, %v1294
        %v1296 = vpop.f32.mrf.mxu0
        %v1297 = vadd.f32 %v1278, %v1296
        %1298 = vmatmul.bf16.gmra.mxu0 %v495
        %v1299 = vpop.f32.mrf.mxu0
        %v1300 = vadd.f32 %v1281, %v1299
        %v1301 = vpop.f32.mrf.mxu0
        %v1302 = vadd.f32 %v1283, %v1301
        %1303 = vdwg.mxu0
        %1304 = vmatpush.bf16.msra.mxu0 %v911
        %1305 = vmatpush.bf16.msra.mxu0 %v909
        %1306 = vmatpush.bf16.msra.mxu0 %v907
        %1307 = vmatpush.bf16.msra.mxu0 %v905
        %1308 = vmatpush.bf16.msra.mxu0 %v903
        %1309 = vmatpush.bf16.msra.mxu0 %v901
        %1310 = vmatpush.bf16.msra.mxu0 %v899
        %1311 = vmatpush.bf16.msra.mxu0 %v897
        %1312 = vmatmul.bf16.gmra.mxu0 %v480
        %v1313 = vpop.f32.mrf.mxu0
        %v1314 = vadd.f32 0.0, %v1313
        %v1315 = vpop.f32.mrf.mxu0
        %v1316 = vadd.f32 0.0, %v1315
        %1317 = vmatmul.bf16.gmra.mxu0 %v488
        %v1318 = vpop.f32.mrf.mxu0
        %v1319 = vadd.f32 0.0, %v1318
        %v1320 = vpop.f32.mrf.mxu0
        %v1321 = vadd.f32 0.0, %v1320
        %1322 = vdwg.mxu0
        %1323 = vmatpush.bf16.msra.mxu0 %v927
        %1324 = vmatpush.bf16.msra.mxu0 %v925
        %1325 = vmatpush.bf16.msra.mxu0 %v923
        %1326 = vmatpush.bf16.msra.mxu0 %v921
        %1327 = vmatpush.bf16.msra.mxu0 %v919
        %1328 = vmatpush.bf16.msra.mxu0 %v917
        %1329 = vmatpush.bf16.msra.mxu0 %v915
        %1330 = vmatpush.bf16.msra.mxu0 %v913
        %1331 = vmatmul.bf16.gmra.mxu0 %v481
        %v1332 = vpop.f32.mrf.mxu0
        %v1333 = vadd.f32 %v1314, %v1332
        %v1334 = vpop.f32.mrf.mxu0
        %v1335 = vadd.f32 %v1316, %v1334
        %1336 = vmatmul.bf16.gmra.mxu0 %v489
        %v1337 = vpop.f32.mrf.mxu0
        %v1338 = vadd.f32 %v1319, %v1337
        %v1339 = vpop.f32.mrf.mxu0
        %v1340 = vadd.f32 %v1321, %v1339
        %1341 = vdwg.mxu0
        %1342 = vmatpush.bf16.msra.mxu0 %v943
        %1343 = vmatpush.bf16.msra.mxu0 %v941
        %1344 = vmatpush.bf16.msra.mxu0 %v939
        %1345 = vmatpush.bf16.msra.mxu0 %v937
        %1346 = vmatpush.bf16.msra.mxu0 %v935
        %1347 = vmatpush.bf16.msra.mxu0 %v933
        %1348 = vmatpush.bf16.msra.mxu0 %v931
        %1349 = vmatpush.bf16.msra.mxu0 %v929
        %1350 = vmatmul.bf16.gmra.mxu0 %v482
        %v1351 = vpop.f32.mrf.mxu0
        %v1352 = vadd.f32 %v1333, %v1351
        %v1353 = vpop.f32.mrf.mxu0
        %v1354 = vadd.f32 %v1335, %v1353
        %1355 = vmatmul.bf16.gmra.mxu0 %v490
        %v1356 = vpop.f32.mrf.mxu0
        %v1357 = vadd.f32 %v1338, %v1356
        %v1358 = vpop.f32.mrf.mxu0
        %v1359 = vadd.f32 %v1340, %v1358
        %1360 = vdwg.mxu0
        %1361 = vmatpush.bf16.msra.mxu0 %v959
        %1362 = vmatpush.bf16.msra.mxu0 %v957
        %1363 = vmatpush.bf16.msra.mxu0 %v955
        %1364 = vmatpush.bf16.msra.mxu0 %v953
        %1365 = vmatpush.bf16.msra.mxu0 %v951
        %1366 = vmatpush.bf16.msra.mxu0 %v949
        %1367 = vmatpush.bf16.msra.mxu0 %v947
        %1368 = vmatpush.bf16.msra.mxu0 %v945
        %1369 = vmatmul.bf16.gmra.mxu0 %v483
        %v1370 = vpop.f32.mrf.mxu0
        %v1371 = vadd.f32 %v1352, %v1370
        %v1372 = vpop.f32.mrf.mxu0
        %v1373 = vadd.f32 %v1354, %v1372
        %1374 = vmatmul.bf16.gmra.mxu0 %v491
        %v1375 = vpop.f32.mrf.mxu0
        %v1376 = vadd.f32 %v1357, %v1375
        %v1377 = vpop.f32.mrf.mxu0
        %v1378 = vadd.f32 %v1359, %v1377
        %1379 = vdwg.mxu0
        %1380 = vmatpush.bf16.msra.mxu0 %v975
        %1381 = vmatpush.bf16.msra.mxu0 %v973
        %1382 = vmatpush.bf16.msra.mxu0 %v971
        %1383 = vmatpush.bf16.msra.mxu0 %v969
        %1384 = vmatpush.bf16.msra.mxu0 %v967
        %1385 = vmatpush.bf16.msra.mxu0 %v965
        %1386 = vmatpush.bf16.msra.mxu0 %v963
        %1387 = vmatpush.bf16.msra.mxu0 %v961
        %1388 = vmatmul.bf16.gmra.mxu0 %v484
        %v1389 = vpop.f32.mrf.mxu0
        %v1390 = vadd.f32 %v1371, %v1389
        %v1391 = vpop.f32.mrf.mxu0
        %v1392 = vadd.f32 %v1373, %v1391
        %1393 = vmatmul.bf16.gmra.mxu0 %v492
        %v1394 = vpop.f32.mrf.mxu0
        %v1395 = vadd.f32 %v1376, %v1394
        %v1396 = vpop.f32.mrf.mxu0
        %v1397 = vadd.f32 %v1378, %v1396
        %1398 = vdwg.mxu0
        %1399 = vmatpush.bf16.msra.mxu0 %v991
        %1400 = vmatpush.bf16.msra.mxu0 %v989
        %1401 = vmatpush.bf16.msra.mxu0 %v987
        %1402 = vmatpush.bf16.msra.mxu0 %v985
        %1403 = vmatpush.bf16.msra.mxu0 %v983
        %1404 = vmatpush.bf16.msra.mxu0 %v981
        %1405 = vmatpush.bf16.msra.mxu0 %v979
        %1406 = vmatpush.bf16.msra.mxu0 %v977
        %1407 = vmatmul.bf16.gmra.mxu0 %v485
        %v1408 = vpop.f32.mrf.mxu0
        %v1409 = vadd.f32 %v1390, %v1408
        %v1410 = vpop.f32.mrf.mxu0
        %v1411 = vadd.f32 %v1392, %v1410
        %1412 = vmatmul.bf16.gmra.mxu0 %v493
        %v1413 = vpop.f32.mrf.mxu0
        %v1414 = vadd.f32 %v1395, %v1413
        %v1415 = vpop.f32.mrf.mxu0
        %v1416 = vadd.f32 %v1397, %v1415
        %1417 = vdwg.mxu0
        %1418 = vmatpush.bf16.msra.mxu0 %v1007
        %1419 = vmatpush.bf16.msra.mxu0 %v1005
        %1420 = vmatpush.bf16.msra.mxu0 %v1003
        %1421 = vmatpush.bf16.msra.mxu0 %v1001
        %1422 = vmatpush.bf16.msra.mxu0 %v999
        %1423 = vmatpush.bf16.msra.mxu0 %v997
        %1424 = vmatpush.bf16.msra.mxu0 %v995
        %1425 = vmatpush.bf16.msra.mxu0 %v993
        %1426 = vmatmul.bf16.gmra.mxu0 %v486
        %v1427 = vpop.f32.mrf.mxu0
        %v1428 = vadd.f32 %v1409, %v1427
        %v1429 = vpop.f32.mrf.mxu0
        %v1430 = vadd.f32 %v1411, %v1429
        %1431 = vmatmul.bf16.gmra.mxu0 %v494
        %v1432 = vpop.f32.mrf.mxu0
        %v1433 = vadd.f32 %v1414, %v1432
        %v1434 = vpop.f32.mrf.mxu0
        %v1435 = vadd.f32 %v1416, %v1434
        %1436 = vdwg.mxu0
        %1437 = vmatpush.bf16.msra.mxu0 %v1023
        %1438 = vmatpush.bf16.msra.mxu0 %v1021
        %1439 = vmatpush.bf16.msra.mxu0 %v1019
        %1440 = vmatpush.bf16.msra.mxu0 %v1017
        %1441 = vmatpush.bf16.msra.mxu0 %v1015
        %1442 = vmatpush.bf16.msra.mxu0 %v1013
        %1443 = vmatpush.bf16.msra.mxu0 %v1011
        %1444 = vmatpush.bf16.msra.mxu0 %v1009
        %1445 = vmatmul.bf16.gmra.mxu0 %v487
        %v1446 = vpop.f32.mrf.mxu0
        %v1447 = vadd.f32 %v1428, %v1446
        %v1448 = vpop.f32.mrf.mxu0
        %v1449 = vadd.f32 %v1430, %v1448
        %1450 = vmatmul.bf16.gmra.mxu0 %v495
        %v1451 = vpop.f32.mrf.mxu0
        %v1452 = vadd.f32 %v1433, %v1451
        %v1453 = vpop.f32.mrf.mxu0
        %v1454 = vadd.f32 %v1435, %v1453
        %1455 = vdwg.mxu0
        %v1456 = vadd.f32 %v280, %v1295
        %v1457 = vadd.f32 %v281, %v1447
        %v1458 = vadd.f32 %v282, %v1297
        %v1459 = vadd.f32 %v283, %v1449
        %v1460 = vadd.f32 %v284, %v1300
        %v1461 = vadd.f32 %v285, %v1452
        %v1462 = vadd.f32 %v286, %v1302
        %v1463 = vadd.f32 %v287, %v1454
        %1464 = vst [vmem:[#allocation2] sm:$0xff] %v1456
        %1465 = vst [vmem:[#allocation2 + $0x8] sm:$0xff] %v1457
        %1466 = vst [vmem:[#allocation2 + $0x10] sm:$0xff] %v1458
        %1467 = vst [vmem:[#allocation2 + $0x18] sm:$0xff] %v1459
        %1468 = vst [vmem:[#allocation2 + $0x20] sm:$0xff] %v1460
        %1469 = vst [vmem:[#allocation2 + $0x28] sm:$0xff] %v1461
        %1470 = vst [vmem:[#allocation2 + $0x30] sm:$0xff] %v1462
        %1471 = vst [vmem:[#allocation2 + $0x38] sm:$0xff] %v1463
        %p1472 = scmp.eq.s32.totalorder %s19, 1
        // Predicated region
        $region60: #{discriminator_forward.12} parent=50 // pred_check
          %p1473 = pneg %p1472
        $region61: #{discriminator_forward.12} parent=50 // pred_check_branch
          %1475 = sbr.rel (%p1473) target = $region63
        $region62: #{discriminator_forward.12} parent=50 // pred_region
          %v1476 = vld [vmem:[#allocation2] sm:$0xff]
          %v1477 = vld [vmem:[#allocation2 + $0x8] sm:$0xff]
          %v1478 = vld [vmem:[#allocation2 + $0x10] sm:$0xff]
          %v1479 = vld [vmem:[#allocation2 + $0x18] sm:$0xff]
          %v1480 = vld [vmem:[#allocation2 + $0x20] sm:$0xff]
          %v1481 = vld [vmem:[#allocation2 + $0x28] sm:$0xff]
          %v1482 = vld [vmem:[#allocation2 + $0x30] sm:$0xff]
          %v1483 = vld [vmem:[#allocation2 + $0x38] sm:$0xff]
          %v1484 = vld [vmem:[%s2] sm:$0x3]
          %v1486 = vperm.slane %v1484, 0
          %v1487 = vperm.slane %v1484, 1
          %v1490 = vadd.f32 %v1476, %v1486
          %v1491 = vadd.f32 %v1477, %v1487
          %v1492 = vadd.f32 %v1478, %v1486
          %v1493 = vadd.f32 %v1479, %v1487
          %v1494 = vadd.f32 %v1480, %v1486
          %v1495 = vadd.f32 %v1481, %v1487
          %v1496 = vadd.f32 %v1482, %v1486
          %v1497 = vadd.f32 %v1483, %v1487
          %1498 = vst [vmem:[%s266] sm:$0xff] %v1490
          %1499 = vst [vmem:[%s266 + $0x8] sm:$0xff] %v1491
          %1500 = vst [vmem:[%s266 + $0x10] sm:$0xff] %v1492
          %1501 = vst [vmem:[%s266 + $0x18] sm:$0xff] %v1493
          %1502 = vst [vmem:[%s266 + $0x20] sm:$0xff] %v1494
          %1503 = vst [vmem:[%s266 + $0x28] sm:$0xff] %v1495
          %1504 = vst [vmem:[%s266 + $0x30] sm:$0xff] %v1496
          %1505 = vst [vmem:[%s266 + $0x38] sm:$0xff] %v1497
        $region63: #{discriminator_forward.12} parent=50 // pred_fallthru
          _
        %s1506 = smul.u32 4, %s18
        %p1507 = scmp.lt.s32.totalorder %s1506, 3
        %s1508 = scalar_select %p1507, %s1506, 3
        %s1509 = smul.addr %s1508, 2
        %s1510 = smul.addr %s1509, 8
        %s1511 = scalar_lea.vmem %s3, %s1510
        // Predicated region
        $region64: #{discriminator_forward.12} parent=50 // pred_check
          %p1512 = pneg %p119
        $region65: #{discriminator_forward.12} parent=50 // pred_check_branch
          %1514 = sbr.rel (%p1512) target = $region67
        $region66: #{discriminator_forward.12} parent=50 // pred_region
          %s1515 = smul.u32 4, %s18
        $region67: #{discriminator_forward.12} parent=50 // pred_fallthru
          _
        // Predicated region
        $region68: #{discriminator_forward.12} parent=50 // pred_check
          %p1516 = pneg %p119
        $region69: #{discriminator_forward.12} parent=50 // pred_check_branch
          %1518 = sbr.rel (%p1516) target = $region71
        $region70: #{discriminator_forward.12} parent=50 // pred_region
          %s1519 = smul.u32 4, %s18
          %p1520 = scmp.lt.s32.totalorder %s1519, 3
          %s1521 = scalar_select %p1520, %s1519, 3
          %s1522 = smul.addr %s1521, 2
          %s1523 = smul.addr %s1522, 8
          %s1524 = scalar_lea.vmem %s3, %s1523
        $region71: #{discriminator_forward.12} parent=50 // pred_fallthru
          _
      $region51: #{discriminator_forward.12} parent=5 // pred_fallthru
        _
      %p1525 = scmp.le.s32.totalorder 2, %s9
      // Predicated region
      $region72: #{discriminator_forward.12} parent=5 // pred_check
        %p1526 = pneg %p1525
      $region73: #{discriminator_forward.12} parent=5 // pred_check_branch
        %1528 = sbr.rel (%p1526) target = $region75
      $region74: #{discriminator_forward.12} parent=5 // pred_region
        %s1529 = ssub.s32 %s9, 2
      $region75: #{discriminator_forward.12} parent=5 // pred_fallthru
        _
    $region6: #{discriminator_forward.12} parent=1 // loop_footer
      %s13 = sadd.s32 1, %s9
    $region7: #{discriminator_forward.12} parent=1 // loop_footer_branch
      %8 = sbr.rel target = $region3
    $region8: #{discriminator_forward.12} parent=1 // loop_exit
      _

// kernel: discriminator_forward.15
$region0: #{discriminator_forward.15}
  #allocation0 [shape = 'u32[]', space=smem, size = 0x4, offset = 0x4, fixed_abs, tag = 'smem constant byte address 0x4 - core index']
  #allocation1 [shape = 'u32[72,128]{1,0:T(1,128)}', space=vmem, size = 0x9000, scoped, tag = 'internal scratch']
  %s0 = inlined_call_operand.vmem [shape: f32[2,9,512], index: 0, kind: input, shape index: {}]
  %s1 = inlined_call_operand.vmem [shape: f32[2,9,512], index: 1, kind: output, shape index: {}]
  %s2 = sld [smem:[#allocation0]]
  $region109: #{discriminator_forward.15} parent=0
    _
  %s4 = ssub.s32 1, %s2
  %s5 = scalar_select 0, %s4, %s2
  $region1: #{discriminator_forward.15} parent=0
    #allocation2 [shape = 'u8[16384]{0}', space=vmem, size = 0x4000, scoped, tag = 'input window, operand 0']
    #allocation3 [shape = 'u8[16384]{0}', space=vmem, size = 0x4000, scoped, tag = 'output window, operand 0']
    loop: start=0, step=1, limit=10
    $region2: #{discriminator_forward.15} parent=1 // loop_pre_header
      _
    $region3: #{discriminator_forward.15} parent=1 // loop_header
      %s7 = sphi 0, %s11
      %p8 = scmp.ge.s32.totalorder %s7, 10
      %s14 = sphi 0, %s26
      %s15 = sphi 0, %s22
      %s16 = sphi 0, %s14
      %s17 = sphi 0, %s15
      %s18 = sphi 0, %s16
      %s19 = sphi 0, %s17
      %s31 = sphi 0, %s33
      %s34 = sphi 0, %s31
      %s35 = sphi 0, %s34
      %s51 = sphi 0, %s35
      %s59 = sphi 0, %s61
      %s62 = sphi 0, %s59
      %s63 = sphi 0, %s62
      %s79 = sphi 0, %s63
    $region4: #{discriminator_forward.15} parent=1 // loop_header_branch
      %10 = sbr.rel (%p8) target = $region8
    $region5: #{discriminator_forward.15} parent=1 // loop_body
      %s12 = ssub.s32 %s7, 1
      %s13 = ssub.s32 %s7, 2
      %s20 = sadd.s32 1, %s15
      %p21 = scmp.ge.s32.totalorder %s20, 4
      %s22 = scalar_select %p21, 0, %s20
      %s23 = sadd.s32 1, %s14
      %s24 = scalar_select %p21, %s23, %s14
      %p25 = scmp.ge.s32.totalorder %s24, 2
      %s26 = scalar_select %p25, 0, %s24
      %s27 = ssub.s32 %s14, %s26
      %s28 = ssub.s32 %s15, %s22
      %s29 = sor.u32 %s27, %s28
      %p30 = scmp.eq.s32.totalorder %s29, 0
      %s32 = sadd.s32 %s31, 1
      %s33 = scalar_select %p30, %s31, %s32
      %p36 = pneg %p30
      %p37 = scmp.eq.s32.totalorder %s7, 7
      %p38 = por %p36, %p37
      %p39 = scmp.ne.s32.totalorder %s31, %s34
      %p40 = scmp.eq.s32.totalorder %s7, 0
      %p41 = por %p39, %p40
      %p42 = scmp.ne.s32.totalorder %s31, %s34
      %p43 = scmp.eq.s32.totalorder %s12, 7
      %p44 = por %p42, %p43
      %p45 = scmp.ne.s32.totalorder %s34, %s35
      %p46 = scmp.eq.s32.totalorder %s12, 0
      %p47 = por %p45, %p46
      %p48 = scmp.ne.s32.totalorder %s34, %s35
      %p49 = scmp.eq.s32.totalorder %s13, 7
      %p50 = por %p48, %p49
      %p52 = scmp.ne.s32.totalorder %s35, %s51
      %p53 = scmp.eq.s32.totalorder %s13, 0
      %p54 = por %p52, %p53
      %s55 = ssub.s32 %s14, %s26
      %s56 = ssub.s32 %s15, %s22
      %s57 = sor.u32 %s55, %s56
      %p58 = scmp.eq.s32.totalorder %s57, 0
      %s60 = sadd.s32 %s59, 1
      %s61 = scalar_select %p58, %s59, %s60
      %p64 = pneg %p58
      %p65 = scmp.eq.s32.totalorder %s7, 7
      %p66 = por %p64, %p65
      %p67 = scmp.ne.s32.totalorder %s59, %s62
      %p68 = scmp.eq.s32.totalorder %s7, 0
      %p69 = por %p67, %p68
      %p70 = scmp.ne.s32.totalorder %s59, %s62
      %p71 = scmp.eq.s32.totalorder %s12, 7
      %p72 = por %p70, %p71
      %p73 = scmp.ne.s32.totalorder %s62, %s63
      %p74 = scmp.eq.s32.totalorder %s12, 0
      %p75 = por %p73, %p74
      %p76 = scmp.ne.s32.totalorder %s62, %s63
      %p77 = scmp.eq.s32.totalorder %s13, 7
      %p78 = por %p76, %p77
      %p80 = scmp.ne.s32.totalorder %s63, %s79
      %p81 = scmp.eq.s32.totalorder %s13, 0
      %p82 = por %p80, %p81
      %p83 = scmp.le.s32.totalorder 1, %s7
      %p84 = scmp.lt.s32.totalorder %s7, 9
      %p85 = pnand %p83, %p84
      %p86 = pneg %p85
      // Predicated region
      $region9: #{discriminator_forward.15} parent=5 // pred_check
        _
      $region10: #{discriminator_forward.15} parent=5 // pred_check_branch
        %88 = sbr.rel (%p85) target = $region12
      $region11: #{discriminator_forward.15} parent=5 // pred_region
        %s89 = ssub.s32 %s7, 1
      $region12: #{discriminator_forward.15} parent=5 // pred_fallthru
        _
      %p90 = scmp.lt.s32.totalorder %s7, 8
      // Predicated region
      $region13: #{discriminator_forward.15} parent=5 // pred_check
        %p91 = pneg %p90
      $region14: #{discriminator_forward.15} parent=5 // pred_check_branch
        %93 = sbr.rel (%p91) target = $region16
      $region15: #{discriminator_forward.15} parent=5 // pred_region
        // Predicated region
        $region17: #{discriminator_forward.15} parent=15 // pred_check
          %p94 = pneg %p41
        $region18: #{discriminator_forward.15} parent=15 // pred_check_branch
          %96 = sbr.rel (%p94) target = $region20
        $region19: #{discriminator_forward.15} parent=15 // pred_region
          %s97 = sand.u32 %s31, 1
          %s98 = sand.u32 %s31, 1
          %s99 = smul.addr %s98, 16
          %s100 = scalar_lea.vmem [#allocation2], %s99
          %s101 = smul.addr %s14, 8
          %s102 = sadd.s32 %s15, %s101
          %s103 = smul.addr %s102, 8
          %s104 = scalar_lea.vmem %s0, %s103
          // Predicated region
          $region21: #{discriminator_forward.15} parent=19 // pred_check
            _
          $region22: #{discriminator_forward.15} parent=19 // pred_check_branch
            %106 = sbr.rel (0) target = $region24
          $region23: #{discriminator_forward.15} parent=19 // pred_region
            // Predicated region
            $region25: #{discriminator_forward.15} parent=23 // pred_check
              _
            $region26: #{discriminator_forward.15} parent=23 // pred_check_branch
              %108 = sbr.rel (0) target = $region28
            $region27: #{discriminator_forward.15} parent=23 // pred_region
              // Predicated region
              $region40: #{discriminator_forward.15} parent=27 // pred_check
                _
              $region41: #{discriminator_forward.15} parent=27 // pred_check_branch
                %126 = sbr.rel (0) target = $region43
              $region42: #{discriminator_forward.15} parent=27 // pred_region
                loop: start=0, step=1, limit=1
                $region44: #{discriminator_forward.15} parent=42 // loop_pre_header
                  _
                $region45: #{discriminator_forward.15} parent=42 // loop_header
                  %s128 = sphi 0, %s132
                  %p129 = scmp.ge.s32.totalorder %s128, 1
                  %s133 = sphi %s104, %s104
                  %s134 = sphi %s100, %s100
                $region46: #{discriminator_forward.15} parent=42 // loop_header_branch
                  %131 = sbr.rel (%p129) target = $region50
                $region47: #{discriminator_forward.15} parent=42 // loop_body
                  %v135 = vld [vmem:[%s133] sm:$0xff]
                  %136 = vst [vmem:[%s134] sm:$0xff] %v135
                  %v137 = vld [vmem:[%s133 + $0x20] sm:$0xff]
                  %138 = vst [vmem:[%s134 + $0x8] sm:$0xff] %v137
                $region48: #{discriminator_forward.15} parent=42 // loop_footer
                  %s132 = sadd.s32 1, %s128
                $region49: #{discriminator_forward.15} parent=42 // loop_footer_branch
                  %127 = sbr.rel target = $region45
                $region50: #{discriminator_forward.15} parent=42 // loop_exit
                  _
              $region43: #{discriminator_forward.15} parent=27 // pred_fallthru
                _
              // Predicated region
              $region51: #{discriminator_forward.15} parent=27 // pred_check
                _
              $region52: #{discriminator_forward.15} parent=27 // pred_check_branch
                %140 = sbr.rel target = $region54
              $region53: #{discriminator_forward.15} parent=27 // pred_region
                _
              $region54: #{discriminator_forward.15} parent=27 // pred_fallthru
                _
            $region28: #{discriminator_forward.15} parent=23 // pred_fallthru
              _
            // Predicated region
            $region29: #{discriminator_forward.15} parent=23 // pred_check
              _
            $region30: #{discriminator_forward.15} parent=23 // pred_check_branch
              %110 = sbr.rel target = $region32
            $region31: #{discriminator_forward.15} parent=23 // pred_region
              %s112 = ssub.s32 256, 1
              loop: start=0, step=1, limit=1
              $region33: #{discriminator_forward.15} parent=31 // loop_pre_header
                _
              $region34: #{discriminator_forward.15} parent=31 // loop_header
                %s114 = sphi 0, %s118
                %p115 = scmp.ge.s32.totalorder %s114, 1
                %s119 = sphi %s104, %s104
                %s120 = sphi %s100, %s100
              $region35: #{discriminator_forward.15} parent=31 // loop_header_branch
                %117 = sbr.rel (%p115) target = $region39
              $region36: #{discriminator_forward.15} parent=31 // loop_body
                %v121 = vld [vmem:[%s119] sm:%s112]
                %122 = vst [vmem:[%s120] sm:%s112] %v121
                %v123 = vld [vmem:[%s119 + $0x20] sm:%s112]
                %124 = vst [vmem:[%s120 + $0x8] sm:%s112] %v123
              $region37: #{discriminator_forward.15} parent=31 // loop_footer
                %s118 = sadd.s32 1, %s114
              $region38: #{discriminator_forward.15} parent=31 // loop_footer_branch
                %113 = sbr.rel target = $region34
              $region39: #{discriminator_forward.15} parent=31 // loop_exit
                _
            $region32: #{discriminator_forward.15} parent=23 // pred_fallthru
              _
          $region24: #{discriminator_forward.15} parent=19 // pred_fallthru
            _
          %141 = vnop
        $region20: #{discriminator_forward.15} parent=15 // pred_fallthru
          _
      $region16: #{discriminator_forward.15} parent=5 // pred_fallthru
        _
      %p142 = scmp.le.s32.totalorder 1, %s7
      %p143 = scmp.lt.s32.totalorder %s7, 9
      %p144 = pnand %p142, %p143
      %p145 = pneg %p144
      // Predicated region
      $region55: #{discriminator_forward.15} parent=5 // pred_check
        _
      $region56: #{discriminator_forward.15} parent=5 // pred_check_branch
        %147 = sbr.rel (%p144) target = $region58
      $region57: #{discriminator_forward.15} parent=5 // pred_region
        %s148 = ssub.s32 %s7, 1
        %s149 = sand.u32 %s34, 1
        %s150 = sand.u32 %s34, 1
        %s151 = smul.addr %s150, 16
        %s152 = scalar_lea.vmem [#allocation2], %s151
        // Predicated region
        $region59: #{discriminator_forward.15} parent=57 // pred_check
          %p153 = pneg %p47
        $region60: #{discriminator_forward.15} parent=57 // pred_check_branch
          %155 = sbr.rel (%p153) target = $region62
        $region61: #{discriminator_forward.15} parent=57 // pred_region
          _
        $region62: #{discriminator_forward.15} parent=57 // pred_fallthru
          _
        %s156 = sand.u32 %s34, 1
        %s157 = sand.u32 %s34, 1
        %s158 = smul.addr %s157, 16
        %s159 = scalar_lea.vmem [#allocation2], %s158
        %p160 = pneg %p47
        %p161 = pneg %p44
        %p162 = pneg %p75
        %p163 = pneg %p72
        %s164 = sand.u32 %s62, 1
        %s165 = sand.u32 %s62, 1
        %s166 = smul.addr %s165, 16
        %s167 = scalar_lea.vmem [#allocation3], %s166
        %v168 = vld [vmem:[%s152] sm:$0xff]
        %v169 = vld [vmem:[%s152 + $0x8] sm:$0x1]
        %vm170 = vcmask 1040384
        %v171 = vsel %vm170, %v169, 0.0
        %v172 = vadd.f32 %v168, %v171
        %v173 = vrot.slane %v172, 4
        %v174 = vadd.f32 %v172, %v173
        %v175 = vrot.slane %v174, 2
        %v176 = vadd.f32 %v174, %v175
        %v177 = vrot.slane %v176, 1
        %v178 = vadd.f32 %v176, %v177
        %v179 = vrcp.pop 9.0
        %v180 = vmul.f32 9.0, %v179
        %v181 = vsub.f32 1.0, %v180
        %v182 = vmul.f32 %v179, %v181
        %v183 = vadd.f32 %v179, %v182
        %vm184 = vweird.f32 %v179
        %v185 = vsel %vm184, %v179, %v183
        %v186 = vmul.f32 %v178, %v185
        %v187 = vsub.f32 %v168, %v186
        %v188 = vsub.f32 %v169, %v186
        %v189 = vmul.f32 %v187, %v187
        %v190 = vmul.f32 %v188, %v188
        %v191 = vsel %vm170, %v190, 0.0
        %v192 = vadd.f32 %v189, %v191
        %v193 = vrot.slane %v192, 4
        %v194 = vadd.f32 %v192, %v193
        %v195 = vrot.slane %v194, 2
        %v196 = vadd.f32 %v194, %v195
        %v197 = vrot.slane %v196, 1
        %v198 = vadd.f32 %v196, %v197
        %v199 = vmul.f32 %v198, %v185
        %v200 = vadd.f32 %v199, 1e-05
        %v201 = vrsqrt.pop %v200
        %v202 = vmul.f32 %v201, %v200
        %v203 = vmul.f32 %v202, %v201
        %v204 = vmul.f32 0.5, %v203
        %v205 = vsub.f32 1.5, %v204
        %v206 = vmul.f32 %v201, %v205
        %vm207 = vweird.f32 %v200
        %vm208 = vweird.f32 %v201
        %vm209 = vmor %vm207, %vm208
        %v210 = vsel %vm209, %v201, %v206
        %v211 = vmul.f32 %v187, %v210
        %v212 = vmul.f32 %v188, %v210
        %vm213 = vcmp.ge.f32.partialorder %v211, 0.0
        %vm214 = vcmp.ge.f32.partialorder %v212, 0.0
        %v215 = vmul.f32 %v211, 0.2
        %v216 = vmul.f32 %v212, 0.2
        %v217 = vsel %vm213, %v211, %v215
        %v218 = vsel %vm214, %v212, %v216
        %219 = vst [vmem:[%s167] sm:$0xff] %v217
        %220 = vst [vmem:[%s167 + $0x8] sm:$0x1] %v218
        %s221 = sand.u32 %s62, 1
        %s222 = sand.u32 %s62, 1
        %s223 = smul.addr %s222, 16
        %s224 = scalar_lea.vmem [#allocation3], %s223
        // Predicated region
        $region63: #{discriminator_forward.15} parent=57 // pred_check
          %p225 = pneg %p72
        $region64: #{discriminator_forward.15} parent=57 // pred_check_branch
          %227 = sbr.rel (%p225) target = $region66
        $region65: #{discriminator_forward.15} parent=57 // pred_region
          %s228 = smul.addr %s16, 8
          %s229 = sadd.s32 %s17, %s228
          %s230 = smul.addr %s229, 8
          %s231 = scalar_lea.vmem %s1, %s230
          // Predicated region
          $region67: #{discriminator_forward.15} parent=65 // pred_check
            _
          $region68: #{discriminator_forward.15} parent=65 // pred_check_branch
            %233 = sbr.rel (0) target = $region70
          $region69: #{discriminator_forward.15} parent=65 // pred_region
            // Predicated region
            $region71: #{discriminator_forward.15} parent=69 // pred_check
              _
            $region72: #{discriminator_forward.15} parent=69 // pred_check_branch
              %235 = sbr.rel (0) target = $region74
            $region73: #{discriminator_forward.15} parent=69 // pred_region
              // Predicated region
              $region86: #{discriminator_forward.15} parent=73 // pred_check
                _
              $region87: #{discriminator_forward.15} parent=73 // pred_check_branch
                %253 = sbr.rel (0) target = $region89
              $region88: #{discriminator_forward.15} parent=73 // pred_region
                loop: start=0, step=1, limit=1
                $region90: #{discriminator_forward.15} parent=88 // loop_pre_header
                  _
                $region91: #{discriminator_forward.15} parent=88 // loop_header
                  %s255 = sphi 0, %s259
                  %p256 = scmp.ge.s32.totalorder %s255, 1
                  %s260 = sphi %s224, %s224
                  %s261 = sphi %s231, %s231
                $region92: #{discriminator_forward.15} parent=88 // loop_header_branch
                  %258 = sbr.rel (%p256) target = $region96
                $region93: #{discriminator_forward.15} parent=88 // loop_body
                  %v262 = vld [vmem:[%s260] sm:$0xff]
                  %263 = vst [vmem:[%s261] sm:$0xff] %v262
                  %v264 = vld [vmem:[%s260 + $0x8] sm:$0xff]
                  %265 = vst [vmem:[%s261 + $0x20] sm:$0xff] %v264
                $region94: #{discriminator_forward.15} parent=88 // loop_footer
                  %s259 = sadd.s32 1, %s255
                $region95: #{discriminator_forward.15} parent=88 // loop_footer_branch
                  %254 = sbr.rel target = $region91
                $region96: #{discriminator_forward.15} parent=88 // loop_exit
                  _
              $region89: #{discriminator_forward.15} parent=73 // pred_fallthru
                _
              // Predicated region
              $region97: #{discriminator_forward.15} parent=73 // pred_check
                _
              $region98: #{discriminator_forward.15} parent=73 // pred_check_branch
                %267 = sbr.rel target = $region100
              $region99: #{discriminator_forward.15} parent=73 // pred_region
                _
              $region100: #{discriminator_forward.15} parent=73 // pred_fallthru
                _
            $region74: #{discriminator_forward.15} parent=69 // pred_fallthru
              _
            // Predicated region
            $region75: #{discriminator_forward.15} parent=69 // pred_check
              _
            $region76: #{discriminator_forward.15} parent=69 // pred_check_branch
              %237 = sbr.rel target = $region78
            $region77: #{discriminator_forward.15} parent=69 // pred_region
              %s239 = ssub.s32 256, 1
              loop: start=0, step=1, limit=1
              $region79: #{discriminator_forward.15} parent=77 // loop_pre_header
                _
              $region80: #{discriminator_forward.15} parent=77 // loop_header
                %s241 = sphi 0, %s245
                %p242 = scmp.ge.s32.totalorder %s241, 1
                %s246 = sphi %s224, %s224
                %s247 = sphi %s231, %s231
              $region81: #{discriminator_forward.15} parent=77 // loop_header_branch
                %244 = sbr.rel (%p242) target = $region85
              $region82: #{discriminator_forward.15} parent=77 // loop_body
                %v248 = vld [vmem:[%s246] sm:%s239]
                %249 = vst [vmem:[%s247] sm:%s239] %v248
                %v250 = vld [vmem:[%s246 + $0x8] sm:%s239]
                %251 = vst [vmem:[%s247 + $0x20] sm:%s239] %v250
              $region83: #{discriminator_forward.15} parent=77 // loop_footer
                %s245 = sadd.s32 1, %s241
              $region84: #{discriminator_forward.15} parent=77 // loop_footer_branch
                %240 = sbr.rel target = $region80
              $region85: #{discriminator_forward.15} parent=77 // loop_exit
                _
            $region78: #{discriminator_forward.15} parent=69 // pred_fallthru
              _
          $region70: #{discriminator_forward.15} parent=65 // pred_fallthru
            _
          %268 = vnop
        $region66: #{discriminator_forward.15} parent=57 // pred_fallthru
          _
      $region58: #{discriminator_forward.15} parent=5 // pred_fallthru
        _
      %p269 = scmp.le.s32.totalorder 2, %s7
      // Predicated region
      $region101: #{discriminator_forward.15} parent=5 // pred_check
        %p270 = pneg %p269
      $region102: #{discriminator_forward.15} parent=5 // pred_check_branch
        %272 = sbr.rel (%p270) target = $region104
      $region103: #{discriminator_forward.15} parent=5 // pred_region
        %s273 = ssub.s32 %s7, 2
        // Predicated region
        $region105: #{discriminator_forward.15} parent=103 // pred_check
          %p274 = pneg %p78
        $region106: #{discriminator_forward.15} parent=103 // pred_check_branch
          %276 = sbr.rel (%p274) target = $region108
        $region107: #{discriminator_forward.15} parent=103 // pred_region
          %s277 = sand.u32 %s63, 1
          %s278 = sand.u32 %s63, 1
          %s279 = smul.addr %s278, 16
          %s280 = scalar_lea.vmem [#allocation3], %s279
        $region108: #{discriminator_forward.15} parent=103 // pred_fallthru
          _
      $region104: #{discriminator_forward.15} parent=5 // pred_fallthru
        _
    $region6: #{discriminator_forward.15} parent=1 // loop_footer
      %s11 = sadd.s32 1, %s7
    $region7: #{discriminator_forward.15} parent=1 // loop_footer_branch
      %6 = sbr.rel target = $region3
    $region8: #{discriminator_forward.15} parent=1 // loop_exit
      _

// kernel: discriminator_forward.14
$region0: #{discriminator_forward.14}
  #allocation0 [shape = 'u32[]', space=smem, size = 0x4, offset = 0x4, fixed_abs, tag = 'smem constant byte address 0x4 - core index']
  #allocation1 [shape = 'u32[72,128]{1,0:T(1,128)}', space=vmem, size = 0x9000, scoped, tag = 'internal scratch']
  #allocation2 [shape = 'f32[24,512]{1,0:T(8,128)}', space=vmem, size = 0xc000, scoped, tag = 'scratch operand']
  %s0 = inlined_call_operand.vmem [shape: bf16[24,4096], index: 0, kind: input, shape index: {}]
  %s1 = inlined_call_operand.vmem [shape: bf16[4096,512], index: 1, kind: input, shape index: {}]
  %s2 = inlined_call_operand.vmem [shape: f32[1,512], index: 2, kind: input, shape index: {}]
  %s3 = inlined_call_operand.vmem [shape: f32[24,512], index: 3, kind: output, shape index: {}]
  %s4 = sld [smem:[#allocation0]]
  $region76: #{discriminator_forward.14} parent=0
    _
  %s6 = ssub.s32 1, %s4
  %s7 = scalar_select 0, %s6, %s4
  $region1: #{discriminator_forward.14} parent=0
    #allocation3 [shape = 'u8[98304]{0}', space=vmem, size = 0x18000, scoped, tag = 'input window, operand 0']
    loop: start=0, step=1, limit=6
    $region2: #{discriminator_forward.14} parent=1 // loop_pre_header
      _
    $region3: #{discriminator_forward.14} parent=1 // loop_header
      %s9 = sphi 0, %s13
      %p10 = scmp.ge.s32.totalorder %s9, 6
      %s16 = sphi 0, %s28
      %s17 = sphi 0, %s24
      %s18 = sphi 0, %s16
      %s19 = sphi 0, %s17
      %s20 = sphi 0, %s18
      %s21 = sphi 0, %s19
      %s33 = sphi 0, %s35
      %s36 = sphi 0, %s33
      %s37 = sphi 0, %s36
      %s53 = sphi 0, %s37
      %s59 = sphi 0, %s61
      %s62 = sphi 0, %s59
      %s63 = sphi 0, %s62
      %s79 = sphi 0, %s63
      %s83 = sphi 0, %s83
      %s85 = sphi 0, %s83
      %s86 = sphi 0, %s85
      %s100 = sphi 0, %s86
      %s106 = sphi 0, %s108
      %s109 = sphi 0, %s106
      %s110 = sphi 0, %s109
      %s126 = sphi 0, %s110
    $region4: #{discriminator_forward.14} parent=1 // loop_header_branch
      %12 = sbr.rel (%p10) target = $region8
    $region5: #{discriminator_forward.14} parent=1 // loop_body
      %s14 = ssub.s32 %s9, 1
      %s15 = ssub.s32 %s9, 2
      %s22 = sadd.s32 1, %s17
      %p23 = scmp.ge.s32.totalorder %s22, 4
      %s24 = scalar_select %p23, 0, %s22
      %s25 = sadd.s32 1, %s16
      %s26 = scalar_select %p23, %s25, %s16
      %p27 = scmp.ge.s32.totalorder %s26, 1
      %s28 = scalar_select %p27, 0, %s26
      %s29 = ssub.s32 %s16, %s28
      %s30 = ssub.s32 %s17, %s24
      %s31 = sor.u32 %s29, %s30
      %p32 = scmp.eq.s32.totalorder %s31, 0
      %s34 = sadd.s32 %s33, 1
      %s35 = scalar_select %p32, %s33, %s34
      %p38 = pneg %p32
      %p39 = scmp.eq.s32.totalorder %s9, 3
      %p40 = por %p38, %p39
      %p41 = scmp.ne.s32.totalorder %s33, %s36
      %p42 = scmp.eq.s32.totalorder %s9, 0
      %p43 = por %p41, %p42
      %p44 = scmp.ne.s32.totalorder %s33, %s36
      %p45 = scmp.eq.s32.totalorder %s14, 3
      %p46 = por %p44, %p45
      %p47 = scmp.ne.s32.totalorder %s36, %s37
      %p48 = scmp.eq.s32.totalorder %s14, 0
      %p49 = por %p47, %p48
      %p50 = scmp.ne.s32.totalorder %s36, %s37
      %p51 = scmp.eq.s32.totalorder %s15, 3
      %p52 = por %p50, %p51
      %p54 = scmp.ne.s32.totalorder %s37, %s53
      %p55 = scmp.eq.s32.totalorder %s15, 0
      %p56 = por %p54, %p55
      %s57 = ssub.s32 %s17, %s24
      %p58 = scmp.eq.s32.totalorder %s57, 0
      %s60 = sadd.s32 %s59, 1
      %s61 = scalar_select %p58, %s59, %s60
      %p64 = pneg %p58
      %p65 = scmp.eq.s32.totalorder %s9, 3
      %p66 = por %p64, %p65
      %p67 = scmp.ne.s32.totalorder %s59, %s62
      %p68 = scmp.eq.s32.totalorder %s9, 0
      %p69 = por %p67, %p68
      %p70 = scmp.ne.s32.totalorder %s59, %s62
      %p71 = scmp.eq.s32.totalorder %s14, 3
      %p72 = por %p70, %p71
      %p73 = scmp.ne.s32.totalorder %s62, %s63
      %p74 = scmp.eq.s32.totalorder %s14, 0
      %p75 = por %p73, %p74
      %p76 = scmp.ne.s32.totalorder %s62, %s63
      %p77 = scmp.eq.s32.totalorder %s15, 3
      %p78 = por %p76, %p77
      %p80 = scmp.ne.s32.totalorder %s63, %s79
      %p81 = scmp.eq.s32.totalorder %s15, 0
      %p82 = por %p80, %p81
      %s84 = sadd.s32 %s83, 1
      %p87 = scmp.eq.s32.totalorder %s9, 3
      %p88 = scmp.ne.s32.totalorder %s83, %s85
      %p89 = scmp.eq.s32.totalorder %s9, 0
      %p90 = por %p88, %p89
      %p91 = scmp.ne.s32.totalorder %s83, %s85
      %p92 = scmp.eq.s32.totalorder %s14, 3
      %p93 = por %p91, %p92
      %p94 = scmp.ne.s32.totalorder %s85, %s86
      %p95 = scmp.eq.s32.totalorder %s14, 0
      %p96 = por %p94, %p95
      %p97 = scmp.ne.s32.totalorder %s85, %s86
      %p98 = scmp.eq.s32.totalorder %s15, 3
      %p99 = por %p97, %p98
      %p101 = scmp.ne.s32.totalorder %s86, %s100
      %p102 = scmp.eq.s32.totalorder %s15, 0
      %p103 = por %p101, %p102
      %s104 = ssub.s32 %s16, %s28
      %p105 = scmp.eq.s32.totalorder %s104, 0
      %s107 = sadd.s32 %s106, 1
      %s108 = scalar_select %p105, %s106, %s107
      %p111 = pneg %p105
      %p112 = scmp.eq.s32.totalorder %s9, 3
      %p113 = por %p111, %p112
      %p114 = scmp.ne.s32.totalorder %s106, %s109
      %p115 = scmp.eq.s32.totalorder %s9, 0
      %p116 = por %p114, %p115
      %p117 = scmp.ne.s32.totalorder %s106, %s109
      %p118 = scmp.eq.s32.totalorder %s14, 3
      %p119 = por %p117, %p118
      %p120 = scmp.ne.s32.totalorder %s109, %s110
      %p121 = scmp.eq.s32.totalorder %s14, 0
      %p122 = por %p120, %p121
      %p123 = scmp.ne.s32.totalorder %s109, %s110
      %p124 = scmp.eq.s32.totalorder %s15, 3
      %p125 = por %p123, %p124
      %p127 = scmp.ne.s32.totalorder %s110, %s126
      %p128 = scmp.eq.s32.totalorder %s15, 0
      %p129 = por %p127, %p128
      %p130 = scmp.le.s32.totalorder 1, %s9
      %p131 = scmp.lt.s32.totalorder %s9, 5
      %p132 = pnand %p130, %p131
      %p133 = pneg %p132
      // Predicated region
      $region9: #{discriminator_forward.14} parent=5 // pred_check
        _
      $region10: #{discriminator_forward.14} parent=5 // pred_check_branch
        %135 = sbr.rel (%p132) target = $region12
      $region11: #{discriminator_forward.14} parent=5 // pred_region
        %s136 = ssub.s32 %s9, 1
        // Predicated region
        $region13: #{discriminator_forward.14} parent=11 // pred_check
          %p137 = pneg %p96
        $region14: #{discriminator_forward.14} parent=11 // pred_check_branch
          %139 = sbr.rel (%p137) target = $region16
        $region15: #{discriminator_forward.14} parent=11 // pred_region
          _
        $region16: #{discriminator_forward.14} parent=11 // pred_fallthru
          _
      $region12: #{discriminator_forward.14} parent=5 // pred_fallthru
        _
      %p140 = scmp.lt.s32.totalorder %s9, 4
      // Predicated region
      $region17: #{discriminator_forward.14} parent=5 // pred_check
        %p141 = pneg %p140
      $region18: #{discriminator_forward.14} parent=5 // pred_check_branch
        %143 = sbr.rel (%p141) target = $region20
      $region19: #{discriminator_forward.14} parent=5 // pred_region
        // Predicated region
        $region21: #{discriminator_forward.14} parent=19 // pred_check
          %p144 = pneg %p43
        $region22: #{discriminator_forward.14} parent=19 // pred_check_branch
          %146 = sbr.rel (%p144) target = $region24
        $region23: #{discriminator_forward.14} parent=19 // pred_region
          %s147 = sand.u32 %s33, 1
          %s148 = sand.u32 %s33, 1
          %s149 = smul.addr %s148, 96
          %s150 = scalar_lea.vmem [#allocation3], %s149
          %s151 = smul.u32 3, %s16
          %s152 = smul.u32 8, %s17
          %s153 = smul.addr %s151, 32
          %s154 = sadd.s32 %s152, %s153
          %s155 = smul.addr %s154, 4
          %s156 = scalar_lea.vmem %s0, %s155
          // Predicated region
          $region25: #{discriminator_forward.14} parent=23 // pred_check
            _
          $region26: #{discriminator_forward.14} parent=23 // pred_check_branch
            %158 = sbr.rel (0) target = $region28
          $region27: #{discriminator_forward.14} parent=23 // pred_region
            // Predicated region
            $region29: #{discriminator_forward.14} parent=27 // pred_check
              _
            $region30: #{discriminator_forward.14} parent=27 // pred_check_branch
              %160 = sbr.rel (0) target = $region32
            $region31: #{discriminator_forward.14} parent=27 // pred_region
              loop: start=0, step=1, limit=1
              $region33: #{discriminator_forward.14} parent=31 // loop_pre_header
                _
              $region34: #{discriminator_forward.14} parent=31 // loop_header
                %s162 = sphi 0, %s166
                %p163 = scmp.ge.s32.totalorder %s162, 1
                %s167 = sphi %s156, %s156
                %s168 = sphi %s150, %s150
              $region35: #{discriminator_forward.14} parent=31 // loop_header_branch
                %165 = sbr.rel (%p163) target = $region39
              $region36: #{discriminator_forward.14} parent=31 // loop_body
                %v169 = vld [vmem:[%s167] sm:$0xff]
                %170 = vst [vmem:[%s168] sm:$0xff] %v169
                %v171 = vld [vmem:[%s167 + $0x8] sm:$0xff]
                %172 = vst [vmem:[%s168 + $0x8] sm:$0xff] %v171
                %v173 = vld [vmem:[%s167 + $0x10] sm:$0xff]
                %174 = vst [vmem:[%s168 + $0x10] sm:$0xff] %v173
                %v175 = vld [vmem:[%s167 + $0x18] sm:$0xff]
                %176 = vst [vmem:[%s168 + $0x18] sm:$0xff] %v175
                %v177 = vld [vmem:[%s167 + $0x80] sm:$0xff]
                %178 = vst [vmem:[%s168 + $0x20] sm:$0xff] %v177
                %v179 = vld [vmem:[%s167 + $0x88] sm:$0xff]
                %180 = vst [vmem:[%s168 + $0x28] sm:$0xff] %v179
                %v181 = vld [vmem:[%s167 + $0x90] sm:$0xff]
                %182 = vst [vmem:[%s168 + $0x30] sm:$0xff] %v181
                %v183 = vld [vmem:[%s167 + $0x98] sm:$0xff]
                %184 = vst [vmem:[%s168 + $0x38] sm:$0xff] %v183
                %v185 = vld [vmem:[%s167 + $0x100] sm:$0xff]
                %186 = vst [vmem:[%s168 + $0x40] sm:$0xff] %v185
                %v187 = vld [vmem:[%s167 + $0x108] sm:$0xff]
                %188 = vst [vmem:[%s168 + $0x48] sm:$0xff] %v187
                %v189 = vld [vmem:[%s167 + $0x110] sm:$0xff]
                %190 = vst [vmem:[%s168 + $0x50] sm:$0xff] %v189
                %v191 = vld [vmem:[%s167 + $0x118] sm:$0xff]
                %192 = vst [vmem:[%s168 + $0x58] sm:$0xff] %v191
              $region37: #{discriminator_forward.14} parent=31 // loop_footer
                %s166 = sadd.s32 1, %s162
              $region38: #{discriminator_forward.14} parent=31 // loop_footer_branch
                %161 = sbr.rel target = $region34
              $region39: #{discriminator_forward.14} parent=31 // loop_exit
                _
            $region32: #{discriminator_forward.14} parent=27 // pred_fallthru
              _
            // Predicated region
            $region40: #{discriminator_forward.14} parent=27 // pred_check
              _
            $region41: #{discriminator_forward.14} parent=27 // pred_check_branch
              %194 = sbr.rel target = $region43
            $region42: #{discriminator_forward.14} parent=27 // pred_region
              _
            $region43: #{discriminator_forward.14} parent=27 // pred_fallthru
              _
          $region28: #{discriminator_forward.14} parent=23 // pred_fallthru
            _
          %195 = vnop
        $region24: #{discriminator_forward.14} parent=19 // pred_fallthru
          _
        // Predicated region
        $region44: #{discriminator_forward.14} parent=19 // pred_check
          %p196 = pneg %p69
        $region45: #{discriminator_forward.14} parent=19 // pred_check_branch
          %198 = sbr.rel (%p196) target = $region47
        $region46: #{discriminator_forward.14} parent=19 // pred_region
          %s199 = smul.u32 128, %s17
          %p200 = scmp.lt.s32.totalorder %s199, 511
          %s201 = scalar_select %p200, %s199, 511
          %s202 = smul.addr %s201, 4
          %s203 = smul.addr %s202, 4
          %s204 = scalar_lea.vmem %s1, %s203
          %s205 = smul.u32 128, %s17
        $region47: #{discriminator_forward.14} parent=19 // pred_fallthru
          _
      $region20: #{discriminator_forward.14} parent=5 // pred_fallthru
        _
      %p206 = scmp.le.s32.totalorder 1, %s9
      %p207 = scmp.lt.s32.totalorder %s9, 5
      %p208 = pnand %p206, %p207
      %p209 = pneg %p208
      // Predicated region
      $region48: #{discriminator_forward.14} parent=5 // pred_check
        _
      $region49: #{discriminator_forward.14} parent=5 // pred_check_branch
        %211 = sbr.rel (%p208) target = $region51
      $region50: #{discriminator_forward.14} parent=5 // pred_region
        %s212 = ssub.s32 %s9, 1
        %s213 = sand.u32 %s36, 1
        %s214 = sand.u32 %s36, 1
        %s215 = smul.addr %s214, 96
        %s216 = scalar_lea.vmem [#allocation3], %s215
        // Predicated region
        $region52: #{discriminator_forward.14} parent=50 // pred_check
          %p217 = pneg %p49
        $region53: #{discriminator_forward.14} parent=50 // pred_check_branch
          %219 = sbr.rel (%p217) target = $region55
        $region54: #{discriminator_forward.14} parent=50 // pred_region
          _
        $region55: #{discriminator_forward.14} parent=50 // pred_fallthru
          _
        %s220 = sand.u32 %s36, 1
        %s221 = sand.u32 %s36, 1
        %s222 = smul.addr %s221, 96
        %s223 = scalar_lea.vmem [#allocation3], %s222
        %p224 = pneg %p49
        %p225 = pneg %p46
        %s226 = smul.u32 128, %s19
        %p227 = scmp.lt.s32.totalorder %s226, 511
        %s228 = scalar_select %p227, %s226, 511
        %s229 = smul.addr %s228, 4
        %s230 = smul.addr %s229, 4
        %s231 = scalar_lea.vmem %s1, %s230
        %p232 = pneg %p75
        %p233 = pneg %p72
        %p234 = pneg %p96
        %p235 = pneg %p93
        %p236 = pneg %p122
        %p237 = pneg %p119
        %s238 = smul.u32 3, %s18
        %p239 = scmp.lt.s32.totalorder %s238, 2
        %s240 = scalar_select %p239, %s238, 2
        %s241 = smul.addr %s240, 4
        %s242 = smul.addr %s241, 8
        %s243 = scalar_lea.vmem %s3, %s242
        %s244 = smul.u32 3, %s18
        %s245 = smul.u32 8, %s19
        %s246 = smul.u32 128, %s19
        %p247 = scmp.lt.s32.totalorder %s246, 511
        %s248 = scalar_select %p247, %s246, 511
        %s249 = smul.addr %s248, 4
        %s250 = smul.addr %s249, 4
        %s251 = scalar_lea.vmem %s1, %s250
        %s252 = smul.u32 128, %s19
        %s253 = smul.u32 3, %s18
        %p254 = scmp.lt.s32.totalorder %s253, 2
        %s255 = scalar_select %p254, %s253, 2
        %s256 = smul.addr %s255, 4
        %s257 = smul.addr %s256, 8
        %s258 = scalar_lea.vmem %s3, %s257
        %s259 = smul.u32 3, %s18
        %p260 = scmp.eq.s32.totalorder %s19, 0
        // Predicated region
        $region56: #{discriminator_forward.14} parent=50 // pred_check
          %p261 = pneg %p260
        $region57: #{discriminator_forward.14} parent=50 // pred_check_branch
          %263 = sbr.rel (%p261) target = $region59
        $region58: #{discriminator_forward.14} parent=50 // pred_region
          %264 = vst [vmem:[#allocation2] sm:$0xff] 0.0
          %265 = vst [vmem:[#allocation2 + $0x8] sm:$0xff] 0.0
          %266 = vst [vmem:[#allocation2 + $0x10] sm:$0xff] 0.0
          %267 = vst [vmem:[#allocation2 + $0x18] sm:$0xff] 0.0
          %268 = vst [vmem:[#allocation2 + $0x20] sm:$0xff] 0.0
          %269 = vst [vmem:[#allocation2 + $0x28] sm:$0xff] 0.0
          %270 = vst [vmem:[#allocation2 + $0x30] sm:$0xff] 0.0
          %271 = vst [vmem:[#allocation2 + $0x38] sm:$0xff] 0.0
          %272 = vst [vmem:[#allocation2 + $0x40] sm:$0xff] 0.0
          %273 = vst [vmem:[#allocation2 + $0x48] sm:$0xff] 0.0
          %274 = vst [vmem:[#allocation2 + $0x50] sm:$0xff] 0.0
          %275 = vst [vmem:[#allocation2 + $0x58] sm:$0xff] 0.0
        $region59: #{discriminator_forward.14} parent=50 // pred_fallthru
          _
        %v276 = vld [vmem:[#allocation2] sm:$0xff]
        %v277 = vld [vmem:[#allocation2 + $0x8] sm:$0xff]
        %v278 = vld [vmem:[#allocation2 + $0x10] sm:$0xff]
        %v279 = vld [vmem:[#allocation2 + $0x18] sm:$0xff]
        %v280 = vld [vmem:[#allocation2 + $0x20] sm:$0xff]
        %v281 = vld [vmem:[#allocation2 + $0x28] sm:$0xff]
        %v282 = vld [vmem:[#allocation2 + $0x30] sm:$0xff]
        %v283 = vld [vmem:[#allocation2 + $0x38] sm:$0xff]
        %v284 = vld [vmem:[#allocation2 + $0x40] sm:$0xff]
        %v285 = vld [vmem:[#allocation2 + $0x48] sm:$0xff]
        %v286 = vld [vmem:[#allocation2 + $0x50] sm:$0xff]
        %v287 = vld [vmem:[#allocation2 + $0x58] sm:$0xff]
        %v288 = vld [vmem:[%s216] sm:$0xff]
        %v289 = vld [vmem:[%s216 + $0x8] sm:$0xff]
        %v290 = vld [vmem:[%s216 + $0x10] sm:$0xff]
        %v291 = vld [vmem:[%s216 + $0x18] sm:$0xff]
        %v292 = vld [vmem:[%s216 + $0x20] sm:$0xff]
        %v293 = vld [vmem:[%s216 + $0x28] sm:$0xff]
        %v294 = vld [vmem:[%s216 + $0x30] sm:$0xff]
        %v295 = vld [vmem:[%s216 + $0x38] sm:$0xff]
        %v296 = vld [vmem:[%s216 + $0x40] sm:$0xff]
        %v297 = vld [vmem:[%s216 + $0x48] sm:$0xff]
        %v298 = vld [vmem:[%s216 + $0x50] sm:$0xff]
        %v299 = vld [vmem:[%s216 + $0x58] sm:$0xff]
        %v300 = vld [vmem:[%s251] sm:$0xff]
        %v301 = vld [vmem:[%s251 + $0x8] sm:$0xff]
        %v302 = vld [vmem:[%s251 + $0x10] sm:$0xff]
        %v303 = vld [vmem:[%s251 + $0x18] sm:$0xff]
        %v304 = vld [vmem:[%s251 + $0x20] sm:$0xff]
        %v305 = vld [vmem:[%s251 + $0x28] sm:$0xff]
        %v306 = vld [vmem:[%s251 + $0x30] sm:$0xff]
        %v307 = vld [vmem:[%s251 + $0x38] sm:$0xff]
        %v308 = vld [vmem:[%s251 + $0x40] sm:$0xff]
        %v309 = vld [vmem:[%s251 + $0x48] sm:$0xff]
        %v310 = vld [vmem:[%s251 + $0x50] sm:$0xff]
        %v311 = vld [vmem:[%s251 + $0x58] sm:$0xff]
        %v312 = vld [vmem:[%s251 + $0x60] sm:$0xff]
        %v313 = vld [vmem:[%s251 + $0x68] sm:$0xff]
        %v314 = vld [vmem:[%s251 + $0x70] sm:$0xff]
        %v315 = vld [vmem:[%s251 + $0x78] sm:$0xff]
        %v316 = vld [vmem:[%s251 + $0x80] sm:$0xff]
        %v317 = vld [vmem:[%s251 + $0x88] sm:$0xff]
        %v318 = vld [vmem:[%s251 + $0x90] sm:$0xff]
        %v319 = vld [vmem:[%s251 + $0x98] sm:$0xff]
        %v320 = vld [vmem:[%s251 + $0xa0] sm:$0xff]
        %v321 = vld [vmem:[%s251 + $0xa8] sm:$0xff]
        %v322 = vld [vmem:[%s251 + $0xb0] sm:$0xff]
        %v323 = vld [vmem:[%s251 + $0xb8] sm:$0xff]
        %v324 = vld [vmem:[%s251 + $0xc0] sm:$0xff]
        %v325 = vld [vmem:[%s251 + $0xc8] sm:$0xff]
        %v326 = vld [vmem:[%s251 + $0xd0] sm:$0xff]
        %v327 = vld [vmem:[%s251 + $0xd8] sm:$0xff]
        %v328 = vld [vmem:[%s251 + $0xe0] sm:$0xff]
        %v329 = vld [vmem:[%s251 + $0xe8] sm:$0xff]
        %v330 = vld [vmem:[%s251 + $0xf0] sm:$0xff]
        %v331 = vld [vmem:[%s251 + $0xf8] sm:$0xff]
        %v332 = vld [vmem:[%s251 + $0x100] sm:$0xff]
        %v333 = vld [vmem:[%s251 + $0x108] sm:$0xff]
        %v334 = vld [vmem:[%s251 + $0x110] sm:$0xff]
        %v335 = vld [vmem:[%s251 + $0x118] sm:$0xff]
        %v336 = vld [vmem:[%s251 + $0x120] sm:$0xff]
        %v337 = vld [vmem:[%s251 + $0x128] sm:$0xff]
        %v338 = vld [vmem:[%s251 + $0x130] sm:$0xff]
        %v339 = vld [vmem:[%s251 + $0x138] sm:$0xff]
        %v340 = vld [vmem:[%s251 + $0x140] sm:$0xff]
        %v341 = vld [vmem:[%s251 + $0x148] sm:$0xff]
        %v342 = vld [vmem:[%s251 + $0x150] sm:$0xff]
        %v343 = vld [vmem:[%s251 + $0x158] sm:$0xff]
        %v344 = vld [vmem:[%s251 + $0x160] sm:$0xff]
        %v345 = vld [vmem:[%s251 + $0x168] sm:$0xff]
        %v346 = vld [vmem:[%s251 + $0x170] sm:$0xff]
        %v347 = vld [vmem:[%s251 + $0x178] sm:$0xff]
        %v348 = vld [vmem:[%s251 + $0x180] sm:$0xff]
        %v349 = vld [vmem:[%s251 + $0x188] sm:$0xff]
        %v350 = vld [vmem:[%s251 + $0x190] sm:$0xff]
        %v351 = vld [vmem:[%s251 + $0x198] sm:$0xff]
        %v352 = vld [vmem:[%s251 + $0x1a0] sm:$0xff]
        %v353 = vld [vmem:[%s251 + $0x1a8] sm:$0xff]
        %v354 = vld [vmem:[%s251 + $0x1b0] sm:$0xff]
        %v355 = vld [vmem:[%s251 + $0x1b8] sm:$0xff]
        %v356 = vld [vmem:[%s251 + $0x1c0] sm:$0xff]
        %v357 = vld [vmem:[%s251 + $0x1c8] sm:$0xff]
        %v358 = vld [vmem:[%s251 + $0x1d0] sm:$0xff]
        %v359 = vld [vmem:[%s251 + $0x1d8] sm:$0xff]
        %v360 = vld [vmem:[%s251 + $0x1e0] sm:$0xff]
        %v361 = vld [vmem:[%s251 + $0x1e8] sm:$0xff]
        %v362 = vld [vmem:[%s251 + $0x1f0] sm:$0xff]
        %v363 = vld [vmem:[%s251 + $0x1f8] sm:$0xff]
        %v364 = vld [vmem:[%s251 + $0x200] sm:$0xff]
        %v365 = vld [vmem:[%s251 + $0x208] sm:$0xff]
        %v366 = vld [vmem:[%s251 + $0x210] sm:$0xff]
        %v367 = vld [vmem:[%s251 + $0x218] sm:$0xff]
        %v368 = vld [vmem:[%s251 + $0x220] sm:$0xff]
        %v369 = vld [vmem:[%s251 + $0x228] sm:$0xff]
        %v370 = vld [vmem:[%s251 + $0x230] sm:$0xff]
        %v371 = vld [vmem:[%s251 + $0x238] sm:$0xff]
        %v372 = vld [vmem:[%s251 + $0x240] sm:$0xff]
        %v373 = vld [vmem:[%s251 + $0x248] sm:$0xff]
        %v374 = vld [vmem:[%s251 + $0x250] sm:$0xff]
        %v375 = vld [vmem:[%s251 + $0x258] sm:$0xff]
        %v376 = vld [vmem:[%s251 + $0x260] sm:$0xff]
        %v377 = vld [vmem:[%s251 + $0x268] sm:$0xff]
        %v378 = vld [vmem:[%s251 + $0x270] sm:$0xff]
        %v379 = vld [vmem:[%s251 + $0x278] sm:$0xff]
        %v380 = vld [vmem:[%s251 + $0x280] sm:$0xff]
        %v381 = vld [vmem:[%s251 + $0x288] sm:$0xff]
        %v382 = vld [vmem:[%s251 + $0x290] sm:$0xff]
        %v383 = vld [vmem:[%s251 + $0x298] sm:$0xff]
        %v384 = vld [vmem:[%s251 + $0x2a0] sm:$0xff]
        %v385 = vld [vmem:[%s251 + $0x2a8] sm:$0xff]
        %v386 = vld [vmem:[%s251 + $0x2b0] sm:$0xff]
        %v387 = vld [vmem:[%s251 + $0x2b8] sm:$0xff]
        %v388 = vld [vmem:[%s251 + $0x2c0] sm:$0xff]
        %v389 = vld [vmem:[%s251 + $0x2c8] sm:$0xff]
        %v390 = vld [vmem:[%s251 + $0x2d0] sm:$0xff]
        %v391 = vld [vmem:[%s251 + $0x2d8] sm:$0xff]
        %v392 = vld [vmem:[%s251 + $0x2e0] sm:$0xff]
        %v393 = vld [vmem:[%s251 + $0x2e8] sm:$0xff]
        %v394 = vld [vmem:[%s251 + $0x2f0] sm:$0xff]
        %v395 = vld [vmem:[%s251 + $0x2f8] sm:$0xff]
        %v396 = vld [vmem:[%s251 + $0x300] sm:$0xff]
        %v397 = vld [vmem:[%s251 + $0x308] sm:$0xff]
        %v398 = vld [vmem:[%s251 + $0x310] sm:$0xff]
        %v399 = vld [vmem:[%s251 + $0x318] sm:$0xff]
        %v400 = vld [vmem:[%s251 + $0x320] sm:$0xff]
        %v401 = vld [vmem:[%s251 + $0x328] sm:$0xff]
        %v402 = vld [vmem:[%s251 + $0x330] sm:$0xff]
        %v403 = vld [vmem:[%s251 + $0x338] sm:$0xff]
        %v404 = vld [vmem:[%s251 + $0x340] sm:$0xff]
        %v405 = vld [vmem:[%s251 + $0x348] sm:$0xff]
        %v406 = vld [vmem:[%s251 + $0x350] sm:$0xff]
        %v407 = vld [vmem:[%s251 + $0x358] sm:$0xff]
        %v408 = vld [vmem:[%s251 + $0x360] sm:$0xff]
        %v409 = vld [vmem:[%s251 + $0x368] sm:$0xff]
        %v410 = vld [vmem:[%s251 + $0x370] sm:$0xff]
        %v411 = vld [vmem:[%s251 + $0x378] sm:$0xff]
        %v412 = vld [vmem:[%s251 + $0x380] sm:$0xff]
        %v413 = vld [vmem:[%s251 + $0x388] sm:$0xff]
        %v414 = vld [vmem:[%s251 + $0x390] sm:$0xff]
        %v415 = vld [vmem:[%s251 + $0x398] sm:$0xff]
        %v416 = vld [vmem:[%s251 + $0x3a0] sm:$0xff]
        %v417 = vld [vmem:[%s251 + $0x3a8] sm:$0xff]
        %v418 = vld [vmem:[%s251 + $0x3b0] sm:$0xff]
        %v419 = vld [vmem:[%s251 + $0x3b8] sm:$0xff]
        %v420 = vld [vmem:[%s251 + $0x3c0] sm:$0xff]
        %v421 = vld [vmem:[%s251 + $0x3c8] sm:$0xff]
        %v422 = vld [vmem:[%s251 + $0x3d0] sm:$0xff]
        %v423 = vld [vmem:[%s251 + $0x3d8] sm:$0xff]
        %v424 = vld [vmem:[%s251 + $0x3e0] sm:$0xff]
        %v425 = vld [vmem:[%s251 + $0x3e8] sm:$0xff]
        %v426 = vld [vmem:[%s251 + $0x3f0] sm:$0xff]
        %v427 = vld [vmem:[%s251 + $0x3f8] sm:$0xff]
        %v428 = vld [vmem:[%s251 + $0x400] sm:$0xff]
        %v429 = vld [vmem:[%s251 + $0x408] sm:$0xff]
        %v430 = vld [vmem:[%s251 + $0x410] sm:$0xff]
        %v431 = vld [vmem:[%s251 + $0x418] sm:$0xff]
        %v432 = vld [vmem:[%s251 + $0x420] sm:$0xff]
        %v433 = vld [vmem:[%s251 + $0x428] sm:$0xff]
        %v434 = vld [vmem:[%s251 + $0x430] sm:$0xff]
        %v435 = vld [vmem:[%s251 + $0x438] sm:$0xff]
        %v436 = vld [vmem:[%s251 + $0x440] sm:$0xff]
        %v437 = vld [vmem:[%s251 + $0x448] sm:$0xff]
        %v438 = vld [vmem:[%s251 + $0x450] sm:$0xff]
        %v439 = vld [vmem:[%s251 + $0x458] sm:$0xff]
        %v440 = vld [vmem:[%s251 + $0x460] sm:$0xff]
        %v441 = vld [vmem:[%s251 + $0x468] sm:$0xff]
        %v442 = vld [vmem:[%s251 + $0x470] sm:$0xff]
        %v443 = vld [vmem:[%s251 + $0x478] sm:$0xff]
        %v444 = vld [vmem:[%s251 + $0x480] sm:$0xff]
        %v445 = vld [vmem:[%s251 + $0x488] sm:$0xff]
        %v446 = vld [vmem:[%s251 + $0x490] sm:$0xff]
        %v447 = vld [vmem:[%s251 + $0x498] sm:$0xff]
        %v448 = vld [vmem:[%s251 + $0x4a0] sm:$0xff]
        %v449 = vld [vmem:[%s251 + $0x4a8] sm:$0xff]
        %v450 = vld [vmem:[%s251 + $0x4b0] sm:$0xff]
        %v451 = vld [vmem:[%s251 + $0x4b8] sm:$0xff]
        %v452 = vld [vmem:[%s251 + $0x4c0] sm:$0xff]
        %v453 = vld [vmem:[%s251 + $0x4c8] sm:$0xff]
        %v454 = vld [vmem:[%s251 + $0x4d0] sm:$0xff]
        %v455 = vld [vmem:[%s251 + $0x4d8] sm:$0xff]
        %v456 = vld [vmem:[%s251 + $0x4e0] sm:$0xff]
        %v457 = vld [vmem:[%s251 + $0x4e8] sm:$0xff]
        %v458 = vld [vmem:[%s251 + $0x4f0] sm:$0xff]
        %v459 = vld [vmem:[%s251 + $0x4f8] sm:$0xff]
        %v460 = vld [vmem:[%s251 + $0x500] sm:$0xff]
        %v461 = vld [vmem:[%s251 + $0x508] sm:$0xff]
        %v462 = vld [vmem:[%s251 + $0x510] sm:$0xff]
        %v463 = vld [vmem:[%s251 + $0x518] sm:$0xff]
        %v464 = vld [vmem:[%s251 + $0x520] sm:$0xff]
        %v465 = vld [vmem:[%s251 + $0x528] sm:$0xff]
        %v466 = vld [vmem:[%s251 + $0x530] sm:$0xff]
        %v467 = vld [vmem:[%s251 + $0x538] sm:$0xff]
        %v468 = vld [vmem:[%s251 + $0x540] sm:$0xff]
        %v469 = vld [vmem:[%s251 + $0x548] sm:$0xff]
        %v470 = vld [vmem:[%s251 + $0x550] sm:$0xff]
        %v471 = vld [vmem:[%s251 + $0x558] sm:$0xff]
        %v472 = vld [vmem:[%s251 + $0x560] sm:$0xff]
        %v473 = vld [vmem:[%s251 + $0x568] sm:$0xff]
        %v474 = vld [vmem:[%s251 + $0x570] sm:$0xff]
        %v475 = vld [vmem:[%s251 + $0x578] sm:$0xff]
        %v476 = vld [vmem:[%s251 + $0x580] sm:$0xff]
        %v477 = vld [vmem:[%s251 + $0x588] sm:$0xff]
        %v478 = vld [vmem:[%s251 + $0x590] sm:$0xff]
        %v479 = vld [vmem:[%s251 + $0x598] sm:$0xff]
        %v480 = vld [vmem:[%s251 + $0x5a0] sm:$0xff]
        %v481 = vld [vmem:[%s251 + $0x5a8] sm:$0xff]
        %v482 = vld [vmem:[%s251 + $0x5b0] sm:$0xff]
        %v483 = vld [vmem:[%s251 + $0x5b8] sm:$0xff]
        %v484 = vld [vmem:[%s251 + $0x5c0] sm:$0xff]
        %v485 = vld [vmem:[%s251 + $0x5c8] sm:$0xff]
        %v486 = vld [vmem:[%s251 + $0x5d0] sm:$0xff]
        %v487 = vld [vmem:[%s251 + $0x5d8] sm:$0xff]
        %v488 = vld [vmem:[%s251 + $0x5e0] sm:$0xff]
        %v489 = vld [vmem:[%s251 + $0x5e8] sm:$0xff]
        %v490 = vld [vmem:[%s251 + $0x5f0] sm:$0xff]
        %v491 = vld [vmem:[%s251 + $0x5f8] sm:$0xff]
        %v492 = vld [vmem:[%s251 + $0x600] sm:$0xff]
        %v493 = vld [vmem:[%s251 + $0x608] sm:$0xff]
        %v494 = vld [vmem:[%s251 + $0x610] sm:$0xff]
        %v495 = vld [vmem:[%s251 + $0x618] sm:$0xff]
        %v496 = vld [vmem:[%s251 + $0x620] sm:$0xff]
        %v497 = vld [vmem:[%s251 + $0x628] sm:$0xff]
        %v498 = vld [vmem:[%s251 + $0x630] sm:$0xff]
        %v499 = vld [vmem:[%s251 + $0x638] sm:$0xff]
        %v500 = vld [vmem:[%s251 + $0x640] sm:$0xff]
        %v501 = vld [vmem:[%s251 + $0x648] sm:$0xff]
        %v502 = vld [vmem:[%s251 + $0x650] sm:$0xff]
        %v503 = vld [vmem:[%s251 + $0x658] sm:$0xff]
        %v504 = vld [vmem:[%s251 + $0x660] sm:$0xff]
        %v505 = vld [vmem:[%s251 + $0x668] sm:$0xff]
        %v506 = vld [vmem:[%s251 + $0x670] sm:$0xff]
        %v507 = vld [vmem:[%s251 + $0x678] sm:$0xff]
        %v508 = vld [vmem:[%s251 + $0x680] sm:$0xff]
        %v509 = vld [vmem:[%s251 + $0x688] sm:$0xff]
        %v510 = vld [vmem:[%s251 + $0x690] sm:$0xff]
        %v511 = vld [vmem:[%s251 + $0x698] sm:$0xff]
        %v512 = vld [vmem:[%s251 + $0x6a0] sm:$0xff]
        %v513 = vld [vmem:[%s251 + $0x6a8] sm:$0xff]
        %v514 = vld [vmem:[%s251 + $0x6b0] sm:$0xff]
        %v515 = vld [vmem:[%s251 + $0x6b8] sm:$0xff]
        %v516 = vld [vmem:[%s251 + $0x6c0] sm:$0xff]
        %v517 = vld [vmem:[%s251 + $0x6c8] sm:$0xff]
        %v518 = vld [vmem:[%s251 + $0x6d0] sm:$0xff]
        %v519 = vld [vmem:[%s251 + $0x6d8] sm:$0xff]
        %v520 = vld [vmem:[%s251 + $0x6e0] sm:$0xff]
        %v521 = vld [vmem:[%s251 + $0x6e8] sm:$0xff]
        %v522 = vld [vmem:[%s251 + $0x6f0] sm:$0xff]
        %v523 = vld [vmem:[%s251 + $0x6f8] sm:$0xff]
        %v524 = vld [vmem:[%s251 + $0x700] sm:$0xff]
        %v525 = vld [vmem:[%s251 + $0x708] sm:$0xff]
        %v526 = vld [vmem:[%s251 + $0x710] sm:$0xff]
        %v527 = vld [vmem:[%s251 + $0x718] sm:$0xff]
        %v528 = vld [vmem:[%s251 + $0x720] sm:$0xff]
        %v529 = vld [vmem:[%s251 + $0x728] sm:$0xff]
        %v530 = vld [vmem:[%s251 + $0x730] sm:$0xff]
        %v531 = vld [vmem:[%s251 + $0x738] sm:$0xff]
        %v532 = vld [vmem:[%s251 + $0x740] sm:$0xff]
        %v533 = vld [vmem:[%s251 + $0x748] sm:$0xff]
        %v534 = vld [vmem:[%s251 + $0x750] sm:$0xff]
        %v535 = vld [vmem:[%s251 + $0x758] sm:$0xff]
        %v536 = vld [vmem:[%s251 + $0x760] sm:$0xff]
        %v537 = vld [vmem:[%s251 + $0x768] sm:$0xff]
        %v538 = vld [vmem:[%s251 + $0x770] sm:$0xff]
        %v539 = vld [vmem:[%s251 + $0x778] sm:$0xff]
        %v540 = vld [vmem:[%s251 + $0x780] sm:$0xff]
        %v541 = vld [vmem:[%s251 + $0x788] sm:$0xff]
        %v542 = vld [vmem:[%s251 + $0x790] sm:$0xff]
        %v543 = vld [vmem:[%s251 + $0x798] sm:$0xff]
        %v544 = vld [vmem:[%s251 + $0x7a0] sm:$0xff]
        %v545 = vld [vmem:[%s251 + $0x7a8] sm:$0xff]
        %v546 = vld [vmem:[%s251 + $0x7b0] sm:$0xff]
        %v547 = vld [vmem:[%s251 + $0x7b8] sm:$0xff]
        %v548 = vld [vmem:[%s251 + $0x7c0] sm:$0xff]
        %v549 = vld [vmem:[%s251 + $0x7c8] sm:$0xff]
        %v550 = vld [vmem:[%s251 + $0x7d0] sm:$0xff]
        %v551 = vld [vmem:[%s251 + $0x7d8] sm:$0xff]
        %v552 = vld [vmem:[%s251 + $0x7e0] sm:$0xff]
        %v553 = vld [vmem:[%s251 + $0x7e8] sm:$0xff]
        %v554 = vld [vmem:[%s251 + $0x7f0] sm:$0xff]
        %v555 = vld [vmem:[%s251 + $0x7f8] sm:$0xff]
        %v568 = vunpack.c.l.b16 %v288
        %v569 = vunpack.c.h.b16 %v288
        %v570 = vunpack.c.l.b16 %v289
        %v571 = vunpack.c.h.b16 %v289
        %v572 = vunpack.c.l.b16 %v290
        %v573 = vunpack.c.h.b16 %v290
        %v574 = vunpack.c.l.b16 %v291
        %v575 = vunpack.c.h.b16 %v291
        %v576 = vunpack.c.l.b16 %v292
        %v577 = vunpack.c.h.b16 %v292
        %v578 = vunpack.c.l.b16 %v293
        %v579 = vunpack.c.h.b16 %v293
        %v580 = vunpack.c.l.b16 %v294
        %v581 = vunpack.c.h.b16 %v294
        %v582 = vunpack.c.l.b16 %v295
        %v583 = vunpack.c.h.b16 %v295
        %v584 = vunpack.c.l.b16 %v296
        %v585 = vunpack.c.h.b16 %v296
        %v586 = vunpack.c.l.b16 %v297
        %v587 = vunpack.c.h.b16 %v297
        %v588 = vunpack.c.l.b16 %v298
        %v589 = vunpack.c.h.b16 %v298
        %v590 = vunpack.c.l.b16 %v299
        %v591 = vunpack.c.h.b16 %v299
        %v592 = vpack.c.b16 %v576, %v568
        %v593 = vpack.c.b16 %v577, %v569
        %v594 = vpack.c.b16 %v578, %v570
        %v595 = vpack.c.b16 %v579, %v571
        %v596 = vpack.c.b16 %v580, %v572
        %v597 = vpack.c.b16 %v581, %v573
        %v598 = vpack.c.b16 %v582, %v574
        %v599 = vpack.c.b16 %v583, %v575
        %v600 = vpack.c.b16 %v584, %v584
        %v601 = vpack.c.b16 %v585, %v585
        %v602 = vpack.c.b16 %v586, %v586
        %v603 = vpack.c.b16 %v587, %v587
        %v604 = vpack.c.b16 %v588, %v588
        %v605 = vpack.c.b16 %v589, %v589
        %v606 = vpack.c.b16 %v590, %v590
        %v607 = vpack.c.b16 %v591, %v591
        %v880 = vunpack.c.l.b16 %v300
        %v881 = vunpack.c.h.b16 %v300
        %v882 = vunpack.c.l.b16 %v301
        %v883 = vunpack.c.h.b16 %v301
        %v884 = vunpack.c.l.b16 %v302
        %v885 = vunpack.c.h.b16 %v302
        %v886 = vunpack.c.l.b16 %v303
        %v887 = vunpack.c.h.b16 %v303
        %v888 = vunpack.c.l.b16 %v304
        %v889 = vunpack.c.h.b16 %v304
        %v890 = vunpack.c.l.b16 %v305
        %v891 = vunpack.c.h.b16 %v305
        %v892 = vunpack.c.l.b16 %v306
        %v893 = vunpack.c.h.b16 %v306
        %v894 = vunpack.c.l.b16 %v307
        %v895 = vunpack.c.h.b16 %v307
        %v896 = vunpack.c.l.b16 %v308
        %v897 = vunpack.c.h.b16 %v308
        %v898 = vunpack.c.l.b16 %v309
        %v899 = vunpack.c.h.b16 %v309
        %v900 = vunpack.c.l.b16 %v310
        %v901 = vunpack.c.h.b16 %v310
        %v902 = vunpack.c.l.b16 %v311
        %v903 = vunpack.c.h.b16 %v311
        %v904 = vunpack.c.l.b16 %v312
        %v905 = vunpack.c.h.b16 %v312
        %v906 = vunpack.c.l.b16 %v313
        %v907 = vunpack.c.h.b16 %v313
        %v908 = vunpack.c.l.b16 %v314
        %v909 = vunpack.c.h.b16 %v314
        %v910 = vunpack.c.l.b16 %v315
        %v911 = vunpack.c.h.b16 %v315
        %v912 = vunpack.c.l.b16 %v316
        %v913 = vunpack.c.h.b16 %v316
        %v914 = vunpack.c.l.b16 %v317
        %v915 = vunpack.c.h.b16 %v317
        %v916 = vunpack.c.l.b16 %v318
        %v917 = vunpack.c.h.b16 %v318
        %v918 = vunpack.c.l.b16 %v319
        %v919 = vunpack.c.h.b16 %v319
        %v920 = vunpack.c.l.b16 %v320
        %v921 = vunpack.c.h.b16 %v320
        %v922 = vunpack.c.l.b16 %v321
        %v923 = vunpack.c.h.b16 %v321
        %v924 = vunpack.c.l.b16 %v322
        %v925 = vunpack.c.h.b16 %v322
        %v926 = vunpack.c.l.b16 %v323
        %v927 = vunpack.c.h.b16 %v323
        %v928 = vunpack.c.l.b16 %v324
        %v929 = vunpack.c.h.b16 %v324
        %v930 = vunpack.c.l.b16 %v325
        %v931 = vunpack.c.h.b16 %v325
        %v932 = vunpack.c.l.b16 %v326
        %v933 = vunpack.c.h.b16 %v326
        %v934 = vunpack.c.l.b16 %v327
        %v935 = vunpack.c.h.b16 %v327
        %v936 = vunpack.c.l.b16 %v328
        %v937 = vunpack.c.h.b16 %v328
        %v938 = vunpack.c.l.b16 %v329
        %v939 = vunpack.c.h.b16 %v329
        %v940 = vunpack.c.l.b16 %v330
        %v941 = vunpack.c.h.b16 %v330
        %v942 = vunpack.c.l.b16 %v331
        %v943 = vunpack.c.h.b16 %v331
        %v944 = vunpack.c.l.b16 %v332
        %v945 = vunpack.c.h.b16 %v332
        %v946 = vunpack.c.l.b16 %v333
        %v947 = vunpack.c.h.b16 %v333
        %v948 = vunpack.c.l.b16 %v334
        %v949 = vunpack.c.h.b16 %v334
        %v950 = vunpack.c.l.b16 %v335
        %v951 = vunpack.c.h.b16 %v335
        %v952 = vunpack.c.l.b16 %v336
        %v953 = vunpack.c.h.b16 %v336
        %v954 = vunpack.c.l.b16 %v337
        %v955 = vunpack.c.h.b16 %v337
        %v956 = vunpack.c.l.b16 %v338
        %v957 = vunpack.c.h.b16 %v338
        %v958 = vunpack.c.l.b16 %v339
        %v959 = vunpack.c.h.b16 %v339
        %v960 = vunpack.c.l.b16 %v340
        %v961 = vunpack.c.h.b16 %v340
        %v962 = vunpack.c.l.b16 %v341
        %v963 = vunpack.c.h.b16 %v341
        %v964 = vunpack.c.l.b16 %v342
        %v965 = vunpack.c.h.b16 %v342
        %v966 = vunpack.c.l.b16 %v343
        %v967 = vunpack.c.h.b16 %v343
        %v968 = vunpack.c.l.b16 %v344
        %v969 = vunpack.c.h.b16 %v344
        %v970 = vunpack.c.l.b16 %v345
        %v971 = vunpack.c.h.b16 %v345
        %v972 = vunpack.c.l.b16 %v346
        %v973 = vunpack.c.h.b16 %v346
        %v974 = vunpack.c.l.b16 %v347
        %v975 = vunpack.c.h.b16 %v347
        %v976 = vunpack.c.l.b16 %v348
        %v977 = vunpack.c.h.b16 %v348
        %v978 = vunpack.c.l.b16 %v349
        %v979 = vunpack.c.h.b16 %v349
        %v980 = vunpack.c.l.b16 %v350
        %v981 = vunpack.c.h.b16 %v350
        %v982 = vunpack.c.l.b16 %v351
        %v983 = vunpack.c.h.b16 %v351
        %v984 = vunpack.c.l.b16 %v352
        %v985 = vunpack.c.h.b16 %v352
        %v986 = vunpack.c.l.b16 %v353
        %v987 = vunpack.c.h.b16 %v353
        %v988 = vunpack.c.l.b16 %v354
        %v989 = vunpack.c.h.b16 %v354
        %v990 = vunpack.c.l.b16 %v355
        %v991 = vunpack.c.h.b16 %v355
        %v992 = vunpack.c.l.b16 %v356
        %v993 = vunpack.c.h.b16 %v356
        %v994 = vunpack.c.l.b16 %v357
        %v995 = vunpack.c.h.b16 %v357
        %v996 = vunpack.c.l.b16 %v358
        %v997 = vunpack.c.h.b16 %v358
        %v998 = vunpack.c.l.b16 %v359
        %v999 = vunpack.c.h.b16 %v359
        %v1000 = vunpack.c.l.b16 %v360
        %v1001 = vunpack.c.h.b16 %v360
        %v1002 = vunpack.c.l.b16 %v361
        %v1003 = vunpack.c.h.b16 %v361
        %v1004 = vunpack.c.l.b16 %v362
        %v1005 = vunpack.c.h.b16 %v362
        %v1006 = vunpack.c.l.b16 %v363
        %v1007 = vunpack.c.h.b16 %v363
        %v1008 = vunpack.c.l.b16 %v364
        %v1009 = vunpack.c.h.b16 %v364
        %v1010 = vunpack.c.l.b16 %v365
        %v1011 = vunpack.c.h.b16 %v365
        %v1012 = vunpack.c.l.b16 %v366
        %v1013 = vunpack.c.h.b16 %v366
        %v1014 = vunpack.c.l.b16 %v367
        %v1015 = vunpack.c.h.b16 %v367
        %v1016 = vunpack.c.l.b16 %v368
        %v1017 = vunpack.c.h.b16 %v368
        %v1018 = vunpack.c.l.b16 %v369
        %v1019 = vunpack.c.h.b16 %v369
        %v1020 = vunpack.c.l.b16 %v370
        %v1021 = vunpack.c.h.b16 %v370
        %v1022 = vunpack.c.l.b16 %v371
        %v1023 = vunpack.c.h.b16 %v371
        %v1024 = vunpack.c.l.b16 %v372
        %v1025 = vunpack.c.h.b16 %v372
        %v1026 = vunpack.c.l.b16 %v373
        %v1027 = vunpack.c.h.b16 %v373
        %v1028 = vunpack.c.l.b16 %v374
        %v1029 = vunpack.c.h.b16 %v374
        %v1030 = vunpack.c.l.b16 %v375
        %v1031 = vunpack.c.h.b16 %v375
        %v1032 = vunpack.c.l.b16 %v376
        %v1033 = vunpack.c.h.b16 %v376
        %v1034 = vunpack.c.l.b16 %v377
        %v1035 = vunpack.c.h.b16 %v377
        %v1036 = vunpack.c.l.b16 %v378
        %v1037 = vunpack.c.h.b16 %v378
        %v1038 = vunpack.c.l.b16 %v379
        %v1039 = vunpack.c.h.b16 %v379
        %v1040 = vunpack.c.l.b16 %v380
        %v1041 = vunpack.c.h.b16 %v380
        %v1042 = vunpack.c.l.b16 %v381
        %v1043 = vunpack.c.h.b16 %v381
        %v1044 = vunpack.c.l.b16 %v382
        %v1045 = vunpack.c.h.b16 %v382
        %v1046 = vunpack.c.l.b16 %v383
        %v1047 = vunpack.c.h.b16 %v383
        %v1048 = vunpack.c.l.b16 %v384
        %v1049 = vunpack.c.h.b16 %v384
        %v1050 = vunpack.c.l.b16 %v385
        %v1051 = vunpack.c.h.b16 %v385
        %v1052 = vunpack.c.l.b16 %v386
        %v1053 = vunpack.c.h.b16 %v386
        %v1054 = vunpack.c.l.b16 %v387
        %v1055 = vunpack.c.h.b16 %v387
        %v1056 = vunpack.c.l.b16 %v388
        %v1057 = vunpack.c.h.b16 %v388
        %v1058 = vunpack.c.l.b16 %v389
        %v1059 = vunpack.c.h.b16 %v389
        %v1060 = vunpack.c.l.b16 %v390
        %v1061 = vunpack.c.h.b16 %v390
        %v1062 = vunpack.c.l.b16 %v391
        %v1063 = vunpack.c.h.b16 %v391
        %v1064 = vunpack.c.l.b16 %v392
        %v1065 = vunpack.c.h.b16 %v392
        %v1066 = vunpack.c.l.b16 %v393
        %v1067 = vunpack.c.h.b16 %v393
        %v1068 = vunpack.c.l.b16 %v394
        %v1069 = vunpack.c.h.b16 %v394
        %v1070 = vunpack.c.l.b16 %v395
        %v1071 = vunpack.c.h.b16 %v395
        %v1072 = vunpack.c.l.b16 %v396
        %v1073 = vunpack.c.h.b16 %v396
        %v1074 = vunpack.c.l.b16 %v397
        %v1075 = vunpack.c.h.b16 %v397
        %v1076 = vunpack.c.l.b16 %v398
        %v1077 = vunpack.c.h.b16 %v398
        %v1078 = vunpack.c.l.b16 %v399
        %v1079 = vunpack.c.h.b16 %v399
        %v1080 = vunpack.c.l.b16 %v400
        %v1081 = vunpack.c.h.b16 %v400
        %v1082 = vunpack.c.l.b16 %v401
        %v1083 = vunpack.c.h.b16 %v401
        %v1084 = vunpack.c.l.b16 %v402
        %v1085 = vunpack.c.h.b16 %v402
        %v1086 = vunpack.c.l.b16 %v403
        %v1087 = vunpack.c.h.b16 %v403
        %v1088 = vunpack.c.l.b16 %v404
        %v1089 = vunpack.c.h.b16 %v404
        %v1090 = vunpack.c.l.b16 %v405
        %v1091 = vunpack.c.h.b16 %v405
        %v1092 = vunpack.c.l.b16 %v406
        %v1093 = vunpack.c.h.b16 %v406
        %v1094 = vunpack.c.l.b16 %v407
        %v1095 = vunpack.c.h.b16 %v407
        %v1096 = vunpack.c.l.b16 %v408
        %v1097 = vunpack.c.h.b16 %v408
        %v1098 = vunpack.c.l.b16 %v409
        %v1099 = vunpack.c.h.b16 %v409
        %v1100 = vunpack.c.l.b16 %v410
        %v1101 = vunpack.c.h.b16 %v410
        %v1102 = vunpack.c.l.b16 %v411
        %v1103 = vunpack.c.h.b16 %v411
        %v1104 = vunpack.c.l.b16 %v412
        %v1105 = vunpack.c.h.b16 %v412
        %v1106 = vunpack.c.l.b16 %v413
        %v1107 = vunpack.c.h.b16 %v413
        %v1108 = vunpack.c.l.b16 %v414
        %v1109 = vunpack.c.h.b16 %v414
        %v1110 = vunpack.c.l.b16 %v415
        %v1111 = vunpack.c.h.b16 %v415
        %v1112 = vunpack.c.l.b16 %v416
        %v1113 = vunpack.c.h.b16 %v416
        %v1114 = vunpack.c.l.b16 %v417
        %v1115 = vunpack.c.h.b16 %v417
        %v1116 = vunpack.c.l.b16 %v418
        %v1117 = vunpack.c.h.b16 %v418
        %v1118 = vunpack.c.l.b16 %v419
        %v1119 = vunpack.c.h.b16 %v419
        %v1120 = vunpack.c.l.b16 %v420
        %v1121 = vunpack.c.h.b16 %v420
        %v1122 = vunpack.c.l.b16 %v421
        %v1123 = vunpack.c.h.b16 %v421
        %v1124 = vunpack.c.l.b16 %v422
        %v1125 = vunpack.c.h.b16 %v422
        %v1126 = vunpack.c.l.b16 %v423
        %v1127 = vunpack.c.h.b16 %v423
        %v1128 = vunpack.c.l.b16 %v424
        %v1129 = vunpack.c.h.b16 %v424
        %v1130 = vunpack.c.l.b16 %v425
        %v1131 = vunpack.c.h.b16 %v425
        %v1132 = vunpack.c.l.b16 %v426
        %v1133 = vunpack.c.h.b16 %v426
        %v1134 = vunpack.c.l.b16 %v427
        %v1135 = vunpack.c.h.b16 %v427
        %v1136 = vunpack.c.l.b16 %v428
        %v1137 = vunpack.c.h.b16 %v428
        %v1138 = vunpack.c.l.b16 %v429
        %v1139 = vunpack.c.h.b16 %v429
        %v1140 = vunpack.c.l.b16 %v430
        %v1141 = vunpack.c.h.b16 %v430
        %v1142 = vunpack.c.l.b16 %v431
        %v1143 = vunpack.c.h.b16 %v431
        %v1144 = vunpack.c.l.b16 %v432
        %v1145 = vunpack.c.h.b16 %v432
        %v1146 = vunpack.c.l.b16 %v433
        %v1147 = vunpack.c.h.b16 %v433
        %v1148 = vunpack.c.l.b16 %v434
        %v1149 = vunpack.c.h.b16 %v434
        %v1150 = vunpack.c.l.b16 %v435
        %v1151 = vunpack.c.h.b16 %v435
        %v1152 = vunpack.c.l.b16 %v436
        %v1153 = vunpack.c.h.b16 %v436
        %v1154 = vunpack.c.l.b16 %v437
        %v1155 = vunpack.c.h.b16 %v437
        %v1156 = vunpack.c.l.b16 %v438
        %v1157 = vunpack.c.h.b16 %v438
        %v1158 = vunpack.c.l.b16 %v439
        %v1159 = vunpack.c.h.b16 %v439
        %v1160 = vunpack.c.l.b16 %v440
        %v1161 = vunpack.c.h.b16 %v440
        %v1162 = vunpack.c.l.b16 %v441
        %v1163 = vunpack.c.h.b16 %v441
        %v1164 = vunpack.c.l.b16 %v442
        %v1165 = vunpack.c.h.b16 %v442
        %v1166 = vunpack.c.l.b16 %v443
        %v1167 = vunpack.c.h.b16 %v443
        %v1168 = vunpack.c.l.b16 %v444
        %v1169 = vunpack.c.h.b16 %v444
        %v1170 = vunpack.c.l.b16 %v445
        %v1171 = vunpack.c.h.b16 %v445
        %v1172 = vunpack.c.l.b16 %v446
        %v1173 = vunpack.c.h.b16 %v446
        %v1174 = vunpack.c.l.b16 %v447
        %v1175 = vunpack.c.h.b16 %v447
        %v1176 = vunpack.c.l.b16 %v448
        %v1177 = vunpack.c.h.b16 %v448
        %v1178 = vunpack.c.l.b16 %v449
        %v1179 = vunpack.c.h.b16 %v449
        %v1180 = vunpack.c.l.b16 %v450
        %v1181 = vunpack.c.h.b16 %v450
        %v1182 = vunpack.c.l.b16 %v451
        %v1183 = vunpack.c.h.b16 %v451
        %v1184 = vunpack.c.l.b16 %v452
        %v1185 = vunpack.c.h.b16 %v452
        %v1186 = vunpack.c.l.b16 %v453
        %v1187 = vunpack.c.h.b16 %v453
        %v1188 = vunpack.c.l.b16 %v454
        %v1189 = vunpack.c.h.b16 %v454
        %v1190 = vunpack.c.l.b16 %v455
        %v1191 = vunpack.c.h.b16 %v455
        %v1192 = vunpack.c.l.b16 %v456
        %v1193 = vunpack.c.h.b16 %v456
        %v1194 = vunpack.c.l.b16 %v457
        %v1195 = vunpack.c.h.b16 %v457
        %v1196 = vunpack.c.l.b16 %v458
        %v1197 = vunpack.c.h.b16 %v458
        %v1198 = vunpack.c.l.b16 %v459
        %v1199 = vunpack.c.h.b16 %v459
        %v1200 = vunpack.c.l.b16 %v460
        %v1201 = vunpack.c.h.b16 %v460
        %v1202 = vunpack.c.l.b16 %v461
        %v1203 = vunpack.c.h.b16 %v461
        %v1204 = vunpack.c.l.b16 %v462
        %v1205 = vunpack.c.h.b16 %v462
        %v1206 = vunpack.c.l.b16 %v463
        %v1207 = vunpack.c.h.b16 %v463
        %v1208 = vunpack.c.l.b16 %v464
        %v1209 = vunpack.c.h.b16 %v464
        %v1210 = vunpack.c.l.b16 %v465
        %v1211 = vunpack.c.h.b16 %v465
        %v1212 = vunpack.c.l.b16 %v466
        %v1213 = vunpack.c.h.b16 %v466
        %v1214 = vunpack.c.l.b16 %v467
        %v1215 = vunpack.c.h.b16 %v467
        %v1216 = vunpack.c.l.b16 %v468
        %v1217 = vunpack.c.h.b16 %v468
        %v1218 = vunpack.c.l.b16 %v469
        %v1219 = vunpack.c.h.b16 %v469
        %v1220 = vunpack.c.l.b16 %v470
        %v1221 = vunpack.c.h.b16 %v470
        %v1222 = vunpack.c.l.b16 %v471
        %v1223 = vunpack.c.h.b16 %v471
        %v1224 = vunpack.c.l.b16 %v472
        %v1225 = vunpack.c.h.b16 %v472
        %v1226 = vunpack.c.l.b16 %v473
        %v1227 = vunpack.c.h.b16 %v473
        %v1228 = vunpack.c.l.b16 %v474
        %v1229 = vunpack.c.h.b16 %v474
        %v1230 = vunpack.c.l.b16 %v475
        %v1231 = vunpack.c.h.b16 %v475
        %v1232 = vunpack.c.l.b16 %v476
        %v1233 = vunpack.c.h.b16 %v476
        %v1234 = vunpack.c.l.b16 %v477
        %v1235 = vunpack.c.h.b16 %v477
        %v1236 = vunpack.c.l.b16 %v478
        %v1237 = vunpack.c.h.b16 %v478
        %v1238 = vunpack.c.l.b16 %v479
        %v1239 = vunpack.c.h.b16 %v479
        %v1240 = vunpack.c.l.b16 %v480
        %v1241 = vunpack.c.h.b16 %v480
        %v1242 = vunpack.c.l.b16 %v481
        %v1243 = vunpack.c.h.b16 %v481
        %v1244 = vunpack.c.l.b16 %v482
        %v1245 = vunpack.c.h.b16 %v482
        %v1246 = vunpack.c.l.b16 %v483
        %v1247 = vunpack.c.h.b16 %v483
        %v1248 = vunpack.c.l.b16 %v484
        %v1249 = vunpack.c.h.b16 %v484
        %v1250 = vunpack.c.l.b16 %v485
        %v1251 = vunpack.c.h.b16 %v485
        %v1252 = vunpack.c.l.b16 %v486
        %v1253 = vunpack.c.h.b16 %v486
        %v1254 = vunpack.c.l.b16 %v487
        %v1255 = vunpack.c.h.b16 %v487
        %v1256 = vunpack.c.l.b16 %v488
        %v1257 = vunpack.c.h.b16 %v488
        %v1258 = vunpack.c.l.b16 %v489
        %v1259 = vunpack.c.h.b16 %v489
        %v1260 = vunpack.c.l.b16 %v490
        %v1261 = vunpack.c.h.b16 %v490
        %v1262 = vunpack.c.l.b16 %v491
        %v1263 = vunpack.c.h.b16 %v491
        %v1264 = vunpack.c.l.b16 %v492
        %v1265 = vunpack.c.h.b16 %v492
        %v1266 = vunpack.c.l.b16 %v493
        %v1267 = vunpack.c.h.b16 %v493
        %v1268 = vunpack.c.l.b16 %v494
        %v1269 = vunpack.c.h.b16 %v494
        %v1270 = vunpack.c.l.b16 %v495
        %v1271 = vunpack.c.h.b16 %v495
        %v1272 = vunpack.c.l.b16 %v496
        %v1273 = vunpack.c.h.b16 %v496
        %v1274 = vunpack.c.l.b16 %v497
        %v1275 = vunpack.c.h.b16 %v497
        %v1276 = vunpack.c.l.b16 %v498
        %v1277 = vunpack.c.h.b16 %v498
        %v1278 = vunpack.c.l.b16 %v499
        %v1279 = vunpack.c.h.b16 %v499
        %v1280 = vunpack.c.l.b16 %v500
        %v1281 = vunpack.c.h.b16 %v500
        %v1282 = vunpack.c.l.b16 %v501
        %v1283 = vunpack.c.h.b16 %v501
        %v1284 = vunpack.c.l.b16 %v502
        %v1285 = vunpack.c.h.b16 %v502
        %v1286 = vunpack.c.l.b16 %v503
        %v1287 = vunpack.c.h.b16 %v503
        %v1288 = vunpack.c.l.b16 %v504
        %v1289 = vunpack.c.h.b16 %v504
        %v1290 = vunpack.c.l.b16 %v505
        %v1291 = vunpack.c.h.b16 %v505
        %v1292 = vunpack.c.l.b16 %v506
        %v1293 = vunpack.c.h.b16 %v506
        %v1294 = vunpack.c.l.b16 %v507
        %v1295 = vunpack.c.h.b16 %v507
        %v1296 = vunpack.c.l.b16 %v508
        %v1297 = vunpack.c.h.b16 %v508
        %v1298 = vunpack.c.l.b16 %v509
        %v1299 = vunpack.c.h.b16 %v509
        %v1300 = vunpack.c.l.b16 %v510
        %v1301 = vunpack.c.h.b16 %v510
        %v1302 = vunpack.c.l.b16 %v511
        %v1303 = vunpack.c.h.b16 %v511
        %v1304 = vunpack.c.l.b16 %v512
        %v1305 = vunpack.c.h.b16 %v512
        %v1306 = vunpack.c.l.b16 %v513
        %v1307 = vunpack.c.h.b16 %v513
        %v1308 = vunpack.c.l.b16 %v514
        %v1309 = vunpack.c.h.b16 %v514
        %v1310 = vunpack.c.l.b16 %v515
        %v1311 = vunpack.c.h.b16 %v515
        %v1312 = vunpack.c.l.b16 %v516
        %v1313 = vunpack.c.h.b16 %v516
        %v1314 = vunpack.c.l.b16 %v517
        %v1315 = vunpack.c.h.b16 %v517
        %v1316 = vunpack.c.l.b16 %v518
        %v1317 = vunpack.c.h.b16 %v518
        %v1318 = vunpack.c.l.b16 %v519
        %v1319 = vunpack.c.h.b16 %v519
        %v1320 = vunpack.c.l.b16 %v520
        %v1321 = vunpack.c.h.b16 %v520
        %v1322 = vunpack.c.l.b16 %v521
        %v1323 = vunpack.c.h.b16 %v521
        %v1324 = vunpack.c.l.b16 %v522
        %v1325 = vunpack.c.h.b16 %v522
        %v1326 = vunpack.c.l.b16 %v523
        %v1327 = vunpack.c.h.b16 %v523
        %v1328 = vunpack.c.l.b16 %v524
        %v1329 = vunpack.c.h.b16 %v524
        %v1330 = vunpack.c.l.b16 %v525
        %v1331 = vunpack.c.h.b16 %v525
        %v1332 = vunpack.c.l.b16 %v526
        %v1333 = vunpack.c.h.b16 %v526
        %v1334 = vunpack.c.l.b16 %v527
        %v1335 = vunpack.c.h.b16 %v527
        %v1336 = vunpack.c.l.b16 %v528
        %v1337 = vunpack.c.h.b16 %v528
        %v1338 = vunpack.c.l.b16 %v529
        %v1339 = vunpack.c.h.b16 %v529
        %v1340 = vunpack.c.l.b16 %v530
        %v1341 = vunpack.c.h.b16 %v530
        %v1342 = vunpack.c.l.b16 %v531
        %v1343 = vunpack.c.h.b16 %v531
        %v1344 = vunpack.c.l.b16 %v532
        %v1345 = vunpack.c.h.b16 %v532
        %v1346 = vunpack.c.l.b16 %v533
        %v1347 = vunpack.c.h.b16 %v533
        %v1348 = vunpack.c.l.b16 %v534
        %v1349 = vunpack.c.h.b16 %v534
        %v1350 = vunpack.c.l.b16 %v535
        %v1351 = vunpack.c.h.b16 %v535
        %v1352 = vunpack.c.l.b16 %v536
        %v1353 = vunpack.c.h.b16 %v536
        %v1354 = vunpack.c.l.b16 %v537
        %v1355 = vunpack.c.h.b16 %v537
        %v1356 = vunpack.c.l.b16 %v538
        %v1357 = vunpack.c.h.b16 %v538
        %v1358 = vunpack.c.l.b16 %v539
        %v1359 = vunpack.c.h.b16 %v539
        %v1360 = vunpack.c.l.b16 %v540
        %v1361 = vunpack.c.h.b16 %v540
        %v1362 = vunpack.c.l.b16 %v541
        %v1363 = vunpack.c.h.b16 %v541
        %v1364 = vunpack.c.l.b16 %v542
        %v1365 = vunpack.c.h.b16 %v542
        %v1366 = vunpack.c.l.b16 %v543
        %v1367 = vunpack.c.h.b16 %v543
        %v1368 = vunpack.c.l.b16 %v544
        %v1369 = vunpack.c.h.b16 %v544
        %v1370 = vunpack.c.l.b16 %v545
        %v1371 = vunpack.c.h.b16 %v545
        %v1372 = vunpack.c.l.b16 %v546
        %v1373 = vunpack.c.h.b16 %v546
        %v1374 = vunpack.c.l.b16 %v547
        %v1375 = vunpack.c.h.b16 %v547
        %v1376 = vunpack.c.l.b16 %v548
        %v1377 = vunpack.c.h.b16 %v548
        %v1378 = vunpack.c.l.b16 %v549
        %v1379 = vunpack.c.h.b16 %v549
        %v1380 = vunpack.c.l.b16 %v550
        %v1381 = vunpack.c.h.b16 %v550
        %v1382 = vunpack.c.l.b16 %v551
        %v1383 = vunpack.c.h.b16 %v551
        %v1384 = vunpack.c.l.b16 %v552
        %v1385 = vunpack.c.h.b16 %v552
        %v1386 = vunpack.c.l.b16 %v553
        %v1387 = vunpack.c.h.b16 %v553
        %v1388 = vunpack.c.l.b16 %v554
        %v1389 = vunpack.c.h.b16 %v554
        %v1390 = vunpack.c.l.b16 %v555
        %v1391 = vunpack.c.h.b16 %v555
        %v1392 = vpack.c.b16 %v884, %v880
        %v1393 = vpack.c.b16 %v885, %v881
        %v1394 = vpack.c.b16 %v886, %v882
        %v1395 = vpack.c.b16 %v887, %v883
        %v1396 = vpack.c.b16 %v892, %v888
        %v1397 = vpack.c.b16 %v893, %v889
        %v1398 = vpack.c.b16 %v894, %v890
        %v1399 = vpack.c.b16 %v895, %v891
        %v1400 = vpack.c.b16 %v900, %v896
        %v1401 = vpack.c.b16 %v901, %v897
        %v1402 = vpack.c.b16 %v902, %v898
        %v1403 = vpack.c.b16 %v903, %v899
        %v1404 = vpack.c.b16 %v908, %v904
        %v1405 = vpack.c.b16 %v909, %v905
        %v1406 = vpack.c.b16 %v910, %v906
        %v1407 = vpack.c.b16 %v911, %v907
        %v1408 = vpack.c.b16 %v916, %v912
        %v1409 = vpack.c.b16 %v917, %v913
        %v1410 = vpack.c.b16 %v918, %v914
        %v1411 = vpack.c.b16 %v919, %v915
        %v1412 = vpack.c.b16 %v924, %v920
        %v1413 = vpack.c.b16 %v925, %v921
        %v1414 = vpack.c.b16 %v926, %v922
        %v1415 = vpack.c.b16 %v927, %v923
        %v1416 = vpack.c.b16 %v932, %v928
        %v1417 = vpack.c.b16 %v933, %v929
        %v1418 = vpack.c.b16 %v934, %v930
        %v1419 = vpack.c.b16 %v935, %v931
        %v1420 = vpack.c.b16 %v940, %v936
        %v1421 = vpack.c.b16 %v941, %v937
        %v1422 = vpack.c.b16 %v942, %v938
        %v1423 = vpack.c.b16 %v943, %v939
        %v1424 = vpack.c.b16 %v948, %v944
        %v1425 = vpack.c.b16 %v949, %v945
        %v1426 = vpack.c.b16 %v950, %v946
        %v1427 = vpack.c.b16 %v951, %v947
        %v1428 = vpack.c.b16 %v956, %v952
        %v1429 = vpack.c.b16 %v957, %v953
        %v1430 = vpack.c.b16 %v958, %v954
        %v1431 = vpack.c.b16 %v959, %v955
        %v1432 = vpack.c.b16 %v964, %v960
        %v1433 = vpack.c.b16 %v965, %v961
        %v1434 = vpack.c.b16 %v966, %v962
        %v1435 = vpack.c.b16 %v967, %v963
        %v1436 = vpack.c.b16 %v972, %v968
        %v1437 = vpack.c.b16 %v973, %v969
        %v1438 = vpack.c.b16 %v974, %v970
        %v1439 = vpack.c.b16 %v975, %v971
        %v1440 = vpack.c.b16 %v980, %v976
        %v1441 = vpack.c.b16 %v981, %v977
        %v1442 = vpack.c.b16 %v982, %v978
        %v1443 = vpack.c.b16 %v983, %v979
        %v1444 = vpack.c.b16 %v988, %v984
        %v1445 = vpack.c.b16 %v989, %v985
        %v1446 = vpack.c.b16 %v990, %v986
        %v1447 = vpack.c.b16 %v991, %v987
        %v1448 = vpack.c.b16 %v996, %v992
        %v1449 = vpack.c.b16 %v997, %v993
        %v1450 = vpack.c.b16 %v998, %v994
        %v1451 = vpack.c.b16 %v999, %v995
        %v1452 = vpack.c.b16 %v1004, %v1000
        %v1453 = vpack.c.b16 %v1005, %v1001
        %v1454 = vpack.c.b16 %v1006, %v1002
        %v1455 = vpack.c.b16 %v1007, %v1003
        %v1456 = vpack.c.b16 %v1012, %v1008
        %v1457 = vpack.c.b16 %v1013, %v1009
        %v1458 = vpack.c.b16 %v1014, %v1010
        %v1459 = vpack.c.b16 %v1015, %v1011
        %v1460 = vpack.c.b16 %v1020, %v1016
        %v1461 = vpack.c.b16 %v1021, %v1017
        %v1462 = vpack.c.b16 %v1022, %v1018
        %v1463 = vpack.c.b16 %v1023, %v1019
        %v1464 = vpack.c.b16 %v1028, %v1024
        %v1465 = vpack.c.b16 %v1029, %v1025
        %v1466 = vpack.c.b16 %v1030, %v1026
        %v1467 = vpack.c.b16 %v1031, %v1027
        %v1468 = vpack.c.b16 %v1036, %v1032
        %v1469 = vpack.c.b16 %v1037, %v1033
        %v1470 = vpack.c.b16 %v1038, %v1034
        %v1471 = vpack.c.b16 %v1039, %v1035
        %v1472 = vpack.c.b16 %v1044, %v1040
        %v1473 = vpack.c.b16 %v1045, %v1041
        %v1474 = vpack.c.b16 %v1046, %v1042
        %v1475 = vpack.c.b16 %v1047, %v1043
        %v1476 = vpack.c.b16 %v1052, %v1048
        %v1477 = vpack.c.b16 %v1053, %v1049
        %v1478 = vpack.c.b16 %v1054, %v1050
        %v1479 = vpack.c.b16 %v1055, %v1051
        %v1480 = vpack.c.b16 %v1060, %v1056
        %v1481 = vpack.c.b16 %v1061, %v1057
        %v1482 = vpack.c.b16 %v1062, %v1058
        %v1483 = vpack.c.b16 %v1063, %v1059
        %v1484 = vpack.c.b16 %v1068, %v1064
        %v1485 = vpack.c.b16 %v1069, %v1065
        %v1486 = vpack.c.b16 %v1070, %v1066
        %v1487 = vpack.c.b16 %v1071, %v1067
        %v1488 = vpack.c.b16 %v1076, %v1072
        %v1489 = vpack.c.b16 %v1077, %v1073
        %v1490 = vpack.c.b16 %v1078, %v1074
        %v1491 = vpack.c.b16 %v1079, %v1075
        %v1492 = vpack.c.b16 %v1084, %v1080
        %v1493 = vpack.c.b16 %v1085, %v1081
        %v1494 = vpack.c.b16 %v1086, %v1082
        %v1495 = vpack.c.b16 %v1087, %v1083
        %v1496 = vpack.c.b16 %v1092, %v1088
        %v1497 = vpack.c.b16 %v1093, %v1089
        %v1498 = vpack.c.b16 %v1094, %v1090
        %v1499 = vpack.c.b16 %v1095, %v1091
        %v1500 = vpack.c.b16 %v1100, %v1096
        %v1501 = vpack.c.b16 %v1101, %v1097
        %v1502 = vpack.c.b16 %v1102, %v1098
        %v1503 = vpack.c.b16 %v1103, %v1099
        %v1504 = vpack.c.b16 %v1108, %v1104
        %v1505 = vpack.c.b16 %v1109, %v1105
        %v1506 = vpack.c.b16 %v1110, %v1106
        %v1507 = vpack.c.b16 %v1111, %v1107
        %v1508 = vpack.c.b16 %v1116, %v1112
        %v1509 = vpack.c.b16 %v1117, %v1113
        %v1510 = vpack.c.b16 %v1118, %v1114
        %v1511 = vpack.c.b16 %v1119, %v1115
        %v1512 = vpack.c.b16 %v1124, %v1120
        %v1513 = vpack.c.b16 %v1125, %v1121
        %v1514 = vpack.c.b16 %v1126, %v1122
        %v1515 = vpack.c.b16 %v1127, %v1123
        %v1516 = vpack.c.b16 %v1132, %v1128
        %v1517 = vpack.c.b16 %v1133, %v1129
        %v1518 = vpack.c.b16 %v1134, %v1130
        %v1519 = vpack.c.b16 %v1135, %v1131
        %v1520 = vpack.c.b16 %v1140, %v1136
        %v1521 = vpack.c.b16 %v1141, %v1137
        %v1522 = vpack.c.b16 %v1142, %v1138
        %v1523 = vpack.c.b16 %v1143, %v1139
        %v1524 = vpack.c.b16 %v1148, %v1144
        %v1525 = vpack.c.b16 %v1149, %v1145
        %v1526 = vpack.c.b16 %v1150, %v1146
        %v1527 = vpack.c.b16 %v1151, %v1147
        %v1528 = vpack.c.b16 %v1156, %v1152
        %v1529 = vpack.c.b16 %v1157, %v1153
        %v1530 = vpack.c.b16 %v1158, %v1154
        %v1531 = vpack.c.b16 %v1159, %v1155
        %v1532 = vpack.c.b16 %v1164, %v1160
        %v1533 = vpack.c.b16 %v1165, %v1161
        %v1534 = vpack.c.b16 %v1166, %v1162
        %v1535 = vpack.c.b16 %v1167, %v1163
        %v1536 = vpack.c.b16 %v1172, %v1168
        %v1537 = vpack.c.b16 %v1173, %v1169
        %v1538 = vpack.c.b16 %v1174, %v1170
        %v1539 = vpack.c.b16 %v1175, %v1171
        %v1540 = vpack.c.b16 %v1180, %v1176
        %v1541 = vpack.c.b16 %v1181, %v1177
        %v1542 = vpack.c.b16 %v1182, %v1178
        %v1543 = vpack.c.b16 %v1183, %v1179
        %v1544 = vpack.c.b16 %v1188, %v1184
        %v1545 = vpack.c.b16 %v1189, %v1185
        %v1546 = vpack.c.b16 %v1190, %v1186
        %v1547 = vpack.c.b16 %v1191, %v1187
        %v1548 = vpack.c.b16 %v1196, %v1192
        %v1549 = vpack.c.b16 %v1197, %v1193
        %v1550 = vpack.c.b16 %v1198, %v1194
        %v1551 = vpack.c.b16 %v1199, %v1195
        %v1552 = vpack.c.b16 %v1204, %v1200
        %v1553 = vpack.c.b16 %v1205, %v1201
        %v1554 = vpack.c.b16 %v1206, %v1202
        %v1555 = vpack.c.b16 %v1207, %v1203
        %v1556 = vpack.c.b16 %v1212, %v1208
        %v1557 = vpack.c.b16 %v1213, %v1209
        %v1558 = vpack.c.b16 %v1214, %v1210
        %v1559 = vpack.c.b16 %v1215, %v1211
        %v1560 = vpack.c.b16 %v1220, %v1216
        %v1561 = vpack.c.b16 %v1221, %v1217
        %v1562 = vpack.c.b16 %v1222, %v1218
        %v1563 = vpack.c.b16 %v1223, %v1219
        %v1564 = vpack.c.b16 %v1228, %v1224
        %v1565 = vpack.c.b16 %v1229, %v1225
        %v1566 = vpack.c.b16 %v1230, %v1226
        %v1567 = vpack.c.b16 %v1231, %v1227
        %v1568 = vpack.c.b16 %v1236, %v1232
        %v1569 = vpack.c.b16 %v1237, %v1233
        %v1570 = vpack.c.b16 %v1238, %v1234
        %v1571 = vpack.c.b16 %v1239, %v1235
        %v1572 = vpack.c.b16 %v1244, %v1240
        %v1573 = vpack.c.b16 %v1245, %v1241
        %v1574 = vpack.c.b16 %v1246, %v1242
        %v1575 = vpack.c.b16 %v1247, %v1243
        %v1576 = vpack.c.b16 %v1252, %v1248
        %v1577 = vpack.c.b16 %v1253, %v1249
        %v1578 = vpack.c.b16 %v1254, %v1250
        %v1579 = vpack.c.b16 %v1255, %v1251
        %v1580 = vpack.c.b16 %v1260, %v1256
        %v1581 = vpack.c.b16 %v1261, %v1257
        %v1582 = vpack.c.b16 %v1262, %v1258
        %v1583 = vpack.c.b16 %v1263, %v1259
        %v1584 = vpack.c.b16 %v1268, %v1264
        %v1585 = vpack.c.b16 %v1269, %v1265
        %v1586 = vpack.c.b16 %v1270, %v1266
        %v1587 = vpack.c.b16 %v1271, %v1267
        %v1588 = vpack.c.b16 %v1276, %v1272
        %v1589 = vpack.c.b16 %v1277, %v1273
        %v1590 = vpack.c.b16 %v1278, %v1274
        %v1591 = vpack.c.b16 %v1279, %v1275
        %v1592 = vpack.c.b16 %v1284, %v1280
        %v1593 = vpack.c.b16 %v1285, %v1281
        %v1594 = vpack.c.b16 %v1286, %v1282
        %v1595 = vpack.c.b16 %v1287, %v1283
        %v1596 = vpack.c.b16 %v1292, %v1288
        %v1597 = vpack.c.b16 %v1293, %v1289
        %v1598 = vpack.c.b16 %v1294, %v1290
        %v1599 = vpack.c.b16 %v1295, %v1291
        %v1600 = vpack.c.b16 %v1300, %v1296
        %v1601 = vpack.c.b16 %v1301, %v1297
        %v1602 = vpack.c.b16 %v1302, %v1298
        %v1603 = vpack.c.b16 %v1303, %v1299
        %v1604 = vpack.c.b16 %v1308, %v1304
        %v1605 = vpack.c.b16 %v1309, %v1305
        %v1606 = vpack.c.b16 %v1310, %v1306
        %v1607 = vpack.c.b16 %v1311, %v1307
        %v1608 = vpack.c.b16 %v1316, %v1312
        %v1609 = vpack.c.b16 %v1317, %v1313
        %v1610 = vpack.c.b16 %v1318, %v1314
        %v1611 = vpack.c.b16 %v1319, %v1315
        %v1612 = vpack.c.b16 %v1324, %v1320
        %v1613 = vpack.c.b16 %v1325, %v1321
        %v1614 = vpack.c.b16 %v1326, %v1322
        %v1615 = vpack.c.b16 %v1327, %v1323
        %v1616 = vpack.c.b16 %v1332, %v1328
        %v1617 = vpack.c.b16 %v1333, %v1329
        %v1618 = vpack.c.b16 %v1334, %v1330
        %v1619 = vpack.c.b16 %v1335, %v1331
        %v1620 = vpack.c.b16 %v1340, %v1336
        %v1621 = vpack.c.b16 %v1341, %v1337
        %v1622 = vpack.c.b16 %v1342, %v1338
        %v1623 = vpack.c.b16 %v1343, %v1339
        %v1624 = vpack.c.b16 %v1348, %v1344
        %v1625 = vpack.c.b16 %v1349, %v1345
        %v1626 = vpack.c.b16 %v1350, %v1346
        %v1627 = vpack.c.b16 %v1351, %v1347
        %v1628 = vpack.c.b16 %v1356, %v1352
        %v1629 = vpack.c.b16 %v1357, %v1353
        %v1630 = vpack.c.b16 %v1358, %v1354
        %v1631 = vpack.c.b16 %v1359, %v1355
        %v1632 = vpack.c.b16 %v1364, %v1360
        %v1633 = vpack.c.b16 %v1365, %v1361
        %v1634 = vpack.c.b16 %v1366, %v1362
        %v1635 = vpack.c.b16 %v1367, %v1363
        %v1636 = vpack.c.b16 %v1372, %v1368
        %v1637 = vpack.c.b16 %v1373, %v1369
        %v1638 = vpack.c.b16 %v1374, %v1370
        %v1639 = vpack.c.b16 %v1375, %v1371
        %v1640 = vpack.c.b16 %v1380, %v1376
        %v1641 = vpack.c.b16 %v1381, %v1377
        %v1642 = vpack.c.b16 %v1382, %v1378
        %v1643 = vpack.c.b16 %v1383, %v1379
        %v1644 = vpack.c.b16 %v1388, %v1384
        %v1645 = vpack.c.b16 %v1389, %v1385
        %v1646 = vpack.c.b16 %v1390, %v1386
        %v1647 = vpack.c.b16 %v1391, %v1387
        %1904 = vmatpush.bf16.msra.mxu0 %v1420
        %1905 = vmatpush.bf16.msra.mxu0 %v1416
        %1906 = vmatpush.bf16.msra.mxu0 %v1412
        %1907 = vmatpush.bf16.msra.mxu0 %v1408
        %1908 = vmatpush.bf16.msra.mxu0 %v1404
        %1909 = vmatpush.bf16.msra.mxu0 %v1400
        %1910 = vmatpush.bf16.msra.mxu0 %v1396
        %1911 = vmatpush.bf16.msra.mxu0 %v1392
        %1912 = vmatmul.bf16.gmra.mxu0 %v592
        %v1913 = vpop.f32.mrf.mxu0
        %v1914 = vadd.f32 0.0, %v1913
        %v1915 = vpop.f32.mrf.mxu0
        %v1916 = vadd.f32 0.0, %v1915
        %1917 = vmatmul.bf16.gmra.mxu0 %v600
        %v1918 = vpop.f32.mrf.mxu0
        %v1919 = vadd.f32 0.0, %v1918
        %v1920 = vpop.f32.mrf.mxu0
        %1921 = vdwg.mxu0
        %1922 = vmatpush.bf16.msra.mxu0 %v1452
        %1923 = vmatpush.bf16.msra.mxu0 %v1448
        %1924 = vmatpush.bf16.msra.mxu0 %v1444
        %1925 = vmatpush.bf16.msra.mxu0 %v1440
        %1926 = vmatpush.bf16.msra.mxu0 %v1436
        %1927 = vmatpush.bf16.msra.mxu0 %v1432
        %1928 = vmatpush.bf16.msra.mxu0 %v1428
        %1929 = vmatpush.bf16.msra.mxu0 %v1424
        %1930 = vmatmul.bf16.gmra.mxu0 %v593
        %v1931 = vpop.f32.mrf.mxu0
        %v1932 = vadd.f32 %v1914, %v1931
        %v1933 = vpop.f32.mrf.mxu0
        %v1934 = vadd.f32 %v1916, %v1933
        %1935 = vmatmul.bf16.gmra.mxu0 %v601
        %v1936 = vpop.f32.mrf.mxu0
        %v1937 = vadd.f32 %v1919, %v1936
        %v1938 = vpop.f32.mrf.mxu0
        %1939 = vdwg.mxu0
        %1940 = vmatpush.bf16.msra.mxu0 %v1484
        %1941 = vmatpush.bf16.msra.mxu0 %v1480
        %1942 = vmatpush.bf16.msra.mxu0 %v1476
        %1943 = vmatpush.bf16.msra.mxu0 %v1472
        %1944 = vmatpush.bf16.msra.mxu0 %v1468
        %1945 = vmatpush.bf16.msra.mxu0 %v1464
        %1946 = vmatpush.bf16.msra.mxu0 %v1460
        %1947 = vmatpush.bf16.msra.mxu0 %v1456
        %1948 = vmatmul.bf16.gmra.mxu0 %v594
        %v1949 = vpop.f32.mrf.mxu0
        %v1950 = vadd.f32 %v1932, %v1949
        %v1951 = vpop.f32.mrf.mxu0
        %v1952 = vadd.f32 %v1934, %v1951
        %1953 = vmatmul.bf16.gmra.mxu0 %v602
        %v1954 = vpop.f32.mrf.mxu0
        %v1955 = vadd.f32 %v1937, %v1954
        %v1956 = vpop.f32.mrf.mxu0
        %1957 = vdwg.mxu0
        %1958 = vmatpush.bf16.msra.mxu0 %v1516
        %1959 = vmatpush.bf16.msra.mxu0 %v1512
        %1960 = vmatpush.bf16.msra.mxu0 %v1508
        %1961 = vmatpush.bf16.msra.mxu0 %v1504
        %1962 = vmatpush.bf16.msra.mxu0 %v1500
        %1963 = vmatpush.bf16.msra.mxu0 %v1496
        %1964 = vmatpush.bf16.msra.mxu0 %v1492
        %1965 = vmatpush.bf16.msra.mxu0 %v1488
        %1966 = vmatmul.bf16.gmra.mxu0 %v595
        %v1967 = vpop.f32.mrf.mxu0
        %v1968 = vadd.f32 %v1950, %v1967
        %v1969 = vpop.f32.mrf.mxu0
        %v1970 = vadd.f32 %v1952, %v1969
        %1971 = vmatmul.bf16.gmra.mxu0 %v603
        %v1972 = vpop.f32.mrf.mxu0
        %v1973 = vadd.f32 %v1955, %v1972
        %v1974 = vpop.f32.mrf.mxu0
        %1975 = vdwg.mxu0
        %1976 = vmatpush.bf16.msra.mxu0 %v1548
        %1977 = vmatpush.bf16.msra.mxu0 %v1544
        %1978 = vmatpush.bf16.msra.mxu0 %v1540
        %1979 = vmatpush.bf16.msra.mxu0 %v1536
        %1980 = vmatpush.bf16.msra.mxu0 %v1532
        %1981 = vmatpush.bf16.msra.mxu0 %v1528
        %1982 = vmatpush.bf16.msra.mxu0 %v1524
        %1983 = vmatpush.bf16.msra.mxu0 %v1520
        %1984 = vmatmul.bf16.gmra.mxu0 %v596
        %v1985 = vpop.f32.mrf.mxu0
        %v1986 = vadd.f32 %v1968, %v1985
        %v1987 = vpop.f32.mrf.mxu0
        %v1988 = vadd.f32 %v1970, %v1987
        %1989 = vmatmul.bf16.gmra.mxu0 %v604
        %v1990 = vpop.f32.mrf.mxu0
        %v1991 = vadd.f32 %v1973, %v1990
        %v1992 = vpop.f32.mrf.mxu0
        %1993 = vdwg.mxu0
        %1994 = vmatpush.bf16.msra.mxu0 %v1580
        %1995 = vmatpush.bf16.msra.mxu0 %v1576
        %1996 = vmatpush.bf16.msra.mxu0 %v1572
        %1997 = vmatpush.bf16.msra.mxu0 %v1568
        %1998 = vmatpush.bf16.msra.mxu0 %v1564
        %1999 = vmatpush.bf16.msra.mxu0 %v1560
        %2000 = vmatpush.bf16.msra.mxu0 %v1556
        %2001 = vmatpush.bf16.msra.mxu0 %v1552
        %2002 = vmatmul.bf16.gmra.mxu0 %v597
        %v2003 = vpop.f32.mrf.mxu0
        %v2004 = vadd.f32 %v1986, %v2003
        %v2005 = vpop.f32.mrf.mxu0
        %v2006 = vadd.f32 %v1988, %v2005
        %2007 = vmatmul.bf16.gmra.mxu0 %v605
        %v2008 = vpop.f32.mrf.mxu0
        %v2009 = vadd.f32 %v1991, %v2008
        %v2010 = vpop.f32.mrf.mxu0
        %2011 = vdwg.mxu0
        %2012 = vmatpush.bf16.msra.mxu0 %v1612
        %2013 = vmatpush.bf16.msra.mxu0 %v1608
        %2014 = vmatpush.bf16.msra.mxu0 %v1604
        %2015 = vmatpush.bf16.msra.mxu0 %v1600
        %2016 = vmatpush.bf16.msra.mxu0 %v1596
        %2017 = vmatpush.bf16.msra.mxu0 %v1592
        %2018 = vmatpush.bf16.msra.mxu0 %v1588
        %2019 = vmatpush.bf16.msra.mxu0 %v1584
        %2020 = vmatmul.bf16.gmra.mxu0 %v598
        %v2021 = vpop.f32.mrf.mxu0
        %v2022 = vadd.f32 %v2004, %v2021
        %v2023 = vpop.f32.mrf.mxu0
        %v2024 = vadd.f32 %v2006, %v2023
        %2025 = vmatmul.bf16.gmra.mxu0 %v606
        %v2026 = vpop.f32.mrf.mxu0
        %v2027 = vadd.f32 %v2009, %v2026
        %v2028 = vpop.f32.mrf.mxu0
        %2029 = vdwg.mxu0
        %2030 = vmatpush.bf16.msra.mxu0 %v1644
        %2031 = vmatpush.bf16.msra.mxu0 %v1640
        %2032 = vmatpush.bf16.msra.mxu0 %v1636
        %2033 = vmatpush.bf16.msra.mxu0 %v1632
        %2034 = vmatpush.bf16.msra.mxu0 %v1628
        %2035 = vmatpush.bf16.msra.mxu0 %v1624
        %2036 = vmatpush.bf16.msra.mxu0 %v1620
        %2037 = vmatpush.bf16.msra.mxu0 %v1616
        %2038 = vmatmul.bf16.gmra.mxu0 %v599
        %v2039 = vpop.f32.mrf.mxu0
        %v2040 = vadd.f32 %v2022, %v2039
        %v2041 = vpop.f32.mrf.mxu0
        %v2042 = vadd.f32 %v2024, %v2041
        %2043 = vmatmul.bf16.gmra.mxu0 %v607
        %v2044 = vpop.f32.mrf.mxu0
        %v2045 = vadd.f32 %v2027, %v2044
        %v2046 = vpop.f32.mrf.mxu0
        %2047 = vdwg.mxu0
        %2048 = vmatpush.bf16.msra.mxu0 %v1421
        %2049 = vmatpush.bf16.msra.mxu0 %v1417
        %2050 = vmatpush.bf16.msra.mxu0 %v1413
        %2051 = vmatpush.bf16.msra.mxu0 %v1409
        %2052 = vmatpush.bf16.msra.mxu0 %v1405
        %2053 = vmatpush.bf16.msra.mxu0 %v1401
        %2054 = vmatpush.bf16.msra.mxu0 %v1397
        %2055 = vmatpush.bf16.msra.mxu0 %v1393
        %2056 = vmatmul.bf16.gmra.mxu0 %v592
        %v2057 = vpop.f32.mrf.mxu0
        %v2058 = vadd.f32 0.0, %v2057
        %v2059 = vpop.f32.mrf.mxu0
        %v2060 = vadd.f32 0.0, %v2059
        %2061 = vmatmul.bf16.gmra.mxu0 %v600
        %v2062 = vpop.f32.mrf.mxu0
        %v2063 = vadd.f32 0.0, %v2062
        %v2064 = vpop.f32.mrf.mxu0
        %2065 = vdwg.mxu0
        %2066 = vmatpush.bf16.msra.mxu0 %v1453
        %2067 = vmatpush.bf16.msra.mxu0 %v1449
        %2068 = vmatpush.bf16.msra.mxu0 %v1445
        %2069 = vmatpush.bf16.msra.mxu0 %v1441
        %2070 = vmatpush.bf16.msra.mxu0 %v1437
        %2071 = vmatpush.bf16.msra.mxu0 %v1433
        %2072 = vmatpush.bf16.msra.mxu0 %v1429
        %2073 = vmatpush.bf16.msra.mxu0 %v1425
        %2074 = vmatmul.bf16.gmra.mxu0 %v593
        %v2075 = vpop.f32.mrf.mxu0
        %v2076 = vadd.f32 %v2058, %v2075
        %v2077 = vpop.f32.mrf.mxu0
        %v2078 = vadd.f32 %v2060, %v2077
        %2079 = vmatmul.bf16.gmra.mxu0 %v601
        %v2080 = vpop.f32.mrf.mxu0
        %v2081 = vadd.f32 %v2063, %v2080
        %v2082 = vpop.f32.mrf.mxu0
        %2083 = vdwg.mxu0
        %2084 = vmatpush.bf16.msra.mxu0 %v1485
        %2085 = vmatpush.bf16.msra.mxu0 %v1481
        %2086 = vmatpush.bf16.msra.mxu0 %v1477
        %2087 = vmatpush.bf16.msra.mxu0 %v1473
        %2088 = vmatpush.bf16.msra.mxu0 %v1469
        %2089 = vmatpush.bf16.msra.mxu0 %v1465
        %2090 = vmatpush.bf16.msra.mxu0 %v1461
        %2091 = vmatpush.bf16.msra.mxu0 %v1457
        %2092 = vmatmul.bf16.gmra.mxu0 %v594
        %v2093 = vpop.f32.mrf.mxu0
        %v2094 = vadd.f32 %v2076, %v2093
        %v2095 = vpop.f32.mrf.mxu0
        %v2096 = vadd.f32 %v2078, %v2095
        %2097 = vmatmul.bf16.gmra.mxu0 %v602
        %v2098 = vpop.f32.mrf.mxu0
        %v2099 = vadd.f32 %v2081, %v2098
        %v2100 = vpop.f32.mrf.mxu0
        %2101 = vdwg.mxu0
        %2102 = vmatpush.bf16.msra.mxu0 %v1517
        %2103 = vmatpush.bf16.msra.mxu0 %v1513
        %2104 = vmatpush.bf16.msra.mxu0 %v1509
        %2105 = vmatpush.bf16.msra.mxu0 %v1505
        %2106 = vmatpush.bf16.msra.mxu0 %v1501
        %2107 = vmatpush.bf16.msra.mxu0 %v1497
        %2108 = vmatpush.bf16.msra.mxu0 %v1493
        %2109 = vmatpush.bf16.msra.mxu0 %v1489
        %2110 = vmatmul.bf16.gmra.mxu0 %v595
        %v2111 = vpop.f32.mrf.mxu0
        %v2112 = vadd.f32 %v2094, %v2111
        %v2113 = vpop.f32.mrf.mxu0
        %v2114 = vadd.f32 %v2096, %v2113
        %2115 = vmatmul.bf16.gmra.mxu0 %v603
        %v2116 = vpop.f32.mrf.mxu0
        %v2117 = vadd.f32 %v2099, %v2116
        %v2118 = vpop.f32.mrf.mxu0
        %2119 = vdwg.mxu0
        %2120 = vmatpush.bf16.msra.mxu0 %v1549
        %2121 = vmatpush.bf16.msra.mxu0 %v1545
        %2122 = vmatpush.bf16.msra.mxu0 %v1541
        %2123 = vmatpush.bf16.msra.mxu0 %v1537
        %2124 = vmatpush.bf16.msra.mxu0 %v1533
        %2125 = vmatpush.bf16.msra.mxu0 %v1529
        %2126 = vmatpush.bf16.msra.mxu0 %v1525
        %2127 = vmatpush.bf16.msra.mxu0 %v1521
        %2128 = vmatmul.bf16.gmra.mxu0 %v596
        %v2129 = vpop.f32.mrf.mxu0
        %v2130 = vadd.f32 %v2112, %v2129
        %v2131 = vpop.f32.mrf.mxu0
        %v2132 = vadd.f32 %v2114, %v2131
        %2133 = vmatmul.bf16.gmra.mxu0 %v604
        %v2134 = vpop.f32.mrf.mxu0
        %v2135 = vadd.f32 %v2117, %v2134
        %v2136 = vpop.f32.mrf.mxu0
        %2137 = vdwg.mxu0
        %2138 = vmatpush.bf16.msra.mxu0 %v1581
        %2139 = vmatpush.bf16.msra.mxu0 %v1577
        %2140 = vmatpush.bf16.msra.mxu0 %v1573
        %2141 = vmatpush.bf16.msra.mxu0 %v1569
        %2142 = vmatpush.bf16.msra.mxu0 %v1565
        %2143 = vmatpush.bf16.msra.mxu0 %v1561
        %2144 = vmatpush.bf16.msra.mxu0 %v1557
        %2145 = vmatpush.bf16.msra.mxu0 %v1553
        %2146 = vmatmul.bf16.gmra.mxu0 %v597
        %v2147 = vpop.f32.mrf.mxu0
        %v2148 = vadd.f32 %v2130, %v2147
        %v2149 = vpop.f32.mrf.mxu0
        %v2150 = vadd.f32 %v2132, %v2149
        %2151 = vmatmul.bf16.gmra.mxu0 %v605
        %v2152 = vpop.f32.mrf.mxu0
        %v2153 = vadd.f32 %v2135, %v2152
        %v2154 = vpop.f32.mrf.mxu0
        %2155 = vdwg.mxu0
        %2156 = vmatpush.bf16.msra.mxu0 %v1613
        %2157 = vmatpush.bf16.msra.mxu0 %v1609
        %2158 = vmatpush.bf16.msra.mxu0 %v1605
        %2159 = vmatpush.bf16.msra.mxu0 %v1601
        %2160 = vmatpush.bf16.msra.mxu0 %v1597
        %2161 = vmatpush.bf16.msra.mxu0 %v1593
        %2162 = vmatpush.bf16.msra.mxu0 %v1589
        %2163 = vmatpush.bf16.msra.mxu0 %v1585
        %2164 = vmatmul.bf16.gmra.mxu0 %v598
        %v2165 = vpop.f32.mrf.mxu0
        %v2166 = vadd.f32 %v2148, %v2165
        %v2167 = vpop.f32.mrf.mxu0
        %v2168 = vadd.f32 %v2150, %v2167
        %2169 = vmatmul.bf16.gmra.mxu0 %v606
        %v2170 = vpop.f32.mrf.mxu0
        %v2171 = vadd.f32 %v2153, %v2170
        %v2172 = vpop.f32.mrf.mxu0
        %2173 = vdwg.mxu0
        %2174 = vmatpush.bf16.msra.mxu0 %v1645
        %2175 = vmatpush.bf16.msra.mxu0 %v1641
        %2176 = vmatpush.bf16.msra.mxu0 %v1637
        %2177 = vmatpush.bf16.msra.mxu0 %v1633
        %2178 = vmatpush.bf16.msra.mxu0 %v1629
        %2179 = vmatpush.bf16.msra.mxu0 %v1625
        %2180 = vmatpush.bf16.msra.mxu0 %v1621
        %2181 = vmatpush.bf16.msra.mxu0 %v1617
        %2182 = vmatmul.bf16.gmra.mxu0 %v599
        %v2183 = vpop.f32.mrf.mxu0
        %v2184 = vadd.f32 %v2166, %v2183
        %v2185 = vpop.f32.mrf.mxu0
        %v2186 = vadd.f32 %v2168, %v2185
        %2187 = vmatmul.bf16.gmra.mxu0 %v607
        %v2188 = vpop.f32.mrf.mxu0
        %v2189 = vadd.f32 %v2171, %v2188
        %v2190 = vpop.f32.mrf.mxu0
        %2191 = vdwg.mxu0
        %2192 = vmatpush.bf16.msra.mxu0 %v1422
        %2193 = vmatpush.bf16.msra.mxu0 %v1418
        %2194 = vmatpush.bf16.msra.mxu0 %v1414
        %2195 = vmatpush.bf16.msra.mxu0 %v1410
        %2196 = vmatpush.bf16.msra.mxu0 %v1406
        %2197 = vmatpush.bf16.msra.mxu0 %v1402
        %2198 = vmatpush.bf16.msra.mxu0 %v1398
        %2199 = vmatpush.bf16.msra.mxu0 %v1394
        %2200 = vmatmul.bf16.gmra.mxu0 %v592
        %v2201 = vpop.f32.mrf.mxu0
        %v2202 = vadd.f32 0.0, %v2201
        %v2203 = vpop.f32.mrf.mxu0
        %v2204 = vadd.f32 0.0, %v2203
        %2205 = vmatmul.bf16.gmra.mxu0 %v600
        %v2206 = vpop.f32.mrf.mxu0
        %v2207 = vadd.f32 0.0, %v2206
        %v2208 = vpop.f32.mrf.mxu0
        %2209 = vdwg.mxu0
        %2210 = vmatpush.bf16.msra.mxu0 %v1454
        %2211 = vmatpush.bf16.msra.mxu0 %v1450
        %2212 = vmatpush.bf16.msra.mxu0 %v1446
        %2213 = vmatpush.bf16.msra.mxu0 %v1442
        %2214 = vmatpush.bf16.msra.mxu0 %v1438
        %2215 = vmatpush.bf16.msra.mxu0 %v1434
        %2216 = vmatpush.bf16.msra.mxu0 %v1430
        %2217 = vmatpush.bf16.msra.mxu0 %v1426
        %2218 = vmatmul.bf16.gmra.mxu0 %v593
        %v2219 = vpop.f32.mrf.mxu0
        %v2220 = vadd.f32 %v2202, %v2219
        %v2221 = vpop.f32.mrf.mxu0
        %v2222 = vadd.f32 %v2204, %v2221
        %2223 = vmatmul.bf16.gmra.mxu0 %v601
        %v2224 = vpop.f32.mrf.mxu0
        %v2225 = vadd.f32 %v2207, %v2224
        %v2226 = vpop.f32.mrf.mxu0
        %2227 = vdwg.mxu0
        %2228 = vmatpush.bf16.msra.mxu0 %v1486
        %2229 = vmatpush.bf16.msra.mxu0 %v1482
        %2230 = vmatpush.bf16.msra.mxu0 %v1478
        %2231 = vmatpush.bf16.msra.mxu0 %v1474
        %2232 = vmatpush.bf16.msra.mxu0 %v1470
        %2233 = vmatpush.bf16.msra.mxu0 %v1466
        %2234 = vmatpush.bf16.msra.mxu0 %v1462
        %2235 = vmatpush.bf16.msra.mxu0 %v1458
        %2236 = vmatmul.bf16.gmra.mxu0 %v594
        %v2237 = vpop.f32.mrf.mxu0
        %v2238 = vadd.f32 %v2220, %v2237
        %v2239 = vpop.f32.mrf.mxu0
        %v2240 = vadd.f32 %v2222, %v2239
        %2241 = vmatmul.bf16.gmra.mxu0 %v602
        %v2242 = vpop.f32.mrf.mxu0
        %v2243 = vadd.f32 %v2225, %v2242
        %v2244 = vpop.f32.mrf.mxu0
        %2245 = vdwg.mxu0
        %2246 = vmatpush.bf16.msra.mxu0 %v1518
        %2247 = vmatpush.bf16.msra.mxu0 %v1514
        %2248 = vmatpush.bf16.msra.mxu0 %v1510
        %2249 = vmatpush.bf16.msra.mxu0 %v1506
        %2250 = vmatpush.bf16.msra.mxu0 %v1502
        %2251 = vmatpush.bf16.msra.mxu0 %v1498
        %2252 = vmatpush.bf16.msra.mxu0 %v1494
        %2253 = vmatpush.bf16.msra.mxu0 %v1490
        %2254 = vmatmul.bf16.gmra.mxu0 %v595
        %v2255 = vpop.f32.mrf.mxu0
        %v2256 = vadd.f32 %v2238, %v2255
        %v2257 = vpop.f32.mrf.mxu0
        %v2258 = vadd.f32 %v2240, %v2257
        %2259 = vmatmul.bf16.gmra.mxu0 %v603
        %v2260 = vpop.f32.mrf.mxu0
        %v2261 = vadd.f32 %v2243, %v2260
        %v2262 = vpop.f32.mrf.mxu0
        %2263 = vdwg.mxu0
        %2264 = vmatpush.bf16.msra.mxu0 %v1550
        %2265 = vmatpush.bf16.msra.mxu0 %v1546
        %2266 = vmatpush.bf16.msra.mxu0 %v1542
        %2267 = vmatpush.bf16.msra.mxu0 %v1538
        %2268 = vmatpush.bf16.msra.mxu0 %v1534
        %2269 = vmatpush.bf16.msra.mxu0 %v1530
        %2270 = vmatpush.bf16.msra.mxu0 %v1526
        %2271 = vmatpush.bf16.msra.mxu0 %v1522
        %2272 = vmatmul.bf16.gmra.mxu0 %v596
        %v2273 = vpop.f32.mrf.mxu0
        %v2274 = vadd.f32 %v2256, %v2273
        %v2275 = vpop.f32.mrf.mxu0
        %v2276 = vadd.f32 %v2258, %v2275
        %2277 = vmatmul.bf16.gmra.mxu0 %v604
        %v2278 = vpop.f32.mrf.mxu0
        %v2279 = vadd.f32 %v2261, %v2278
        %v2280 = vpop.f32.mrf.mxu0
        %2281 = vdwg.mxu0
        %2282 = vmatpush.bf16.msra.mxu0 %v1582
        %2283 = vmatpush.bf16.msra.mxu0 %v1578
        %2284 = vmatpush.bf16.msra.mxu0 %v1574
        %2285 = vmatpush.bf16.msra.mxu0 %v1570
        %2286 = vmatpush.bf16.msra.mxu0 %v1566
        %2287 = vmatpush.bf16.msra.mxu0 %v1562
        %2288 = vmatpush.bf16.msra.mxu0 %v1558
        %2289 = vmatpush.bf16.msra.mxu0 %v1554
        %2290 = vmatmul.bf16.gmra.mxu0 %v597
        %v2291 = vpop.f32.mrf.mxu0
        %v2292 = vadd.f32 %v2274, %v2291
        %v2293 = vpop.f32.mrf.mxu0
        %v2294 = vadd.f32 %v2276, %v2293
        %2295 = vmatmul.bf16.gmra.mxu0 %v605
        %v2296 = vpop.f32.mrf.mxu0
        %v2297 = vadd.f32 %v2279, %v2296
        %v2298 = vpop.f32.mrf.mxu0
        %2299 = vdwg.mxu0
        %2300 = vmatpush.bf16.msra.mxu0 %v1614
        %2301 = vmatpush.bf16.msra.mxu0 %v1610
        %2302 = vmatpush.bf16.msra.mxu0 %v1606
        %2303 = vmatpush.bf16.msra.mxu0 %v1602
        %2304 = vmatpush.bf16.msra.mxu0 %v1598
        %2305 = vmatpush.bf16.msra.mxu0 %v1594
        %2306 = vmatpush.bf16.msra.mxu0 %v1590
        %2307 = vmatpush.bf16.msra.mxu0 %v1586
        %2308 = vmatmul.bf16.gmra.mxu0 %v598
        %v2309 = vpop.f32.mrf.mxu0
        %v2310 = vadd.f32 %v2292, %v2309
        %v2311 = vpop.f32.mrf.mxu0
        %v2312 = vadd.f32 %v2294, %v2311
        %2313 = vmatmul.bf16.gmra.mxu0 %v606
        %v2314 = vpop.f32.mrf.mxu0
        %v2315 = vadd.f32 %v2297, %v2314
        %v2316 = vpop.f32.mrf.mxu0
        %2317 = vdwg.mxu0
        %2318 = vmatpush.bf16.msra.mxu0 %v1646
        %2319 = vmatpush.bf16.msra.mxu0 %v1642
        %2320 = vmatpush.bf16.msra.mxu0 %v1638
        %2321 = vmatpush.bf16.msra.mxu0 %v1634
        %2322 = vmatpush.bf16.msra.mxu0 %v1630
        %2323 = vmatpush.bf16.msra.mxu0 %v1626
        %2324 = vmatpush.bf16.msra.mxu0 %v1622
        %2325 = vmatpush.bf16.msra.mxu0 %v1618
        %2326 = vmatmul.bf16.gmra.mxu0 %v599
        %v2327 = vpop.f32.mrf.mxu0
        %v2328 = vadd.f32 %v2310, %v2327
        %v2329 = vpop.f32.mrf.mxu0
        %v2330 = vadd.f32 %v2312, %v2329
        %2331 = vmatmul.bf16.gmra.mxu0 %v607
        %v2332 = vpop.f32.mrf.mxu0
        %v2333 = vadd.f32 %v2315, %v2332
        %v2334 = vpop.f32.mrf.mxu0
        %2335 = vdwg.mxu0
        %2336 = vmatpush.bf16.msra.mxu0 %v1423
        %2337 = vmatpush.bf16.msra.mxu0 %v1419
        %2338 = vmatpush.bf16.msra.mxu0 %v1415
        %2339 = vmatpush.bf16.msra.mxu0 %v1411
        %2340 = vmatpush.bf16.msra.mxu0 %v1407
        %2341 = vmatpush.bf16.msra.mxu0 %v1403
        %2342 = vmatpush.bf16.msra.mxu0 %v1399
        %2343 = vmatpush.bf16.msra.mxu0 %v1395
        %2344 = vmatmul.bf16.gmra.mxu0 %v592
        %v2345 = vpop.f32.mrf.mxu0
        %v2346 = vadd.f32 0.0, %v2345
        %v2347 = vpop.f32.mrf.mxu0
        %v2348 = vadd.f32 0.0, %v2347
        %2349 = vmatmul.bf16.gmra.mxu0 %v600
        %v2350 = vpop.f32.mrf.mxu0
        %v2351 = vadd.f32 0.0, %v2350
        %v2352 = vpop.f32.mrf.mxu0
        %2353 = vdwg.mxu0
        %2354 = vmatpush.bf16.msra.mxu0 %v1455
        %2355 = vmatpush.bf16.msra.mxu0 %v1451
        %2356 = vmatpush.bf16.msra.mxu0 %v1447
        %2357 = vmatpush.bf16.msra.mxu0 %v1443
        %2358 = vmatpush.bf16.msra.mxu0 %v1439
        %2359 = vmatpush.bf16.msra.mxu0 %v1435
        %2360 = vmatpush.bf16.msra.mxu0 %v1431
        %2361 = vmatpush.bf16.msra.mxu0 %v1427
        %2362 = vmatmul.bf16.gmra.mxu0 %v593
        %v2363 = vpop.f32.mrf.mxu0
        %v2364 = vadd.f32 %v2346, %v2363
        %v2365 = vpop.f32.mrf.mxu0
        %v2366 = vadd.f32 %v2348, %v2365
        %2367 = vmatmul.bf16.gmra.mxu0 %v601
        %v2368 = vpop.f32.mrf.mxu0
        %v2369 = vadd.f32 %v2351, %v2368
        %v2370 = vpop.f32.mrf.mxu0
        %2371 = vdwg.mxu0
        %2372 = vmatpush.bf16.msra.mxu0 %v1487
        %2373 = vmatpush.bf16.msra.mxu0 %v1483
        %2374 = vmatpush.bf16.msra.mxu0 %v1479
        %2375 = vmatpush.bf16.msra.mxu0 %v1475
        %2376 = vmatpush.bf16.msra.mxu0 %v1471
        %2377 = vmatpush.bf16.msra.mxu0 %v1467
        %2378 = vmatpush.bf16.msra.mxu0 %v1463
        %2379 = vmatpush.bf16.msra.mxu0 %v1459
        %2380 = vmatmul.bf16.gmra.mxu0 %v594
        %v2381 = vpop.f32.mrf.mxu0
        %v2382 = vadd.f32 %v2364, %v2381
        %v2383 = vpop.f32.mrf.mxu0
        %v2384 = vadd.f32 %v2366, %v2383
        %2385 = vmatmul.bf16.gmra.mxu0 %v602
        %v2386 = vpop.f32.mrf.mxu0
        %v2387 = vadd.f32 %v2369, %v2386
        %v2388 = vpop.f32.mrf.mxu0
        %2389 = vdwg.mxu0
        %2390 = vmatpush.bf16.msra.mxu0 %v1519
        %2391 = vmatpush.bf16.msra.mxu0 %v1515
        %2392 = vmatpush.bf16.msra.mxu0 %v1511
        %2393 = vmatpush.bf16.msra.mxu0 %v1507
        %2394 = vmatpush.bf16.msra.mxu0 %v1503
        %2395 = vmatpush.bf16.msra.mxu0 %v1499
        %2396 = vmatpush.bf16.msra.mxu0 %v1495
        %2397 = vmatpush.bf16.msra.mxu0 %v1491
        %2398 = vmatmul.bf16.gmra.mxu0 %v595
        %v2399 = vpop.f32.mrf.mxu0
        %v2400 = vadd.f32 %v2382, %v2399
        %v2401 = vpop.f32.mrf.mxu0
        %v2402 = vadd.f32 %v2384, %v2401
        %2403 = vmatmul.bf16.gmra.mxu0 %v603
        %v2404 = vpop.f32.mrf.mxu0
        %v2405 = vadd.f32 %v2387, %v2404
        %v2406 = vpop.f32.mrf.mxu0
        %2407 = vdwg.mxu0
        %2408 = vmatpush.bf16.msra.mxu0 %v1551
        %2409 = vmatpush.bf16.msra.mxu0 %v1547
        %2410 = vmatpush.bf16.msra.mxu0 %v1543
        %2411 = vmatpush.bf16.msra.mxu0 %v1539
        %2412 = vmatpush.bf16.msra.mxu0 %v1535
        %2413 = vmatpush.bf16.msra.mxu0 %v1531
        %2414 = vmatpush.bf16.msra.mxu0 %v1527
        %2415 = vmatpush.bf16.msra.mxu0 %v1523
        %2416 = vmatmul.bf16.gmra.mxu0 %v596
        %v2417 = vpop.f32.mrf.mxu0
        %v2418 = vadd.f32 %v2400, %v2417
        %v2419 = vpop.f32.mrf.mxu0
        %v2420 = vadd.f32 %v2402, %v2419
        %2421 = vmatmul.bf16.gmra.mxu0 %v604
        %v2422 = vpop.f32.mrf.mxu0
        %v2423 = vadd.f32 %v2405, %v2422
        %v2424 = vpop.f32.mrf.mxu0
        %2425 = vdwg.mxu0
        %2426 = vmatpush.bf16.msra.mxu0 %v1583
        %2427 = vmatpush.bf16.msra.mxu0 %v1579
        %2428 = vmatpush.bf16.msra.mxu0 %v1575
        %2429 = vmatpush.bf16.msra.mxu0 %v1571
        %2430 = vmatpush.bf16.msra.mxu0 %v1567
        %2431 = vmatpush.bf16.msra.mxu0 %v1563
        %2432 = vmatpush.bf16.msra.mxu0 %v1559
        %2433 = vmatpush.bf16.msra.mxu0 %v1555
        %2434 = vmatmul.bf16.gmra.mxu0 %v597
        %v2435 = vpop.f32.mrf.mxu0
        %v2436 = vadd.f32 %v2418, %v2435
        %v2437 = vpop.f32.mrf.mxu0
        %v2438 = vadd.f32 %v2420, %v2437
        %2439 = vmatmul.bf16.gmra.mxu0 %v605
        %v2440 = vpop.f32.mrf.mxu0
        %v2441 = vadd.f32 %v2423, %v2440
        %v2442 = vpop.f32.mrf.mxu0
        %2443 = vdwg.mxu0
        %2444 = vmatpush.bf16.msra.mxu0 %v1615
        %2445 = vmatpush.bf16.msra.mxu0 %v1611
        %2446 = vmatpush.bf16.msra.mxu0 %v1607
        %2447 = vmatpush.bf16.msra.mxu0 %v1603
        %2448 = vmatpush.bf16.msra.mxu0 %v1599
        %2449 = vmatpush.bf16.msra.mxu0 %v1595
        %2450 = vmatpush.bf16.msra.mxu0 %v1591
        %2451 = vmatpush.bf16.msra.mxu0 %v1587
        %2452 = vmatmul.bf16.gmra.mxu0 %v598
        %v2453 = vpop.f32.mrf.mxu0
        %v2454 = vadd.f32 %v2436, %v2453
        %v2455 = vpop.f32.mrf.mxu0
        %v2456 = vadd.f32 %v2438, %v2455
        %2457 = vmatmul.bf16.gmra.mxu0 %v606
        %v2458 = vpop.f32.mrf.mxu0
        %v2459 = vadd.f32 %v2441, %v2458
        %v2460 = vpop.f32.mrf.mxu0
        %2461 = vdwg.mxu0
        %2462 = vmatpush.bf16.msra.mxu0 %v1647
        %2463 = vmatpush.bf16.msra.mxu0 %v1643
        %2464 = vmatpush.bf16.msra.mxu0 %v1639
        %2465 = vmatpush.bf16.msra.mxu0 %v1635
        %2466 = vmatpush.bf16.msra.mxu0 %v1631
        %2467 = vmatpush.bf16.msra.mxu0 %v1627
        %2468 = vmatpush.bf16.msra.mxu0 %v1623
        %2469 = vmatpush.bf16.msra.mxu0 %v1619
        %2470 = vmatmul.bf16.gmra.mxu0 %v599
        %v2471 = vpop.f32.mrf.mxu0
        %v2472 = vadd.f32 %v2454, %v2471
        %v2473 = vpop.f32.mrf.mxu0
        %v2474 = vadd.f32 %v2456, %v2473
        %2475 = vmatmul.bf16.gmra.mxu0 %v607
        %v2476 = vpop.f32.mrf.mxu0
        %v2477 = vadd.f32 %v2459, %v2476
        %v2478 = vpop.f32.mrf.mxu0
        %2479 = vdwg.mxu0
        %v2480 = vadd.f32 %v276, %v2040
        %v2481 = vadd.f32 %v277, %v2184
        %v2482 = vadd.f32 %v278, %v2328
        %v2483 = vadd.f32 %v279, %v2472
        %v2484 = vadd.f32 %v280, %v2042
        %v2485 = vadd.f32 %v281, %v2186
        %v2486 = vadd.f32 %v282, %v2330
        %v2487 = vadd.f32 %v283, %v2474
        %v2488 = vadd.f32 %v284, %v2045
        %v2489 = vadd.f32 %v285, %v2189
        %v2490 = vadd.f32 %v286, %v2333
        %v2491 = vadd.f32 %v287, %v2477
        %2492 = vst [vmem:[#allocation2] sm:$0xff] %v2480
        %2493 = vst [vmem:[#allocation2 + $0x8] sm:$0xff] %v2481
        %2494 = vst [vmem:[#allocation2 + $0x10] sm:$0xff] %v2482
        %2495 = vst [vmem:[#allocation2 + $0x18] sm:$0xff] %v2483
        %2496 = vst [vmem:[#allocation2 + $0x20] sm:$0xff] %v2484
        %2497 = vst [vmem:[#allocation2 + $0x28] sm:$0xff] %v2485
        %2498 = vst [vmem:[#allocation2 + $0x30] sm:$0xff] %v2486
        %2499 = vst [vmem:[#allocation2 + $0x38] sm:$0xff] %v2487
        %2500 = vst [vmem:[#allocation2 + $0x40] sm:$0xff] %v2488
        %2501 = vst [vmem:[#allocation2 + $0x48] sm:$0xff] %v2489
        %2502 = vst [vmem:[#allocation2 + $0x50] sm:$0xff] %v2490
        %2503 = vst [vmem:[#allocation2 + $0x58] sm:$0xff] %v2491
        %p2504 = scmp.eq.s32.totalorder %s19, 3
        // Predicated region
        $region60: #{discriminator_forward.14} parent=50 // pred_check
          %p2505 = pneg %p2504
        $region61: #{discriminator_forward.14} parent=50 // pred_check_branch
          %2507 = sbr.rel (%p2505) target = $region63
        $region62: #{discriminator_forward.14} parent=50 // pred_region
          %v2508 = vld [vmem:[#allocation2] sm:$0xff]
          %v2509 = vld [vmem:[#allocation2 + $0x8] sm:$0xff]
          %v2510 = vld [vmem:[#allocation2 + $0x10] sm:$0xff]
          %v2511 = vld [vmem:[#allocation2 + $0x18] sm:$0xff]
          %v2512 = vld [vmem:[#allocation2 + $0x20] sm:$0xff]
          %v2513 = vld [vmem:[#allocation2 + $0x28] sm:$0xff]
          %v2514 = vld [vmem:[#allocation2 + $0x30] sm:$0xff]
          %v2515 = vld [vmem:[#allocation2 + $0x38] sm:$0xff]
          %v2516 = vld [vmem:[#allocation2 + $0x40] sm:$0xff]
          %v2517 = vld [vmem:[#allocation2 + $0x48] sm:$0xff]
          %v2518 = vld [vmem:[#allocation2 + $0x50] sm:$0xff]
          %v2519 = vld [vmem:[#allocation2 + $0x58] sm:$0xff]
          %v2520 = vld [vmem:[%s2] sm:$0xf]
          %v2522 = vperm.slane %v2520, 0
          %v2523 = vperm.slane %v2520, 1
          %v2524 = vperm.slane %v2520, 2
          %v2525 = vperm.slane %v2520, 3
          %v2530 = vadd.f32 %v2508, %v2522
          %v2531 = vadd.f32 %v2509, %v2523
          %v2532 = vadd.f32 %v2510, %v2524
          %v2533 = vadd.f32 %v2511, %v2525
          %v2534 = vadd.f32 %v2512, %v2522
          %v2535 = vadd.f32 %v2513, %v2523
          %v2536 = vadd.f32 %v2514, %v2524
          %v2537 = vadd.f32 %v2515, %v2525
          %v2538 = vadd.f32 %v2516, %v2522
          %v2539 = vadd.f32 %v2517, %v2523
          %v2540 = vadd.f32 %v2518, %v2524
          %v2541 = vadd.f32 %v2519, %v2525
          %2542 = vst [vmem:[%s258] sm:$0xff] %v2530
          %2543 = vst [vmem:[%s258 + $0x8] sm:$0xff] %v2531
          %2544 = vst [vmem:[%s258 + $0x10] sm:$0xff] %v2532
          %2545 = vst [vmem:[%s258 + $0x18] sm:$0xff] %v2533
          %2546 = vst [vmem:[%s258 + $0x20] sm:$0xff] %v2534
          %2547 = vst [vmem:[%s258 + $0x28] sm:$0xff] %v2535
          %2548 = vst [vmem:[%s258 + $0x30] sm:$0xff] %v2536
          %2549 = vst [vmem:[%s258 + $0x38] sm:$0xff] %v2537
          %2550 = vst [vmem:[%s258 + $0x40] sm:$0xff] %v2538
          %2551 = vst [vmem:[%s258 + $0x48] sm:$0xff] %v2539
          %2552 = vst [vmem:[%s258 + $0x50] sm:$0xff] %v2540
          %2553 = vst [vmem:[%s258 + $0x58] sm:$0xff] %v2541
        $region63: #{discriminator_forward.14} parent=50 // pred_fallthru
          _
        %s2554 = smul.u32 3, %s18
        %p2555 = scmp.lt.s32.totalorder %s2554, 2
        %s2556 = scalar_select %p2555, %s2554, 2
        %s2557 = smul.addr %s2556, 4
        %s2558 = smul.addr %s2557, 8
        %s2559 = scalar_lea.vmem %s3, %s2558
        // Predicated region
        $region64: #{discriminator_forward.14} parent=50 // pred_check
          %p2560 = pneg %p119
        $region65: #{discriminator_forward.14} parent=50 // pred_check_branch
          %2562 = sbr.rel (%p2560) target = $region67
        $region66: #{discriminator_forward.14} parent=50 // pred_region
          %s2563 = smul.u32 3, %s18
        $region67: #{discriminator_forward.14} parent=50 // pred_fallthru
          _
        // Predicated region
        $region68: #{discriminator_forward.14} parent=50 // pred_check
          %p2564 = pneg %p119
        $region69: #{discriminator_forward.14} parent=50 // pred_check_branch
          %2566 = sbr.rel (%p2564) target = $region71
        $region70: #{discriminator_forward.14} parent=50 // pred_region
          %s2567 = smul.u32 3, %s18
          %p2568 = scmp.lt.s32.totalorder %s2567, 2
          %s2569 = scalar_select %p2568, %s2567, 2
          %s2570 = smul.addr %s2569, 4
          %s2571 = smul.addr %s2570, 8
          %s2572 = scalar_lea.vmem %s3, %s2571
        $region71: #{discriminator_forward.14} parent=50 // pred_fallthru
          _
      $region51: #{discriminator_forward.14} parent=5 // pred_fallthru
        _
      %p2573 = scmp.le.s32.totalorder 2, %s9
      // Predicated region
      $region72: #{discriminator_forward.14} parent=5 // pred_check
        %p2574 = pneg %p2573
      $region73: #{discriminator_forward.14} parent=5 // pred_check_branch
        %2576 = sbr.rel (%p2574) target = $region75
      $region74: #{discriminator_forward.14} parent=5 // pred_region
        %s2577 = ssub.s32 %s9, 2
      $region75: #{discriminator_forward.14} parent=5 // pred_fallthru
        _
    $region6: #{discriminator_forward.14} parent=1 // loop_footer
      %s13 = sadd.s32 1, %s9
    $region7: #{discriminator_forward.14} parent=1 // loop_footer_branch
      %8 = sbr.rel target = $region3
    $region8: #{discriminator_forward.14} parent=1 // loop_exit
      _

// kernel: discriminator_forward.17
$region0: #{discriminator_forward.17}
  #allocation0 [shape = 'u32[]', space=smem, size = 0x4, offset = 0x4, fixed_abs, tag = 'smem constant byte address 0x4 - core index']
  #allocation1 [shape = 'u32[72,128]{1,0:T(1,128)}', space=vmem, size = 0x9000, scoped, tag = 'internal scratch']
  %s0 = inlined_call_operand.vmem [shape: f32[2,4,128], index: 0, kind: input, shape index: {}]
  %s1 = inlined_call_operand.vmem [shape: f32[2,1,128], index: 1, kind: output, shape index: {}]
  %s2 = sld [smem:[#allocation0]]
  $region37: #{discriminator_forward.17} parent=0
    _
  %s4 = ssub.s32 1, %s2
  %s5 = scalar_select 0, %s4, %s2
  loop: start=0, step=1, limit=4
  $region2: #{discriminator_forward.17} parent=0 // loop_pre_header
    _
  $region3: #{discriminator_forward.17} parent=0 // loop_header
    %s7 = sphi 0, %s11
    %p8 = scmp.ge.s32.totalorder %s7, 4
    %s17 = sphi 0, %s19
    %s20 = sphi 0, %s17
    %s21 = sphi 0, %s20
    %s37 = sphi 0, %s21
    %s43 = sphi 0, %s45
    %s46 = sphi 0, %s43
    %s47 = sphi 0, %s46
    %s63 = sphi 0, %s47
  $region4: #{discriminator_forward.17} parent=0 // loop_header_branch
    %10 = sbr.rel (%p8) target = $region8
  $region5: #{discriminator_forward.17} parent=0 // loop_body
    %s12 = ssub.s32 %s7, 1
    %s13 = ssub.s32 %s7, 2
    %s14 = sadd.s32 %s7, 1
    %s15 = ssub.s32 %s7, %s14
    %p16 = scmp.eq.s32.totalorder %s15, 0
    %s18 = sadd.s32 %s17, 1
    %s19 = scalar_select %p16, %s17, %s18
    %p22 = pneg %p16
    %p23 = scmp.eq.s32.totalorder %s7, 1
    %p24 = por %p22, %p23
    %p25 = scmp.ne.s32.totalorder %s17, %s20
    %p26 = scmp.eq.s32.totalorder %s7, 0
    %p27 = por %p25, %p26
    %p28 = scmp.ne.s32.totalorder %s17, %s20
    %p29 = scmp.eq.s32.totalorder %s12, 1
    %p30 = por %p28, %p29
    %p31 = scmp.ne.s32.totalorder %s20, %s21
    %p32 = scmp.eq.s32.totalorder %s12, 0
    %p33 = por %p31, %p32
    %p34 = scmp.ne.s32.totalorder %s20, %s21
    %p35 = scmp.eq.s32.totalorder %s13, 1
    %p36 = por %p34, %p35
    %p38 = scmp.ne.s32.totalorder %s21, %s37
    %p39 = scmp.eq.s32.totalorder %s13, 0
    %p40 = por %p38, %p39
    %s41 = ssub.s32 %s7, %s14
    %p42 = scmp.eq.s32.totalorder %s41, 0
    %s44 = sadd.s32 %s43, 1
    %s45 = scalar_select %p42, %s43, %s44
    %p48 = pneg %p42
    %p49 = scmp.eq.s32.totalorder %s7, 1
    %p50 = por %p48, %p49
    %p51 = scmp.ne.s32.totalorder %s43, %s46
    %p52 = scmp.eq.s32.totalorder %s7, 0
    %p53 = por %p51, %p52
    %p54 = scmp.ne.s32.totalorder %s43, %s46
    %p55 = scmp.eq.s32.totalorder %s12, 1
    %p56 = por %p54, %p55
    %p57 = scmp.ne.s32.totalorder %s46, %s47
    %p58 = scmp.eq.s32.totalorder %s12, 0
    %p59 = por %p57, %p58
    %p60 = scmp.ne.s32.totalorder %s46, %s47
    %p61 = scmp.eq.s32.totalorder %s13, 1
    %p62 = por %p60, %p61
    %p64 = scmp.ne.s32.totalorder %s47, %s63
    %p65 = scmp.eq.s32.totalorder %s13, 0
    %p66 = por %p64, %p65
    %p67 = scmp.le.s32.totalorder 1, %s7
    %p68 = scmp.lt.s32.totalorder %s7, 3
    %p69 = pnand %p67, %p68
    %p70 = pneg %p69
    // Predicated region
    $region9: #{discriminator_forward.17} parent=5 // pred_check
      _
    $region10: #{discriminator_forward.17} parent=5 // pred_check_branch
      %72 = sbr.rel (%p69) target = $region12
    $region11: #{discriminator_forward.17} parent=5 // pred_region
      %s73 = ssub.s32 %s7, 1
    $region12: #{discriminator_forward.17} parent=5 // pred_fallthru
      _
    %p74 = scmp.lt.s32.totalorder %s7, 2
    // Predicated region
    $region13: #{discriminator_forward.17} parent=5 // pred_check
      %p75 = pneg %p74
    $region14: #{discriminator_forward.17} parent=5 // pred_check_branch
      %77 = sbr.rel (%p75) target = $region16
    $region15: #{discriminator_forward.17} parent=5 // pred_region
      // Predicated region
      $region17: #{discriminator_forward.17} parent=15 // pred_check
        %p78 = pneg %p27
      $region18: #{discriminator_forward.17} parent=15 // pred_check_branch
        %80 = sbr.rel (%p78) target = $region20
      $region19: #{discriminator_forward.17} parent=15 // pred_region
        %p81 = scmp.lt.s32.totalorder %s7, 1
        %s82 = scalar_select %p81, %s7, 1
        %s83 = smul.addr %s82, 4
        %s84 = scalar_lea.vmem %s0, %s83
      $region20: #{discriminator_forward.17} parent=15 // pred_fallthru
        _
    $region16: #{discriminator_forward.17} parent=5 // pred_fallthru
      _
    %p85 = scmp.le.s32.totalorder 1, %s7
    %p86 = scmp.lt.s32.totalorder %s7, 3
    %p87 = pnand %p85, %p86
    %p88 = pneg %p87
    // Predicated region
    $region21: #{discriminator_forward.17} parent=5 // pred_check
      _
    $region22: #{discriminator_forward.17} parent=5 // pred_check_branch
      %90 = sbr.rel (%p87) target = $region24
    $region23: #{discriminator_forward.17} parent=5 // pred_region
      %s91 = ssub.s32 %s7, 1
      %p92 = scmp.lt.s32.totalorder %s12, 1
      %s93 = scalar_select %p92, %s12, 1
      %s94 = smul.addr %s93, 4
      %s95 = scalar_lea.vmem %s0, %s94
      %p96 = pneg %p33
      %p97 = pneg %p30
      %p98 = pneg %p59
      %p99 = pneg %p56
      %p100 = scmp.lt.s32.totalorder %s12, 1
      %s101 = scalar_select %p100, %s12, 1
      %s102 = scalar_lea.vmem %s1, %s101
      %p103 = scmp.lt.s32.totalorder %s12, 1
      %s104 = scalar_select %p103, %s12, 1
      %s105 = smul.addr %s104, 4
      %s106 = scalar_lea.vmem %s0, %s105
      %p107 = scmp.lt.s32.totalorder %s12, 1
      %s108 = scalar_select %p107, %s12, 1
      %s109 = scalar_lea.vmem %s1, %s108
      %v110 = vld [vmem:[%s106] sm:$0xf]
      %vm111 = vcmask 1043456
      %v112 = vsel %vm111, %v110, 0.0
      %v113 = vrot.slane %v112, 4
      %v114 = vadd.f32 %v112, %v113
      %v115 = vrot.slane %v114, 2
      %v116 = vadd.f32 %v114, %v115
      %v117 = vrot.slane %v116, 1
      %v118 = vadd.f32 %v116, %v117
      %v119 = vrcp.pop 4.0
      %v120 = vmul.f32 4.0, %v119
      %v121 = vsub.f32 1.0, %v120
      %v122 = vmul.f32 %v119, %v121
      %v123 = vadd.f32 %v119, %v122
      %vm124 = vweird.f32 %v119
      %v125 = vsel %vm124, %v119, %v123
      %v126 = vmul.f32 %v118, %v125
      %127 = vst [vmem:[%s109] sm:$0x1] %v126
      %p128 = scmp.lt.s32.totalorder %s12, 1
      %s129 = scalar_select %p128, %s12, 1
      %s130 = scalar_lea.vmem %s1, %s129
      // Predicated region
      $region25: #{discriminator_forward.17} parent=23 // pred_check
        %p131 = pneg %p56
      $region26: #{discriminator_forward.17} parent=23 // pred_check_branch
        %133 = sbr.rel (%p131) target = $region28
      $region27: #{discriminator_forward.17} parent=23 // pred_region
        _
      $region28: #{discriminator_forward.17} parent=23 // pred_fallthru
        _
    $region24: #{discriminator_forward.17} parent=5 // pred_fallthru
      _
    %p134 = scmp.le.s32.totalorder 2, %s7
    // Predicated region
    $region29: #{discriminator_forward.17} parent=5 // pred_check
      %p135 = pneg %p134
    $region30: #{discriminator_forward.17} parent=5 // pred_check_branch
      %137 = sbr.rel (%p135) target = $region32
    $region31: #{discriminator_forward.17} parent=5 // pred_region
      %s138 = ssub.s32 %s7, 2
      // Predicated region
      $region33: #{discriminator_forward.17} parent=31 // pred_check
        %p139 = pneg %p62
      $region34: #{discriminator_forward.17} parent=31 // pred_check_branch
        %141 = sbr.rel (%p139) target = $region36
      $region35: #{discriminator_forward.17} parent=31 // pred_region
        %p142 = scmp.lt.s32.totalorder %s13, 1
        %s143 = scalar_select %p142, %s13, 1
        %s144 = scalar_lea.vmem %s1, %s143
      $region36: #{discriminator_forward.17} parent=31 // pred_fallthru
        _
    $region32: #{discriminator_forward.17} parent=5 // pred_fallthru
      _
  $region6: #{discriminator_forward.17} parent=0 // loop_footer
    %s11 = sadd.s32 1, %s7
  $region7: #{discriminator_forward.17} parent=0 // loop_footer_branch
    %6 = sbr.rel target = $region3
  $region8: #{discriminator_forward.17} parent=0 // loop_exit
    _

// kernel: discriminator_forward.16
$region0: #{discriminator_forward.16}
  #allocation0 [shape = 'u32[]', space=smem, size = 0x4, offset = 0x4, fixed_abs, tag = 'smem constant byte address 0x4 - core index']
  #allocation1 [shape = 'u32[72,128]{1,0:T(1,128)}', space=vmem, size = 0x9000, scoped, tag = 'internal scratch']
  #allocation2 [shape = 'f32[8,128]{1,0:T(8,128)}', space=vmem, size = 0x1000, scoped, tag = 'scratch operand']
  %s0 = inlined_call_operand.vmem [shape: bf16[8,8192], index: 0, kind: input, shape index: {}]
  %s1 = inlined_call_operand.vmem [shape: bf16[8192,128], index: 1, kind: input, shape index: {}]
  %s2 = inlined_call_operand.vmem [shape: f32[1,128], index: 2, kind: input, shape index: {}]
  %s3 = inlined_call_operand.vmem [shape: f32[8,128], index: 3, kind: output, shape index: {}]
  %s4 = sld [smem:[#allocation0]]
  $region53: #{discriminator_forward.16} parent=0
    _
  %s6 = ssub.s32 1, %s4
  %s7 = scalar_select 0, %s6, %s4
  loop: start=0, step=1, limit=10
  $region2: #{discriminator_forward.16} parent=0 // loop_pre_header
    _
  $region3: #{discriminator_forward.16} parent=0 // loop_header
    %s9 = sphi 0, %s13
    %p10 = scmp.ge.s32.totalorder %s9, 10
    %s16 = sphi 0, %s28
    %s17 = sphi 0, %s24
    %s18 = sphi 0, %s16
    %s19 = sphi 0, %s17
    %s20 = sphi 0, %s18
    %s21 = sphi 0, %s19
    %s33 = sphi 0, %s35
    %s36 = sphi 0, %s33
    %s37 = sphi 0, %s36
    %s53 = sphi 0, %s37
    %s59 = sphi 0, %s61
    %s62 = sphi 0, %s59
    %s63 = sphi 0, %s62
    %s79 = sphi 0, %s63
    %s83 = sphi 0, %s83
    %s85 = sphi 0, %s83
    %s86 = sphi 0, %s85
    %s100 = sphi 0, %s86
    %s106 = sphi 0, %s108
    %s109 = sphi 0, %s106
    %s110 = sphi 0, %s109
    %s126 = sphi 0, %s110
  $region4: #{discriminator_forward.16} parent=0 // loop_header_branch
    %12 = sbr.rel (%p10) target = $region8
  $region5: #{discriminator_forward.16} parent=0 // loop_body
    %s14 = ssub.s32 %s9, 1
    %s15 = ssub.s32 %s9, 2
    %s22 = sadd.s32 1, %s17
    %p23 = scmp.ge.s32.totalorder %s22, 8
    %s24 = scalar_select %p23, 0, %s22
    %s25 = sadd.s32 1, %s16
    %s26 = scalar_select %p23, %s25, %s16
    %p27 = scmp.ge.s32.totalorder %s26, 1
    %s28 = scalar_select %p27, 0, %s26
    %s29 = ssub.s32 %s16, %s28
    %s30 = ssub.s32 %s17, %s24
    %s31 = sor.u32 %s29, %s30
    %p32 = scmp.eq.s32.totalorder %s31, 0
    %s34 = sadd.s32 %s33, 1
    %s35 = scalar_select %p32, %s33, %s34
    %p38 = pneg %p32
    %p39 = scmp.eq.s32.totalorder %s9, 7
    %p40 = por %p38, %p39
    %p41 = scmp.ne.s32.totalorder %s33, %s36
    %p42 = scmp.eq.s32.totalorder %s9, 0
    %p43 = por %p41, %p42
    %p44 = scmp.ne.s32.totalorder %s33, %s36
    %p45 = scmp.eq.s32.totalorder %s14, 7
    %p46 = por %p44, %p45
    %p47 = scmp.ne.s32.totalorder %s36, %s37
    %p48 = scmp.eq.s32.totalorder %s14, 0
    %p49 = por %p47, %p48
    %p50 = scmp.ne.s32.totalorder %s36, %s37
    %p51 = scmp.eq.s32.totalorder %s15, 7
    %p52 = por %p50, %p51
    %p54 = scmp.ne.s32.totalorder %s37, %s53
    %p55 = scmp.eq.s32.totalorder %s15, 0
    %p56 = por %p54, %p55
    %s57 = ssub.s32 %s17, %s24
    %p58 = scmp.eq.s32.totalorder %s57, 0
    %s60 = sadd.s32 %s59, 1
    %s61 = scalar_select %p58, %s59, %s60
    %p64 = pneg %p58
    %p65 = scmp.eq.s32.totalorder %s9, 7
    %p66 = por %p64, %p65
    %p67 = scmp.ne.s32.totalorder %s59, %s62
    %p68 = scmp.eq.s32.totalorder %s9, 0
    %p69 = por %p67, %p68
    %p70 = scmp.ne.s32.totalorder %s59, %s62
    %p71 = scmp.eq.s32.totalorder %s14, 7
    %p72 = por %p70, %p71
    %p73 = scmp.ne.s32.totalorder %s62, %s63
    %p74 = scmp.eq.s32.totalorder %s14, 0
    %p75 = por %p73, %p74
    %p76 = scmp.ne.s32.totalorder %s62, %s63
    %p77 = scmp.eq.s32.totalorder %s15, 7
    %p78 = por %p76, %p77
    %p80 = scmp.ne.s32.totalorder %s63, %s79
    %p81 = scmp.eq.s32.totalorder %s15, 0
    %p82 = por %p80, %p81
    %s84 = sadd.s32 %s83, 1
    %p87 = scmp.eq.s32.totalorder %s9, 7
    %p88 = scmp.ne.s32.totalorder %s83, %s85
    %p89 = scmp.eq.s32.totalorder %s9, 0
    %p90 = por %p88, %p89
    %p91 = scmp.ne.s32.totalorder %s83, %s85
    %p92 = scmp.eq.s32.totalorder %s14, 7
    %p93 = por %p91, %p92
    %p94 = scmp.ne.s32.totalorder %s85, %s86
    %p95 = scmp.eq.s32.totalorder %s14, 0
    %p96 = por %p94, %p95
    %p97 = scmp.ne.s32.totalorder %s85, %s86
    %p98 = scmp.eq.s32.totalorder %s15, 7
    %p99 = por %p97, %p98
    %p101 = scmp.ne.s32.totalorder %s86, %s100
    %p102 = scmp.eq.s32.totalorder %s15, 0
    %p103 = por %p101, %p102
    %s104 = ssub.s32 %s16, %s28
    %p105 = scmp.eq.s32.totalorder %s104, 0
    %s107 = sadd.s32 %s106, 1
    %s108 = scalar_select %p105, %s106, %s107
    %p111 = pneg %p105
    %p112 = scmp.eq.s32.totalorder %s9, 7
    %p113 = por %p111, %p112
    %p114 = scmp.ne.s32.totalorder %s106, %s109
    %p115 = scmp.eq.s32.totalorder %s9, 0
    %p116 = por %p114, %p115
    %p117 = scmp.ne.s32.totalorder %s106, %s109
    %p118 = scmp.eq.s32.totalorder %s14, 7
    %p119 = por %p117, %p118
    %p120 = scmp.ne.s32.totalorder %s109, %s110
    %p121 = scmp.eq.s32.totalorder %s14, 0
    %p122 = por %p120, %p121
    %p123 = scmp.ne.s32.totalorder %s109, %s110
    %p124 = scmp.eq.s32.totalorder %s15, 7
    %p125 = por %p123, %p124
    %p127 = scmp.ne.s32.totalorder %s110, %s126
    %p128 = scmp.eq.s32.totalorder %s15, 0
    %p129 = por %p127, %p128
    %p130 = scmp.le.s32.totalorder 1, %s9
    %p131 = scmp.lt.s32.totalorder %s9, 9
    %p132 = pnand %p130, %p131
    %p133 = pneg %p132
    // Predicated region
    $region9: #{discriminator_forward.16} parent=5 // pred_check
      _
    $region10: #{discriminator_forward.16} parent=5 // pred_check_branch
      %135 = sbr.rel (%p132) target = $region12
    $region11: #{discriminator_forward.16} parent=5 // pred_region
      %s136 = ssub.s32 %s9, 1
      // Predicated region
      $region13: #{discriminator_forward.16} parent=11 // pred_check
        %p137 = pneg %p96
      $region14: #{discriminator_forward.16} parent=11 // pred_check_branch
        %139 = sbr.rel (%p137) target = $region16
      $region15: #{discriminator_forward.16} parent=11 // pred_region
        _
      $region16: #{discriminator_forward.16} parent=11 // pred_fallthru
        _
    $region12: #{discriminator_forward.16} parent=5 // pred_fallthru
      _
    %p140 = scmp.lt.s32.totalorder %s9, 8
    // Predicated region
    $region17: #{discriminator_forward.16} parent=5 // pred_check
      %p141 = pneg %p140
    $region18: #{discriminator_forward.16} parent=5 // pred_check_branch
      %143 = sbr.rel (%p141) target = $region20
    $region19: #{discriminator_forward.16} parent=5 // pred_region
      // Predicated region
      $region21: #{discriminator_forward.16} parent=19 // pred_check
        %p144 = pneg %p43
      $region22: #{discriminator_forward.16} parent=19 // pred_check_branch
        %146 = sbr.rel (%p144) target = $region24
      $region23: #{discriminator_forward.16} parent=19 // pred_region
        %s147 = smul.u32 8, %s17
        %p148 = scmp.lt.s32.totalorder %s16, 0
        %s149 = scalar_select %p148, %s16, 0
        %p150 = scmp.lt.s32.totalorder %s147, 63
        %s151 = scalar_select %p150, %s147, 63
        %s152 = smul.addr %s149, 64
        %s153 = sadd.s32 %s151, %s152
        %s154 = smul.addr %s153, 4
        %s155 = scalar_lea.vmem %s0, %s154
        %s156 = smul.u32 8, %s17
      $region24: #{discriminator_forward.16} parent=19 // pred_fallthru
        _
      // Predicated region
      $region25: #{discriminator_forward.16} parent=19 // pred_check
        %p157 = pneg %p69
      $region26: #{discriminator_forward.16} parent=19 // pred_check_branch
        %159 = sbr.rel (%p157) target = $region28
      $region27: #{discriminator_forward.16} parent=19 // pred_region
        %s160 = smul.u32 128, %s17
        %p161 = scmp.lt.s32.totalorder %s160, 1023
        %s162 = scalar_select %p161, %s160, 1023
        %s163 = smul.addr %s162, 4
        %s164 = scalar_lea.vmem %s1, %s163
        %s165 = smul.u32 128, %s17
      $region28: #{discriminator_forward.16} parent=19 // pred_fallthru
        _
    $region20: #{discriminator_forward.16} parent=5 // pred_fallthru
      _
    %p166 = scmp.le.s32.totalorder 1, %s9
    %p167 = scmp.lt.s32.totalorder %s9, 9
    %p168 = pnand %p166, %p167
    %p169 = pneg %p168
    // Predicated region
    $region29: #{discriminator_forward.16} parent=5 // pred_check
      _
    $region30: #{discriminator_forward.16} parent=5 // pred_check_branch
      %171 = sbr.rel (%p168) target = $region32
    $region31: #{discriminator_forward.16} parent=5 // pred_region
      %s172 = ssub.s32 %s9, 1
      %s173 = smul.u32 8, %s19
      %p174 = scmp.lt.s32.totalorder %s18, 0
      %s175 = scalar_select %p174, %s18, 0
      %p176 = scmp.lt.s32.totalorder %s173, 63
      %s177 = scalar_select %p176, %s173, 63
      %s178 = smul.addr %s175, 64
      %s179 = sadd.s32 %s177, %s178
      %s180 = smul.addr %s179, 4
      %s181 = scalar_lea.vmem %s0, %s180
      %p182 = pneg %p49
      %p183 = pneg %p46
      %s184 = smul.u32 128, %s19
      %p185 = scmp.lt.s32.totalorder %s184, 1023
      %s186 = scalar_select %p185, %s184, 1023
      %s187 = smul.addr %s186, 4
      %s188 = scalar_lea.vmem %s1, %s187
      %p189 = pneg %p75
      %p190 = pneg %p72
      %p191 = pneg %p96
      %p192 = pneg %p93
      %p193 = pneg %p122
      %p194 = pneg %p119
      %p195 = scmp.lt.s32.totalorder %s18, 0
      %s196 = scalar_select %p195, %s18, 0
      %s197 = smul.addr %s196, 8
      %s198 = scalar_lea.vmem %s3, %s197
      %s199 = smul.u32 8, %s19
      %p200 = scmp.lt.s32.totalorder %s18, 0
      %s201 = scalar_select %p200, %s18, 0
      %p202 = scmp.lt.s32.totalorder %s199, 63
      %s203 = scalar_select %p202, %s199, 63
      %s204 = smul.addr %s201, 64
      %s205 = sadd.s32 %s203, %s204
      %s206 = smul.addr %s205, 4
      %s207 = scalar_lea.vmem %s0, %s206
      %s208 = smul.u32 8, %s19
      %s209 = smul.u32 128, %s19
      %p210 = scmp.lt.s32.totalorder %s209, 1023
      %s211 = scalar_select %p210, %s209, 1023
      %s212 = smul.addr %s211, 4
      %s213 = scalar_lea.vmem %s1, %s212
      %s214 = smul.u32 128, %s19
      %p215 = scmp.lt.s32.totalorder %s18, 0
      %s216 = scalar_select %p215, %s18, 0
      %s217 = smul.addr %s216, 8
      %s218 = scalar_lea.vmem %s3, %s217
      %p219 = scmp.eq.s32.totalorder %s19, 0
      // Predicated region
      $region33: #{discriminator_forward.16} parent=31 // pred_check
        %p220 = pneg %p219
      $region34: #{discriminator_forward.16} parent=31 // pred_check_branch
        %222 = sbr.rel (%p220) target = $region36
      $region35: #{discriminator_forward.16} parent=31 // pred_region
        %223 = vst [vmem:[#allocation2] sm:$0xff] 0.0
      $region36: #{discriminator_forward.16} parent=31 // pred_fallthru
        _
      %v224 = vld [vmem:[#allocation2] sm:$0xff]
      %v225 = vld [vmem:[%s207] sm:$0xff]
      %v226 = vld [vmem:[%s207 + $0x8] sm:$0xff]
      %v227 = vld [vmem:[%s207 + $0x10] sm:$0xff]
      %v228 = vld [vmem:[%s207 + $0x18] sm:$0xff]
      %v229 = vld [vmem:[%s213] sm:$0xf]
      %v230 = vld [vmem:[%s213 + $0x4] sm:$0xf]
      %v231 = vld [vmem:[%s213 + $0x8] sm:$0xf]
      %v232 = vld [vmem:[%s213 + $0xc] sm:$0xf]
      %v233 = vld [vmem:[%s213 + $0x10] sm:$0xf]
      %v234 = vld [vmem:[%s213 + $0x14] sm:$0xf]
      %v235 = vld [vmem:[%s213 + $0x18] sm:$0xf]
      %v236 = vld [vmem:[%s213 + $0x1c] sm:$0xf]
      %v237 = vld [vmem:[%s213 + $0x20] sm:$0xf]
      %v238 = vld [vmem:[%s213 + $0x24] sm:$0xf]
      %v239 = vld [vmem:[%s213 + $0x28] sm:$0xf]
      %v240 = vld [vmem:[%s213 + $0x2c] sm:$0xf]
      %v241 = vld [vmem:[%s213 + $0x30] sm:$0xf]
      %v242 = vld [vmem:[%s213 + $0x34] sm:$0xf]
      %v243 = vld [vmem:[%s213 + $0x38] sm:$0xf]
      %v244 = vld [vmem:[%s213 + $0x3c] sm:$0xf]
      %v245 = vld [vmem:[%s213 + $0x40] sm:$0xf]
      %v246 = vld [vmem:[%s213 + $0x44] sm:$0xf]
      %v247 = vld [vmem:[%s213 + $0x48] sm:$0xf]
      %v248 = vld [vmem:[%s213 + $0x4c] sm:$0xf]
      %v249 = vld [vmem:[%s213 + $0x50] sm:$0xf]
      %v250 = vld [vmem:[%s213 + $0x54] sm:$0xf]
      %v251 = vld [vmem:[%s213 + $0x58] sm:$0xf]
      %v252 = vld [vmem:[%s213 + $0x5c] sm:$0xf]
      %v253 = vld [vmem:[%s213 + $0x60] sm:$0xf]
      %v254 = vld [vmem:[%s213 + $0x64] sm:$0xf]
      %v255 = vld [vmem:[%s213 + $0x68] sm:$0xf]
      %v256 = vld [vmem:[%s213 + $0x6c] sm:$0xf]
      %v257 = vld [vmem:[%s213 + $0x70] sm:$0xf]
      %v258 = vld [vmem:[%s213 + $0x74] sm:$0xf]
      %v259 = vld [vmem:[%s213 + $0x78] sm:$0xf]
      %v260 = vld [vmem:[%s213 + $0x7c] sm:$0xf]
      %v261 = vld [vmem:[%s213 + $0x80] sm:$0xf]
      %v262 = vld [vmem:[%s213 + $0x84] sm:$0xf]
      %v263 = vld [vmem:[%s213 + $0x88] sm:$0xf]
      %v264 = vld [vmem:[%s213 + $0x8c] sm:$0xf]
      %v265 = vld [vmem:[%s213 + $0x90] sm:$0xf]
      %v266 = vld [vmem:[%s213 + $0x94] sm:$0xf]
      %v267 = vld [vmem:[%s213 + $0x98] sm:$0xf]
      %v268 = vld [vmem:[%s213 + $0x9c] sm:$0xf]
      %v269 = vld [vmem:[%s213 + $0xa0] sm:$0xf]
      %v270 = vld [vmem:[%s213 + $0xa4] sm:$0xf]
      %v271 = vld [vmem:[%s213 + $0xa8] sm:$0xf]
      %v272 = vld [vmem:[%s213 + $0xac] sm:$0xf]
      %v273 = vld [vmem:[%s213 + $0xb0] sm:$0xf]
      %v274 = vld [vmem:[%s213 + $0xb4] sm:$0xf]
      %v275 = vld [vmem:[%s213 + $0xb8] sm:$0xf]
      %v276 = vld [vmem:[%s213 + $0xbc] sm:$0xf]
      %v277 = vld [vmem:[%s213 + $0xc0] sm:$0xf]
      %v278 = vld [vmem:[%s213 + $0xc4] sm:$0xf]
      %v279 = vld [vmem:[%s213 + $0xc8] sm:$0xf]
      %v280 = vld [vmem:[%s213 + $0xcc] sm:$0xf]
      %v281 = vld [vmem:[%s213 + $0xd0] sm:$0xf]
      %v282 = vld [vmem:[%s213 + $0xd4] sm:$0xf]
      %v283 = vld [vmem:[%s213 + $0xd8] sm:$0xf]
      %v284 = vld [vmem:[%s213 + $0xdc] sm:$0xf]
      %v285 = vld [vmem:[%s213 + $0xe0] sm:$0xf]
      %v286 = vld [vmem:[%s213 + $0xe4] sm:$0xf]
      %v287 = vld [vmem:[%s213 + $0xe8] sm:$0xf]
      %v288 = vld [vmem:[%s213 + $0xec] sm:$0xf]
      %v289 = vld [vmem:[%s213 + $0xf0] sm:$0xf]
      %v290 = vld [vmem:[%s213 + $0xf4] sm:$0xf]
      %v291 = vld [vmem:[%s213 + $0xf8] sm:$0xf]
      %v292 = vld [vmem:[%s213 + $0xfc] sm:$0xf]
      %v293 = vld [vmem:[%s213 + $0x100] sm:$0xf]
      %v294 = vld [vmem:[%s213 + $0x104] sm:$0xf]
      %v295 = vld [vmem:[%s213 + $0x108] sm:$0xf]
      %v296 = vld [vmem:[%s213 + $0x10c] sm:$0xf]
      %v297 = vld [vmem:[%s213 + $0x110] sm:$0xf]
      %v298 = vld [vmem:[%s213 + $0x114] sm:$0xf]
      %v299 = vld [vmem:[%s213 + $0x118] sm:$0xf]
      %v300 = vld [vmem:[%s213 + $0x11c] sm:$0xf]
      %v301 = vld [vmem:[%s213 + $0x120] sm:$0xf]
      %v302 = vld [vmem:[%s213 + $0x124] sm:$0xf]
      %v303 = vld [vmem:[%s213 + $0x128] sm:$0xf]
      %v304 = vld [vmem:[%s213 + $0x12c] sm:$0xf]
      %v305 = vld [vmem:[%s213 + $0x130] sm:$0xf]
      %v306 = vld [vmem:[%s213 + $0x134] sm:$0xf]
      %v307 = vld [vmem:[%s213 + $0x138] sm:$0xf]
      %v308 = vld [vmem:[%s213 + $0x13c] sm:$0xf]
      %v309 = vld [vmem:[%s213 + $0x140] sm:$0xf]
      %v310 = vld [vmem:[%s213 + $0x144] sm:$0xf]
      %v311 = vld [vmem:[%s213 + $0x148] sm:$0xf]
      %v312 = vld [vmem:[%s213 + $0x14c] sm:$0xf]
      %v313 = vld [vmem:[%s213 + $0x150] sm:$0xf]
      %v314 = vld [vmem:[%s213 + $0x154] sm:$0xf]
      %v315 = vld [vmem:[%s213 + $0x158] sm:$0xf]
      %v316 = vld [vmem:[%s213 + $0x15c] sm:$0xf]
      %v317 = vld [vmem:[%s213 + $0x160] sm:$0xf]
      %v318 = vld [vmem:[%s213 + $0x164] sm:$0xf]
      %v319 = vld [vmem:[%s213 + $0x168] sm:$0xf]
      %v320 = vld [vmem:[%s213 + $0x16c] sm:$0xf]
      %v321 = vld [vmem:[%s213 + $0x170] sm:$0xf]
      %v322 = vld [vmem:[%s213 + $0x174] sm:$0xf]
      %v323 = vld [vmem:[%s213 + $0x178] sm:$0xf]
      %v324 = vld [vmem:[%s213 + $0x17c] sm:$0xf]
      %v325 = vld [vmem:[%s213 + $0x180] sm:$0xf]
      %v326 = vld [vmem:[%s213 + $0x184] sm:$0xf]
      %v327 = vld [vmem:[%s213 + $0x188] sm:$0xf]
      %v328 = vld [vmem:[%s213 + $0x18c] sm:$0xf]
      %v329 = vld [vmem:[%s213 + $0x190] sm:$0xf]
      %v330 = vld [vmem:[%s213 + $0x194] sm:$0xf]
      %v331 = vld [vmem:[%s213 + $0x198] sm:$0xf]
      %v332 = vld [vmem:[%s213 + $0x19c] sm:$0xf]
      %v333 = vld [vmem:[%s213 + $0x1a0] sm:$0xf]
      %v334 = vld [vmem:[%s213 + $0x1a4] sm:$0xf]
      %v335 = vld [vmem:[%s213 + $0x1a8] sm:$0xf]
      %v336 = vld [vmem:[%s213 + $0x1ac] sm:$0xf]
      %v337 = vld [vmem:[%s213 + $0x1b0] sm:$0xf]
      %v338 = vld [vmem:[%s213 + $0x1b4] sm:$0xf]
      %v339 = vld [vmem:[%s213 + $0x1b8] sm:$0xf]
      %v340 = vld [vmem:[%s213 + $0x1bc] sm:$0xf]
      %v341 = vld [vmem:[%s213 + $0x1c0] sm:$0xf]
      %v342 = vld [vmem:[%s213 + $0x1c4] sm:$0xf]
      %v343 = vld [vmem:[%s213 + $0x1c8] sm:$0xf]
      %v344 = vld [vmem:[%s213 + $0x1cc] sm:$0xf]
      %v345 = vld [vmem:[%s213 + $0x1d0] sm:$0xf]
      %v346 = vld [vmem:[%s213 + $0x1d4] sm:$0xf]
      %v347 = vld [vmem:[%s213 + $0x1d8] sm:$0xf]
      %v348 = vld [vmem:[%s213 + $0x1dc] sm:$0xf]
      %v349 = vld [vmem:[%s213 + $0x1e0] sm:$0xf]
      %v350 = vld [vmem:[%s213 + $0x1e4] sm:$0xf]
      %v351 = vld [vmem:[%s213 + $0x1e8] sm:$0xf]
      %v352 = vld [vmem:[%s213 + $0x1ec] sm:$0xf]
      %v353 = vld [vmem:[%s213 + $0x1f0] sm:$0xf]
      %v354 = vld [vmem:[%s213 + $0x1f4] sm:$0xf]
      %v355 = vld [vmem:[%s213 + $0x1f8] sm:$0xf]
      %v356 = vld [vmem:[%s213 + $0x1fc] sm:$0xf]
      %v361 = vunpack.c.l.b16 %v225
      %v362 = vunpack.c.h.b16 %v225
      %v363 = vunpack.c.l.b16 %v226
      %v364 = vunpack.c.h.b16 %v226
      %v365 = vunpack.c.l.b16 %v227
      %v366 = vunpack.c.h.b16 %v227
      %v367 = vunpack.c.l.b16 %v228
      %v368 = vunpack.c.h.b16 %v228
      %v369 = vpack.c.b16 %v361, %v361
      %v370 = vpack.c.b16 %v362, %v362
      %v371 = vpack.c.b16 %v363, %v363
      %v372 = vpack.c.b16 %v364, %v364
      %v373 = vpack.c.b16 %v365, %v365
      %v374 = vpack.c.b16 %v366, %v366
      %v375 = vpack.c.b16 %v367, %v367
      %v376 = vpack.c.b16 %v368, %v368
      %v513 = vunpack.c.l.b16 %v229
      %v514 = vunpack.c.l.b16 %v230
      %v515 = vunpack.c.l.b16 %v231
      %v516 = vunpack.c.l.b16 %v232
      %v517 = vunpack.c.l.b16 %v233
      %v518 = vunpack.c.l.b16 %v234
      %v519 = vunpack.c.l.b16 %v235
      %v520 = vunpack.c.l.b16 %v236
      %v521 = vunpack.c.l.b16 %v237
      %v522 = vunpack.c.l.b16 %v238
      %v523 = vunpack.c.l.b16 %v239
      %v524 = vunpack.c.l.b16 %v240
      %v525 = vunpack.c.l.b16 %v241
      %v526 = vunpack.c.l.b16 %v242
      %v527 = vunpack.c.l.b16 %v243
      %v528 = vunpack.c.l.b16 %v244
      %v529 = vunpack.c.l.b16 %v245
      %v530 = vunpack.c.l.b16 %v246
      %v531 = vunpack.c.l.b16 %v247
      %v532 = vunpack.c.l.b16 %v248
      %v533 = vunpack.c.l.b16 %v249
      %v534 = vunpack.c.l.b16 %v250
      %v535 = vunpack.c.l.b16 %v251
      %v536 = vunpack.c.l.b16 %v252
      %v537 = vunpack.c.l.b16 %v253
      %v538 = vunpack.c.l.b16 %v254
      %v539 = vunpack.c.l.b16 %v255
      %v540 = vunpack.c.l.b16 %v256
      %v541 = vunpack.c.l.b16 %v257
      %v542 = vunpack.c.l.b16 %v258
      %v543 = vunpack.c.l.b16 %v259
      %v544 = vunpack.c.l.b16 %v260
      %v545 = vunpack.c.l.b16 %v261
      %v546 = vunpack.c.l.b16 %v262
      %v547 = vunpack.c.l.b16 %v263
      %v548 = vunpack.c.l.b16 %v264
      %v549 = vunpack.c.l.b16 %v265
      %v550 = vunpack.c.l.b16 %v266
      %v551 = vunpack.c.l.b16 %v267
      %v552 = vunpack.c.l.b16 %v268
      %v553 = vunpack.c.l.b16 %v269
      %v554 = vunpack.c.l.b16 %v270
      %v555 = vunpack.c.l.b16 %v271
      %v556 = vunpack.c.l.b16 %v272
      %v557 = vunpack.c.l.b16 %v273
      %v558 = vunpack.c.l.b16 %v274
      %v559 = vunpack.c.l.b16 %v275
      %v560 = vunpack.c.l.b16 %v276
      %v561 = vunpack.c.l.b16 %v277
      %v562 = vunpack.c.l.b16 %v278
      %v563 = vunpack.c.l.b16 %v279
      %v564 = vunpack.c.l.b16 %v280
      %v565 = vunpack.c.l.b16 %v281
      %v566 = vunpack.c.l.b16 %v282
      %v567 = vunpack.c.l.b16 %v283
      %v568 = vunpack.c.l.b16 %v284
      %v569 = vunpack.c.l.b16 %v285
      %v570 = vunpack.c.l.b16 %v286
      %v571 = vunpack.c.l.b16 %v287
      %v572 = vunpack.c.l.b16 %v288
      %v573 = vunpack.c.l.b16 %v289
      %v574 = vunpack.c.l.b16 %v290
      %v575 = vunpack.c.l.b16 %v291
      %v576 = vunpack.c.l.b16 %v292
      %v577 = vunpack.c.l.b16 %v293
      %v578 = vunpack.c.l.b16 %v294
      %v579 = vunpack.c.l.b16 %v295
      %v580 = vunpack.c.l.b16 %v296
      %v581 = vunpack.c.l.b16 %v297
      %v582 = vunpack.c.l.b16 %v298
      %v583 = vunpack.c.l.b16 %v299
      %v584 = vunpack.c.l.b16 %v300
      %v585 = vunpack.c.l.b16 %v301
      %v586 = vunpack.c.l.b16 %v302
      %v587 = vunpack.c.l.b16 %v303
      %v588 = vunpack.c.l.b16 %v304
      %v589 = vunpack.c.l.b16 %v305
      %v590 = vunpack.c.l.b16 %v306
      %v591 = vunpack.c.l.b16 %v307
      %v592 = vunpack.c.l.b16 %v308
      %v593 = vunpack.c.l.b16 %v309
      %v594 = vunpack.c.l.b16 %v310
      %v595 = vunpack.c.l.b16 %v311
      %v596 = vunpack.c.l.b16 %v312
      %v597 = vunpack.c.l.b16 %v313
      %v598 = vunpack.c.l.b16 %v314
      %v599 = vunpack.c.l.b16 %v315
      %v600 = vunpack.c.l.b16 %v316
      %v601 = vunpack.c.l.b16 %v317
      %v602 = vunpack.c.l.b16 %v318
      %v603 = vunpack.c.l.b16 %v319
      %v604 = vunpack.c.l.b16 %v320
      %v605 = vunpack.c.l.b16 %v321
      %v606 = vunpack.c.l.b16 %v322
      %v607 = vunpack.c.l.b16 %v323
      %v608 = vunpack.c.l.b16 %v324
      %v609 = vunpack.c.l.b16 %v325
      %v610 = vunpack.c.l.b16 %v326
      %v611 = vunpack.c.l.b16 %v327
      %v612 = vunpack.c.l.b16 %v328
      %v613 = vunpack.c.l.b16 %v329
      %v614 = vunpack.c.l.b16 %v330
      %v615 = vunpack.c.l.b16 %v331
      %v616 = vunpack.c.l.b16 %v332
      %v617 = vunpack.c.l.b16 %v333
      %v618 = vunpack.c.l.b16 %v334
      %v619 = vunpack.c.l.b16 %v335
      %v620 = vunpack.c.l.b16 %v336
      %v621 = vunpack.c.l.b16 %v337
      %v622 = vunpack.c.l.b16 %v338
      %v623 = vunpack.c.l.b16 %v339
      %v624 = vunpack.c.l.b16 %v340
      %v625 = vunpack.c.l.b16 %v341
      %v626 = vunpack.c.l.b16 %v342
      %v627 = vunpack.c.l.b16 %v343
      %v628 = vunpack.c.l.b16 %v344
      %v629 = vunpack.c.l.b16 %v345
      %v630 = vunpack.c.l.b16 %v346
      %v631 = vunpack.c.l.b16 %v347
      %v632 = vunpack.c.l.b16 %v348
      %v633 = vunpack.c.l.b16 %v349
      %v634 = vunpack.c.l.b16 %v350
      %v635 = vunpack.c.l.b16 %v351
      %v636 = vunpack.c.l.b16 %v352
      %v637 = vunpack.c.l.b16 %v353
      %v638 = vunpack.c.l.b16 %v354
      %v639 = vunpack.c.l.b16 %v355
      %v640 = vunpack.c.l.b16 %v356
      %v641 = vpack.c.b16 %v514, %v513
      %v642 = vpack.c.b16 %v516, %v515
      %v643 = vpack.c.b16 %v518, %v517
      %v644 = vpack.c.b16 %v520, %v519
      %v645 = vpack.c.b16 %v522, %v521
      %v646 = vpack.c.b16 %v524, %v523
      %v647 = vpack.c.b16 %v526, %v525
      %v648 = vpack.c.b16 %v528, %v527
      %v649 = vpack.c.b16 %v530, %v529
      %v650 = vpack.c.b16 %v532, %v531
      %v651 = vpack.c.b16 %v534, %v533
      %v652 = vpack.c.b16 %v536, %v535
      %v653 = vpack.c.b16 %v538, %v537
      %v654 = vpack.c.b16 %v540, %v539
      %v655 = vpack.c.b16 %v542, %v541
      %v656 = vpack.c.b16 %v544, %v543
      %v657 = vpack.c.b16 %v546, %v545
      %v658 = vpack.c.b16 %v548, %v547
      %v659 = vpack.c.b16 %v550, %v549
      %v660 = vpack.c.b16 %v552, %v551
      %v661 = vpack.c.b16 %v554, %v553
      %v662 = vpack.c.b16 %v556, %v555
      %v663 = vpack.c.b16 %v558, %v557
      %v664 = vpack.c.b16 %v560, %v559
      %v665 = vpack.c.b16 %v562, %v561
      %v666 = vpack.c.b16 %v564, %v563
      %v667 = vpack.c.b16 %v566, %v565
      %v668 = vpack.c.b16 %v568, %v567
      %v669 = vpack.c.b16 %v570, %v569
      %v670 = vpack.c.b16 %v572, %v571
      %v671 = vpack.c.b16 %v574, %v573
      %v672 = vpack.c.b16 %v576, %v575
      %v673 = vpack.c.b16 %v578, %v577
      %v674 = vpack.c.b16 %v580, %v579
      %v675 = vpack.c.b16 %v582, %v581
      %v676 = vpack.c.b16 %v584, %v583
      %v677 = vpack.c.b16 %v586, %v585
      %v678 = vpack.c.b16 %v588, %v587
      %v679 = vpack.c.b16 %v590, %v589
      %v680 = vpack.c.b16 %v592, %v591
      %v681 = vpack.c.b16 %v594, %v593
      %v682 = vpack.c.b16 %v596, %v595
      %v683 = vpack.c.b16 %v598, %v597
      %v684 = vpack.c.b16 %v600, %v599
      %v685 = vpack.c.b16 %v602, %v601
      %v686 = vpack.c.b16 %v604, %v603
      %v687 = vpack.c.b16 %v606, %v605
      %v688 = vpack.c.b16 %v608, %v607
      %v689 = vpack.c.b16 %v610, %v609
      %v690 = vpack.c.b16 %v612, %v611
      %v691 = vpack.c.b16 %v614, %v613
      %v692 = vpack.c.b16 %v616, %v615
      %v693 = vpack.c.b16 %v618, %v617
      %v694 = vpack.c.b16 %v620, %v619
      %v695 = vpack.c.b16 %v622, %v621
      %v696 = vpack.c.b16 %v624, %v623
      %v697 = vpack.c.b16 %v626, %v625
      %v698 = vpack.c.b16 %v628, %v627
      %v699 = vpack.c.b16 %v630, %v629
      %v700 = vpack.c.b16 %v632, %v631
      %v701 = vpack.c.b16 %v634, %v633
      %v702 = vpack.c.b16 %v636, %v635
      %v703 = vpack.c.b16 %v638, %v637
      %v704 = vpack.c.b16 %v640, %v639
      %769 = vmatpush.bf16.msra.mxu0 %v648
      %770 = vmatpush.bf16.msra.mxu0 %v647
      %771 = vmatpush.bf16.msra.mxu0 %v646
      %772 = vmatpush.bf16.msra.mxu0 %v645
      %773 = vmatpush.bf16.msra.mxu0 %v644
      %774 = vmatpush.bf16.msra.mxu0 %v643
      %775 = vmatpush.bf16.msra.mxu0 %v642
      %776 = vmatpush.bf16.msra.mxu0 %v641
      %777 = vmatmul.bf16.gmra.mxu0 %v369
      %v778 = vpop.f32.mrf.mxu0
      %v779 = vadd.f32 0.0, %v778
      %v780 = vpop.f32.mrf.mxu0
      %781 = vdwg.mxu0
      %782 = vmatpush.bf16.msra.mxu0 %v656
      %783 = vmatpush.bf16.msra.mxu0 %v655
      %784 = vmatpush.bf16.msra.mxu0 %v654
      %785 = vmatpush.bf16.msra.mxu0 %v653
      %786 = vmatpush.bf16.msra.mxu0 %v652
      %787 = vmatpush.bf16.msra.mxu0 %v651
      %788 = vmatpush.bf16.msra.mxu0 %v650
      %789 = vmatpush.bf16.msra.mxu0 %v649
      %790 = vmatmul.bf16.gmra.mxu0 %v370
      %v791 = vpop.f32.mrf.mxu0
      %v792 = vadd.f32 %v779, %v791
      %v793 = vpop.f32.mrf.mxu0
      %794 = vdwg.mxu0
      %795 = vmatpush.bf16.msra.mxu0 %v664
      %796 = vmatpush.bf16.msra.mxu0 %v663
      %797 = vmatpush.bf16.msra.mxu0 %v662
      %798 = vmatpush.bf16.msra.mxu0 %v661
      %799 = vmatpush.bf16.msra.mxu0 %v660
      %800 = vmatpush.bf16.msra.mxu0 %v659
      %801 = vmatpush.bf16.msra.mxu0 %v658
      %802 = vmatpush.bf16.msra.mxu0 %v657
      %803 = vmatmul.bf16.gmra.mxu0 %v371
      %v804 = vpop.f32.mrf.mxu0
      %v805 = vadd.f32 %v792, %v804
      %v806 = vpop.f32.mrf.mxu0
      %807 = vdwg.mxu0
      %808 = vmatpush.bf16.msra.mxu0 %v672
      %809 = vmatpush.bf16.msra.mxu0 %v671
      %810 = vmatpush.bf16.msra.mxu0 %v670
      %811 = vmatpush.bf16.msra.mxu0 %v669
      %812 = vmatpush.bf16.msra.mxu0 %v668
      %813 = vmatpush.bf16.msra.mxu0 %v667
      %814 = vmatpush.bf16.msra.mxu0 %v666
      %815 = vmatpush.bf16.msra.mxu0 %v665
      %816 = vmatmul.bf16.gmra.mxu0 %v372
      %v817 = vpop.f32.mrf.mxu0
      %v818 = vadd.f32 %v805, %v817
      %v819 = vpop.f32.mrf.mxu0
      %820 = vdwg.mxu0
      %821 = vmatpush.bf16.msra.mxu0 %v680
      %822 = vmatpush.bf16.msra.mxu0 %v679
      %823 = vmatpush.bf16.msra.mxu0 %v678
      %824 = vmatpush.bf16.msra.mxu0 %v677
      %825 = vmatpush.bf16.msra.mxu0 %v676
      %826 = vmatpush.bf16.msra.mxu0 %v675
      %827 = vmatpush.bf16.msra.mxu0 %v674
      %828 = vmatpush.bf16.msra.mxu0 %v673
      %829 = vmatmul.bf16.gmra.mxu0 %v373
      %v830 = vpop.f32.mrf.mxu0
      %v831 = vadd.f32 %v818, %v830
      %v832 = vpop.f32.mrf.mxu0
      %833 = vdwg.mxu0
      %834 = vmatpush.bf16.msra.mxu0 %v688
      %835 = vmatpush.bf16.msra.mxu0 %v687
      %836 = vmatpush.bf16.msra.mxu0 %v686
      %837 = vmatpush.bf16.msra.mxu0 %v685
      %838 = vmatpush.bf16.msra.mxu0 %v684
      %839 = vmatpush.bf16.msra.mxu0 %v683
      %840 = vmatpush.bf16.msra.mxu0 %v682
      %841 = vmatpush.bf16.msra.mxu0 %v681
      %842 = vmatmul.bf16.gmra.mxu0 %v374
      %v843 = vpop.f32.mrf.mxu0
      %v844 = vadd.f32 %v831, %v843
      %v845 = vpop.f32.mrf.mxu0
      %846 = vdwg.mxu0
      %847 = vmatpush.bf16.msra.mxu0 %v696
      %848 = vmatpush.bf16.msra.mxu0 %v695
      %849 = vmatpush.bf16.msra.mxu0 %v694
      %850 = vmatpush.bf16.msra.mxu0 %v693
      %851 = vmatpush.bf16.msra.mxu0 %v692
      %852 = vmatpush.bf16.msra.mxu0 %v691
      %853 = vmatpush.bf16.msra.mxu0 %v690
      %854 = vmatpush.bf16.msra.mxu0 %v689
      %855 = vmatmul.bf16.gmra.mxu0 %v375
      %v856 = vpop.f32.mrf.mxu0
      %v857 = vadd.f32 %v844, %v856
      %v858 = vpop.f32.mrf.mxu0
      %859 = vdwg.mxu0
      %860 = vmatpush.bf16.msra.mxu0 %v704
      %861 = vmatpush.bf16.msra.mxu0 %v703
      %862 = vmatpush.bf16.msra.mxu0 %v702
      %863 = vmatpush.bf16.msra.mxu0 %v701
      %864 = vmatpush.bf16.msra.mxu0 %v700
      %865 = vmatpush.bf16.msra.mxu0 %v699
      %866 = vmatpush.bf16.msra.mxu0 %v698
      %867 = vmatpush.bf16.msra.mxu0 %v697
      %868 = vmatmul.bf16.gmra.mxu0 %v376
      %v869 = vpop.f32.mrf.mxu0
      %v870 = vadd.f32 %v857, %v869
      %v871 = vpop.f32.mrf.mxu0
      %872 = vdwg.mxu0
      %v873 = vadd.f32 %v224, %v870
      %874 = vst [vmem:[#allocation2] sm:$0xff] %v873
      %p875 = scmp.eq.s32.totalorder %s19, 7
      // Predicated region
      $region37: #{discriminator_forward.16} parent=31 // pred_check
        %p876 = pneg %p875
      $region38: #{discriminator_forward.16} parent=31 // pred_check_branch
        %878 = sbr.rel (%p876) target = $region40
      $region39: #{discriminator_forward.16} parent=31 // pred_region
        %v879 = vld [vmem:[#allocation2] sm:$0xff]
        %v880 = vld [vmem:[%s2] sm:$0x1]
        %v882 = vperm.slane %v880, 0
        %v884 = vadd.f32 %v879, %v882
        %885 = vst [vmem:[%s218] sm:$0xff] %v884
      $region40: #{discriminator_forward.16} parent=31 // pred_fallthru
        _
      %p886 = scmp.lt.s32.totalorder %s18, 0
      %s887 = scalar_select %p886, %s18, 0
      %s888 = smul.addr %s887, 8
      %s889 = scalar_lea.vmem %s3, %s888
      // Predicated region
      $region41: #{discriminator_forward.16} parent=31 // pred_check
        %p890 = pneg %p119
      $region42: #{discriminator_forward.16} parent=31 // pred_check_branch
        %892 = sbr.rel (%p890) target = $region44
      $region43: #{discriminator_forward.16} parent=31 // pred_region
        _
      $region44: #{discriminator_forward.16} parent=31 // pred_fallthru
        _
      // Predicated region
      $region45: #{discriminator_forward.16} parent=31 // pred_check
        %p893 = pneg %p119
      $region46: #{discriminator_forward.16} parent=31 // pred_check_branch
        %895 = sbr.rel (%p893) target = $region48
      $region47: #{discriminator_forward.16} parent=31 // pred_region
        %p896 = scmp.lt.s32.totalorder %s18, 0
        %s897 = scalar_select %p896, %s18, 0
        %s898 = smul.addr %s897, 8
        %s899 = scalar_lea.vmem %s3, %s898
      $region48: #{discriminator_forward.16} parent=31 // pred_fallthru
        _
    $region32: #{discriminator_forward.16} parent=5 // pred_fallthru
      _
    %p900 = scmp.le.s32.totalorder 2, %s9
    // Predicated region
    $region49: #{discriminator_forward.16} parent=5 // pred_check
      %p901 = pneg %p900
    $region50: #{discriminator_forward.16} parent=5 // pred_check_branch
      %903 = sbr.rel (%p901) target = $region52
    $region51: #{discriminator_forward.16} parent=5 // pred_region
      %s904 = ssub.s32 %s9, 2
    $region52: #{discriminator_forward.16} parent=5 // pred_fallthru
      _
  $region6: #{discriminator_forward.16} parent=0 // loop_footer
    %s13 = sadd.s32 1, %s9
  $region7: #{discriminator_forward.16} parent=0 // loop_footer_branch
    %8 = sbr.rel target = $region3
  $region8: #{discriminator_forward.16} parent=0 // loop_exit
    _

</llo_original>
